<compile_context>
chip_gen: v7x
topology: tpu7x:2x2x1
jax: 0.10.0
libtpu: 0.0.40
codegen_flags: <defaults>
</compile_context>

<pallas_src>
import functools

import numpy as np
import jax
import jax.numpy as jnp
from jax import lax
from jax.experimental import pallas as pl
from jax.experimental.pallas import tpu as pltpu

_SIGMAS = (0.5, 1.0, 2.0, 4.0, 8.0)
_FS = 33            # filter_size = 4 * 8 + 1
_PAD = 16           # pad = 2 * 8
_K1, _K2 = 0.01, 0.03
_DR = 1.0
_C1 = (_K1 * _DR) ** 2
_C2 = (_K2 * _DR) ** 2
_ALPHA = 0.025
_COMPENSATION = 200.0

# Grouped-conv assignment of the original (out channel o -> input channel o//5,
# sigma index o//3), reduced to the 7 unique (channel, sigma) groups and their
# multiplicities in the 15-term cs product.
_SIGMA_CHANNELS = {0: (0,), 1: (0, 1), 2: (1,), 3: (1, 2), 4: (2,)}
_COUNT = {(0, 0): 3, (0, 1): 2, (1, 1): 1, (1, 2): 3, (1, 3): 1, (2, 3): 2, (2, 4): 3}


def _round_up(x, m):
    return ((x + m - 1) // m) * m


def _gauss_1d(size, sigma):
    coords = np.arange(size, dtype=np.float64) - size // 2
    g = np.exp(-(coords ** 2) / (2.0 * sigma * sigma))
    return (g / g.sum()).astype(np.float32)


def _toeplitz_row_matrix(g, tm):
    """(tm, tm + 32): out_band = M @ in_slab where in_slab carries a 16-row
    (zero-padded) halo above and below the tm output rows.  Identical for every
    band, so one copy stays resident for the whole grid."""
    k = g.shape[0]
    m = np.zeros((tm, tm + k - 1), dtype=np.float32)
    for a in range(tm):
        m[a, a:a + k] = g
    return m


def _truncated_band_matrix(g, out_len):
    """(out_len, out_len): M @ x == 'same' Gaussian conv of x under zero padding
    (pad columns dropped -> no padding along this axis, smaller matmul K)."""
    k = g.shape[0]
    half = k // 2
    m = np.zeros((out_len, out_len), dtype=np.float32)
    for i in range(out_len):
        lo = max(0, i - half)
        hi = min(out_len, i - half + k)
        for j in range(lo, hi):
            m[i, j] = g[j - i + half]
    return m


def _fast_div(num, den):
    """num / den via EUP approx reciprocal + one Newton step (~1e-7 rel. error)."""
    r = pl.reciprocal(den, approx=True)
    r = r * (2.0 - den * r)
    return num * r


def _ms_ssim_l1_band_kernel(x_ref, y_ref, r_ref, ct_ref, out_ref, *, h_valid, tm):
    """One (image, row-band) step of the MS-SSIM + Gaussian-L1 mixed loss.

    x_ref / y_ref: (1, 1, 3, tm + 32, W) halo'd band slabs (zero-padded rows).
    r_ref:  (5, tm, tm + 32)  Toeplitz row-blur slabs, one per sigma.
    ct_ref: (5, W, W)         transposed truncated column-blur band matrices.
    out_ref: (1, 1, 8, 128)   VMEM; the band's masked loss sum broadcast over the
                              block (lane-dense, unmasked store).
    """
    j = pl.program_id(1)
    w = ct_ref.shape[1]

    def blur(plane, s):
        # Band-aware separable blur: row matmul K = tm + 32 (not H).
        t = jnp.dot(r_ref[s], plane, preferred_element_type=jnp.float32)    # (tm, W)
        return jnp.dot(t, ct_ref[s], preferred_element_type=jnp.float32)    # (tm, W)

    pics = None   # running product of cs^count over the 15 conv output channels
    lm = None     # l_{(ch 2, sigma 8)}^3
    gl1 = None    # Gaussian-weighted L1 (channel mean, sigma=8 masks)

    for s in range(5):
        num = None
        den = None
        for c in _SIGMA_CHANNELS[s]:
            # Products recomputed per (channel, sigma): ~9 extra VPU mults/pixel, but
            # no persistent per-channel plane cache held live in VMEM.
            xc = x_ref[0, 0, c]
            yc = y_ref[0, 0, c]
            mux = blur(xc, s)
            muy = blur(yc, s)
            ex2 = blur(xc * xc, s)
            ey2 = blur(yc * yc, s)
            exy = blur(xc * yc, s)
            mux2 = mux * mux
            muy2 = muy * muy
            muxy = mux * muy
            n_cs = 2.0 * (exy - muxy) + _C2
            d_cs = (ex2 - mux2) + (ey2 - muy2) + _C2
            n_pow, d_pow = n_cs, d_cs
            for _ in range(_COUNT[(c, s)] - 1):        # fold multiplicity as powers
                n_pow = n_pow * n_cs
                d_pow = d_pow * d_cs
            num = n_pow if num is None else num * n_pow
            den = d_pow if den is None else den * d_pow
            if (c, s) == (2, 4):
                l = _fast_div(2.0 * muxy + _C1, mux2 + muy2 + _C1)
                lm = l * l * l
        # One divide per sigma.  Safe: at most 3 cs terms are fused, so the flat-
        # region denominator floor is C2^3 ~ 7e-10 (no f32 underflow).  Never fuse
        # across sigmas (C2^15 would flush to zero -> NaN).
        cs_s = _fast_div(num, den)
        pics = cs_s if pics is None else pics * cs_s

        if s == 4:
            g = blur(jnp.abs(x_ref[0, 0, 0] - y_ref[0, 0, 0]), s)
            g = g + blur(jnp.abs(x_ref[0, 0, 1] - y_ref[0, 0, 1]), s)
            g = g + blur(jnp.abs(x_ref[0, 0, 2] - y_ref[0, 0, 2]), s)
            gl1 = g * (1.0 / 3.0)
            # TODO(synk): optionally run these three cancellation-free blurs in bf16
            # (f32 accumulate) to shave ~8% of the MXU work.

    loss_ms_ssim = 1.0 - lm * pics                                        # (tm, W)
    loss_mix = _ALPHA * loss_ms_ssim + (1.0 - _ALPHA) * gl1 * (1.0 / _DR)

    # Mask output rows that fall past the true image height (last band only).
    valid = h_valid - j * tm
    row_idx = lax.broadcasted_iota(jnp.int32, (tm, w), 0)
    band_sum = _COMPENSATION * jnp.sum(jnp.where(row_idx < valid, loss_mix, 0.0))

    # Per-(image, band) partial sum; both grid axes stay "parallel", the tiny
    # cross-band / cross-image reduction happens in XLA.
    out_ref[0, 0] = jnp.zeros((8, 128), jnp.float32) + band_sum


def _vmem_budget_bytes():
    try:
        cap = int(pltpu.get_tpu_info().vmem_capacity_bytes)
    except Exception:
        cap = 64 * 1024 * 1024          # v7x worst case
    return max(16 * 1024 * 1024, int(cap * 0.85))


def _auto_row_tile(h, w, budget):
    """Largest row tile (multiple of 8, <= 256) whose footprint fits the budget."""
    def footprint(tm):
        kb = tm + 2 * _PAD
        mats = (5 * tm * kb + 5 * w * w) * 4           # band matrices (resident)
        inputs = 2 * 2 * 3 * kb * w * 4                # x / y band slabs, double-buffered
        live = (26 * tm + 6 * kb) * w * 4              # worst-case live f32 intermediates
        return int(1.2 * (mats + inputs + live)) + (2 << 20)

    tm = min(256, _round_up(h, 8))
    while tm > 8 and footprint(tm) > budget:
        tm -= 8
    return tm


def msl1_loss_pallas(pred, target, loss_weight=1.0, row_tile=None):
    """MSL1Loss.forward: loss_weight * MS_SSIM_L1_LOSS(pred, target). NCHW, C == 3."""
    n, c, h, w = pred.shape
    assert c == 3, "MS_SSIM_L1_LOSS is defined for 3-channel NCHW inputs"

    budget = _vmem_budget_bytes()
    if row_tile is None:
        tm = _auto_row_tile(h, w, budget)
    else:
        tm = max(8, min(_round_up(row_tile, 8), _round_up(h, 8)))
    nb = -(-h // tm)                    # number of row bands
    kb = tm + 2 * _PAD                  # band slab rows (16-row halo top + bottom)
    h_pad = nb * tm + 2 * _PAD

    g1 = [_gauss_1d(_FS, s) for s in _SIGMAS]
    r_mats = jnp.asarray(
        np.stack([_toeplitz_row_matrix(g, tm) for g in g1]))                 # (5, tm, kb)
    ct_mats = jnp.asarray(
        np.stack([_truncated_band_matrix(g, w).T.copy() for g in g1]))       # (5, w, w)

    x = pred.astype(jnp.float32)
    y = target.astype(jnp.float32)
    pad_cfg = ((0, 0), (0, 0), (_PAD, h_pad - h - _PAD), (0, 0))
    x_pad = jnp.pad(x, pad_cfg)
    y_pad = jnp.pad(y, pad_cfg)
    # Halo'd band slabs (N, nb, 3, kb, W): 32 duplicated halo rows per band so every
    # grid step gets a plain Blocked window (no overlapping BlockSpec needed).
    x_bands = jnp.stack([x_pad[:, :, j * tm:j * tm + kb, :] for j in range(nb)], axis=1)
    y_bands = jnp.stack([y_pad[:, :, j * tm:j * tm + kb, :] for j in range(nb)], axis=1)

    n_blurs = 38                         # blurred (tm, W) planes per band step
    flops = n * nb * n_blurs * (2 * tm * kb * w + 2 * tm * w * w)
    transcendentals = n * nb * 6 * tm * w
    bytes_accessed = 4 * (n * nb * 2 * 3 * kb * w + 5 * tm * kb + 5 * w * w
                          + n * nb * 8 * 128)
    cost = pl.CostEstimate(flops=flops, transcendentals=transcendentals,
                           bytes_accessed=bytes_accessed)

    kernel = functools.partial(_ms_ssim_l1_band_kernel, h_valid=h, tm=tm)

    partials = pl.pallas_call(
        kernel,
        out_shape=jax.ShapeDtypeStruct((n, nb, 8, 128), jnp.float32),
        grid=(n, nb),
        in_specs=[
            pl.BlockSpec((1, 1, 3, kb, w), lambda b, j: (b, j, 0, 0, 0)),
            pl.BlockSpec((1, 1, 3, kb, w), lambda b, j: (b, j, 0, 0, 0)),
            pl.BlockSpec((5, tm, kb), lambda b, j: (0, 0, 0)),
            pl.BlockSpec((5, w, w), lambda b, j: (0, 0, 0)),
        ],
        out_specs=pl.BlockSpec((1, 1, 8, 128), lambda b, j: (b, j, 0, 0)),
        compiler_params=pltpu.CompilerParams(
            dimension_semantics=("parallel", "parallel"),
            vmem_limit_bytes=budget),
        cost_estimate=cost,
    )(x_bands, y_bands, r_mats, ct_mats)

    total = jnp.sum(partials[:, :, 0, 0])
    return loss_weight * total / (n * h * w)


def msl1_loss_ref(pred, target, loss_weight=1.0):
    """Pure-JAX mirror of the PyTorch MS_SSIM_L1_LOSS forward (for validation)."""
    g1 = [_gauss_1d(_FS, s) for s in _SIGMAS]
    masks = np.zeros((15, 1, _FS, _FS), np.float32)
    for idx in range(5):
        m2 = np.outer(g1[idx], g1[idx]).astype(np.float32)
        for chn in range(3):
            masks[3 * idx + chn, 0] = m2
    wgt = jnp.asarray(masks)

    def conv(inp, weight, groups):
        return jax.lax.conv_general_dilated(
            inp, weight, (1, 1), [(_PAD, _PAD), (_PAD, _PAD)],
            dimension_numbers=("NCHW", "OIHW", "NCHW"),
            feature_group_count=groups)

    x = pred.astype(jnp.float32)
    y = target.astype(jnp.float32)
    mux, muy = conv(x, wgt, 3), conv(y, wgt, 3)
    mux2, muy2, muxy = mux * mux, muy * muy, mux * muy
    sx2 = conv(x * x, wgt, 3) - mux2
    sy2 = conv(y * y, wgt, 3) - muy2
    sxy = conv(x * y, wgt, 3) - muxy
    l = (2 * muxy + _C1) / (mux2 + muy2 + _C1)
    cs = (2 * sxy + _C2) / (sx2 + sy2 + _C2)
    lm = l[:, -1] * l[:, -2] * l[:, -3]
    pics = jnp.prod(cs, axis=1)
    loss_ms_ssim = 1.0 - lm * pics
    gl1 = conv(jnp.abs(x - y), wgt[-3:], 3).mean(axis=1)
    loss_mix = _ALPHA * loss_ms_ssim + (1.0 - _ALPHA) * gl1 / _DR
    return loss_weight * (_COMPENSATION * loss_mix).mean()


if __name__ == "__main__":
    key = jax.random.PRNGKey(0)
    k1, k2, k3, k4 = jax.random.split(key, 4)

    # Primary small smoke test (single band).
    N, C, H, W = 2, 3, 16, 16
    pred = jax.random.uniform(k1, (N, C, H, W), dtype=jnp.float32)
    target = jax.random.uniform(k2, (N, C, H, W), dtype=jnp.float32)
    loss = jax.block_until_ready(msl1_loss_pallas(pred, target, loss_weight=1.0))
    ref = jax.block_until_ready(msl1_loss_ref(pred, target, loss_weight=1.0))
    np.testing.assert_allclose(np.asarray(loss), np.asarray(ref), rtol=2e-3, atol=2e-4)

    # Explicitly exercise the row-band tiling + halo + tail-row masking path.
    pred2 = jax.random.uniform(k3, (1, 3, 20, 16), dtype=jnp.float32)
    target2 = jax.random.uniform(k4, (1, 3, 20, 16), dtype=jnp.float32)
    loss2 = jax.block_until_ready(
        msl1_loss_pallas(pred2, target2, loss_weight=1.0, row_tile=8))
    ref2 = jax.block_until_ready(msl1_loss_ref(pred2, target2, loss_weight=1.0))
    np.testing.assert_allclose(np.asarray(loss2), np.asarray(ref2), rtol=2e-3, atol=2e-4)

    print("KERNEL_OK")
</pallas_src>

<mosaic_0001>
module attributes {stable_mosaic.version = 11 : i64} {
  func.func @_ms_ssim_l1_band_kernel(%arg0: i32, %arg1: i32, %arg2: memref<1x1x3x48x16xf32, #tpu.memory_space<vmem>>, %arg3: memref<1x1x3x48x16xf32, #tpu.memory_space<vmem>>, %arg4: memref<5x16x48xf32, #tpu.memory_space<vmem>>, %arg5: memref<5x16x16xf32, #tpu.memory_space<vmem>>, %arg6: memref<1x1x8x128xf32, #tpu.memory_space<vmem>>) attributes {dimension_semantics = [#tpu.dimension_semantics<parallel>, #tpu.dimension_semantics<parallel>], iteration_bounds = array<i64: 2, 1>, scalar_prefetch = 0 : i64, scratch_operands = 0 : i64, tpu.core_type = #tpu.core_type<tc>, window_params = [{transform_indices = @transform_0, window_bounds = array<i64: 1, 1, 3, 48, 16>}, {transform_indices = @transform_1, window_bounds = array<i64: 1, 1, 3, 48, 16>}, {pipeline_mode = #tpu.pipeline_mode<synchronous>, transform_indices = @transform_2, window_bounds = array<i64: 5, 16, 48>}, {pipeline_mode = #tpu.pipeline_mode<synchronous>, transform_indices = @transform_3, window_bounds = array<i64: 5, 16, 16>}, {transform_indices = @transform_4, window_bounds = array<i64: 1, 1, 8, 128>}]} {
    %c0 = arith.constant 0 : index
    %c0_0 = arith.constant 0 : index
    %c0_1 = arith.constant 0 : index
    %c0_2 = arith.constant 0 : index
    %c0_3 = arith.constant 0 : index
    %0 = vector.load %arg2[%c0, %c0_0, %c0_1, %c0_2, %c0_3] : memref<1x1x3x48x16xf32, #tpu.memory_space<vmem>>, vector<1x1x1x48x16xf32>
    %1 = vector.shape_cast %0 : vector<1x1x1x48x16xf32> to vector<48x16xf32>
    %c0_4 = arith.constant 0 : index
    %c0_5 = arith.constant 0 : index
    %c0_6 = arith.constant 0 : index
    %c0_7 = arith.constant 0 : index
    %c0_8 = arith.constant 0 : index
    %2 = vector.load %arg3[%c0_4, %c0_5, %c0_6, %c0_7, %c0_8] : memref<1x1x3x48x16xf32, #tpu.memory_space<vmem>>, vector<1x1x1x48x16xf32>
    %3 = vector.shape_cast %2 : vector<1x1x1x48x16xf32> to vector<48x16xf32>
    %c0_9 = arith.constant 0 : index
    %c0_10 = arith.constant 0 : index
    %c0_11 = arith.constant 0 : index
    %4 = vector.load %arg4[%c0_9, %c0_10, %c0_11] : memref<5x16x48xf32, #tpu.memory_space<vmem>>, vector<1x16x48xf32>
    %5 = vector.shape_cast %4 : vector<1x16x48xf32> to vector<16x48xf32>
    %cst = arith.constant dense<0.000000e+00> : vector<16x16xf32>
    %6 = tpu.matmul %5, %1, %cst {dimension_numbers = #tpu.dot_dimension_numbers<[1], [0], [0], [1], [0, 0, 1, 1], [], []>} : vector<16x48xf32>, vector<48x16xf32>, vector<16x16xf32> -> vector<16x16xf32>
    %c0_12 = arith.constant 0 : index
    %c0_13 = arith.constant 0 : index
    %c0_14 = arith.constant 0 : index
    %7 = vector.load %arg5[%c0_12, %c0_13, %c0_14] : memref<5x16x16xf32, #tpu.memory_space<vmem>>, vector<1x16x16xf32>
    %8 = vector.shape_cast %7 : vector<1x16x16xf32> to vector<16x16xf32>
    %cst_15 = arith.constant dense<0.000000e+00> : vector<16x16xf32>
    %9 = tpu.matmul %6, %8, %cst_15 {dimension_numbers = #tpu.dot_dimension_numbers<[1], [0], [0], [1], [0, 0, 1, 1], [], []>} : vector<16x16xf32>, vector<16x16xf32>, vector<16x16xf32> -> vector<16x16xf32>
    %c0_16 = arith.constant 0 : index
    %c0_17 = arith.constant 0 : index
    %c0_18 = arith.constant 0 : index
    %10 = vector.load %arg4[%c0_16, %c0_17, %c0_18] : memref<5x16x48xf32, #tpu.memory_space<vmem>>, vector<1x16x48xf32>
    %11 = vector.shape_cast %10 : vector<1x16x48xf32> to vector<16x48xf32>
    %cst_19 = arith.constant dense<0.000000e+00> : vector<16x16xf32>
    %12 = tpu.matmul %11, %3, %cst_19 {dimension_numbers = #tpu.dot_dimension_numbers<[1], [0], [0], [1], [0, 0, 1, 1], [], []>} : vector<16x48xf32>, vector<48x16xf32>, vector<16x16xf32> -> vector<16x16xf32>
    %c0_20 = arith.constant 0 : index
    %c0_21 = arith.constant 0 : index
    %c0_22 = arith.constant 0 : index
    %13 = vector.load %arg5[%c0_20, %c0_21, %c0_22] : memref<5x16x16xf32, #tpu.memory_space<vmem>>, vector<1x16x16xf32>
    %14 = vector.shape_cast %13 : vector<1x16x16xf32> to vector<16x16xf32>
    %cst_23 = arith.constant dense<0.000000e+00> : vector<16x16xf32>
    %15 = tpu.matmul %12, %14, %cst_23 {dimension_numbers = #tpu.dot_dimension_numbers<[1], [0], [0], [1], [0, 0, 1, 1], [], []>} : vector<16x16xf32>, vector<16x16xf32>, vector<16x16xf32> -> vector<16x16xf32>
    %16 = arith.mulf %1, %1 : vector<48x16xf32>
    %c0_24 = arith.constant 0 : index
    %c0_25 = arith.constant 0 : index
    %c0_26 = arith.constant 0 : index
    %17 = vector.load %arg4[%c0_24, %c0_25, %c0_26] : memref<5x16x48xf32, #tpu.memory_space<vmem>>, vector<1x16x48xf32>
    %18 = vector.shape_cast %17 : vector<1x16x48xf32> to vector<16x48xf32>
    %cst_27 = arith.constant dense<0.000000e+00> : vector<16x16xf32>
    %19 = tpu.matmul %18, %16, %cst_27 {dimension_numbers = #tpu.dot_dimension_numbers<[1], [0], [0], [1], [0, 0, 1, 1], [], []>} : vector<16x48xf32>, vector<48x16xf32>, vector<16x16xf32> -> vector<16x16xf32>
    %c0_28 = arith.constant 0 : index
    %c0_29 = arith.constant 0 : index
    %c0_30 = arith.constant 0 : index
    %20 = vector.load %arg5[%c0_28, %c0_29, %c0_30] : memref<5x16x16xf32, #tpu.memory_space<vmem>>, vector<1x16x16xf32>
    %21 = vector.shape_cast %20 : vector<1x16x16xf32> to vector<16x16xf32>
    %cst_31 = arith.constant dense<0.000000e+00> : vector<16x16xf32>
    %22 = tpu.matmul %19, %21, %cst_31 {dimension_numbers = #tpu.dot_dimension_numbers<[1], [0], [0], [1], [0, 0, 1, 1], [], []>} : vector<16x16xf32>, vector<16x16xf32>, vector<16x16xf32> -> vector<16x16xf32>
    %23 = arith.mulf %3, %3 : vector<48x16xf32>
    %c0_32 = arith.constant 0 : index
    %c0_33 = arith.constant 0 : index
    %c0_34 = arith.constant 0 : index
    %24 = vector.load %arg4[%c0_32, %c0_33, %c0_34] : memref<5x16x48xf32, #tpu.memory_space<vmem>>, vector<1x16x48xf32>
    %25 = vector.shape_cast %24 : vector<1x16x48xf32> to vector<16x48xf32>
    %cst_35 = arith.constant dense<0.000000e+00> : vector<16x16xf32>
    %26 = tpu.matmul %25, %23, %cst_35 {dimension_numbers = #tpu.dot_dimension_numbers<[1], [0], [0], [1], [0, 0, 1, 1], [], []>} : vector<16x48xf32>, vector<48x16xf32>, vector<16x16xf32> -> vector<16x16xf32>
    %c0_36 = arith.constant 0 : index
    %c0_37 = arith.constant 0 : index
    %c0_38 = arith.constant 0 : index
    %27 = vector.load %arg5[%c0_36, %c0_37, %c0_38] : memref<5x16x16xf32, #tpu.memory_space<vmem>>, vector<1x16x16xf32>
    %28 = vector.shape_cast %27 : vector<1x16x16xf32> to vector<16x16xf32>
    %cst_39 = arith.constant dense<0.000000e+00> : vector<16x16xf32>
    %29 = tpu.matmul %26, %28, %cst_39 {dimension_numbers = #tpu.dot_dimension_numbers<[1], [0], [0], [1], [0, 0, 1, 1], [], []>} : vector<16x16xf32>, vector<16x16xf32>, vector<16x16xf32> -> vector<16x16xf32>
    %30 = arith.mulf %1, %3 : vector<48x16xf32>
    %c0_40 = arith.constant 0 : index
    %c0_41 = arith.constant 0 : index
    %c0_42 = arith.constant 0 : index
    %31 = vector.load %arg4[%c0_40, %c0_41, %c0_42] : memref<5x16x48xf32, #tpu.memory_space<vmem>>, vector<1x16x48xf32>
    %32 = vector.shape_cast %31 : vector<1x16x48xf32> to vector<16x48xf32>
    %cst_43 = arith.constant dense<0.000000e+00> : vector<16x16xf32>
    %33 = tpu.matmul %32, %30, %cst_43 {dimension_numbers = #tpu.dot_dimension_numbers<[1], [0], [0], [1], [0, 0, 1, 1], [], []>} : vector<16x48xf32>, vector<48x16xf32>, vector<16x16xf32> -> vector<16x16xf32>
    %c0_44 = arith.constant 0 : index
    %c0_45 = arith.constant 0 : index
    %c0_46 = arith.constant 0 : index
    %34 = vector.load %arg5[%c0_44, %c0_45, %c0_46] : memref<5x16x16xf32, #tpu.memory_space<vmem>>, vector<1x16x16xf32>
    %35 = vector.shape_cast %34 : vector<1x16x16xf32> to vector<16x16xf32>
    %cst_47 = arith.constant dense<0.000000e+00> : vector<16x16xf32>
    %36 = tpu.matmul %33, %35, %cst_47 {dimension_numbers = #tpu.dot_dimension_numbers<[1], [0], [0], [1], [0, 0, 1, 1], [], []>} : vector<16x16xf32>, vector<16x16xf32>, vector<16x16xf32> -> vector<16x16xf32>
    %37 = arith.mulf %9, %9 : vector<16x16xf32>
    %38 = arith.mulf %15, %15 : vector<16x16xf32>
    %39 = arith.mulf %9, %15 : vector<16x16xf32>
    %40 = arith.subf %36, %39 : vector<16x16xf32>
    %cst_48 = arith.constant 2.000000e+00 : f32
    %41 = vector.broadcast %cst_48 : f32 to vector<16x16xf32>
    %42 = arith.mulf %41, %40 : vector<16x16xf32>
    %cst_49 = arith.constant 8.99999984E-4 : f32
    %43 = vector.broadcast %cst_49 : f32 to vector<16x16xf32>
    %44 = arith.addf %42, %43 : vector<16x16xf32>
    %45 = arith.subf %22, %37 : vector<16x16xf32>
    %46 = arith.subf %29, %38 : vector<16x16xf32>
    %47 = arith.addf %45, %46 : vector<16x16xf32>
    %cst_50 = arith.constant 8.99999984E-4 : f32
    %48 = vector.broadcast %cst_50 : f32 to vector<16x16xf32>
    %49 = arith.addf %47, %48 : vector<16x16xf32>
    %50 = arith.mulf %44, %44 : vector<16x16xf32>
    %51 = arith.mulf %49, %49 : vector<16x16xf32>
    %52 = arith.mulf %50, %44 : vector<16x16xf32>
    %53 = arith.mulf %51, %49 : vector<16x16xf32>
    %54 = tpu.reciprocal %53 {approx = true} : vector<16x16xf32> -> vector<16x16xf32>
    %55 = arith.mulf %53, %54 : vector<16x16xf32>
    %cst_51 = arith.constant 2.000000e+00 : f32
    %56 = vector.broadcast %cst_51 : f32 to vector<16x16xf32>
    %57 = arith.subf %56, %55 : vector<16x16xf32>
    %58 = arith.mulf %54, %57 : vector<16x16xf32>
    %59 = arith.mulf %52, %58 : vector<16x16xf32>
    %c0_52 = arith.constant 0 : index
    %c0_53 = arith.constant 0 : index
    %c0_54 = arith.constant 0 : index
    %c0_55 = arith.constant 0 : index
    %c0_56 = arith.constant 0 : index
    %60 = vector.load %arg2[%c0_52, %c0_53, %c0_54, %c0_55, %c0_56] : memref<1x1x3x48x16xf32, #tpu.memory_space<vmem>>, vector<1x1x1x48x16xf32>
    %61 = vector.shape_cast %60 : vector<1x1x1x48x16xf32> to vector<48x16xf32>
    %c0_57 = arith.constant 0 : index
    %c0_58 = arith.constant 0 : index
    %c0_59 = arith.constant 0 : index
    %c0_60 = arith.constant 0 : index
    %c0_61 = arith.constant 0 : index
    %62 = vector.load %arg3[%c0_57, %c0_58, %c0_59, %c0_60, %c0_61] : memref<1x1x3x48x16xf32, #tpu.memory_space<vmem>>, vector<1x1x1x48x16xf32>
    %63 = vector.shape_cast %62 : vector<1x1x1x48x16xf32> to vector<48x16xf32>
    %c1 = arith.constant 1 : index
    %c0_62 = arith.constant 0 : index
    %c0_63 = arith.constant 0 : index
    %64 = vector.load %arg4[%c1, %c0_62, %c0_63] : memref<5x16x48xf32, #tpu.memory_space<vmem>>, vector<1x16x48xf32>
    %65 = vector.shape_cast %64 : vector<1x16x48xf32> to vector<16x48xf32>
    %cst_64 = arith.constant dense<0.000000e+00> : vector<16x16xf32>
    %66 = tpu.matmul %65, %61, %cst_64 {dimension_numbers = #tpu.dot_dimension_numbers<[1], [0], [0], [1], [0, 0, 1, 1], [], []>} : vector<16x48xf32>, vector<48x16xf32>, vector<16x16xf32> -> vector<16x16xf32>
    %c1_65 = arith.constant 1 : index
    %c0_66 = arith.constant 0 : index
    %c0_67 = arith.constant 0 : index
    %67 = vector.load %arg5[%c1_65, %c0_66, %c0_67] : memref<5x16x16xf32, #tpu.memory_space<vmem>>, vector<1x16x16xf32>
    %68 = vector.shape_cast %67 : vector<1x16x16xf32> to vector<16x16xf32>
    %cst_68 = arith.constant dense<0.000000e+00> : vector<16x16xf32>
    %69 = tpu.matmul %66, %68, %cst_68 {dimension_numbers = #tpu.dot_dimension_numbers<[1], [0], [0], [1], [0, 0, 1, 1], [], []>} : vector<16x16xf32>, vector<16x16xf32>, vector<16x16xf32> -> vector<16x16xf32>
    %c1_69 = arith.constant 1 : index
    %c0_70 = arith.constant 0 : index
    %c0_71 = arith.constant 0 : index
    %70 = vector.load %arg4[%c1_69, %c0_70, %c0_71] : memref<5x16x48xf32, #tpu.memory_space<vmem>>, vector<1x16x48xf32>
    %71 = vector.shape_cast %70 : vector<1x16x48xf32> to vector<16x48xf32>
    %cst_72 = arith.constant dense<0.000000e+00> : vector<16x16xf32>
    %72 = tpu.matmul %71, %63, %cst_72 {dimension_numbers = #tpu.dot_dimension_numbers<[1], [0], [0], [1], [0, 0, 1, 1], [], []>} : vector<16x48xf32>, vector<48x16xf32>, vector<16x16xf32> -> vector<16x16xf32>
    %c1_73 = arith.constant 1 : index
    %c0_74 = arith.constant 0 : index
    %c0_75 = arith.constant 0 : index
    %73 = vector.load %arg5[%c1_73, %c0_74, %c0_75] : memref<5x16x16xf32, #tpu.memory_space<vmem>>, vector<1x16x16xf32>
    %74 = vector.shape_cast %73 : vector<1x16x16xf32> to vector<16x16xf32>
    %cst_76 = arith.constant dense<0.000000e+00> : vector<16x16xf32>
    %75 = tpu.matmul %72, %74, %cst_76 {dimension_numbers = #tpu.dot_dimension_numbers<[1], [0], [0], [1], [0, 0, 1, 1], [], []>} : vector<16x16xf32>, vector<16x16xf32>, vector<16x16xf32> -> vector<16x16xf32>
    %76 = arith.mulf %61, %61 : vector<48x16xf32>
    %c1_77 = arith.constant 1 : index
    %c0_78 = arith.constant 0 : index
    %c0_79 = arith.constant 0 : index
    %77 = vector.load %arg4[%c1_77, %c0_78, %c0_79] : memref<5x16x48xf32, #tpu.memory_space<vmem>>, vector<1x16x48xf32>
    %78 = vector.shape_cast %77 : vector<1x16x48xf32> to vector<16x48xf32>
    %cst_80 = arith.constant dense<0.000000e+00> : vector<16x16xf32>
    %79 = tpu.matmul %78, %76, %cst_80 {dimension_numbers = #tpu.dot_dimension_numbers<[1], [0], [0], [1], [0, 0, 1, 1], [], []>} : vector<16x48xf32>, vector<48x16xf32>, vector<16x16xf32> -> vector<16x16xf32>
    %c1_81 = arith.constant 1 : index
    %c0_82 = arith.constant 0 : index
    %c0_83 = arith.constant 0 : index
    %80 = vector.load %arg5[%c1_81, %c0_82, %c0_83] : memref<5x16x16xf32, #tpu.memory_space<vmem>>, vector<1x16x16xf32>
    %81 = vector.shape_cast %80 : vector<1x16x16xf32> to vector<16x16xf32>
    %cst_84 = arith.constant dense<0.000000e+00> : vector<16x16xf32>
    %82 = tpu.matmul %79, %81, %cst_84 {dimension_numbers = #tpu.dot_dimension_numbers<[1], [0], [0], [1], [0, 0, 1, 1], [], []>} : vector<16x16xf32>, vector<16x16xf32>, vector<16x16xf32> -> vector<16x16xf32>
    %83 = arith.mulf %63, %63 : vector<48x16xf32>
    %c1_85 = arith.constant 1 : index
    %c0_86 = arith.constant 0 : index
    %c0_87 = arith.constant 0 : index
    %84 = vector.load %arg4[%c1_85, %c0_86, %c0_87] : memref<5x16x48xf32, #tpu.memory_space<vmem>>, vector<1x16x48xf32>
    %85 = vector.shape_cast %84 : vector<1x16x48xf32> to vector<16x48xf32>
    %cst_88 = arith.constant dense<0.000000e+00> : vector<16x16xf32>
    %86 = tpu.matmul %85, %83, %cst_88 {dimension_numbers = #tpu.dot_dimension_numbers<[1], [0], [0], [1], [0, 0, 1, 1], [], []>} : vector<16x48xf32>, vector<48x16xf32>, vector<16x16xf32> -> vector<16x16xf32>
    %c1_89 = arith.constant 1 : index
    %c0_90 = arith.constant 0 : index
    %c0_91 = arith.constant 0 : index
    %87 = vector.load %arg5[%c1_89, %c0_90, %c0_91] : memref<5x16x16xf32, #tpu.memory_space<vmem>>, vector<1x16x16xf32>
    %88 = vector.shape_cast %87 : vector<1x16x16xf32> to vector<16x16xf32>
    %cst_92 = arith.constant dense<0.000000e+00> : vector<16x16xf32>
    %89 = tpu.matmul %86, %88, %cst_92 {dimension_numbers = #tpu.dot_dimension_numbers<[1], [0], [0], [1], [0, 0, 1, 1], [], []>} : vector<16x16xf32>, vector<16x16xf32>, vector<16x16xf32> -> vector<16x16xf32>
    %90 = arith.mulf %61, %63 : vector<48x16xf32>
    %c1_93 = arith.constant 1 : index
    %c0_94 = arith.constant 0 : index
    %c0_95 = arith.constant 0 : index
    %91 = vector.load %arg4[%c1_93, %c0_94, %c0_95] : memref<5x16x48xf32, #tpu.memory_space<vmem>>, vector<1x16x48xf32>
    %92 = vector.shape_cast %91 : vector<1x16x48xf32> to vector<16x48xf32>
    %cst_96 = arith.constant dense<0.000000e+00> : vector<16x16xf32>
    %93 = tpu.matmul %92, %90, %cst_96 {dimension_numbers = #tpu.dot_dimension_numbers<[1], [0], [0], [1], [0, 0, 1, 1], [], []>} : vector<16x48xf32>, vector<48x16xf32>, vector<16x16xf32> -> vector<16x16xf32>
    %c1_97 = arith.constant 1 : index
    %c0_98 = arith.constant 0 : index
    %c0_99 = arith.constant 0 : index
    %94 = vector.load %arg5[%c1_97, %c0_98, %c0_99] : memref<5x16x16xf32, #tpu.memory_space<vmem>>, vector<1x16x16xf32>
    %95 = vector.shape_cast %94 : vector<1x16x16xf32> to vector<16x16xf32>
    %cst_100 = arith.constant dense<0.000000e+00> : vector<16x16xf32>
    %96 = tpu.matmul %93, %95, %cst_100 {dimension_numbers = #tpu.dot_dimension_numbers<[1], [0], [0], [1], [0, 0, 1, 1], [], []>} : vector<16x16xf32>, vector<16x16xf32>, vector<16x16xf32> -> vector<16x16xf32>
    %97 = arith.mulf %69, %69 : vector<16x16xf32>
    %98 = arith.mulf %75, %75 : vector<16x16xf32>
    %99 = arith.mulf %69, %75 : vector<16x16xf32>
    %100 = arith.subf %96, %99 : vector<16x16xf32>
    %cst_101 = arith.constant 2.000000e+00 : f32
    %101 = vector.broadcast %cst_101 : f32 to vector<16x16xf32>
    %102 = arith.mulf %101, %100 : vector<16x16xf32>
    %cst_102 = arith.constant 8.99999984E-4 : f32
    %103 = vector.broadcast %cst_102 : f32 to vector<16x16xf32>
    %104 = arith.addf %102, %103 : vector<16x16xf32>
    %105 = arith.subf %82, %97 : vector<16x16xf32>
    %106 = arith.subf %89, %98 : vector<16x16xf32>
    %107 = arith.addf %105, %106 : vector<16x16xf32>
    %cst_103 = arith.constant 8.99999984E-4 : f32
    %108 = vector.broadcast %cst_103 : f32 to vector<16x16xf32>
    %109 = arith.addf %107, %108 : vector<16x16xf32>
    %110 = arith.mulf %104, %104 : vector<16x16xf32>
    %111 = arith.mulf %109, %109 : vector<16x16xf32>
    %c0_104 = arith.constant 0 : index
    %c0_105 = arith.constant 0 : index
    %c1_106 = arith.constant 1 : index
    %c0_107 = arith.constant 0 : index
    %c0_108 = arith.constant 0 : index
    %112 = vector.load %arg2[%c0_104, %c0_105, %c1_106, %c0_107, %c0_108] : memref<1x1x3x48x16xf32, #tpu.memory_space<vmem>>, vector<1x1x1x48x16xf32>
    %113 = vector.shape_cast %112 : vector<1x1x1x48x16xf32> to vector<48x16xf32>
    %c0_109 = arith.constant 0 : index
    %c0_110 = arith.constant 0 : index
    %c1_111 = arith.constant 1 : index
    %c0_112 = arith.constant 0 : index
    %c0_113 = arith.constant 0 : index
    %114 = vector.load %arg3[%c0_109, %c0_110, %c1_111, %c0_112, %c0_113] : memref<1x1x3x48x16xf32, #tpu.memory_space<vmem>>, vector<1x1x1x48x16xf32>
    %115 = vector.shape_cast %114 : vector<1x1x1x48x16xf32> to vector<48x16xf32>
    %c1_114 = arith.constant 1 : index
    %c0_115 = arith.constant 0 : index
    %c0_116 = arith.constant 0 : index
    %116 = vector.load %arg4[%c1_114, %c0_115, %c0_116] : memref<5x16x48xf32, #tpu.memory_space<vmem>>, vector<1x16x48xf32>
    %117 = vector.shape_cast %116 : vector<1x16x48xf32> to vector<16x48xf32>
    %cst_117 = arith.constant dense<0.000000e+00> : vector<16x16xf32>
    %118 = tpu.matmul %117, %113, %cst_117 {dimension_numbers = #tpu.dot_dimension_numbers<[1], [0], [0], [1], [0, 0, 1, 1], [], []>} : vector<16x48xf32>, vector<48x16xf32>, vector<16x16xf32> -> vector<16x16xf32>
    %c1_118 = arith.constant 1 : index
    %c0_119 = arith.constant 0 : index
    %c0_120 = arith.constant 0 : index
    %119 = vector.load %arg5[%c1_118, %c0_119, %c0_120] : memref<5x16x16xf32, #tpu.memory_space<vmem>>, vector<1x16x16xf32>
    %120 = vector.shape_cast %119 : vector<1x16x16xf32> to vector<16x16xf32>
    %cst_121 = arith.constant dense<0.000000e+00> : vector<16x16xf32>
    %121 = tpu.matmul %118, %120, %cst_121 {dimension_numbers = #tpu.dot_dimension_numbers<[1], [0], [0], [1], [0, 0, 1, 1], [], []>} : vector<16x16xf32>, vector<16x16xf32>, vector<16x16xf32> -> vector<16x16xf32>
    %c1_122 = arith.constant 1 : index
    %c0_123 = arith.constant 0 : index
    %c0_124 = arith.constant 0 : index
    %122 = vector.load %arg4[%c1_122, %c0_123, %c0_124] : memref<5x16x48xf32, #tpu.memory_space<vmem>>, vector<1x16x48xf32>
    %123 = vector.shape_cast %122 : vector<1x16x48xf32> to vector<16x48xf32>
    %cst_125 = arith.constant dense<0.000000e+00> : vector<16x16xf32>
    %124 = tpu.matmul %123, %115, %cst_125 {dimension_numbers = #tpu.dot_dimension_numbers<[1], [0], [0], [1], [0, 0, 1, 1], [], []>} : vector<16x48xf32>, vector<48x16xf32>, vector<16x16xf32> -> vector<16x16xf32>
    %c1_126 = arith.constant 1 : index
    %c0_127 = arith.constant 0 : index
    %c0_128 = arith.constant 0 : index
    %125 = vector.load %arg5[%c1_126, %c0_127, %c0_128] : memref<5x16x16xf32, #tpu.memory_space<vmem>>, vector<1x16x16xf32>
    %126 = vector.shape_cast %125 : vector<1x16x16xf32> to vector<16x16xf32>
    %cst_129 = arith.constant dense<0.000000e+00> : vector<16x16xf32>
    %127 = tpu.matmul %124, %126, %cst_129 {dimension_numbers = #tpu.dot_dimension_numbers<[1], [0], [0], [1], [0, 0, 1, 1], [], []>} : vector<16x16xf32>, vector<16x16xf32>, vector<16x16xf32> -> vector<16x16xf32>
    %128 = arith.mulf %113, %113 : vector<48x16xf32>
    %c1_130 = arith.constant 1 : index
    %c0_131 = arith.constant 0 : index
    %c0_132 = arith.constant 0 : index
    %129 = vector.load %arg4[%c1_130, %c0_131, %c0_132] : memref<5x16x48xf32, #tpu.memory_space<vmem>>, vector<1x16x48xf32>
    %130 = vector.shape_cast %129 : vector<1x16x48xf32> to vector<16x48xf32>
    %cst_133 = arith.constant dense<0.000000e+00> : vector<16x16xf32>
    %131 = tpu.matmul %130, %128, %cst_133 {dimension_numbers = #tpu.dot_dimension_numbers<[1], [0], [0], [1], [0, 0, 1, 1], [], []>} : vector<16x48xf32>, vector<48x16xf32>, vector<16x16xf32> -> vector<16x16xf32>
    %c1_134 = arith.constant 1 : index
    %c0_135 = arith.constant 0 : index
    %c0_136 = arith.constant 0 : index
    %132 = vector.load %arg5[%c1_134, %c0_135, %c0_136] : memref<5x16x16xf32, #tpu.memory_space<vmem>>, vector<1x16x16xf32>
    %133 = vector.shape_cast %132 : vector<1x16x16xf32> to vector<16x16xf32>
    %cst_137 = arith.constant dense<0.000000e+00> : vector<16x16xf32>
    %134 = tpu.matmul %131, %133, %cst_137 {dimension_numbers = #tpu.dot_dimension_numbers<[1], [0], [0], [1], [0, 0, 1, 1], [], []>} : vector<16x16xf32>, vector<16x16xf32>, vector<16x16xf32> -> vector<16x16xf32>
    %135 = arith.mulf %115, %115 : vector<48x16xf32>
    %c1_138 = arith.constant 1 : index
    %c0_139 = arith.constant 0 : index
    %c0_140 = arith.constant 0 : index
    %136 = vector.load %arg4[%c1_138, %c0_139, %c0_140] : memref<5x16x48xf32, #tpu.memory_space<vmem>>, vector<1x16x48xf32>
    %137 = vector.shape_cast %136 : vector<1x16x48xf32> to vector<16x48xf32>
    %cst_141 = arith.constant dense<0.000000e+00> : vector<16x16xf32>
    %138 = tpu.matmul %137, %135, %cst_141 {dimension_numbers = #tpu.dot_dimension_numbers<[1], [0], [0], [1], [0, 0, 1, 1], [], []>} : vector<16x48xf32>, vector<48x16xf32>, vector<16x16xf32> -> vector<16x16xf32>
    %c1_142 = arith.constant 1 : index
    %c0_143 = arith.constant 0 : index
    %c0_144 = arith.constant 0 : index
    %139 = vector.load %arg5[%c1_142, %c0_143, %c0_144] : memref<5x16x16xf32, #tpu.memory_space<vmem>>, vector<1x16x16xf32>
    %140 = vector.shape_cast %139 : vector<1x16x16xf32> to vector<16x16xf32>
    %cst_145 = arith.constant dense<0.000000e+00> : vector<16x16xf32>
    %141 = tpu.matmul %138, %140, %cst_145 {dimension_numbers = #tpu.dot_dimension_numbers<[1], [0], [0], [1], [0, 0, 1, 1], [], []>} : vector<16x16xf32>, vector<16x16xf32>, vector<16x16xf32> -> vector<16x16xf32>
    %142 = arith.mulf %113, %115 : vector<48x16xf32>
    %c1_146 = arith.constant 1 : index
    %c0_147 = arith.constant 0 : index
    %c0_148 = arith.constant 0 : index
    %143 = vector.load %arg4[%c1_146, %c0_147, %c0_148] : memref<5x16x48xf32, #tpu.memory_space<vmem>>, vector<1x16x48xf32>
    %144 = vector.shape_cast %143 : vector<1x16x48xf32> to vector<16x48xf32>
    %cst_149 = arith.constant dense<0.000000e+00> : vector<16x16xf32>
    %145 = tpu.matmul %144, %142, %cst_149 {dimension_numbers = #tpu.dot_dimension_numbers<[1], [0], [0], [1], [0, 0, 1, 1], [], []>} : vector<16x48xf32>, vector<48x16xf32>, vector<16x16xf32> -> vector<16x16xf32>
    %c1_150 = arith.constant 1 : index
    %c0_151 = arith.constant 0 : index
    %c0_152 = arith.constant 0 : index
    %146 = vector.load %arg5[%c1_150, %c0_151, %c0_152] : memref<5x16x16xf32, #tpu.memory_space<vmem>>, vector<1x16x16xf32>
    %147 = vector.shape_cast %146 : vector<1x16x16xf32> to vector<16x16xf32>
    %cst_153 = arith.constant dense<0.000000e+00> : vector<16x16xf32>
    %148 = tpu.matmul %145, %147, %cst_153 {dimension_numbers = #tpu.dot_dimension_numbers<[1], [0], [0], [1], [0, 0, 1, 1], [], []>} : vector<16x16xf32>, vector<16x16xf32>, vector<16x16xf32> -> vector<16x16xf32>
    %149 = arith.mulf %121, %121 : vector<16x16xf32>
    %150 = arith.mulf %127, %127 : vector<16x16xf32>
    %151 = arith.mulf %121, %127 : vector<16x16xf32>
    %152 = arith.subf %148, %151 : vector<16x16xf32>
    %cst_154 = arith.constant 2.000000e+00 : f32
    %153 = vector.broadcast %cst_154 : f32 to vector<16x16xf32>
    %154 = arith.mulf %153, %152 : vector<16x16xf32>
    %cst_155 = arith.constant 8.99999984E-4 : f32
    %155 = vector.broadcast %cst_155 : f32 to vector<16x16xf32>
    %156 = arith.addf %154, %155 : vector<16x16xf32>
    %157 = arith.subf %134, %149 : vector<16x16xf32>
    %158 = arith.subf %141, %150 : vector<16x16xf32>
    %159 = arith.addf %157, %158 : vector<16x16xf32>
    %cst_156 = arith.constant 8.99999984E-4 : f32
    %160 = vector.broadcast %cst_156 : f32 to vector<16x16xf32>
    %161 = arith.addf %159, %160 : vector<16x16xf32>
    %162 = arith.mulf %110, %156 : vector<16x16xf32>
    %163 = arith.mulf %111, %161 : vector<16x16xf32>
    %164 = tpu.reciprocal %163 {approx = true} : vector<16x16xf32> -> vector<16x16xf32>
    %165 = arith.mulf %163, %164 : vector<16x16xf32>
    %cst_157 = arith.constant 2.000000e+00 : f32
    %166 = vector.broadcast %cst_157 : f32 to vector<16x16xf32>
    %167 = arith.subf %166, %165 : vector<16x16xf32>
    %168 = arith.mulf %164, %167 : vector<16x16xf32>
    %169 = arith.mulf %162, %168 : vector<16x16xf32>
    %170 = arith.mulf %59, %169 : vector<16x16xf32>
    %c0_158 = arith.constant 0 : index
    %c0_159 = arith.constant 0 : index
    %c1_160 = arith.constant 1 : index
    %c0_161 = arith.constant 0 : index
    %c0_162 = arith.constant 0 : index
    %171 = vector.load %arg2[%c0_158, %c0_159, %c1_160, %c0_161, %c0_162] : memref<1x1x3x48x16xf32, #tpu.memory_space<vmem>>, vector<1x1x1x48x16xf32>
    %172 = vector.shape_cast %171 : vector<1x1x1x48x16xf32> to vector<48x16xf32>
    %c0_163 = arith.constant 0 : index
    %c0_164 = arith.constant 0 : index
    %c1_165 = arith.constant 1 : index
    %c0_166 = arith.constant 0 : index
    %c0_167 = arith.constant 0 : index
    %173 = vector.load %arg3[%c0_163, %c0_164, %c1_165, %c0_166, %c0_167] : memref<1x1x3x48x16xf32, #tpu.memory_space<vmem>>, vector<1x1x1x48x16xf32>
    %174 = vector.shape_cast %173 : vector<1x1x1x48x16xf32> to vector<48x16xf32>
    %c2 = arith.constant 2 : index
    %c0_168 = arith.constant 0 : index
    %c0_169 = arith.constant 0 : index
    %175 = vector.load %arg4[%c2, %c0_168, %c0_169] : memref<5x16x48xf32, #tpu.memory_space<vmem>>, vector<1x16x48xf32>
    %176 = vector.shape_cast %175 : vector<1x16x48xf32> to vector<16x48xf32>
    %cst_170 = arith.constant dense<0.000000e+00> : vector<16x16xf32>
    %177 = tpu.matmul %176, %172, %cst_170 {dimension_numbers = #tpu.dot_dimension_numbers<[1], [0], [0], [1], [0, 0, 1, 1], [], []>} : vector<16x48xf32>, vector<48x16xf32>, vector<16x16xf32> -> vector<16x16xf32>
    %c2_171 = arith.constant 2 : index
    %c0_172 = arith.constant 0 : index
    %c0_173 = arith.constant 0 : index
    %178 = vector.load %arg5[%c2_171, %c0_172, %c0_173] : memref<5x16x16xf32, #tpu.memory_space<vmem>>, vector<1x16x16xf32>
    %179 = vector.shape_cast %178 : vector<1x16x16xf32> to vector<16x16xf32>
    %cst_174 = arith.constant dense<0.000000e+00> : vector<16x16xf32>
    %180 = tpu.matmul %177, %179, %cst_174 {dimension_numbers = #tpu.dot_dimension_numbers<[1], [0], [0], [1], [0, 0, 1, 1], [], []>} : vector<16x16xf32>, vector<16x16xf32>, vector<16x16xf32> -> vector<16x16xf32>
    %c2_175 = arith.constant 2 : index
    %c0_176 = arith.constant 0 : index
    %c0_177 = arith.constant 0 : index
    %181 = vector.load %arg4[%c2_175, %c0_176, %c0_177] : memref<5x16x48xf32, #tpu.memory_space<vmem>>, vector<1x16x48xf32>
    %182 = vector.shape_cast %181 : vector<1x16x48xf32> to vector<16x48xf32>
    %cst_178 = arith.constant dense<0.000000e+00> : vector<16x16xf32>
    %183 = tpu.matmul %182, %174, %cst_178 {dimension_numbers = #tpu.dot_dimension_numbers<[1], [0], [0], [1], [0, 0, 1, 1], [], []>} : vector<16x48xf32>, vector<48x16xf32>, vector<16x16xf32> -> vector<16x16xf32>
    %c2_179 = arith.constant 2 : index
    %c0_180 = arith.constant 0 : index
    %c0_181 = arith.constant 0 : index
    %184 = vector.load %arg5[%c2_179, %c0_180, %c0_181] : memref<5x16x16xf32, #tpu.memory_space<vmem>>, vector<1x16x16xf32>
    %185 = vector.shape_cast %184 : vector<1x16x16xf32> to vector<16x16xf32>
    %cst_182 = arith.constant dense<0.000000e+00> : vector<16x16xf32>
    %186 = tpu.matmul %183, %185, %cst_182 {dimension_numbers = #tpu.dot_dimension_numbers<[1], [0], [0], [1], [0, 0, 1, 1], [], []>} : vector<16x16xf32>, vector<16x16xf32>, vector<16x16xf32> -> vector<16x16xf32>
    %187 = arith.mulf %172, %172 : vector<48x16xf32>
    %c2_183 = arith.constant 2 : index
    %c0_184 = arith.constant 0 : index
    %c0_185 = arith.constant 0 : index
    %188 = vector.load %arg4[%c2_183, %c0_184, %c0_185] : memref<5x16x48xf32, #tpu.memory_space<vmem>>, vector<1x16x48xf32>
    %189 = vector.shape_cast %188 : vector<1x16x48xf32> to vector<16x48xf32>
    %cst_186 = arith.constant dense<0.000000e+00> : vector<16x16xf32>
    %190 = tpu.matmul %189, %187, %cst_186 {dimension_numbers = #tpu.dot_dimension_numbers<[1], [0], [0], [1], [0, 0, 1, 1], [], []>} : vector<16x48xf32>, vector<48x16xf32>, vector<16x16xf32> -> vector<16x16xf32>
    %c2_187 = arith.constant 2 : index
    %c0_188 = arith.constant 0 : index
    %c0_189 = arith.constant 0 : index
    %191 = vector.load %arg5[%c2_187, %c0_188, %c0_189] : memref<5x16x16xf32, #tpu.memory_space<vmem>>, vector<1x16x16xf32>
    %192 = vector.shape_cast %191 : vector<1x16x16xf32> to vector<16x16xf32>
    %cst_190 = arith.constant dense<0.000000e+00> : vector<16x16xf32>
    %193 = tpu.matmul %190, %192, %cst_190 {dimension_numbers = #tpu.dot_dimension_numbers<[1], [0], [0], [1], [0, 0, 1, 1], [], []>} : vector<16x16xf32>, vector<16x16xf32>, vector<16x16xf32> -> vector<16x16xf32>
    %194 = arith.mulf %174, %174 : vector<48x16xf32>
    %c2_191 = arith.constant 2 : index
    %c0_192 = arith.constant 0 : index
    %c0_193 = arith.constant 0 : index
    %195 = vector.load %arg4[%c2_191, %c0_192, %c0_193] : memref<5x16x48xf32, #tpu.memory_space<vmem>>, vector<1x16x48xf32>
    %196 = vector.shape_cast %195 : vector<1x16x48xf32> to vector<16x48xf32>
    %cst_194 = arith.constant dense<0.000000e+00> : vector<16x16xf32>
    %197 = tpu.matmul %196, %194, %cst_194 {dimension_numbers = #tpu.dot_dimension_numbers<[1], [0], [0], [1], [0, 0, 1, 1], [], []>} : vector<16x48xf32>, vector<48x16xf32>, vector<16x16xf32> -> vector<16x16xf32>
    %c2_195 = arith.constant 2 : index
    %c0_196 = arith.constant 0 : index
    %c0_197 = arith.constant 0 : index
    %198 = vector.load %arg5[%c2_195, %c0_196, %c0_197] : memref<5x16x16xf32, #tpu.memory_space<vmem>>, vector<1x16x16xf32>
    %199 = vector.shape_cast %198 : vector<1x16x16xf32> to vector<16x16xf32>
    %cst_198 = arith.constant dense<0.000000e+00> : vector<16x16xf32>
    %200 = tpu.matmul %197, %199, %cst_198 {dimension_numbers = #tpu.dot_dimension_numbers<[1], [0], [0], [1], [0, 0, 1, 1], [], []>} : vector<16x16xf32>, vector<16x16xf32>, vector<16x16xf32> -> vector<16x16xf32>
    %201 = arith.mulf %172, %174 : vector<48x16xf32>
    %c2_199 = arith.constant 2 : index
    %c0_200 = arith.constant 0 : index
    %c0_201 = arith.constant 0 : index
    %202 = vector.load %arg4[%c2_199, %c0_200, %c0_201] : memref<5x16x48xf32, #tpu.memory_space<vmem>>, vector<1x16x48xf32>
    %203 = vector.shape_cast %202 : vector<1x16x48xf32> to vector<16x48xf32>
    %cst_202 = arith.constant dense<0.000000e+00> : vector<16x16xf32>
    %204 = tpu.matmul %203, %201, %cst_202 {dimension_numbers = #tpu.dot_dimension_numbers<[1], [0], [0], [1], [0, 0, 1, 1], [], []>} : vector<16x48xf32>, vector<48x16xf32>, vector<16x16xf32> -> vector<16x16xf32>
    %c2_203 = arith.constant 2 : index
    %c0_204 = arith.constant 0 : index
    %c0_205 = arith.constant 0 : index
    %205 = vector.load %arg5[%c2_203, %c0_204, %c0_205] : memref<5x16x16xf32, #tpu.memory_space<vmem>>, vector<1x16x16xf32>
    %206 = vector.shape_cast %205 : vector<1x16x16xf32> to vector<16x16xf32>
    %cst_206 = arith.constant dense<0.000000e+00> : vector<16x16xf32>
    %207 = tpu.matmul %204, %206, %cst_206 {dimension_numbers = #tpu.dot_dimension_numbers<[1], [0], [0], [1], [0, 0, 1, 1], [], []>} : vector<16x16xf32>, vector<16x16xf32>, vector<16x16xf32> -> vector<16x16xf32>
    %208 = arith.mulf %180, %180 : vector<16x16xf32>
    %209 = arith.mulf %186, %186 : vector<16x16xf32>
    %210 = arith.mulf %180, %186 : vector<16x16xf32>
    %211 = arith.subf %207, %210 : vector<16x16xf32>
    %cst_207 = arith.constant 2.000000e+00 : f32
    %212 = vector.broadcast %cst_207 : f32 to vector<16x16xf32>
    %213 = arith.mulf %212, %211 : vector<16x16xf32>
    %cst_208 = arith.constant 8.99999984E-4 : f32
    %214 = vector.broadcast %cst_208 : f32 to vector<16x16xf32>
    %215 = arith.addf %213, %214 : vector<16x16xf32>
    %216 = arith.subf %193, %208 : vector<16x16xf32>
    %217 = arith.subf %200, %209 : vector<16x16xf32>
    %218 = arith.addf %216, %217 : vector<16x16xf32>
    %cst_209 = arith.constant 8.99999984E-4 : f32
    %219 = vector.broadcast %cst_209 : f32 to vector<16x16xf32>
    %220 = arith.addf %218, %219 : vector<16x16xf32>
    %221 = arith.mulf %215, %215 : vector<16x16xf32>
    %222 = arith.mulf %220, %220 : vector<16x16xf32>
    %223 = arith.mulf %221, %215 : vector<16x16xf32>
    %224 = arith.mulf %222, %220 : vector<16x16xf32>
    %225 = tpu.reciprocal %224 {approx = true} : vector<16x16xf32> -> vector<16x16xf32>
    %226 = arith.mulf %224, %225 : vector<16x16xf32>
    %cst_210 = arith.constant 2.000000e+00 : f32
    %227 = vector.broadcast %cst_210 : f32 to vector<16x16xf32>
    %228 = arith.subf %227, %226 : vector<16x16xf32>
    %229 = arith.mulf %225, %228 : vector<16x16xf32>
    %230 = arith.mulf %223, %229 : vector<16x16xf32>
    %231 = arith.mulf %170, %230 : vector<16x16xf32>
    %c0_211 = arith.constant 0 : index
    %c0_212 = arith.constant 0 : index
    %c1_213 = arith.constant 1 : index
    %c0_214 = arith.constant 0 : index
    %c0_215 = arith.constant 0 : index
    %232 = vector.load %arg2[%c0_211, %c0_212, %c1_213, %c0_214, %c0_215] : memref<1x1x3x48x16xf32, #tpu.memory_space<vmem>>, vector<1x1x1x48x16xf32>
    %233 = vector.shape_cast %232 : vector<1x1x1x48x16xf32> to vector<48x16xf32>
    %c0_216 = arith.constant 0 : index
    %c0_217 = arith.constant 0 : index
    %c1_218 = arith.constant 1 : index
    %c0_219 = arith.constant 0 : index
    %c0_220 = arith.constant 0 : index
    %234 = vector.load %arg3[%c0_216, %c0_217, %c1_218, %c0_219, %c0_220] : memref<1x1x3x48x16xf32, #tpu.memory_space<vmem>>, vector<1x1x1x48x16xf32>
    %235 = vector.shape_cast %234 : vector<1x1x1x48x16xf32> to vector<48x16xf32>
    %c3 = arith.constant 3 : index
    %c0_221 = arith.constant 0 : index
    %c0_222 = arith.constant 0 : index
    %236 = vector.load %arg4[%c3, %c0_221, %c0_222] : memref<5x16x48xf32, #tpu.memory_space<vmem>>, vector<1x16x48xf32>
    %237 = vector.shape_cast %236 : vector<1x16x48xf32> to vector<16x48xf32>
    %cst_223 = arith.constant dense<0.000000e+00> : vector<16x16xf32>
    %238 = tpu.matmul %237, %233, %cst_223 {dimension_numbers = #tpu.dot_dimension_numbers<[1], [0], [0], [1], [0, 0, 1, 1], [], []>} : vector<16x48xf32>, vector<48x16xf32>, vector<16x16xf32> -> vector<16x16xf32>
    %c3_224 = arith.constant 3 : index
    %c0_225 = arith.constant 0 : index
    %c0_226 = arith.constant 0 : index
    %239 = vector.load %arg5[%c3_224, %c0_225, %c0_226] : memref<5x16x16xf32, #tpu.memory_space<vmem>>, vector<1x16x16xf32>
    %240 = vector.shape_cast %239 : vector<1x16x16xf32> to vector<16x16xf32>
    %cst_227 = arith.constant dense<0.000000e+00> : vector<16x16xf32>
    %241 = tpu.matmul %238, %240, %cst_227 {dimension_numbers = #tpu.dot_dimension_numbers<[1], [0], [0], [1], [0, 0, 1, 1], [], []>} : vector<16x16xf32>, vector<16x16xf32>, vector<16x16xf32> -> vector<16x16xf32>
    %c3_228 = arith.constant 3 : index
    %c0_229 = arith.constant 0 : index
    %c0_230 = arith.constant 0 : index
    %242 = vector.load %arg4[%c3_228, %c0_229, %c0_230] : memref<5x16x48xf32, #tpu.memory_space<vmem>>, vector<1x16x48xf32>
    %243 = vector.shape_cast %242 : vector<1x16x48xf32> to vector<16x48xf32>
    %cst_231 = arith.constant dense<0.000000e+00> : vector<16x16xf32>
    %244 = tpu.matmul %243, %235, %cst_231 {dimension_numbers = #tpu.dot_dimension_numbers<[1], [0], [0], [1], [0, 0, 1, 1], [], []>} : vector<16x48xf32>, vector<48x16xf32>, vector<16x16xf32> -> vector<16x16xf32>
    %c3_232 = arith.constant 3 : index
    %c0_233 = arith.constant 0 : index
    %c0_234 = arith.constant 0 : index
    %245 = vector.load %arg5[%c3_232, %c0_233, %c0_234] : memref<5x16x16xf32, #tpu.memory_space<vmem>>, vector<1x16x16xf32>
    %246 = vector.shape_cast %245 : vector<1x16x16xf32> to vector<16x16xf32>
    %cst_235 = arith.constant dense<0.000000e+00> : vector<16x16xf32>
    %247 = tpu.matmul %244, %246, %cst_235 {dimension_numbers = #tpu.dot_dimension_numbers<[1], [0], [0], [1], [0, 0, 1, 1], [], []>} : vector<16x16xf32>, vector<16x16xf32>, vector<16x16xf32> -> vector<16x16xf32>
    %248 = arith.mulf %233, %233 : vector<48x16xf32>
    %c3_236 = arith.constant 3 : index
    %c0_237 = arith.constant 0 : index
    %c0_238 = arith.constant 0 : index
    %249 = vector.load %arg4[%c3_236, %c0_237, %c0_238] : memref<5x16x48xf32, #tpu.memory_space<vmem>>, vector<1x16x48xf32>
    %250 = vector.shape_cast %249 : vector<1x16x48xf32> to vector<16x48xf32>
    %cst_239 = arith.constant dense<0.000000e+00> : vector<16x16xf32>
    %251 = tpu.matmul %250, %248, %cst_239 {dimension_numbers = #tpu.dot_dimension_numbers<[1], [0], [0], [1], [0, 0, 1, 1], [], []>} : vector<16x48xf32>, vector<48x16xf32>, vector<16x16xf32> -> vector<16x16xf32>
    %c3_240 = arith.constant 3 : index
    %c0_241 = arith.constant 0 : index
    %c0_242 = arith.constant 0 : index
    %252 = vector.load %arg5[%c3_240, %c0_241, %c0_242] : memref<5x16x16xf32, #tpu.memory_space<vmem>>, vector<1x16x16xf32>
    %253 = vector.shape_cast %252 : vector<1x16x16xf32> to vector<16x16xf32>
    %cst_243 = arith.constant dense<0.000000e+00> : vector<16x16xf32>
    %254 = tpu.matmul %251, %253, %cst_243 {dimension_numbers = #tpu.dot_dimension_numbers<[1], [0], [0], [1], [0, 0, 1, 1], [], []>} : vector<16x16xf32>, vector<16x16xf32>, vector<16x16xf32> -> vector<16x16xf32>
    %255 = arith.mulf %235, %235 : vector<48x16xf32>
    %c3_244 = arith.constant 3 : index
    %c0_245 = arith.constant 0 : index
    %c0_246 = arith.constant 0 : index
    %256 = vector.load %arg4[%c3_244, %c0_245, %c0_246] : memref<5x16x48xf32, #tpu.memory_space<vmem>>, vector<1x16x48xf32>
    %257 = vector.shape_cast %256 : vector<1x16x48xf32> to vector<16x48xf32>
    %cst_247 = arith.constant dense<0.000000e+00> : vector<16x16xf32>
    %258 = tpu.matmul %257, %255, %cst_247 {dimension_numbers = #tpu.dot_dimension_numbers<[1], [0], [0], [1], [0, 0, 1, 1], [], []>} : vector<16x48xf32>, vector<48x16xf32>, vector<16x16xf32> -> vector<16x16xf32>
    %c3_248 = arith.constant 3 : index
    %c0_249 = arith.constant 0 : index
    %c0_250 = arith.constant 0 : index
    %259 = vector.load %arg5[%c3_248, %c0_249, %c0_250] : memref<5x16x16xf32, #tpu.memory_space<vmem>>, vector<1x16x16xf32>
    %260 = vector.shape_cast %259 : vector<1x16x16xf32> to vector<16x16xf32>
    %cst_251 = arith.constant dense<0.000000e+00> : vector<16x16xf32>
    %261 = tpu.matmul %258, %260, %cst_251 {dimension_numbers = #tpu.dot_dimension_numbers<[1], [0], [0], [1], [0, 0, 1, 1], [], []>} : vector<16x16xf32>, vector<16x16xf32>, vector<16x16xf32> -> vector<16x16xf32>
    %262 = arith.mulf %233, %235 : vector<48x16xf32>
    %c3_252 = arith.constant 3 : index
    %c0_253 = arith.constant 0 : index
    %c0_254 = arith.constant 0 : index
    %263 = vector.load %arg4[%c3_252, %c0_253, %c0_254] : memref<5x16x48xf32, #tpu.memory_space<vmem>>, vector<1x16x48xf32>
    %264 = vector.shape_cast %263 : vector<1x16x48xf32> to vector<16x48xf32>
    %cst_255 = arith.constant dense<0.000000e+00> : vector<16x16xf32>
    %265 = tpu.matmul %264, %262, %cst_255 {dimension_numbers = #tpu.dot_dimension_numbers<[1], [0], [0], [1], [0, 0, 1, 1], [], []>} : vector<16x48xf32>, vector<48x16xf32>, vector<16x16xf32> -> vector<16x16xf32>
    %c3_256 = arith.constant 3 : index
    %c0_257 = arith.constant 0 : index
    %c0_258 = arith.constant 0 : index
    %266 = vector.load %arg5[%c3_256, %c0_257, %c0_258] : memref<5x16x16xf32, #tpu.memory_space<vmem>>, vector<1x16x16xf32>
    %267 = vector.shape_cast %266 : vector<1x16x16xf32> to vector<16x16xf32>
    %cst_259 = arith.constant dense<0.000000e+00> : vector<16x16xf32>
    %268 = tpu.matmul %265, %267, %cst_259 {dimension_numbers = #tpu.dot_dimension_numbers<[1], [0], [0], [1], [0, 0, 1, 1], [], []>} : vector<16x16xf32>, vector<16x16xf32>, vector<16x16xf32> -> vector<16x16xf32>
    %269 = arith.mulf %241, %241 : vector<16x16xf32>
    %270 = arith.mulf %247, %247 : vector<16x16xf32>
    %271 = arith.mulf %241, %247 : vector<16x16xf32>
    %272 = arith.subf %268, %271 : vector<16x16xf32>
    %cst_260 = arith.constant 2.000000e+00 : f32
    %273 = vector.broadcast %cst_260 : f32 to vector<16x16xf32>
    %274 = arith.mulf %273, %272 : vector<16x16xf32>
    %cst_261 = arith.constant 8.99999984E-4 : f32
    %275 = vector.broadcast %cst_261 : f32 to vector<16x16xf32>
    %276 = arith.addf %274, %275 : vector<16x16xf32>
    %277 = arith.subf %254, %269 : vector<16x16xf32>
    %278 = arith.subf %261, %270 : vector<16x16xf32>
    %279 = arith.addf %277, %278 : vector<16x16xf32>
    %cst_262 = arith.constant 8.99999984E-4 : f32
    %280 = vector.broadcast %cst_262 : f32 to vector<16x16xf32>
    %281 = arith.addf %279, %280 : vector<16x16xf32>
    %c0_263 = arith.constant 0 : index
    %c0_264 = arith.constant 0 : index
    %c2_265 = arith.constant 2 : index
    %c0_266 = arith.constant 0 : index
    %c0_267 = arith.constant 0 : index
    %282 = vector.load %arg2[%c0_263, %c0_264, %c2_265, %c0_266, %c0_267] : memref<1x1x3x48x16xf32, #tpu.memory_space<vmem>>, vector<1x1x1x48x16xf32>
    %283 = vector.shape_cast %282 : vector<1x1x1x48x16xf32> to vector<48x16xf32>
    %c0_268 = arith.constant 0 : index
    %c0_269 = arith.constant 0 : index
    %c2_270 = arith.constant 2 : index
    %c0_271 = arith.constant 0 : index
    %c0_272 = arith.constant 0 : index
    %284 = vector.load %arg3[%c0_268, %c0_269, %c2_270, %c0_271, %c0_272] : memref<1x1x3x48x16xf32, #tpu.memory_space<vmem>>, vector<1x1x1x48x16xf32>
    %285 = vector.shape_cast %284 : vector<1x1x1x48x16xf32> to vector<48x16xf32>
    %c3_273 = arith.constant 3 : index
    %c0_274 = arith.constant 0 : index
    %c0_275 = arith.constant 0 : index
    %286 = vector.load %arg4[%c3_273, %c0_274, %c0_275] : memref<5x16x48xf32, #tpu.memory_space<vmem>>, vector<1x16x48xf32>
    %287 = vector.shape_cast %286 : vector<1x16x48xf32> to vector<16x48xf32>
    %cst_276 = arith.constant dense<0.000000e+00> : vector<16x16xf32>
    %288 = tpu.matmul %287, %283, %cst_276 {dimension_numbers = #tpu.dot_dimension_numbers<[1], [0], [0], [1], [0, 0, 1, 1], [], []>} : vector<16x48xf32>, vector<48x16xf32>, vector<16x16xf32> -> vector<16x16xf32>
    %c3_277 = arith.constant 3 : index
    %c0_278 = arith.constant 0 : index
    %c0_279 = arith.constant 0 : index
    %289 = vector.load %arg5[%c3_277, %c0_278, %c0_279] : memref<5x16x16xf32, #tpu.memory_space<vmem>>, vector<1x16x16xf32>
    %290 = vector.shape_cast %289 : vector<1x16x16xf32> to vector<16x16xf32>
    %cst_280 = arith.constant dense<0.000000e+00> : vector<16x16xf32>
    %291 = tpu.matmul %288, %290, %cst_280 {dimension_numbers = #tpu.dot_dimension_numbers<[1], [0], [0], [1], [0, 0, 1, 1], [], []>} : vector<16x16xf32>, vector<16x16xf32>, vector<16x16xf32> -> vector<16x16xf32>
    %c3_281 = arith.constant 3 : index
    %c0_282 = arith.constant 0 : index
    %c0_283 = arith.constant 0 : index
    %292 = vector.load %arg4[%c3_281, %c0_282, %c0_283] : memref<5x16x48xf32, #tpu.memory_space<vmem>>, vector<1x16x48xf32>
    %293 = vector.shape_cast %292 : vector<1x16x48xf32> to vector<16x48xf32>
    %cst_284 = arith.constant dense<0.000000e+00> : vector<16x16xf32>
    %294 = tpu.matmul %293, %285, %cst_284 {dimension_numbers = #tpu.dot_dimension_numbers<[1], [0], [0], [1], [0, 0, 1, 1], [], []>} : vector<16x48xf32>, vector<48x16xf32>, vector<16x16xf32> -> vector<16x16xf32>
    %c3_285 = arith.constant 3 : index
    %c0_286 = arith.constant 0 : index
    %c0_287 = arith.constant 0 : index
    %295 = vector.load %arg5[%c3_285, %c0_286, %c0_287] : memref<5x16x16xf32, #tpu.memory_space<vmem>>, vector<1x16x16xf32>
    %296 = vector.shape_cast %295 : vector<1x16x16xf32> to vector<16x16xf32>
    %cst_288 = arith.constant dense<0.000000e+00> : vector<16x16xf32>
    %297 = tpu.matmul %294, %296, %cst_288 {dimension_numbers = #tpu.dot_dimension_numbers<[1], [0], [0], [1], [0, 0, 1, 1], [], []>} : vector<16x16xf32>, vector<16x16xf32>, vector<16x16xf32> -> vector<16x16xf32>
    %298 = arith.mulf %283, %283 : vector<48x16xf32>
    %c3_289 = arith.constant 3 : index
    %c0_290 = arith.constant 0 : index
    %c0_291 = arith.constant 0 : index
    %299 = vector.load %arg4[%c3_289, %c0_290, %c0_291] : memref<5x16x48xf32, #tpu.memory_space<vmem>>, vector<1x16x48xf32>
    %300 = vector.shape_cast %299 : vector<1x16x48xf32> to vector<16x48xf32>
    %cst_292 = arith.constant dense<0.000000e+00> : vector<16x16xf32>
    %301 = tpu.matmul %300, %298, %cst_292 {dimension_numbers = #tpu.dot_dimension_numbers<[1], [0], [0], [1], [0, 0, 1, 1], [], []>} : vector<16x48xf32>, vector<48x16xf32>, vector<16x16xf32> -> vector<16x16xf32>
    %c3_293 = arith.constant 3 : index
    %c0_294 = arith.constant 0 : index
    %c0_295 = arith.constant 0 : index
    %302 = vector.load %arg5[%c3_293, %c0_294, %c0_295] : memref<5x16x16xf32, #tpu.memory_space<vmem>>, vector<1x16x16xf32>
    %303 = vector.shape_cast %302 : vector<1x16x16xf32> to vector<16x16xf32>
    %cst_296 = arith.constant dense<0.000000e+00> : vector<16x16xf32>
    %304 = tpu.matmul %301, %303, %cst_296 {dimension_numbers = #tpu.dot_dimension_numbers<[1], [0], [0], [1], [0, 0, 1, 1], [], []>} : vector<16x16xf32>, vector<16x16xf32>, vector<16x16xf32> -> vector<16x16xf32>
    %305 = arith.mulf %285, %285 : vector<48x16xf32>
    %c3_297 = arith.constant 3 : index
    %c0_298 = arith.constant 0 : index
    %c0_299 = arith.constant 0 : index
    %306 = vector.load %arg4[%c3_297, %c0_298, %c0_299] : memref<5x16x48xf32, #tpu.memory_space<vmem>>, vector<1x16x48xf32>
    %307 = vector.shape_cast %306 : vector<1x16x48xf32> to vector<16x48xf32>
    %cst_300 = arith.constant dense<0.000000e+00> : vector<16x16xf32>
    %308 = tpu.matmul %307, %305, %cst_300 {dimension_numbers = #tpu.dot_dimension_numbers<[1], [0], [0], [1], [0, 0, 1, 1], [], []>} : vector<16x48xf32>, vector<48x16xf32>, vector<16x16xf32> -> vector<16x16xf32>
    %c3_301 = arith.constant 3 : index
    %c0_302 = arith.constant 0 : index
    %c0_303 = arith.constant 0 : index
    %309 = vector.load %arg5[%c3_301, %c0_302, %c0_303] : memref<5x16x16xf32, #tpu.memory_space<vmem>>, vector<1x16x16xf32>
    %310 = vector.shape_cast %309 : vector<1x16x16xf32> to vector<16x16xf32>
    %cst_304 = arith.constant dense<0.000000e+00> : vector<16x16xf32>
    %311 = tpu.matmul %308, %310, %cst_304 {dimension_numbers = #tpu.dot_dimension_numbers<[1], [0], [0], [1], [0, 0, 1, 1], [], []>} : vector<16x16xf32>, vector<16x16xf32>, vector<16x16xf32> -> vector<16x16xf32>
    %312 = arith.mulf %283, %285 : vector<48x16xf32>
    %c3_305 = arith.constant 3 : index
    %c0_306 = arith.constant 0 : index
    %c0_307 = arith.constant 0 : index
    %313 = vector.load %arg4[%c3_305, %c0_306, %c0_307] : memref<5x16x48xf32, #tpu.memory_space<vmem>>, vector<1x16x48xf32>
    %314 = vector.shape_cast %313 : vector<1x16x48xf32> to vector<16x48xf32>
    %cst_308 = arith.constant dense<0.000000e+00> : vector<16x16xf32>
    %315 = tpu.matmul %314, %312, %cst_308 {dimension_numbers = #tpu.dot_dimension_numbers<[1], [0], [0], [1], [0, 0, 1, 1], [], []>} : vector<16x48xf32>, vector<48x16xf32>, vector<16x16xf32> -> vector<16x16xf32>
    %c3_309 = arith.constant 3 : index
    %c0_310 = arith.constant 0 : index
    %c0_311 = arith.constant 0 : index
    %316 = vector.load %arg5[%c3_309, %c0_310, %c0_311] : memref<5x16x16xf32, #tpu.memory_space<vmem>>, vector<1x16x16xf32>
    %317 = vector.shape_cast %316 : vector<1x16x16xf32> to vector<16x16xf32>
    %cst_312 = arith.constant dense<0.000000e+00> : vector<16x16xf32>
    %318 = tpu.matmul %315, %317, %cst_312 {dimension_numbers = #tpu.dot_dimension_numbers<[1], [0], [0], [1], [0, 0, 1, 1], [], []>} : vector<16x16xf32>, vector<16x16xf32>, vector<16x16xf32> -> vector<16x16xf32>
    %319 = arith.mulf %291, %291 : vector<16x16xf32>
    %320 = arith.mulf %297, %297 : vector<16x16xf32>
    %321 = arith.mulf %291, %297 : vector<16x16xf32>
    %322 = arith.subf %318, %321 : vector<16x16xf32>
    %cst_313 = arith.constant 2.000000e+00 : f32
    %323 = vector.broadcast %cst_313 : f32 to vector<16x16xf32>
    %324 = arith.mulf %323, %322 : vector<16x16xf32>
    %cst_314 = arith.constant 8.99999984E-4 : f32
    %325 = vector.broadcast %cst_314 : f32 to vector<16x16xf32>
    %326 = arith.addf %324, %325 : vector<16x16xf32>
    %327 = arith.subf %304, %319 : vector<16x16xf32>
    %328 = arith.subf %311, %320 : vector<16x16xf32>
    %329 = arith.addf %327, %328 : vector<16x16xf32>
    %cst_315 = arith.constant 8.99999984E-4 : f32
    %330 = vector.broadcast %cst_315 : f32 to vector<16x16xf32>
    %331 = arith.addf %329, %330 : vector<16x16xf32>
    %332 = arith.mulf %326, %326 : vector<16x16xf32>
    %333 = arith.mulf %331, %331 : vector<16x16xf32>
    %334 = arith.mulf %276, %332 : vector<16x16xf32>
    %335 = arith.mulf %281, %333 : vector<16x16xf32>
    %336 = tpu.reciprocal %335 {approx = true} : vector<16x16xf32> -> vector<16x16xf32>
    %337 = arith.mulf %335, %336 : vector<16x16xf32>
    %cst_316 = arith.constant 2.000000e+00 : f32
    %338 = vector.broadcast %cst_316 : f32 to vector<16x16xf32>
    %339 = arith.subf %338, %337 : vector<16x16xf32>
    %340 = arith.mulf %336, %339 : vector<16x16xf32>
    %341 = arith.mulf %334, %340 : vector<16x16xf32>
    %342 = arith.mulf %231, %341 : vector<16x16xf32>
    %c0_317 = arith.constant 0 : index
    %c0_318 = arith.constant 0 : index
    %c2_319 = arith.constant 2 : index
    %c0_320 = arith.constant 0 : index
    %c0_321 = arith.constant 0 : index
    %343 = vector.load %arg2[%c0_317, %c0_318, %c2_319, %c0_320, %c0_321] : memref<1x1x3x48x16xf32, #tpu.memory_space<vmem>>, vector<1x1x1x48x16xf32>
    %344 = vector.shape_cast %343 : vector<1x1x1x48x16xf32> to vector<48x16xf32>
    %c0_322 = arith.constant 0 : index
    %c0_323 = arith.constant 0 : index
    %c2_324 = arith.constant 2 : index
    %c0_325 = arith.constant 0 : index
    %c0_326 = arith.constant 0 : index
    %345 = vector.load %arg3[%c0_322, %c0_323, %c2_324, %c0_325, %c0_326] : memref<1x1x3x48x16xf32, #tpu.memory_space<vmem>>, vector<1x1x1x48x16xf32>
    %346 = vector.shape_cast %345 : vector<1x1x1x48x16xf32> to vector<48x16xf32>
    %c4 = arith.constant 4 : index
    %c0_327 = arith.constant 0 : index
    %c0_328 = arith.constant 0 : index
    %347 = vector.load %arg4[%c4, %c0_327, %c0_328] : memref<5x16x48xf32, #tpu.memory_space<vmem>>, vector<1x16x48xf32>
    %348 = vector.shape_cast %347 : vector<1x16x48xf32> to vector<16x48xf32>
    %cst_329 = arith.constant dense<0.000000e+00> : vector<16x16xf32>
    %349 = tpu.matmul %348, %344, %cst_329 {dimension_numbers = #tpu.dot_dimension_numbers<[1], [0], [0], [1], [0, 0, 1, 1], [], []>} : vector<16x48xf32>, vector<48x16xf32>, vector<16x16xf32> -> vector<16x16xf32>
    %c4_330 = arith.constant 4 : index
    %c0_331 = arith.constant 0 : index
    %c0_332 = arith.constant 0 : index
    %350 = vector.load %arg5[%c4_330, %c0_331, %c0_332] : memref<5x16x16xf32, #tpu.memory_space<vmem>>, vector<1x16x16xf32>
    %351 = vector.shape_cast %350 : vector<1x16x16xf32> to vector<16x16xf32>
    %cst_333 = arith.constant dense<0.000000e+00> : vector<16x16xf32>
    %352 = tpu.matmul %349, %351, %cst_333 {dimension_numbers = #tpu.dot_dimension_numbers<[1], [0], [0], [1], [0, 0, 1, 1], [], []>} : vector<16x16xf32>, vector<16x16xf32>, vector<16x16xf32> -> vector<16x16xf32>
    %c4_334 = arith.constant 4 : index
    %c0_335 = arith.constant 0 : index
    %c0_336 = arith.constant 0 : index
    %353 = vector.load %arg4[%c4_334, %c0_335, %c0_336] : memref<5x16x48xf32, #tpu.memory_space<vmem>>, vector<1x16x48xf32>
    %354 = vector.shape_cast %353 : vector<1x16x48xf32> to vector<16x48xf32>
    %cst_337 = arith.constant dense<0.000000e+00> : vector<16x16xf32>
    %355 = tpu.matmul %354, %346, %cst_337 {dimension_numbers = #tpu.dot_dimension_numbers<[1], [0], [0], [1], [0, 0, 1, 1], [], []>} : vector<16x48xf32>, vector<48x16xf32>, vector<16x16xf32> -> vector<16x16xf32>
    %c4_338 = arith.constant 4 : index
    %c0_339 = arith.constant 0 : index
    %c0_340 = arith.constant 0 : index
    %356 = vector.load %arg5[%c4_338, %c0_339, %c0_340] : memref<5x16x16xf32, #tpu.memory_space<vmem>>, vector<1x16x16xf32>
    %357 = vector.shape_cast %356 : vector<1x16x16xf32> to vector<16x16xf32>
    %cst_341 = arith.constant dense<0.000000e+00> : vector<16x16xf32>
    %358 = tpu.matmul %355, %357, %cst_341 {dimension_numbers = #tpu.dot_dimension_numbers<[1], [0], [0], [1], [0, 0, 1, 1], [], []>} : vector<16x16xf32>, vector<16x16xf32>, vector<16x16xf32> -> vector<16x16xf32>
    %359 = arith.mulf %344, %344 : vector<48x16xf32>
    %c4_342 = arith.constant 4 : index
    %c0_343 = arith.constant 0 : index
    %c0_344 = arith.constant 0 : index
    %360 = vector.load %arg4[%c4_342, %c0_343, %c0_344] : memref<5x16x48xf32, #tpu.memory_space<vmem>>, vector<1x16x48xf32>
    %361 = vector.shape_cast %360 : vector<1x16x48xf32> to vector<16x48xf32>
    %cst_345 = arith.constant dense<0.000000e+00> : vector<16x16xf32>
    %362 = tpu.matmul %361, %359, %cst_345 {dimension_numbers = #tpu.dot_dimension_numbers<[1], [0], [0], [1], [0, 0, 1, 1], [], []>} : vector<16x48xf32>, vector<48x16xf32>, vector<16x16xf32> -> vector<16x16xf32>
    %c4_346 = arith.constant 4 : index
    %c0_347 = arith.constant 0 : index
    %c0_348 = arith.constant 0 : index
    %363 = vector.load %arg5[%c4_346, %c0_347, %c0_348] : memref<5x16x16xf32, #tpu.memory_space<vmem>>, vector<1x16x16xf32>
    %364 = vector.shape_cast %363 : vector<1x16x16xf32> to vector<16x16xf32>
    %cst_349 = arith.constant dense<0.000000e+00> : vector<16x16xf32>
    %365 = tpu.matmul %362, %364, %cst_349 {dimension_numbers = #tpu.dot_dimension_numbers<[1], [0], [0], [1], [0, 0, 1, 1], [], []>} : vector<16x16xf32>, vector<16x16xf32>, vector<16x16xf32> -> vector<16x16xf32>
    %366 = arith.mulf %346, %346 : vector<48x16xf32>
    %c4_350 = arith.constant 4 : index
    %c0_351 = arith.constant 0 : index
    %c0_352 = arith.constant 0 : index
    %367 = vector.load %arg4[%c4_350, %c0_351, %c0_352] : memref<5x16x48xf32, #tpu.memory_space<vmem>>, vector<1x16x48xf32>
    %368 = vector.shape_cast %367 : vector<1x16x48xf32> to vector<16x48xf32>
    %cst_353 = arith.constant dense<0.000000e+00> : vector<16x16xf32>
    %369 = tpu.matmul %368, %366, %cst_353 {dimension_numbers = #tpu.dot_dimension_numbers<[1], [0], [0], [1], [0, 0, 1, 1], [], []>} : vector<16x48xf32>, vector<48x16xf32>, vector<16x16xf32> -> vector<16x16xf32>
    %c4_354 = arith.constant 4 : index
    %c0_355 = arith.constant 0 : index
    %c0_356 = arith.constant 0 : index
    %370 = vector.load %arg5[%c4_354, %c0_355, %c0_356] : memref<5x16x16xf32, #tpu.memory_space<vmem>>, vector<1x16x16xf32>
    %371 = vector.shape_cast %370 : vector<1x16x16xf32> to vector<16x16xf32>
    %cst_357 = arith.constant dense<0.000000e+00> : vector<16x16xf32>
    %372 = tpu.matmul %369, %371, %cst_357 {dimension_numbers = #tpu.dot_dimension_numbers<[1], [0], [0], [1], [0, 0, 1, 1], [], []>} : vector<16x16xf32>, vector<16x16xf32>, vector<16x16xf32> -> vector<16x16xf32>
    %373 = arith.mulf %344, %346 : vector<48x16xf32>
    %c4_358 = arith.constant 4 : index
    %c0_359 = arith.constant 0 : index
    %c0_360 = arith.constant 0 : index
    %374 = vector.load %arg4[%c4_358, %c0_359, %c0_360] : memref<5x16x48xf32, #tpu.memory_space<vmem>>, vector<1x16x48xf32>
    %375 = vector.shape_cast %374 : vector<1x16x48xf32> to vector<16x48xf32>
    %cst_361 = arith.constant dense<0.000000e+00> : vector<16x16xf32>
    %376 = tpu.matmul %375, %373, %cst_361 {dimension_numbers = #tpu.dot_dimension_numbers<[1], [0], [0], [1], [0, 0, 1, 1], [], []>} : vector<16x48xf32>, vector<48x16xf32>, vector<16x16xf32> -> vector<16x16xf32>
    %c4_362 = arith.constant 4 : index
    %c0_363 = arith.constant 0 : index
    %c0_364 = arith.constant 0 : index
    %377 = vector.load %arg5[%c4_362, %c0_363, %c0_364] : memref<5x16x16xf32, #tpu.memory_space<vmem>>, vector<1x16x16xf32>
    %378 = vector.shape_cast %377 : vector<1x16x16xf32> to vector<16x16xf32>
    %cst_365 = arith.constant dense<0.000000e+00> : vector<16x16xf32>
    %379 = tpu.matmul %376, %378, %cst_365 {dimension_numbers = #tpu.dot_dimension_numbers<[1], [0], [0], [1], [0, 0, 1, 1], [], []>} : vector<16x16xf32>, vector<16x16xf32>, vector<16x16xf32> -> vector<16x16xf32>
    %380 = arith.mulf %352, %352 : vector<16x16xf32>
    %381 = arith.mulf %358, %358 : vector<16x16xf32>
    %382 = arith.mulf %352, %358 : vector<16x16xf32>
    %383 = arith.subf %379, %382 : vector<16x16xf32>
    %cst_366 = arith.constant 2.000000e+00 : f32
    %384 = vector.broadcast %cst_366 : f32 to vector<16x16xf32>
    %385 = arith.mulf %384, %383 : vector<16x16xf32>
    %cst_367 = arith.constant 8.99999984E-4 : f32
    %386 = vector.broadcast %cst_367 : f32 to vector<16x16xf32>
    %387 = arith.addf %385, %386 : vector<16x16xf32>
    %388 = arith.subf %365, %380 : vector<16x16xf32>
    %389 = arith.subf %372, %381 : vector<16x16xf32>
    %390 = arith.addf %388, %389 : vector<16x16xf32>
    %cst_368 = arith.constant 8.99999984E-4 : f32
    %391 = vector.broadcast %cst_368 : f32 to vector<16x16xf32>
    %392 = arith.addf %390, %391 : vector<16x16xf32>
    %393 = arith.mulf %387, %387 : vector<16x16xf32>
    %394 = arith.mulf %392, %392 : vector<16x16xf32>
    %395 = arith.mulf %393, %387 : vector<16x16xf32>
    %396 = arith.mulf %394, %392 : vector<16x16xf32>
    %cst_369 = arith.constant 2.000000e+00 : f32
    %397 = vector.broadcast %cst_369 : f32 to vector<16x16xf32>
    %398 = arith.mulf %397, %382 : vector<16x16xf32>
    %cst_370 = arith.constant 9.99999974E-5 : f32
    %399 = vector.broadcast %cst_370 : f32 to vector<16x16xf32>
    %400 = arith.addf %398, %399 : vector<16x16xf32>
    %401 = arith.addf %380, %381 : vector<16x16xf32>
    %cst_371 = arith.constant 9.99999974E-5 : f32
    %402 = vector.broadcast %cst_371 : f32 to vector<16x16xf32>
    %403 = arith.addf %401, %402 : vector<16x16xf32>
    %404 = tpu.reciprocal %403 {approx = true} : vector<16x16xf32> -> vector<16x16xf32>
    %405 = arith.mulf %403, %404 : vector<16x16xf32>
    %cst_372 = arith.constant 2.000000e+00 : f32
    %406 = vector.broadcast %cst_372 : f32 to vector<16x16xf32>
    %407 = arith.subf %406, %405 : vector<16x16xf32>
    %408 = arith.mulf %404, %407 : vector<16x16xf32>
    %409 = arith.mulf %400, %408 : vector<16x16xf32>
    %410 = arith.mulf %409, %409 : vector<16x16xf32>
    %411 = arith.mulf %410, %409 : vector<16x16xf32>
    %412 = tpu.reciprocal %396 {approx = true} : vector<16x16xf32> -> vector<16x16xf32>
    %413 = arith.mulf %396, %412 : vector<16x16xf32>
    %cst_373 = arith.constant 2.000000e+00 : f32
    %414 = vector.broadcast %cst_373 : f32 to vector<16x16xf32>
    %415 = arith.subf %414, %413 : vector<16x16xf32>
    %416 = arith.mulf %412, %415 : vector<16x16xf32>
    %417 = arith.mulf %395, %416 : vector<16x16xf32>
    %418 = arith.mulf %342, %417 : vector<16x16xf32>
    %c0_374 = arith.constant 0 : index
    %c0_375 = arith.constant 0 : index
    %c0_376 = arith.constant 0 : index
    %c0_377 = arith.constant 0 : index
    %c0_378 = arith.constant 0 : index
    %419 = vector.load %arg2[%c0_374, %c0_375, %c0_376, %c0_377, %c0_378] : memref<1x1x3x48x16xf32, #tpu.memory_space<vmem>>, vector<1x1x1x48x16xf32>
    %420 = vector.shape_cast %419 : vector<1x1x1x48x16xf32> to vector<48x16xf32>
    %c0_379 = arith.constant 0 : index
    %c0_380 = arith.constant 0 : index
    %c0_381 = arith.constant 0 : index
    %c0_382 = arith.constant 0 : index
    %c0_383 = arith.constant 0 : index
    %421 = vector.load %arg3[%c0_379, %c0_380, %c0_381, %c0_382, %c0_383] : memref<1x1x3x48x16xf32, #tpu.memory_space<vmem>>, vector<1x1x1x48x16xf32>
    %422 = vector.shape_cast %421 : vector<1x1x1x48x16xf32> to vector<48x16xf32>
    %423 = arith.subf %420, %422 : vector<48x16xf32>
    %424 = math.absf %423 : vector<48x16xf32>
    %c4_384 = arith.constant 4 : index
    %c0_385 = arith.constant 0 : index
    %c0_386 = arith.constant 0 : index
    %425 = vector.load %arg4[%c4_384, %c0_385, %c0_386] : memref<5x16x48xf32, #tpu.memory_space<vmem>>, vector<1x16x48xf32>
    %426 = vector.shape_cast %425 : vector<1x16x48xf32> to vector<16x48xf32>
    %cst_387 = arith.constant dense<0.000000e+00> : vector<16x16xf32>
    %427 = tpu.matmul %426, %424, %cst_387 {dimension_numbers = #tpu.dot_dimension_numbers<[1], [0], [0], [1], [0, 0, 1, 1], [], []>} : vector<16x48xf32>, vector<48x16xf32>, vector<16x16xf32> -> vector<16x16xf32>
    %c4_388 = arith.constant 4 : index
    %c0_389 = arith.constant 0 : index
    %c0_390 = arith.constant 0 : index
    %428 = vector.load %arg5[%c4_388, %c0_389, %c0_390] : memref<5x16x16xf32, #tpu.memory_space<vmem>>, vector<1x16x16xf32>
    %429 = vector.shape_cast %428 : vector<1x16x16xf32> to vector<16x16xf32>
    %cst_391 = arith.constant dense<0.000000e+00> : vector<16x16xf32>
    %430 = tpu.matmul %427, %429, %cst_391 {dimension_numbers = #tpu.dot_dimension_numbers<[1], [0], [0], [1], [0, 0, 1, 1], [], []>} : vector<16x16xf32>, vector<16x16xf32>, vector<16x16xf32> -> vector<16x16xf32>
    %c0_392 = arith.constant 0 : index
    %c0_393 = arith.constant 0 : index
    %c1_394 = arith.constant 1 : index
    %c0_395 = arith.constant 0 : index
    %c0_396 = arith.constant 0 : index
    %431 = vector.load %arg2[%c0_392, %c0_393, %c1_394, %c0_395, %c0_396] : memref<1x1x3x48x16xf32, #tpu.memory_space<vmem>>, vector<1x1x1x48x16xf32>
    %432 = vector.shape_cast %431 : vector<1x1x1x48x16xf32> to vector<48x16xf32>
    %c0_397 = arith.constant 0 : index
    %c0_398 = arith.constant 0 : index
    %c1_399 = arith.constant 1 : index
    %c0_400 = arith.constant 0 : index
    %c0_401 = arith.constant 0 : index
    %433 = vector.load %arg3[%c0_397, %c0_398, %c1_399, %c0_400, %c0_401] : memref<1x1x3x48x16xf32, #tpu.memory_space<vmem>>, vector<1x1x1x48x16xf32>
    %434 = vector.shape_cast %433 : vector<1x1x1x48x16xf32> to vector<48x16xf32>
    %435 = arith.subf %432, %434 : vector<48x16xf32>
    %436 = math.absf %435 : vector<48x16xf32>
    %c4_402 = arith.constant 4 : index
    %c0_403 = arith.constant 0 : index
    %c0_404 = arith.constant 0 : index
    %437 = vector.load %arg4[%c4_402, %c0_403, %c0_404] : memref<5x16x48xf32, #tpu.memory_space<vmem>>, vector<1x16x48xf32>
    %438 = vector.shape_cast %437 : vector<1x16x48xf32> to vector<16x48xf32>
    %cst_405 = arith.constant dense<0.000000e+00> : vector<16x16xf32>
    %439 = tpu.matmul %438, %436, %cst_405 {dimension_numbers = #tpu.dot_dimension_numbers<[1], [0], [0], [1], [0, 0, 1, 1], [], []>} : vector<16x48xf32>, vector<48x16xf32>, vector<16x16xf32> -> vector<16x16xf32>
    %c4_406 = arith.constant 4 : index
    %c0_407 = arith.constant 0 : index
    %c0_408 = arith.constant 0 : index
    %440 = vector.load %arg5[%c4_406, %c0_407, %c0_408] : memref<5x16x16xf32, #tpu.memory_space<vmem>>, vector<1x16x16xf32>
    %441 = vector.shape_cast %440 : vector<1x16x16xf32> to vector<16x16xf32>
    %cst_409 = arith.constant dense<0.000000e+00> : vector<16x16xf32>
    %442 = tpu.matmul %439, %441, %cst_409 {dimension_numbers = #tpu.dot_dimension_numbers<[1], [0], [0], [1], [0, 0, 1, 1], [], []>} : vector<16x16xf32>, vector<16x16xf32>, vector<16x16xf32> -> vector<16x16xf32>
    %443 = arith.addf %430, %442 : vector<16x16xf32>
    %c0_410 = arith.constant 0 : index
    %c0_411 = arith.constant 0 : index
    %c2_412 = arith.constant 2 : index
    %c0_413 = arith.constant 0 : index
    %c0_414 = arith.constant 0 : index
    %444 = vector.load %arg2[%c0_410, %c0_411, %c2_412, %c0_413, %c0_414] : memref<1x1x3x48x16xf32, #tpu.memory_space<vmem>>, vector<1x1x1x48x16xf32>
    %445 = vector.shape_cast %444 : vector<1x1x1x48x16xf32> to vector<48x16xf32>
    %c0_415 = arith.constant 0 : index
    %c0_416 = arith.constant 0 : index
    %c2_417 = arith.constant 2 : index
    %c0_418 = arith.constant 0 : index
    %c0_419 = arith.constant 0 : index
    %446 = vector.load %arg3[%c0_415, %c0_416, %c2_417, %c0_418, %c0_419] : memref<1x1x3x48x16xf32, #tpu.memory_space<vmem>>, vector<1x1x1x48x16xf32>
    %447 = vector.shape_cast %446 : vector<1x1x1x48x16xf32> to vector<48x16xf32>
    %448 = arith.subf %445, %447 : vector<48x16xf32>
    %449 = math.absf %448 : vector<48x16xf32>
    %c4_420 = arith.constant 4 : index
    %c0_421 = arith.constant 0 : index
    %c0_422 = arith.constant 0 : index
    %450 = vector.load %arg4[%c4_420, %c0_421, %c0_422] : memref<5x16x48xf32, #tpu.memory_space<vmem>>, vector<1x16x48xf32>
    %451 = vector.shape_cast %450 : vector<1x16x48xf32> to vector<16x48xf32>
    %cst_423 = arith.constant dense<0.000000e+00> : vector<16x16xf32>
    %452 = tpu.matmul %451, %449, %cst_423 {dimension_numbers = #tpu.dot_dimension_numbers<[1], [0], [0], [1], [0, 0, 1, 1], [], []>} : vector<16x48xf32>, vector<48x16xf32>, vector<16x16xf32> -> vector<16x16xf32>
    %c4_424 = arith.constant 4 : index
    %c0_425 = arith.constant 0 : index
    %c0_426 = arith.constant 0 : index
    %453 = vector.load %arg5[%c4_424, %c0_425, %c0_426] : memref<5x16x16xf32, #tpu.memory_space<vmem>>, vector<1x16x16xf32>
    %454 = vector.shape_cast %453 : vector<1x16x16xf32> to vector<16x16xf32>
    %cst_427 = arith.constant dense<0.000000e+00> : vector<16x16xf32>
    %455 = tpu.matmul %452, %454, %cst_427 {dimension_numbers = #tpu.dot_dimension_numbers<[1], [0], [0], [1], [0, 0, 1, 1], [], []>} : vector<16x16xf32>, vector<16x16xf32>, vector<16x16xf32> -> vector<16x16xf32>
    %456 = arith.addf %443, %455 : vector<16x16xf32>
    %cst_428 = arith.constant 0.333333343 : f32
    %457 = vector.broadcast %cst_428 : f32 to vector<16x16xf32>
    %458 = arith.mulf %456, %457 : vector<16x16xf32>
    %459 = arith.mulf %411, %418 : vector<16x16xf32>
    %cst_429 = arith.constant 1.000000e+00 : f32
    %460 = vector.broadcast %cst_429 : f32 to vector<16x16xf32>
    %461 = arith.subf %460, %459 : vector<16x16xf32>
    %cst_430 = arith.constant 2.500000e-02 : f32
    %462 = vector.broadcast %cst_430 : f32 to vector<16x16xf32>
    %463 = arith.mulf %462, %461 : vector<16x16xf32>
    %cst_431 = arith.constant 9.750000e-01 : f32
    %464 = vector.broadcast %cst_431 : f32 to vector<16x16xf32>
    %465 = arith.mulf %464, %458 : vector<16x16xf32>
    %cst_432 = arith.constant 1.000000e+00 : f32
    %466 = vector.broadcast %cst_432 : f32 to vector<16x16xf32>
    %467 = arith.mulf %465, %466 : vector<16x16xf32>
    %468 = arith.addf %463, %467 : vector<16x16xf32>
    %c16_i32 = arith.constant 16 : i32
    %469 = arith.muli %arg1, %c16_i32 : i32
    %c16_i32_433 = arith.constant 16 : i32
    %470 = arith.subi %c16_i32_433, %469 : i32
    %471 = tpu.iota {dimensions = array<i32: 0>} : vector<16x16xi32>
    %472 = vector.broadcast %470 : i32 to vector<16x16xi32>
    %473 = arith.cmpi slt, %471, %472 : vector<16x16xi32>
    %cst_434 = arith.constant 0.000000e+00 : f32
    %474 = vector.broadcast %cst_434 : f32 to vector<16x16xf32>
    %475 = arith.select %473, %468, %474 : vector<16x16xi1>, vector<16x16xf32>
    %476 = vector.shape_cast %475 : vector<16x16xf32> to vector<1x16x16xf32>
    %cst_435 = arith.constant dense<0.000000e+00> : vector<1xf32>
    %477 = vector.multi_reduction <add>, %476, %cst_435 [1, 2] : vector<1x16x16xf32> to vector<1xf32>
    %478 = vector.shape_cast %477 : vector<1xf32> to vector<1x1x1xf32>
    %479 = vector.extract %478[0, 0, 0] : f32 from vector<1x1x1xf32>
    %cst_436 = arith.constant 2.000000e+02 : f32
    %480 = arith.mulf %cst_436, %479 : f32
    %cst_437 = arith.constant 0.000000e+00 : f32
    %481 = vector.broadcast %cst_437 : f32 to vector<8x128xf32>
    %482 = vector.broadcast %480 : f32 to vector<8x128xf32>
    %483 = arith.addf %481, %482 : vector<8x128xf32>
    %c0_438 = arith.constant 0 : index
    %c0_439 = arith.constant 0 : index
    %c0_440 = arith.constant 0 : index
    %c0_441 = arith.constant 0 : index
    %484 = vector.load %arg6[%c0_438, %c0_439, %c0_440, %c0_441] : memref<1x1x8x128xf32, #tpu.memory_space<vmem>>, vector<1x1x8x128xf32>
    %485 = vector.shape_cast %484 : vector<1x1x8x128xf32> to vector<8x128xf32>
    %486 = vector.shape_cast %483 : vector<8x128xf32> to vector<1x1x8x128xf32>
    tpu.vector_store %arg6[%c0_438, %c0_439, %c0_440, %c0_441], %486 {strides = array<i32>} : memref<1x1x8x128xf32, #tpu.memory_space<vmem>>, vector<1x1x8x128xf32>,
    return
  }
  func.func @transform_0(%arg0: i32, %arg1: i32) -> (i32, i32, i32, i32, i32) {
    %c0_i32 = arith.constant 0 : i32
    %c0_i32_0 = arith.constant 0 : i32
    %c0_i32_1 = arith.constant 0 : i32
    %c0_i32_2 = arith.constant 0 : i32
    return %arg0, %arg1, %c0_i32, %c0_i32_0, %c0_i32_1 : i32, i32, i32, i32, i32
  }
  func.func @transform_1(%arg0: i32, %arg1: i32) -> (i32, i32, i32, i32, i32) {
    %c0_i32 = arith.constant 0 : i32
    %c0_i32_0 = arith.constant 0 : i32
    %c0_i32_1 = arith.constant 0 : i32
    %c0_i32_2 = arith.constant 0 : i32
    return %arg0, %arg1, %c0_i32, %c0_i32_0, %c0_i32_1 : i32, i32, i32, i32, i32
  }
  func.func @transform_2(%arg0: i32, %arg1: i32) -> (i32, i32, i32) {
    %c0_i32 = arith.constant 0 : i32
    %c0_i32_0 = arith.constant 0 : i32
    %c0_i32_1 = arith.constant 0 : i32
    %c0_i32_2 = arith.constant 0 : i32
    return %c0_i32, %c0_i32_0, %c0_i32_1 : i32, i32, i32
  }
  func.func @transform_3(%arg0: i32, %arg1: i32) -> (i32, i32, i32) {
    %c0_i32 = arith.constant 0 : i32
    %c0_i32_0 = arith.constant 0 : i32
    %c0_i32_1 = arith.constant 0 : i32
    %c0_i32_2 = arith.constant 0 : i32
    return %c0_i32, %c0_i32_0, %c0_i32_1 : i32, i32, i32
  }
  func.func @transform_4(%arg0: i32, %arg1: i32) -> (i32, i32, i32, i32) {
    %c0_i32 = arith.constant 0 : i32
    %c0_i32_0 = arith.constant 0 : i32
    %c0_i32_1 = arith.constant 0 : i32
    return %arg0, %arg1, %c0_i32, %c0_i32_0 : i32, i32, i32, i32
  }
}

</mosaic_0001>

<llo_original>
// kernel: tpu_custom_call.1
$region0: #{tpu_custom_call.1}
  #allocation0 [shape = 'u32[]', space=smem, size = 0x4, offset = 0x4, fixed_abs, tag = 'smem constant byte address 0x4 - core index']
  #allocation1 [shape = 'u32[144,128]{1,0:T(1,128)}', space=vmem, size = 0x12000, scoped, tag = 'internal scratch']
  %s0 = inlined_call_operand.vmem [shape: f32[2,1,3,48,16], index: 0, kind: input, shape index: {}]
  %s1 = inlined_call_operand.vmem [shape: f32[2,1,3,48,16], index: 1, kind: input, shape index: {}]
  %s2 = inlined_call_operand.vmem [shape: f32[5,16,48], index: 2, kind: input, shape index: {}]
  %s3 = inlined_call_operand.vmem [shape: f32[5,16,16], index: 3, kind: input, shape index: {}]
  %s4 = inlined_call_operand.hbm [shape: f32[2,1,8,128], index: 4, kind: output, shape index: {}]
  %s5 = sld [smem:[#allocation0]]
  $region49: #{tpu_custom_call.1} parent=0
    _
  %s7 = ssub.s32 1, %s5
  %s8 = scalar_select 0, %s7, %s5
  $region1: #{tpu_custom_call.1} parent=0
    #allocation2 [shape = 'u8[8192]{0}', space=vmem, size = 0x2000, scoped, tag = 'output window, operand 0']
    #allocation3 [shape = 's32[2]{0}', space=sflag, size = 0x8, scoped, tag = 'scoped memory for tpu_custom_call.1']
    %9 = vsyncpa [#allocation3], 0
    %s10 = scalar_lea.sflag [#allocation3], 1
    %11 = vsyncpa %s10, 0
    loop: start=0, step=1, limit=4
    $region2: #{tpu_custom_call.1} parent=1 // loop_pre_header
      _
    $region3: #{tpu_custom_call.1} parent=1 // loop_header
      %s13 = sphi 0, %s17
      %p14 = scmp.ge.s32.totalorder %s13, 4
      %s20 = sphi 0, %s32
      %s21 = sphi 0, %s28
      %s22 = sphi 0, %s20
      %s23 = sphi 0, %s21
      %s24 = sphi 0, %s22
      %s25 = sphi 0, %s23
      %s37 = sphi 0, %s39
      %s40 = sphi 0, %s37
      %s41 = sphi 0, %s40
      %s57 = sphi 0, %s41
      %s65 = sphi 0, %s67
      %s68 = sphi 0, %s65
      %s69 = sphi 0, %s68
      %s85 = sphi 0, %s69
      %s89 = sphi 0, %s89
      %s91 = sphi 0, %s89
      %s92 = sphi 0, %s91
      %s106 = sphi 0, %s92
      %s110 = sphi 0, %s110
      %s112 = sphi 0, %s110
      %s113 = sphi 0, %s112
      %s127 = sphi 0, %s113
      %s135 = sphi 0, %s137
      %s138 = sphi 0, %s135
      %s139 = sphi 0, %s138
      %s155 = sphi 0, %s139
    $region4: #{tpu_custom_call.1} parent=1 // loop_header_branch
      %16 = sbr.rel (%p14) target = $region8
    $region5: #{tpu_custom_call.1} parent=1 // loop_body
      %s18 = ssub.s32 %s13, 1
      %s19 = ssub.s32 %s13, 2
      %s26 = sadd.s32 1, %s21
      %p27 = scmp.ge.s32.totalorder %s26, 1
      %s28 = scalar_select %p27, 0, %s26
      %s29 = sadd.s32 1, %s20
      %s30 = scalar_select %p27, %s29, %s20
      %p31 = scmp.ge.s32.totalorder %s30, 2
      %s32 = scalar_select %p31, 0, %s30
      %s33 = ssub.s32 %s20, %s32
      %s34 = ssub.s32 %s21, %s28
      %s35 = sor.u32 %s33, %s34
      %p36 = scmp.eq.s32.totalorder %s35, 0
      %s38 = sadd.s32 %s37, 1
      %s39 = scalar_select %p36, %s37, %s38
      %p42 = pneg %p36
      %p43 = scmp.eq.s32.totalorder %s13, 1
      %p44 = por %p42, %p43
      %p45 = scmp.ne.s32.totalorder %s37, %s40
      %p46 = scmp.eq.s32.totalorder %s13, 0
      %p47 = por %p45, %p46
      %p48 = scmp.ne.s32.totalorder %s37, %s40
      %p49 = scmp.eq.s32.totalorder %s18, 1
      %p50 = por %p48, %p49
      %p51 = scmp.ne.s32.totalorder %s40, %s41
      %p52 = scmp.eq.s32.totalorder %s18, 0
      %p53 = por %p51, %p52
      %p54 = scmp.ne.s32.totalorder %s40, %s41
      %p55 = scmp.eq.s32.totalorder %s19, 1
      %p56 = por %p54, %p55
      %p58 = scmp.ne.s32.totalorder %s41, %s57
      %p59 = scmp.eq.s32.totalorder %s19, 0
      %p60 = por %p58, %p59
      %s61 = ssub.s32 %s20, %s32
      %s62 = ssub.s32 %s21, %s28
      %s63 = sor.u32 %s61, %s62
      %p64 = scmp.eq.s32.totalorder %s63, 0
      %s66 = sadd.s32 %s65, 1
      %s67 = scalar_select %p64, %s65, %s66
      %p70 = pneg %p64
      %p71 = scmp.eq.s32.totalorder %s13, 1
      %p72 = por %p70, %p71
      %p73 = scmp.ne.s32.totalorder %s65, %s68
      %p74 = scmp.eq.s32.totalorder %s13, 0
      %p75 = por %p73, %p74
      %p76 = scmp.ne.s32.totalorder %s65, %s68
      %p77 = scmp.eq.s32.totalorder %s18, 1
      %p78 = por %p76, %p77
      %p79 = scmp.ne.s32.totalorder %s68, %s69
      %p80 = scmp.eq.s32.totalorder %s18, 0
      %p81 = por %p79, %p80
      %p82 = scmp.ne.s32.totalorder %s68, %s69
      %p83 = scmp.eq.s32.totalorder %s19, 1
      %p84 = por %p82, %p83
      %p86 = scmp.ne.s32.totalorder %s69, %s85
      %p87 = scmp.eq.s32.totalorder %s19, 0
      %p88 = por %p86, %p87
      %s90 = sadd.s32 %s89, 1
      %p93 = scmp.eq.s32.totalorder %s13, 1
      %p94 = scmp.ne.s32.totalorder %s89, %s91
      %p95 = scmp.eq.s32.totalorder %s13, 0
      %p96 = por %p94, %p95
      %p97 = scmp.ne.s32.totalorder %s89, %s91
      %p98 = scmp.eq.s32.totalorder %s18, 1
      %p99 = por %p97, %p98
      %p100 = scmp.ne.s32.totalorder %s91, %s92
      %p101 = scmp.eq.s32.totalorder %s18, 0
      %p102 = por %p100, %p101
      %p103 = scmp.ne.s32.totalorder %s91, %s92
      %p104 = scmp.eq.s32.totalorder %s19, 1
      %p105 = por %p103, %p104
      %p107 = scmp.ne.s32.totalorder %s92, %s106
      %p108 = scmp.eq.s32.totalorder %s19, 0
      %p109 = por %p107, %p108
      %s111 = sadd.s32 %s110, 1
      %p114 = scmp.eq.s32.totalorder %s13, 1
      %p115 = scmp.ne.s32.totalorder %s110, %s112
      %p116 = scmp.eq.s32.totalorder %s13, 0
      %p117 = por %p115, %p116
      %p118 = scmp.ne.s32.totalorder %s110, %s112
      %p119 = scmp.eq.s32.totalorder %s18, 1
      %p120 = por %p118, %p119
      %p121 = scmp.ne.s32.totalorder %s112, %s113
      %p122 = scmp.eq.s32.totalorder %s18, 0
      %p123 = por %p121, %p122
      %p124 = scmp.ne.s32.totalorder %s112, %s113
      %p125 = scmp.eq.s32.totalorder %s19, 1
      %p126 = por %p124, %p125
      %p128 = scmp.ne.s32.totalorder %s113, %s127
      %p129 = scmp.eq.s32.totalorder %s19, 0
      %p130 = por %p128, %p129
      %s131 = ssub.s32 %s20, %s32
      %s132 = ssub.s32 %s21, %s28
      %s133 = sor.u32 %s131, %s132
      %p134 = scmp.eq.s32.totalorder %s133, 0
      %s136 = sadd.s32 %s135, 1
      %s137 = scalar_select %p134, %s135, %s136
      %p140 = pneg %p134
      %p141 = scmp.eq.s32.totalorder %s13, 1
      %p142 = por %p140, %p141
      %p143 = scmp.ne.s32.totalorder %s135, %s138
      %p144 = scmp.eq.s32.totalorder %s13, 0
      %p145 = por %p143, %p144
      %p146 = scmp.ne.s32.totalorder %s135, %s138
      %p147 = scmp.eq.s32.totalorder %s18, 1
      %p148 = por %p146, %p147
      %p149 = scmp.ne.s32.totalorder %s138, %s139
      %p150 = scmp.eq.s32.totalorder %s18, 0
      %p151 = por %p149, %p150
      %p152 = scmp.ne.s32.totalorder %s138, %s139
      %p153 = scmp.eq.s32.totalorder %s19, 1
      %p154 = por %p152, %p153
      %p156 = scmp.ne.s32.totalorder %s139, %s155
      %p157 = scmp.eq.s32.totalorder %s19, 0
      %p158 = por %p156, %p157
      %p159 = scmp.le.s32.totalorder 1, %s13
      %p160 = scmp.lt.s32.totalorder %s13, 3
      %p161 = pnand %p159, %p160
      %p162 = pneg %p161
      // Predicated region
      $region9: #{tpu_custom_call.1} parent=5 // pred_check
        _
      $region10: #{tpu_custom_call.1} parent=5 // pred_check_branch
        %164 = sbr.rel (%p161) target = $region12
      $region11: #{tpu_custom_call.1} parent=5 // pred_region
        %s165 = ssub.s32 %s13, 1
        // Predicated region
        $region13: #{tpu_custom_call.1} parent=11 // pred_check
          %p166 = pneg %p102
        $region14: #{tpu_custom_call.1} parent=11 // pred_check_branch
          %168 = sbr.rel (%p166) target = $region16
        $region15: #{tpu_custom_call.1} parent=11 // pred_region
          _
        $region16: #{tpu_custom_call.1} parent=11 // pred_fallthru
          _
        // Predicated region
        $region17: #{tpu_custom_call.1} parent=11 // pred_check
          %p169 = pneg %p123
        $region18: #{tpu_custom_call.1} parent=11 // pred_check_branch
          %171 = sbr.rel (%p169) target = $region20
        $region19: #{tpu_custom_call.1} parent=11 // pred_region
          _
        $region20: #{tpu_custom_call.1} parent=11 // pred_fallthru
          _
      $region12: #{tpu_custom_call.1} parent=5 // pred_fallthru
        _
      %p172 = scmp.lt.s32.totalorder %s13, 2
      // Predicated region
      $region21: #{tpu_custom_call.1} parent=5 // pred_check
        %p173 = pneg %p172
      $region22: #{tpu_custom_call.1} parent=5 // pred_check_branch
        %175 = sbr.rel (%p173) target = $region24
      $region23: #{tpu_custom_call.1} parent=5 // pred_region
        // Predicated region
        $region25: #{tpu_custom_call.1} parent=23 // pred_check
          %p176 = pneg %p47
        $region26: #{tpu_custom_call.1} parent=23 // pred_check_branch
          %178 = sbr.rel (%p176) target = $region28
        $region27: #{tpu_custom_call.1} parent=23 // pred_region
          %p179 = scmp.lt.s32.totalorder %s20, 1
          %s180 = scalar_select %p179, %s20, 1
          %p181 = scmp.lt.s32.totalorder %s21, 0
          %s182 = scalar_select %p181, %s21, 0
          %s183 = smul.addr %s182, 18
          %s184 = smul.addr %s180, 18
          %s185 = sadd.s32 %s183, %s184
          %s186 = smul.addr %s185, 8
          %s187 = scalar_lea.vmem %s0, %s186
        $region28: #{tpu_custom_call.1} parent=23 // pred_fallthru
          _
        // Predicated region
        $region29: #{tpu_custom_call.1} parent=23 // pred_check
          %p188 = pneg %p75
        $region30: #{tpu_custom_call.1} parent=23 // pred_check_branch
          %190 = sbr.rel (%p188) target = $region32
        $region31: #{tpu_custom_call.1} parent=23 // pred_region
          %p191 = scmp.lt.s32.totalorder %s20, 1
          %s192 = scalar_select %p191, %s20, 1
          %p193 = scmp.lt.s32.totalorder %s21, 0
          %s194 = scalar_select %p193, %s21, 0
          %s195 = smul.addr %s194, 18
          %s196 = smul.addr %s192, 18
          %s197 = sadd.s32 %s195, %s196
          %s198 = smul.addr %s197, 8
          %s199 = scalar_lea.vmem %s1, %s198
        $region32: #{tpu_custom_call.1} parent=23 // pred_fallthru
          _
      $region24: #{tpu_custom_call.1} parent=5 // pred_fallthru
        _
      %p200 = scmp.le.s32.totalorder 1, %s13
      %p201 = scmp.lt.s32.totalorder %s13, 3
      %p202 = pnand %p200, %p201
      %p203 = pneg %p202
      // Predicated region
      $region33: #{tpu_custom_call.1} parent=5 // pred_check
        _
      $region34: #{tpu_custom_call.1} parent=5 // pred_check_branch
        %205 = sbr.rel (%p202) target = $region36
      $region35: #{tpu_custom_call.1} parent=5 // pred_region
        %s206 = ssub.s32 %s13, 1
        %p207 = scmp.lt.s32.totalorder %s22, 1
        %s208 = scalar_select %p207, %s22, 1
        %p209 = scmp.lt.s32.totalorder %s23, 0
        %s210 = scalar_select %p209, %s23, 0
        %s211 = smul.addr %s210, 18
        %s212 = smul.addr %s208, 18
        %s213 = sadd.s32 %s211, %s212
        %s214 = smul.addr %s213, 8
        %s215 = scalar_lea.vmem %s0, %s214
        %p216 = pneg %p53
        %p217 = pneg %p50
        %p218 = scmp.lt.s32.totalorder %s22, 1
        %s219 = scalar_select %p218, %s22, 1
        %p220 = scmp.lt.s32.totalorder %s23, 0
        %s221 = scalar_select %p220, %s23, 0
        %s222 = smul.addr %s221, 18
        %s223 = smul.addr %s219, 18
        %s224 = sadd.s32 %s222, %s223
        %s225 = smul.addr %s224, 8
        %s226 = scalar_lea.vmem %s1, %s225
        %p227 = pneg %p81
        %p228 = pneg %p78
        %p229 = pneg %p102
        %p230 = pneg %p99
        %p231 = pneg %p123
        %p232 = pneg %p120
        %p233 = pneg %p151
        %p234 = pneg %p148
        %s235 = sand.u32 %s138, 1
        %s236 = scalar_lea.sflag [#allocation3], %s235
        %s237 = sand.u32 %s138, 1
        %s238 = smul.addr %s237, 8
        %s239 = scalar_lea.vmem [#allocation2], %s238
        %p240 = scmp.lt.s32.totalorder %s22, 1
        %s241 = scalar_select %p240, %s22, 1
        %p242 = scmp.lt.s32.totalorder %s23, 0
        %s243 = scalar_select %p242, %s23, 0
        %s244 = smul.addr %s243, 18
        %s245 = smul.addr %s241, 18
        %s246 = sadd.s32 %s244, %s245
        %s247 = smul.addr %s246, 8
        %s248 = scalar_lea.vmem %s0, %s247
        %p249 = scmp.lt.s32.totalorder %s22, 1
        %s250 = scalar_select %p249, %s22, 1
        %p251 = scmp.lt.s32.totalorder %s23, 0
        %s252 = scalar_select %p251, %s23, 0
        %s253 = smul.addr %s252, 18
        %s254 = smul.addr %s250, 18
        %s255 = sadd.s32 %s253, %s254
        %s256 = smul.addr %s255, 8
        %s257 = scalar_lea.vmem %s1, %s256
        %v258 = vld [vmem:[%s248] sm:$0xff]
        %v259 = vld [vmem:[%s248 + $0x8] sm:$0xff]
        %v260 = vld [vmem:[%s248 + $0x10] sm:$0xff]
        %v261 = vld [vmem:[%s248 + $0x18] sm:$0xff]
        %v262 = vld [vmem:[%s248 + $0x20] sm:$0xff]
        %v263 = vld [vmem:[%s248 + $0x28] sm:$0xff]
        %v264 = vld [vmem:[%s257] sm:$0xff]
        %v265 = vld [vmem:[%s257 + $0x8] sm:$0xff]
        %v266 = vld [vmem:[%s257 + $0x10] sm:$0xff]
        %v267 = vld [vmem:[%s257 + $0x18] sm:$0xff]
        %v268 = vld [vmem:[%s257 + $0x20] sm:$0xff]
        %v269 = vld [vmem:[%s257 + $0x28] sm:$0xff]
        %v270 = vld [vmem:[%s2] sm:$0xff]
        %v271 = vld [vmem:[%s2 + $0x8] sm:$0xff]
        %vm272 = vcmask 392192
        %v274 = vsel %vm272, %v270, 0
        %v277 = vsel %vm272, %v271, 0
        %279 = vmatprep.subr.mxu0 0.0
        %280 = vmatpush1.msra.mxu0 %v258
        %281 = vmatprep.subr.mxu0 0.0
        %282 = vmatpush1.msra.mxu0 %v259
        %283 = vmatprep.subr.mxu0 0.0
        %284 = vmatpush1.msra.mxu0 %v260
        %285 = vmatprep.subr.mxu0 0.0
        %286 = vmatpush1.msra.mxu0 %v261
        %287 = vmatprep.subr.mxu0 0.0
        %288 = vmatpush1.msra.mxu0 %v262
        %289 = vmatprep.subr.mxu0 0.0
        %290 = vmatpush1.msra.mxu0 %v263
        %291 = vmatprep.subr.mxu0 0.0
        %292 = vmatpush1.msra.mxu0 0.0
        %293 = vmatprep.subr.mxu0 0.0
        %294 = vmatpush1.msra.mxu0 0.0
        %295 = vmatprep.subr.mxu0 0.0
        %296 = vmatpush1.msra.mxu0 0.0
        %297 = vmatprep.subr.mxu0 0.0
        %298 = vmatpush1.msra.mxu0 0.0
        %299 = vmatprep.subr.mxu0 0.0
        %300 = vmatpush1.msra.mxu0 0.0
        %301 = vmatprep.subr.mxu0 0.0
        %302 = vmatpush1.msra.mxu0 0.0
        %303 = vmatprep.subr.mxu0 0.0
        %304 = vmatpush1.msra.mxu0 0.0
        %305 = vmatprep.subr.mxu0 0.0
        %306 = vmatpush1.msra.mxu0 0.0
        %307 = vmatprep.subr.mxu0 0.0
        %308 = vmatpush1.msra.mxu0 0.0
        %309 = vmatprep.subr.mxu0 0.0
        %310 = vmatpush1.msra.mxu0 0.0
        %311 = vmatprep.subr.mxu0 0.0
        %312 = vmatpush1.msra.mxu0 0.0
        %313 = vmatprep.subr.mxu0 0.0
        %314 = vmatpush1.msra.mxu0 0.0
        %315 = vmatprep.subr.mxu0 0.0
        %316 = vmatpush1.msra.mxu0 0.0
        %317 = vmatprep.subr.mxu0 0.0
        %318 = vmatpush1.msra.mxu0 0.0
        %319 = vmatprep.subr.mxu0 0.0
        %320 = vmatpush1.msra.mxu0 0.0
        %321 = vmatprep.subr.mxu0 0.0
        %322 = vmatpush1.msra.mxu0 0.0
        %323 = vmatprep.subr.mxu0 0.0
        %324 = vmatpush1.msra.mxu0 0.0
        %325 = vmatprep.subr.mxu0 0.0
        %326 = vmatpush1.msra.mxu0 0.0
        %327 = vmatprep.subr.mxu0 0.0
        %328 = vmatpush1.msra.mxu0 0.0
        %329 = vmatprep.subr.mxu0 0.0
        %330 = vmatpush1.msra.mxu0 0.0
        %331 = vmatprep.subr.mxu0 0.0
        %332 = vmatpush1.msra.mxu0 0.0
        %333 = vmatprep.subr.mxu0 0.0
        %334 = vmatpush1.msra.mxu0 0.0
        %335 = vmatprep.subr.mxu0 0.0
        %336 = vmatpush1.msra.mxu0 0.0
        %337 = vmatprep.subr.mxu0 0.0
        %338 = vmatpush1.msra.mxu0 0.0
        %339 = vmatprep.subr.mxu0 0.0
        %340 = vmatpush1.msra.mxu0 0.0
        %341 = vmatprep.subr.mxu0 0.0
        %342 = vmatpush1.msra.mxu0 0.0
        %343 = vmatprep.mubr.f32.mxu0 0.0
        %344 = vmatmul.mubr.f32.gmra.mrb[0].mxu0 %v274
        %v345 = vpop.f32.mrb[0].mxu0
        %v346 = vadd.f32 0.0, %v345
        %v347 = vpop.f32.mrb[0].mxu0
        %348 = vmatprep.mubr.f32.mxu0 0.0
        %349 = vmatmul.mubr.f32.gmra.mrb[0].mxu0 %v277
        %v350 = vpop.f32.mrb[0].mxu0
        %v351 = vadd.f32 0.0, %v350
        %v352 = vpop.f32.mrb[0].mxu0
        %353 = vdwg.mxu0
        %v354 = vld [vmem:[%s3] sm:$0xff]
        %v355 = vld [vmem:[%s3 + $0x8] sm:$0xff]
        %vm356 = vcmask 130048
        %v358 = vsel %vm356, %v346, 0
        %v361 = vsel %vm356, %v351, 0
        %363 = vmatprep.subr.mxu0 0.0
        %364 = vmatpush1.msra.mxu0 %v354
        %365 = vmatprep.subr.mxu0 0.0
        %366 = vmatpush1.msra.mxu0 %v355
        %367 = vmatprep.subr.mxu0 0.0
        %368 = vmatpush1.msra.mxu0 0.0
        %369 = vmatprep.subr.mxu0 0.0
        %370 = vmatpush1.msra.mxu0 0.0
        %371 = vmatprep.subr.mxu0 0.0
        %372 = vmatpush1.msra.mxu0 0.0
        %373 = vmatprep.subr.mxu0 0.0
        %374 = vmatpush1.msra.mxu0 0.0
        %375 = vmatprep.subr.mxu0 0.0
        %376 = vmatpush1.msra.mxu0 0.0
        %377 = vmatprep.subr.mxu0 0.0
        %378 = vmatpush1.msra.mxu0 0.0
        %379 = vmatprep.subr.mxu0 0.0
        %380 = vmatpush1.msra.mxu0 0.0
        %381 = vmatprep.subr.mxu0 0.0
        %382 = vmatpush1.msra.mxu0 0.0
        %383 = vmatprep.subr.mxu0 0.0
        %384 = vmatpush1.msra.mxu0 0.0
        %385 = vmatprep.subr.mxu0 0.0
        %386 = vmatpush1.msra.mxu0 0.0
        %387 = vmatprep.subr.mxu0 0.0
        %388 = vmatpush1.msra.mxu0 0.0
        %389 = vmatprep.subr.mxu0 0.0
        %390 = vmatpush1.msra.mxu0 0.0
        %391 = vmatprep.subr.mxu0 0.0
        %392 = vmatpush1.msra.mxu0 0.0
        %393 = vmatprep.subr.mxu0 0.0
        %394 = vmatpush1.msra.mxu0 0.0
        %395 = vmatprep.subr.mxu0 0.0
        %396 = vmatpush1.msra.mxu0 0.0
        %397 = vmatprep.subr.mxu0 0.0
        %398 = vmatpush1.msra.mxu0 0.0
        %399 = vmatprep.subr.mxu0 0.0
        %400 = vmatpush1.msra.mxu0 0.0
        %401 = vmatprep.subr.mxu0 0.0
        %402 = vmatpush1.msra.mxu0 0.0
        %403 = vmatprep.subr.mxu0 0.0
        %404 = vmatpush1.msra.mxu0 0.0
        %405 = vmatprep.subr.mxu0 0.0
        %406 = vmatpush1.msra.mxu0 0.0
        %407 = vmatprep.subr.mxu0 0.0
        %408 = vmatpush1.msra.mxu0 0.0
        %409 = vmatprep.subr.mxu0 0.0
        %410 = vmatpush1.msra.mxu0 0.0
        %411 = vmatprep.subr.mxu0 0.0
        %412 = vmatpush1.msra.mxu0 0.0
        %413 = vmatprep.subr.mxu0 0.0
        %414 = vmatpush1.msra.mxu0 0.0
        %415 = vmatprep.subr.mxu0 0.0
        %416 = vmatpush1.msra.mxu0 0.0
        %417 = vmatprep.subr.mxu0 0.0
        %418 = vmatpush1.msra.mxu0 0.0
        %419 = vmatprep.subr.mxu0 0.0
        %420 = vmatpush1.msra.mxu0 0.0
        %421 = vmatprep.subr.mxu0 0.0
        %422 = vmatpush1.msra.mxu0 0.0
        %423 = vmatprep.subr.mxu0 0.0
        %424 = vmatpush1.msra.mxu0 0.0
        %425 = vmatprep.subr.mxu0 0.0
        %426 = vmatpush1.msra.mxu0 0.0
        %427 = vmatprep.mubr.f32.mxu0 0.0
        %428 = vmatmul.mubr.f32.gmra.mrb[0].mxu0 %v358
        %v429 = vpop.f32.mrb[0].mxu0
        %v430 = vadd.f32 0.0, %v429
        %v431 = vpop.f32.mrb[0].mxu0
        %432 = vmatprep.mubr.f32.mxu0 0.0
        %433 = vmatmul.mubr.f32.gmra.mrb[0].mxu0 %v361
        %v434 = vpop.f32.mrb[0].mxu0
        %v435 = vadd.f32 0.0, %v434
        %v436 = vpop.f32.mrb[0].mxu0
        %437 = vdwg.mxu0
        %438 = vmatprep.subr.mxu0 0.0
        %439 = vmatpush1.msra.mxu0 %v264
        %440 = vmatprep.subr.mxu0 0.0
        %441 = vmatpush1.msra.mxu0 %v265
        %442 = vmatprep.subr.mxu0 0.0
        %443 = vmatpush1.msra.mxu0 %v266
        %444 = vmatprep.subr.mxu0 0.0
        %445 = vmatpush1.msra.mxu0 %v267
        %446 = vmatprep.subr.mxu0 0.0
        %447 = vmatpush1.msra.mxu0 %v268
        %448 = vmatprep.subr.mxu0 0.0
        %449 = vmatpush1.msra.mxu0 %v269
        %450 = vmatprep.subr.mxu0 0.0
        %451 = vmatpush1.msra.mxu0 0.0
        %452 = vmatprep.subr.mxu0 0.0
        %453 = vmatpush1.msra.mxu0 0.0
        %454 = vmatprep.subr.mxu0 0.0
        %455 = vmatpush1.msra.mxu0 0.0
        %456 = vmatprep.subr.mxu0 0.0
        %457 = vmatpush1.msra.mxu0 0.0
        %458 = vmatprep.subr.mxu0 0.0
        %459 = vmatpush1.msra.mxu0 0.0
        %460 = vmatprep.subr.mxu0 0.0
        %461 = vmatpush1.msra.mxu0 0.0
        %462 = vmatprep.subr.mxu0 0.0
        %463 = vmatpush1.msra.mxu0 0.0
        %464 = vmatprep.subr.mxu0 0.0
        %465 = vmatpush1.msra.mxu0 0.0
        %466 = vmatprep.subr.mxu0 0.0
        %467 = vmatpush1.msra.mxu0 0.0
        %468 = vmatprep.subr.mxu0 0.0
        %469 = vmatpush1.msra.mxu0 0.0
        %470 = vmatprep.subr.mxu0 0.0
        %471 = vmatpush1.msra.mxu0 0.0
        %472 = vmatprep.subr.mxu0 0.0
        %473 = vmatpush1.msra.mxu0 0.0
        %474 = vmatprep.subr.mxu0 0.0
        %475 = vmatpush1.msra.mxu0 0.0
        %476 = vmatprep.subr.mxu0 0.0
        %477 = vmatpush1.msra.mxu0 0.0
        %478 = vmatprep.subr.mxu0 0.0
        %479 = vmatpush1.msra.mxu0 0.0
        %480 = vmatprep.subr.mxu0 0.0
        %481 = vmatpush1.msra.mxu0 0.0
        %482 = vmatprep.subr.mxu0 0.0
        %483 = vmatpush1.msra.mxu0 0.0
        %484 = vmatprep.subr.mxu0 0.0
        %485 = vmatpush1.msra.mxu0 0.0
        %486 = vmatprep.subr.mxu0 0.0
        %487 = vmatpush1.msra.mxu0 0.0
        %488 = vmatprep.subr.mxu0 0.0
        %489 = vmatpush1.msra.mxu0 0.0
        %490 = vmatprep.subr.mxu0 0.0
        %491 = vmatpush1.msra.mxu0 0.0
        %492 = vmatprep.subr.mxu0 0.0
        %493 = vmatpush1.msra.mxu0 0.0
        %494 = vmatprep.subr.mxu0 0.0
        %495 = vmatpush1.msra.mxu0 0.0
        %496 = vmatprep.subr.mxu0 0.0
        %497 = vmatpush1.msra.mxu0 0.0
        %498 = vmatprep.subr.mxu0 0.0
        %499 = vmatpush1.msra.mxu0 0.0
        %500 = vmatprep.subr.mxu0 0.0
        %501 = vmatpush1.msra.mxu0 0.0
        %502 = vmatprep.mubr.f32.mxu0 0.0
        %503 = vmatmul.mubr.f32.gmra.mrb[0].mxu0 %v274
        %v504 = vpop.f32.mrb[0].mxu0
        %v505 = vadd.f32 0.0, %v504
        %v506 = vpop.f32.mrb[0].mxu0
        %507 = vmatprep.mubr.f32.mxu0 0.0
        %508 = vmatmul.mubr.f32.gmra.mrb[0].mxu0 %v277
        %v509 = vpop.f32.mrb[0].mxu0
        %v510 = vadd.f32 0.0, %v509
        %v511 = vpop.f32.mrb[0].mxu0
        %512 = vdwg.mxu0
        %v514 = vsel %vm356, %v505, 0
        %v517 = vsel %vm356, %v510, 0
        %519 = vmatprep.subr.mxu0 0.0
        %520 = vmatpush1.msra.mxu0 %v354
        %521 = vmatprep.subr.mxu0 0.0
        %522 = vmatpush1.msra.mxu0 %v355
        %523 = vmatprep.subr.mxu0 0.0
        %524 = vmatpush1.msra.mxu0 0.0
        %525 = vmatprep.subr.mxu0 0.0
        %526 = vmatpush1.msra.mxu0 0.0
        %527 = vmatprep.subr.mxu0 0.0
        %528 = vmatpush1.msra.mxu0 0.0
        %529 = vmatprep.subr.mxu0 0.0
        %530 = vmatpush1.msra.mxu0 0.0
        %531 = vmatprep.subr.mxu0 0.0
        %532 = vmatpush1.msra.mxu0 0.0
        %533 = vmatprep.subr.mxu0 0.0
        %534 = vmatpush1.msra.mxu0 0.0
        %535 = vmatprep.subr.mxu0 0.0
        %536 = vmatpush1.msra.mxu0 0.0
        %537 = vmatprep.subr.mxu0 0.0
        %538 = vmatpush1.msra.mxu0 0.0
        %539 = vmatprep.subr.mxu0 0.0
        %540 = vmatpush1.msra.mxu0 0.0
        %541 = vmatprep.subr.mxu0 0.0
        %542 = vmatpush1.msra.mxu0 0.0
        %543 = vmatprep.subr.mxu0 0.0
        %544 = vmatpush1.msra.mxu0 0.0
        %545 = vmatprep.subr.mxu0 0.0
        %546 = vmatpush1.msra.mxu0 0.0
        %547 = vmatprep.subr.mxu0 0.0
        %548 = vmatpush1.msra.mxu0 0.0
        %549 = vmatprep.subr.mxu0 0.0
        %550 = vmatpush1.msra.mxu0 0.0
        %551 = vmatprep.subr.mxu0 0.0
        %552 = vmatpush1.msra.mxu0 0.0
        %553 = vmatprep.subr.mxu0 0.0
        %554 = vmatpush1.msra.mxu0 0.0
        %555 = vmatprep.subr.mxu0 0.0
        %556 = vmatpush1.msra.mxu0 0.0
        %557 = vmatprep.subr.mxu0 0.0
        %558 = vmatpush1.msra.mxu0 0.0
        %559 = vmatprep.subr.mxu0 0.0
        %560 = vmatpush1.msra.mxu0 0.0
        %561 = vmatprep.subr.mxu0 0.0
        %562 = vmatpush1.msra.mxu0 0.0
        %563 = vmatprep.subr.mxu0 0.0
        %564 = vmatpush1.msra.mxu0 0.0
        %565 = vmatprep.subr.mxu0 0.0
        %566 = vmatpush1.msra.mxu0 0.0
        %567 = vmatprep.subr.mxu0 0.0
        %568 = vmatpush1.msra.mxu0 0.0
        %569 = vmatprep.subr.mxu0 0.0
        %570 = vmatpush1.msra.mxu0 0.0
        %571 = vmatprep.subr.mxu0 0.0
        %572 = vmatpush1.msra.mxu0 0.0
        %573 = vmatprep.subr.mxu0 0.0
        %574 = vmatpush1.msra.mxu0 0.0
        %575 = vmatprep.subr.mxu0 0.0
        %576 = vmatpush1.msra.mxu0 0.0
        %577 = vmatprep.subr.mxu0 0.0
        %578 = vmatpush1.msra.mxu0 0.0
        %579 = vmatprep.subr.mxu0 0.0
        %580 = vmatpush1.msra.mxu0 0.0
        %581 = vmatprep.subr.mxu0 0.0
        %582 = vmatpush1.msra.mxu0 0.0
        %583 = vmatprep.mubr.f32.mxu0 0.0
        %584 = vmatmul.mubr.f32.gmra.mrb[0].mxu0 %v514
        %v585 = vpop.f32.mrb[0].mxu0
        %v586 = vadd.f32 0.0, %v585
        %v587 = vpop.f32.mrb[0].mxu0
        %588 = vmatprep.mubr.f32.mxu0 0.0
        %589 = vmatmul.mubr.f32.gmra.mrb[0].mxu0 %v517
        %v590 = vpop.f32.mrb[0].mxu0
        %v591 = vadd.f32 0.0, %v590
        %v592 = vpop.f32.mrb[0].mxu0
        %593 = vdwg.mxu0
        %v594 = vmul.f32 %v258, %v258
        %v595 = vmul.f32 %v259, %v259
        %v596 = vmul.f32 %v260, %v260
        %v597 = vmul.f32 %v261, %v261
        %v598 = vmul.f32 %v262, %v262
        %v599 = vmul.f32 %v263, %v263
        %600 = vmatprep.subr.mxu0 0.0
        %601 = vmatpush1.msra.mxu0 %v594
        %602 = vmatprep.subr.mxu0 0.0
        %603 = vmatpush1.msra.mxu0 %v595
        %604 = vmatprep.subr.mxu0 0.0
        %605 = vmatpush1.msra.mxu0 %v596
        %606 = vmatprep.subr.mxu0 0.0
        %607 = vmatpush1.msra.mxu0 %v597
        %608 = vmatprep.subr.mxu0 0.0
        %609 = vmatpush1.msra.mxu0 %v598
        %610 = vmatprep.subr.mxu0 0.0
        %611 = vmatpush1.msra.mxu0 %v599
        %612 = vmatprep.subr.mxu0 0.0
        %613 = vmatpush1.msra.mxu0 0.0
        %614 = vmatprep.subr.mxu0 0.0
        %615 = vmatpush1.msra.mxu0 0.0
        %616 = vmatprep.subr.mxu0 0.0
        %617 = vmatpush1.msra.mxu0 0.0
        %618 = vmatprep.subr.mxu0 0.0
        %619 = vmatpush1.msra.mxu0 0.0
        %620 = vmatprep.subr.mxu0 0.0
        %621 = vmatpush1.msra.mxu0 0.0
        %622 = vmatprep.subr.mxu0 0.0
        %623 = vmatpush1.msra.mxu0 0.0
        %624 = vmatprep.subr.mxu0 0.0
        %625 = vmatpush1.msra.mxu0 0.0
        %626 = vmatprep.subr.mxu0 0.0
        %627 = vmatpush1.msra.mxu0 0.0
        %628 = vmatprep.subr.mxu0 0.0
        %629 = vmatpush1.msra.mxu0 0.0
        %630 = vmatprep.subr.mxu0 0.0
        %631 = vmatpush1.msra.mxu0 0.0
        %632 = vmatprep.subr.mxu0 0.0
        %633 = vmatpush1.msra.mxu0 0.0
        %634 = vmatprep.subr.mxu0 0.0
        %635 = vmatpush1.msra.mxu0 0.0
        %636 = vmatprep.subr.mxu0 0.0
        %637 = vmatpush1.msra.mxu0 0.0
        %638 = vmatprep.subr.mxu0 0.0
        %639 = vmatpush1.msra.mxu0 0.0
        %640 = vmatprep.subr.mxu0 0.0
        %641 = vmatpush1.msra.mxu0 0.0
        %642 = vmatprep.subr.mxu0 0.0
        %643 = vmatpush1.msra.mxu0 0.0
        %644 = vmatprep.subr.mxu0 0.0
        %645 = vmatpush1.msra.mxu0 0.0
        %646 = vmatprep.subr.mxu0 0.0
        %647 = vmatpush1.msra.mxu0 0.0
        %648 = vmatprep.subr.mxu0 0.0
        %649 = vmatpush1.msra.mxu0 0.0
        %650 = vmatprep.subr.mxu0 0.0
        %651 = vmatpush1.msra.mxu0 0.0
        %652 = vmatprep.subr.mxu0 0.0
        %653 = vmatpush1.msra.mxu0 0.0
        %654 = vmatprep.subr.mxu0 0.0
        %655 = vmatpush1.msra.mxu0 0.0
        %656 = vmatprep.subr.mxu0 0.0
        %657 = vmatpush1.msra.mxu0 0.0
        %658 = vmatprep.subr.mxu0 0.0
        %659 = vmatpush1.msra.mxu0 0.0
        %660 = vmatprep.subr.mxu0 0.0
        %661 = vmatpush1.msra.mxu0 0.0
        %662 = vmatprep.subr.mxu0 0.0
        %663 = vmatpush1.msra.mxu0 0.0
        %664 = vmatprep.mubr.f32.mxu0 0.0
        %665 = vmatmul.mubr.f32.gmra.mrb[0].mxu0 %v274
        %v666 = vpop.f32.mrb[0].mxu0
        %v667 = vadd.f32 0.0, %v666
        %v668 = vpop.f32.mrb[0].mxu0
        %669 = vmatprep.mubr.f32.mxu0 0.0
        %670 = vmatmul.mubr.f32.gmra.mrb[0].mxu0 %v277
        %v671 = vpop.f32.mrb[0].mxu0
        %v672 = vadd.f32 0.0, %v671
        %v673 = vpop.f32.mrb[0].mxu0
        %674 = vdwg.mxu0
        %v676 = vsel %vm356, %v667, 0
        %v679 = vsel %vm356, %v672, 0
        %681 = vmatprep.subr.mxu0 0.0
        %682 = vmatpush1.msra.mxu0 %v354
        %683 = vmatprep.subr.mxu0 0.0
        %684 = vmatpush1.msra.mxu0 %v355
        %685 = vmatprep.subr.mxu0 0.0
        %686 = vmatpush1.msra.mxu0 0.0
        %687 = vmatprep.subr.mxu0 0.0
        %688 = vmatpush1.msra.mxu0 0.0
        %689 = vmatprep.subr.mxu0 0.0
        %690 = vmatpush1.msra.mxu0 0.0
        %691 = vmatprep.subr.mxu0 0.0
        %692 = vmatpush1.msra.mxu0 0.0
        %693 = vmatprep.subr.mxu0 0.0
        %694 = vmatpush1.msra.mxu0 0.0
        %695 = vmatprep.subr.mxu0 0.0
        %696 = vmatpush1.msra.mxu0 0.0
        %697 = vmatprep.subr.mxu0 0.0
        %698 = vmatpush1.msra.mxu0 0.0
        %699 = vmatprep.subr.mxu0 0.0
        %700 = vmatpush1.msra.mxu0 0.0
        %701 = vmatprep.subr.mxu0 0.0
        %702 = vmatpush1.msra.mxu0 0.0
        %703 = vmatprep.subr.mxu0 0.0
        %704 = vmatpush1.msra.mxu0 0.0
        %705 = vmatprep.subr.mxu0 0.0
        %706 = vmatpush1.msra.mxu0 0.0
        %707 = vmatprep.subr.mxu0 0.0
        %708 = vmatpush1.msra.mxu0 0.0
        %709 = vmatprep.subr.mxu0 0.0
        %710 = vmatpush1.msra.mxu0 0.0
        %711 = vmatprep.subr.mxu0 0.0
        %712 = vmatpush1.msra.mxu0 0.0
        %713 = vmatprep.subr.mxu0 0.0
        %714 = vmatpush1.msra.mxu0 0.0
        %715 = vmatprep.subr.mxu0 0.0
        %716 = vmatpush1.msra.mxu0 0.0
        %717 = vmatprep.subr.mxu0 0.0
        %718 = vmatpush1.msra.mxu0 0.0
        %719 = vmatprep.subr.mxu0 0.0
        %720 = vmatpush1.msra.mxu0 0.0
        %721 = vmatprep.subr.mxu0 0.0
        %722 = vmatpush1.msra.mxu0 0.0
        %723 = vmatprep.subr.mxu0 0.0
        %724 = vmatpush1.msra.mxu0 0.0
        %725 = vmatprep.subr.mxu0 0.0
        %726 = vmatpush1.msra.mxu0 0.0
        %727 = vmatprep.subr.mxu0 0.0
        %728 = vmatpush1.msra.mxu0 0.0
        %729 = vmatprep.subr.mxu0 0.0
        %730 = vmatpush1.msra.mxu0 0.0
        %731 = vmatprep.subr.mxu0 0.0
        %732 = vmatpush1.msra.mxu0 0.0
        %733 = vmatprep.subr.mxu0 0.0
        %734 = vmatpush1.msra.mxu0 0.0
        %735 = vmatprep.subr.mxu0 0.0
        %736 = vmatpush1.msra.mxu0 0.0
        %737 = vmatprep.subr.mxu0 0.0
        %738 = vmatpush1.msra.mxu0 0.0
        %739 = vmatprep.subr.mxu0 0.0
        %740 = vmatpush1.msra.mxu0 0.0
        %741 = vmatprep.subr.mxu0 0.0
        %742 = vmatpush1.msra.mxu0 0.0
        %743 = vmatprep.subr.mxu0 0.0
        %744 = vmatpush1.msra.mxu0 0.0
        %745 = vmatprep.mubr.f32.mxu0 0.0
        %746 = vmatmul.mubr.f32.gmra.mrb[0].mxu0 %v676
        %v747 = vpop.f32.mrb[0].mxu0
        %v748 = vadd.f32 0.0, %v747
        %v749 = vpop.f32.mrb[0].mxu0
        %750 = vmatprep.mubr.f32.mxu0 0.0
        %751 = vmatmul.mubr.f32.gmra.mrb[0].mxu0 %v679
        %v752 = vpop.f32.mrb[0].mxu0
        %v753 = vadd.f32 0.0, %v752
        %v754 = vpop.f32.mrb[0].mxu0
        %755 = vdwg.mxu0
        %v756 = vmul.f32 %v264, %v264
        %v757 = vmul.f32 %v265, %v265
        %v758 = vmul.f32 %v266, %v266
        %v759 = vmul.f32 %v267, %v267
        %v760 = vmul.f32 %v268, %v268
        %v761 = vmul.f32 %v269, %v269
        %762 = vmatprep.subr.mxu0 0.0
        %763 = vmatpush1.msra.mxu0 %v756
        %764 = vmatprep.subr.mxu0 0.0
        %765 = vmatpush1.msra.mxu0 %v757
        %766 = vmatprep.subr.mxu0 0.0
        %767 = vmatpush1.msra.mxu0 %v758
        %768 = vmatprep.subr.mxu0 0.0
        %769 = vmatpush1.msra.mxu0 %v759
        %770 = vmatprep.subr.mxu0 0.0
        %771 = vmatpush1.msra.mxu0 %v760
        %772 = vmatprep.subr.mxu0 0.0
        %773 = vmatpush1.msra.mxu0 %v761
        %774 = vmatprep.subr.mxu0 0.0
        %775 = vmatpush1.msra.mxu0 0.0
        %776 = vmatprep.subr.mxu0 0.0
        %777 = vmatpush1.msra.mxu0 0.0
        %778 = vmatprep.subr.mxu0 0.0
        %779 = vmatpush1.msra.mxu0 0.0
        %780 = vmatprep.subr.mxu0 0.0
        %781 = vmatpush1.msra.mxu0 0.0
        %782 = vmatprep.subr.mxu0 0.0
        %783 = vmatpush1.msra.mxu0 0.0
        %784 = vmatprep.subr.mxu0 0.0
        %785 = vmatpush1.msra.mxu0 0.0
        %786 = vmatprep.subr.mxu0 0.0
        %787 = vmatpush1.msra.mxu0 0.0
        %788 = vmatprep.subr.mxu0 0.0
        %789 = vmatpush1.msra.mxu0 0.0
        %790 = vmatprep.subr.mxu0 0.0
        %791 = vmatpush1.msra.mxu0 0.0
        %792 = vmatprep.subr.mxu0 0.0
        %793 = vmatpush1.msra.mxu0 0.0
        %794 = vmatprep.subr.mxu0 0.0
        %795 = vmatpush1.msra.mxu0 0.0
        %796 = vmatprep.subr.mxu0 0.0
        %797 = vmatpush1.msra.mxu0 0.0
        %798 = vmatprep.subr.mxu0 0.0
        %799 = vmatpush1.msra.mxu0 0.0
        %800 = vmatprep.subr.mxu0 0.0
        %801 = vmatpush1.msra.mxu0 0.0
        %802 = vmatprep.subr.mxu0 0.0
        %803 = vmatpush1.msra.mxu0 0.0
        %804 = vmatprep.subr.mxu0 0.0
        %805 = vmatpush1.msra.mxu0 0.0
        %806 = vmatprep.subr.mxu0 0.0
        %807 = vmatpush1.msra.mxu0 0.0
        %808 = vmatprep.subr.mxu0 0.0
        %809 = vmatpush1.msra.mxu0 0.0
        %810 = vmatprep.subr.mxu0 0.0
        %811 = vmatpush1.msra.mxu0 0.0
        %812 = vmatprep.subr.mxu0 0.0
        %813 = vmatpush1.msra.mxu0 0.0
        %814 = vmatprep.subr.mxu0 0.0
        %815 = vmatpush1.msra.mxu0 0.0
        %816 = vmatprep.subr.mxu0 0.0
        %817 = vmatpush1.msra.mxu0 0.0
        %818 = vmatprep.subr.mxu0 0.0
        %819 = vmatpush1.msra.mxu0 0.0
        %820 = vmatprep.subr.mxu0 0.0
        %821 = vmatpush1.msra.mxu0 0.0
        %822 = vmatprep.subr.mxu0 0.0
        %823 = vmatpush1.msra.mxu0 0.0
        %824 = vmatprep.subr.mxu0 0.0
        %825 = vmatpush1.msra.mxu0 0.0
        %826 = vmatprep.mubr.f32.mxu0 0.0
        %827 = vmatmul.mubr.f32.gmra.mrb[0].mxu0 %v274
        %v828 = vpop.f32.mrb[0].mxu0
        %v829 = vadd.f32 0.0, %v828
        %v830 = vpop.f32.mrb[0].mxu0
        %831 = vmatprep.mubr.f32.mxu0 0.0
        %832 = vmatmul.mubr.f32.gmra.mrb[0].mxu0 %v277
        %v833 = vpop.f32.mrb[0].mxu0
        %v834 = vadd.f32 0.0, %v833
        %v835 = vpop.f32.mrb[0].mxu0
        %836 = vdwg.mxu0
        %v838 = vsel %vm356, %v829, 0
        %v841 = vsel %vm356, %v834, 0
        %843 = vmatprep.subr.mxu0 0.0
        %844 = vmatpush1.msra.mxu0 %v354
        %845 = vmatprep.subr.mxu0 0.0
        %846 = vmatpush1.msra.mxu0 %v355
        %847 = vmatprep.subr.mxu0 0.0
        %848 = vmatpush1.msra.mxu0 0.0
        %849 = vmatprep.subr.mxu0 0.0
        %850 = vmatpush1.msra.mxu0 0.0
        %851 = vmatprep.subr.mxu0 0.0
        %852 = vmatpush1.msra.mxu0 0.0
        %853 = vmatprep.subr.mxu0 0.0
        %854 = vmatpush1.msra.mxu0 0.0
        %855 = vmatprep.subr.mxu0 0.0
        %856 = vmatpush1.msra.mxu0 0.0
        %857 = vmatprep.subr.mxu0 0.0
        %858 = vmatpush1.msra.mxu0 0.0
        %859 = vmatprep.subr.mxu0 0.0
        %860 = vmatpush1.msra.mxu0 0.0
        %861 = vmatprep.subr.mxu0 0.0
        %862 = vmatpush1.msra.mxu0 0.0
        %863 = vmatprep.subr.mxu0 0.0
        %864 = vmatpush1.msra.mxu0 0.0
        %865 = vmatprep.subr.mxu0 0.0
        %866 = vmatpush1.msra.mxu0 0.0
        %867 = vmatprep.subr.mxu0 0.0
        %868 = vmatpush1.msra.mxu0 0.0
        %869 = vmatprep.subr.mxu0 0.0
        %870 = vmatpush1.msra.mxu0 0.0
        %871 = vmatprep.subr.mxu0 0.0
        %872 = vmatpush1.msra.mxu0 0.0
        %873 = vmatprep.subr.mxu0 0.0
        %874 = vmatpush1.msra.mxu0 0.0
        %875 = vmatprep.subr.mxu0 0.0
        %876 = vmatpush1.msra.mxu0 0.0
        %877 = vmatprep.subr.mxu0 0.0
        %878 = vmatpush1.msra.mxu0 0.0
        %879 = vmatprep.subr.mxu0 0.0
        %880 = vmatpush1.msra.mxu0 0.0
        %881 = vmatprep.subr.mxu0 0.0
        %882 = vmatpush1.msra.mxu0 0.0
        %883 = vmatprep.subr.mxu0 0.0
        %884 = vmatpush1.msra.mxu0 0.0
        %885 = vmatprep.subr.mxu0 0.0
        %886 = vmatpush1.msra.mxu0 0.0
        %887 = vmatprep.subr.mxu0 0.0
        %888 = vmatpush1.msra.mxu0 0.0
        %889 = vmatprep.subr.mxu0 0.0
        %890 = vmatpush1.msra.mxu0 0.0
        %891 = vmatprep.subr.mxu0 0.0
        %892 = vmatpush1.msra.mxu0 0.0
        %893 = vmatprep.subr.mxu0 0.0
        %894 = vmatpush1.msra.mxu0 0.0
        %895 = vmatprep.subr.mxu0 0.0
        %896 = vmatpush1.msra.mxu0 0.0
        %897 = vmatprep.subr.mxu0 0.0
        %898 = vmatpush1.msra.mxu0 0.0
        %899 = vmatprep.subr.mxu0 0.0
        %900 = vmatpush1.msra.mxu0 0.0
        %901 = vmatprep.subr.mxu0 0.0
        %902 = vmatpush1.msra.mxu0 0.0
        %903 = vmatprep.subr.mxu0 0.0
        %904 = vmatpush1.msra.mxu0 0.0
        %905 = vmatprep.subr.mxu0 0.0
        %906 = vmatpush1.msra.mxu0 0.0
        %907 = vmatprep.mubr.f32.mxu0 0.0
        %908 = vmatmul.mubr.f32.gmra.mrb[0].mxu0 %v838
        %v909 = vpop.f32.mrb[0].mxu0
        %v910 = vadd.f32 0.0, %v909
        %v911 = vpop.f32.mrb[0].mxu0
        %912 = vmatprep.mubr.f32.mxu0 0.0
        %913 = vmatmul.mubr.f32.gmra.mrb[0].mxu0 %v841
        %v914 = vpop.f32.mrb[0].mxu0
        %v915 = vadd.f32 0.0, %v914
        %v916 = vpop.f32.mrb[0].mxu0
        %917 = vdwg.mxu0
        %v918 = vmul.f32 %v258, %v264
        %v919 = vmul.f32 %v259, %v265
        %v920 = vmul.f32 %v260, %v266
        %v921 = vmul.f32 %v261, %v267
        %v922 = vmul.f32 %v262, %v268
        %v923 = vmul.f32 %v263, %v269
        %924 = vmatprep.subr.mxu0 0.0
        %925 = vmatpush1.msra.mxu0 %v918
        %926 = vmatprep.subr.mxu0 0.0
        %927 = vmatpush1.msra.mxu0 %v919
        %928 = vmatprep.subr.mxu0 0.0
        %929 = vmatpush1.msra.mxu0 %v920
        %930 = vmatprep.subr.mxu0 0.0
        %931 = vmatpush1.msra.mxu0 %v921
        %932 = vmatprep.subr.mxu0 0.0
        %933 = vmatpush1.msra.mxu0 %v922
        %934 = vmatprep.subr.mxu0 0.0
        %935 = vmatpush1.msra.mxu0 %v923
        %936 = vmatprep.subr.mxu0 0.0
        %937 = vmatpush1.msra.mxu0 0.0
        %938 = vmatprep.subr.mxu0 0.0
        %939 = vmatpush1.msra.mxu0 0.0
        %940 = vmatprep.subr.mxu0 0.0
        %941 = vmatpush1.msra.mxu0 0.0
        %942 = vmatprep.subr.mxu0 0.0
        %943 = vmatpush1.msra.mxu0 0.0
        %944 = vmatprep.subr.mxu0 0.0
        %945 = vmatpush1.msra.mxu0 0.0
        %946 = vmatprep.subr.mxu0 0.0
        %947 = vmatpush1.msra.mxu0 0.0
        %948 = vmatprep.subr.mxu0 0.0
        %949 = vmatpush1.msra.mxu0 0.0
        %950 = vmatprep.subr.mxu0 0.0
        %951 = vmatpush1.msra.mxu0 0.0
        %952 = vmatprep.subr.mxu0 0.0
        %953 = vmatpush1.msra.mxu0 0.0
        %954 = vmatprep.subr.mxu0 0.0
        %955 = vmatpush1.msra.mxu0 0.0
        %956 = vmatprep.subr.mxu0 0.0
        %957 = vmatpush1.msra.mxu0 0.0
        %958 = vmatprep.subr.mxu0 0.0
        %959 = vmatpush1.msra.mxu0 0.0
        %960 = vmatprep.subr.mxu0 0.0
        %961 = vmatpush1.msra.mxu0 0.0
        %962 = vmatprep.subr.mxu0 0.0
        %963 = vmatpush1.msra.mxu0 0.0
        %964 = vmatprep.subr.mxu0 0.0
        %965 = vmatpush1.msra.mxu0 0.0
        %966 = vmatprep.subr.mxu0 0.0
        %967 = vmatpush1.msra.mxu0 0.0
        %968 = vmatprep.subr.mxu0 0.0
        %969 = vmatpush1.msra.mxu0 0.0
        %970 = vmatprep.subr.mxu0 0.0
        %971 = vmatpush1.msra.mxu0 0.0
        %972 = vmatprep.subr.mxu0 0.0
        %973 = vmatpush1.msra.mxu0 0.0
        %974 = vmatprep.subr.mxu0 0.0
        %975 = vmatpush1.msra.mxu0 0.0
        %976 = vmatprep.subr.mxu0 0.0
        %977 = vmatpush1.msra.mxu0 0.0
        %978 = vmatprep.subr.mxu0 0.0
        %979 = vmatpush1.msra.mxu0 0.0
        %980 = vmatprep.subr.mxu0 0.0
        %981 = vmatpush1.msra.mxu0 0.0
        %982 = vmatprep.subr.mxu0 0.0
        %983 = vmatpush1.msra.mxu0 0.0
        %984 = vmatprep.subr.mxu0 0.0
        %985 = vmatpush1.msra.mxu0 0.0
        %986 = vmatprep.subr.mxu0 0.0
        %987 = vmatpush1.msra.mxu0 0.0
        %988 = vmatprep.mubr.f32.mxu0 0.0
        %989 = vmatmul.mubr.f32.gmra.mrb[0].mxu0 %v274
        %v990 = vpop.f32.mrb[0].mxu0
        %v991 = vadd.f32 0.0, %v990
        %v992 = vpop.f32.mrb[0].mxu0
        %993 = vmatprep.mubr.f32.mxu0 0.0
        %994 = vmatmul.mubr.f32.gmra.mrb[0].mxu0 %v277
        %v995 = vpop.f32.mrb[0].mxu0
        %v996 = vadd.f32 0.0, %v995
        %v997 = vpop.f32.mrb[0].mxu0
        %998 = vdwg.mxu0
        %v1000 = vsel %vm356, %v991, 0
        %v1003 = vsel %vm356, %v996, 0
        %1005 = vmatprep.subr.mxu0 0.0
        %1006 = vmatpush1.msra.mxu0 %v354
        %1007 = vmatprep.subr.mxu0 0.0
        %1008 = vmatpush1.msra.mxu0 %v355
        %1009 = vmatprep.subr.mxu0 0.0
        %1010 = vmatpush1.msra.mxu0 0.0
        %1011 = vmatprep.subr.mxu0 0.0
        %1012 = vmatpush1.msra.mxu0 0.0
        %1013 = vmatprep.subr.mxu0 0.0
        %1014 = vmatpush1.msra.mxu0 0.0
        %1015 = vmatprep.subr.mxu0 0.0
        %1016 = vmatpush1.msra.mxu0 0.0
        %1017 = vmatprep.subr.mxu0 0.0
        %1018 = vmatpush1.msra.mxu0 0.0
        %1019 = vmatprep.subr.mxu0 0.0
        %1020 = vmatpush1.msra.mxu0 0.0
        %1021 = vmatprep.subr.mxu0 0.0
        %1022 = vmatpush1.msra.mxu0 0.0
        %1023 = vmatprep.subr.mxu0 0.0
        %1024 = vmatpush1.msra.mxu0 0.0
        %1025 = vmatprep.subr.mxu0 0.0
        %1026 = vmatpush1.msra.mxu0 0.0
        %1027 = vmatprep.subr.mxu0 0.0
        %1028 = vmatpush1.msra.mxu0 0.0
        %1029 = vmatprep.subr.mxu0 0.0
        %1030 = vmatpush1.msra.mxu0 0.0
        %1031 = vmatprep.subr.mxu0 0.0
        %1032 = vmatpush1.msra.mxu0 0.0
        %1033 = vmatprep.subr.mxu0 0.0
        %1034 = vmatpush1.msra.mxu0 0.0
        %1035 = vmatprep.subr.mxu0 0.0
        %1036 = vmatpush1.msra.mxu0 0.0
        %1037 = vmatprep.subr.mxu0 0.0
        %1038 = vmatpush1.msra.mxu0 0.0
        %1039 = vmatprep.subr.mxu0 0.0
        %1040 = vmatpush1.msra.mxu0 0.0
        %1041 = vmatprep.subr.mxu0 0.0
        %1042 = vmatpush1.msra.mxu0 0.0
        %1043 = vmatprep.subr.mxu0 0.0
        %1044 = vmatpush1.msra.mxu0 0.0
        %1045 = vmatprep.subr.mxu0 0.0
        %1046 = vmatpush1.msra.mxu0 0.0
        %1047 = vmatprep.subr.mxu0 0.0
        %1048 = vmatpush1.msra.mxu0 0.0
        %1049 = vmatprep.subr.mxu0 0.0
        %1050 = vmatpush1.msra.mxu0 0.0
        %1051 = vmatprep.subr.mxu0 0.0
        %1052 = vmatpush1.msra.mxu0 0.0
        %1053 = vmatprep.subr.mxu0 0.0
        %1054 = vmatpush1.msra.mxu0 0.0
        %1055 = vmatprep.subr.mxu0 0.0
        %1056 = vmatpush1.msra.mxu0 0.0
        %1057 = vmatprep.subr.mxu0 0.0
        %1058 = vmatpush1.msra.mxu0 0.0
        %1059 = vmatprep.subr.mxu0 0.0
        %1060 = vmatpush1.msra.mxu0 0.0
        %1061 = vmatprep.subr.mxu0 0.0
        %1062 = vmatpush1.msra.mxu0 0.0
        %1063 = vmatprep.subr.mxu0 0.0
        %1064 = vmatpush1.msra.mxu0 0.0
        %1065 = vmatprep.subr.mxu0 0.0
        %1066 = vmatpush1.msra.mxu0 0.0
        %1067 = vmatprep.subr.mxu0 0.0
        %1068 = vmatpush1.msra.mxu0 0.0
        %1069 = vmatprep.mubr.f32.mxu0 0.0
        %1070 = vmatmul.mubr.f32.gmra.mrb[0].mxu0 %v1000
        %v1071 = vpop.f32.mrb[0].mxu0
        %v1072 = vadd.f32 0.0, %v1071
        %v1073 = vpop.f32.mrb[0].mxu0
        %1074 = vmatprep.mubr.f32.mxu0 0.0
        %1075 = vmatmul.mubr.f32.gmra.mrb[0].mxu0 %v1003
        %v1076 = vpop.f32.mrb[0].mxu0
        %v1077 = vadd.f32 0.0, %v1076
        %v1078 = vpop.f32.mrb[0].mxu0
        %1079 = vdwg.mxu0
        %v1080 = vmul.f32 %v430, %v430
        %v1081 = vmul.f32 %v435, %v435
        %v1082 = vmul.f32 %v586, %v586
        %v1083 = vmul.f32 %v591, %v591
        %v1084 = vmul.f32 %v430, %v586
        %v1085 = vmul.f32 %v435, %v591
        %v1086 = vsub.f32 %v1072, %v1084
        %v1087 = vsub.f32 %v1077, %v1085
        %v1088 = vmul.f32 %v1086, 2.0
        %v1089 = vmul.f32 %v1087, 2.0
        %v1090 = vadd.f32 %v1088, 0.0009
        %v1091 = vadd.f32 %v1089, 0.0009
        %v1092 = vsub.f32 %v748, %v1080
        %v1093 = vsub.f32 %v753, %v1081
        %v1094 = vsub.f32 %v910, %v1082
        %v1095 = vsub.f32 %v915, %v1083
        %v1096 = vadd.f32 %v1092, %v1094
        %v1097 = vadd.f32 %v1093, %v1095
        %v1098 = vadd.f32 %v1096, 0.0009
        %v1099 = vadd.f32 %v1097, 0.0009
        %v1100 = vmul.f32 %v1090, %v1090
        %v1101 = vmul.f32 %v1091, %v1091
        %v1102 = vmul.f32 %v1098, %v1098
        %v1103 = vmul.f32 %v1099, %v1099
        %v1104 = vmul.f32 %v1100, %v1090
        %v1105 = vmul.f32 %v1101, %v1091
        %v1106 = vmul.f32 %v1102, %v1098
        %v1107 = vmul.f32 %v1103, %v1099
        %v1108 = vrcp.pop %v1106
        %v1109 = vrcp.pop %v1107
        %v1110 = vmul.f32 %v1106, %v1108
        %v1111 = vmul.f32 %v1107, %v1109
        %v1112 = vsub.f32 2.0, %v1110
        %v1113 = vsub.f32 2.0, %v1111
        %v1114 = vmul.f32 %v1108, %v1112
        %v1115 = vmul.f32 %v1109, %v1113
        %v1116 = vmul.f32 %v1104, %v1114
        %v1117 = vmul.f32 %v1105, %v1115
        %s1118 = scalar_lea.vmem %s2, 16
        %v1119 = vld [vmem:[%s1118] sm:$0xff]
        %v1120 = vld [vmem:[%s1118 + $0x8] sm:$0xff]
        %v1122 = vsel %vm272, %v1119, 0
        %v1125 = vsel %vm272, %v1120, 0
        %1127 = vmatprep.subr.mxu0 0.0
        %1128 = vmatpush1.msra.mxu0 %v258
        %1129 = vmatprep.subr.mxu0 0.0
        %1130 = vmatpush1.msra.mxu0 %v259
        %1131 = vmatprep.subr.mxu0 0.0
        %1132 = vmatpush1.msra.mxu0 %v260
        %1133 = vmatprep.subr.mxu0 0.0
        %1134 = vmatpush1.msra.mxu0 %v261
        %1135 = vmatprep.subr.mxu0 0.0
        %1136 = vmatpush1.msra.mxu0 %v262
        %1137 = vmatprep.subr.mxu0 0.0
        %1138 = vmatpush1.msra.mxu0 %v263
        %1139 = vmatprep.subr.mxu0 0.0
        %1140 = vmatpush1.msra.mxu0 0.0
        %1141 = vmatprep.subr.mxu0 0.0
        %1142 = vmatpush1.msra.mxu0 0.0
        %1143 = vmatprep.subr.mxu0 0.0
        %1144 = vmatpush1.msra.mxu0 0.0
        %1145 = vmatprep.subr.mxu0 0.0
        %1146 = vmatpush1.msra.mxu0 0.0
        %1147 = vmatprep.subr.mxu0 0.0
        %1148 = vmatpush1.msra.mxu0 0.0
        %1149 = vmatprep.subr.mxu0 0.0
        %1150 = vmatpush1.msra.mxu0 0.0
        %1151 = vmatprep.subr.mxu0 0.0
        %1152 = vmatpush1.msra.mxu0 0.0
        %1153 = vmatprep.subr.mxu0 0.0
        %1154 = vmatpush1.msra.mxu0 0.0
        %1155 = vmatprep.subr.mxu0 0.0
        %1156 = vmatpush1.msra.mxu0 0.0
        %1157 = vmatprep.subr.mxu0 0.0
        %1158 = vmatpush1.msra.mxu0 0.0
        %1159 = vmatprep.subr.mxu0 0.0
        %1160 = vmatpush1.msra.mxu0 0.0
        %1161 = vmatprep.subr.mxu0 0.0
        %1162 = vmatpush1.msra.mxu0 0.0
        %1163 = vmatprep.subr.mxu0 0.0
        %1164 = vmatpush1.msra.mxu0 0.0
        %1165 = vmatprep.subr.mxu0 0.0
        %1166 = vmatpush1.msra.mxu0 0.0
        %1167 = vmatprep.subr.mxu0 0.0
        %1168 = vmatpush1.msra.mxu0 0.0
        %1169 = vmatprep.subr.mxu0 0.0
        %1170 = vmatpush1.msra.mxu0 0.0
        %1171 = vmatprep.subr.mxu0 0.0
        %1172 = vmatpush1.msra.mxu0 0.0
        %1173 = vmatprep.subr.mxu0 0.0
        %1174 = vmatpush1.msra.mxu0 0.0
        %1175 = vmatprep.subr.mxu0 0.0
        %1176 = vmatpush1.msra.mxu0 0.0
        %1177 = vmatprep.subr.mxu0 0.0
        %1178 = vmatpush1.msra.mxu0 0.0
        %1179 = vmatprep.subr.mxu0 0.0
        %1180 = vmatpush1.msra.mxu0 0.0
        %1181 = vmatprep.subr.mxu0 0.0
        %1182 = vmatpush1.msra.mxu0 0.0
        %1183 = vmatprep.subr.mxu0 0.0
        %1184 = vmatpush1.msra.mxu0 0.0
        %1185 = vmatprep.subr.mxu0 0.0
        %1186 = vmatpush1.msra.mxu0 0.0
        %1187 = vmatprep.subr.mxu0 0.0
        %1188 = vmatpush1.msra.mxu0 0.0
        %1189 = vmatprep.subr.mxu0 0.0
        %1190 = vmatpush1.msra.mxu0 0.0
        %1191 = vmatprep.mubr.f32.mxu0 0.0
        %1192 = vmatmul.mubr.f32.gmra.mrb[0].mxu0 %v1122
        %v1193 = vpop.f32.mrb[0].mxu0
        %v1194 = vadd.f32 0.0, %v1193
        %v1195 = vpop.f32.mrb[0].mxu0
        %1196 = vmatprep.mubr.f32.mxu0 0.0
        %1197 = vmatmul.mubr.f32.gmra.mrb[0].mxu0 %v1125
        %v1198 = vpop.f32.mrb[0].mxu0
        %v1199 = vadd.f32 0.0, %v1198
        %v1200 = vpop.f32.mrb[0].mxu0
        %1201 = vdwg.mxu0
        %s1202 = scalar_lea.vmem %s3, 16
        %v1203 = vld [vmem:[%s1202] sm:$0xff]
        %v1204 = vld [vmem:[%s1202 + $0x8] sm:$0xff]
        %v1206 = vsel %vm356, %v1194, 0
        %v1209 = vsel %vm356, %v1199, 0
        %1211 = vmatprep.subr.mxu0 0.0
        %1212 = vmatpush1.msra.mxu0 %v1203
        %1213 = vmatprep.subr.mxu0 0.0
        %1214 = vmatpush1.msra.mxu0 %v1204
        %1215 = vmatprep.subr.mxu0 0.0
        %1216 = vmatpush1.msra.mxu0 0.0
        %1217 = vmatprep.subr.mxu0 0.0
        %1218 = vmatpush1.msra.mxu0 0.0
        %1219 = vmatprep.subr.mxu0 0.0
        %1220 = vmatpush1.msra.mxu0 0.0
        %1221 = vmatprep.subr.mxu0 0.0
        %1222 = vmatpush1.msra.mxu0 0.0
        %1223 = vmatprep.subr.mxu0 0.0
        %1224 = vmatpush1.msra.mxu0 0.0
        %1225 = vmatprep.subr.mxu0 0.0
        %1226 = vmatpush1.msra.mxu0 0.0
        %1227 = vmatprep.subr.mxu0 0.0
        %1228 = vmatpush1.msra.mxu0 0.0
        %1229 = vmatprep.subr.mxu0 0.0
        %1230 = vmatpush1.msra.mxu0 0.0
        %1231 = vmatprep.subr.mxu0 0.0
        %1232 = vmatpush1.msra.mxu0 0.0
        %1233 = vmatprep.subr.mxu0 0.0
        %1234 = vmatpush1.msra.mxu0 0.0
        %1235 = vmatprep.subr.mxu0 0.0
        %1236 = vmatpush1.msra.mxu0 0.0
        %1237 = vmatprep.subr.mxu0 0.0
        %1238 = vmatpush1.msra.mxu0 0.0
        %1239 = vmatprep.subr.mxu0 0.0
        %1240 = vmatpush1.msra.mxu0 0.0
        %1241 = vmatprep.subr.mxu0 0.0
        %1242 = vmatpush1.msra.mxu0 0.0
        %1243 = vmatprep.subr.mxu0 0.0
        %1244 = vmatpush1.msra.mxu0 0.0
        %1245 = vmatprep.subr.mxu0 0.0
        %1246 = vmatpush1.msra.mxu0 0.0
        %1247 = vmatprep.subr.mxu0 0.0
        %1248 = vmatpush1.msra.mxu0 0.0
        %1249 = vmatprep.subr.mxu0 0.0
        %1250 = vmatpush1.msra.mxu0 0.0
        %1251 = vmatprep.subr.mxu0 0.0
        %1252 = vmatpush1.msra.mxu0 0.0
        %1253 = vmatprep.subr.mxu0 0.0
        %1254 = vmatpush1.msra.mxu0 0.0
        %1255 = vmatprep.subr.mxu0 0.0
        %1256 = vmatpush1.msra.mxu0 0.0
        %1257 = vmatprep.subr.mxu0 0.0
        %1258 = vmatpush1.msra.mxu0 0.0
        %1259 = vmatprep.subr.mxu0 0.0
        %1260 = vmatpush1.msra.mxu0 0.0
        %1261 = vmatprep.subr.mxu0 0.0
        %1262 = vmatpush1.msra.mxu0 0.0
        %1263 = vmatprep.subr.mxu0 0.0
        %1264 = vmatpush1.msra.mxu0 0.0
        %1265 = vmatprep.subr.mxu0 0.0
        %1266 = vmatpush1.msra.mxu0 0.0
        %1267 = vmatprep.subr.mxu0 0.0
        %1268 = vmatpush1.msra.mxu0 0.0
        %1269 = vmatprep.subr.mxu0 0.0
        %1270 = vmatpush1.msra.mxu0 0.0
        %1271 = vmatprep.subr.mxu0 0.0
        %1272 = vmatpush1.msra.mxu0 0.0
        %1273 = vmatprep.subr.mxu0 0.0
        %1274 = vmatpush1.msra.mxu0 0.0
        %1275 = vmatprep.mubr.f32.mxu0 0.0
        %1276 = vmatmul.mubr.f32.gmra.mrb[0].mxu0 %v1206
        %v1277 = vpop.f32.mrb[0].mxu0
        %v1278 = vadd.f32 0.0, %v1277
        %v1279 = vpop.f32.mrb[0].mxu0
        %1280 = vmatprep.mubr.f32.mxu0 0.0
        %1281 = vmatmul.mubr.f32.gmra.mrb[0].mxu0 %v1209
        %v1282 = vpop.f32.mrb[0].mxu0
        %v1283 = vadd.f32 0.0, %v1282
        %v1284 = vpop.f32.mrb[0].mxu0
        %1285 = vdwg.mxu0
        %1286 = vmatprep.subr.mxu0 0.0
        %1287 = vmatpush1.msra.mxu0 %v264
        %1288 = vmatprep.subr.mxu0 0.0
        %1289 = vmatpush1.msra.mxu0 %v265
        %1290 = vmatprep.subr.mxu0 0.0
        %1291 = vmatpush1.msra.mxu0 %v266
        %1292 = vmatprep.subr.mxu0 0.0
        %1293 = vmatpush1.msra.mxu0 %v267
        %1294 = vmatprep.subr.mxu0 0.0
        %1295 = vmatpush1.msra.mxu0 %v268
        %1296 = vmatprep.subr.mxu0 0.0
        %1297 = vmatpush1.msra.mxu0 %v269
        %1298 = vmatprep.subr.mxu0 0.0
        %1299 = vmatpush1.msra.mxu0 0.0
        %1300 = vmatprep.subr.mxu0 0.0
        %1301 = vmatpush1.msra.mxu0 0.0
        %1302 = vmatprep.subr.mxu0 0.0
        %1303 = vmatpush1.msra.mxu0 0.0
        %1304 = vmatprep.subr.mxu0 0.0
        %1305 = vmatpush1.msra.mxu0 0.0
        %1306 = vmatprep.subr.mxu0 0.0
        %1307 = vmatpush1.msra.mxu0 0.0
        %1308 = vmatprep.subr.mxu0 0.0
        %1309 = vmatpush1.msra.mxu0 0.0
        %1310 = vmatprep.subr.mxu0 0.0
        %1311 = vmatpush1.msra.mxu0 0.0
        %1312 = vmatprep.subr.mxu0 0.0
        %1313 = vmatpush1.msra.mxu0 0.0
        %1314 = vmatprep.subr.mxu0 0.0
        %1315 = vmatpush1.msra.mxu0 0.0
        %1316 = vmatprep.subr.mxu0 0.0
        %1317 = vmatpush1.msra.mxu0 0.0
        %1318 = vmatprep.subr.mxu0 0.0
        %1319 = vmatpush1.msra.mxu0 0.0
        %1320 = vmatprep.subr.mxu0 0.0
        %1321 = vmatpush1.msra.mxu0 0.0
        %1322 = vmatprep.subr.mxu0 0.0
        %1323 = vmatpush1.msra.mxu0 0.0
        %1324 = vmatprep.subr.mxu0 0.0
        %1325 = vmatpush1.msra.mxu0 0.0
        %1326 = vmatprep.subr.mxu0 0.0
        %1327 = vmatpush1.msra.mxu0 0.0
        %1328 = vmatprep.subr.mxu0 0.0
        %1329 = vmatpush1.msra.mxu0 0.0
        %1330 = vmatprep.subr.mxu0 0.0
        %1331 = vmatpush1.msra.mxu0 0.0
        %1332 = vmatprep.subr.mxu0 0.0
        %1333 = vmatpush1.msra.mxu0 0.0
        %1334 = vmatprep.subr.mxu0 0.0
        %1335 = vmatpush1.msra.mxu0 0.0
        %1336 = vmatprep.subr.mxu0 0.0
        %1337 = vmatpush1.msra.mxu0 0.0
        %1338 = vmatprep.subr.mxu0 0.0
        %1339 = vmatpush1.msra.mxu0 0.0
        %1340 = vmatprep.subr.mxu0 0.0
        %1341 = vmatpush1.msra.mxu0 0.0
        %1342 = vmatprep.subr.mxu0 0.0
        %1343 = vmatpush1.msra.mxu0 0.0
        %1344 = vmatprep.subr.mxu0 0.0
        %1345 = vmatpush1.msra.mxu0 0.0
        %1346 = vmatprep.subr.mxu0 0.0
        %1347 = vmatpush1.msra.mxu0 0.0
        %1348 = vmatprep.subr.mxu0 0.0
        %1349 = vmatpush1.msra.mxu0 0.0
        %1350 = vmatprep.mubr.f32.mxu0 0.0
        %1351 = vmatmul.mubr.f32.gmra.mrb[0].mxu0 %v1122
        %v1352 = vpop.f32.mrb[0].mxu0
        %v1353 = vadd.f32 0.0, %v1352
        %v1354 = vpop.f32.mrb[0].mxu0
        %1355 = vmatprep.mubr.f32.mxu0 0.0
        %1356 = vmatmul.mubr.f32.gmra.mrb[0].mxu0 %v1125
        %v1357 = vpop.f32.mrb[0].mxu0
        %v1358 = vadd.f32 0.0, %v1357
        %v1359 = vpop.f32.mrb[0].mxu0
        %1360 = vdwg.mxu0
        %v1362 = vsel %vm356, %v1353, 0
        %v1365 = vsel %vm356, %v1358, 0
        %1367 = vmatprep.subr.mxu0 0.0
        %1368 = vmatpush1.msra.mxu0 %v1203
        %1369 = vmatprep.subr.mxu0 0.0
        %1370 = vmatpush1.msra.mxu0 %v1204
        %1371 = vmatprep.subr.mxu0 0.0
        %1372 = vmatpush1.msra.mxu0 0.0
        %1373 = vmatprep.subr.mxu0 0.0
        %1374 = vmatpush1.msra.mxu0 0.0
        %1375 = vmatprep.subr.mxu0 0.0
        %1376 = vmatpush1.msra.mxu0 0.0
        %1377 = vmatprep.subr.mxu0 0.0
        %1378 = vmatpush1.msra.mxu0 0.0
        %1379 = vmatprep.subr.mxu0 0.0
        %1380 = vmatpush1.msra.mxu0 0.0
        %1381 = vmatprep.subr.mxu0 0.0
        %1382 = vmatpush1.msra.mxu0 0.0
        %1383 = vmatprep.subr.mxu0 0.0
        %1384 = vmatpush1.msra.mxu0 0.0
        %1385 = vmatprep.subr.mxu0 0.0
        %1386 = vmatpush1.msra.mxu0 0.0
        %1387 = vmatprep.subr.mxu0 0.0
        %1388 = vmatpush1.msra.mxu0 0.0
        %1389 = vmatprep.subr.mxu0 0.0
        %1390 = vmatpush1.msra.mxu0 0.0
        %1391 = vmatprep.subr.mxu0 0.0
        %1392 = vmatpush1.msra.mxu0 0.0
        %1393 = vmatprep.subr.mxu0 0.0
        %1394 = vmatpush1.msra.mxu0 0.0
        %1395 = vmatprep.subr.mxu0 0.0
        %1396 = vmatpush1.msra.mxu0 0.0
        %1397 = vmatprep.subr.mxu0 0.0
        %1398 = vmatpush1.msra.mxu0 0.0
        %1399 = vmatprep.subr.mxu0 0.0
        %1400 = vmatpush1.msra.mxu0 0.0
        %1401 = vmatprep.subr.mxu0 0.0
        %1402 = vmatpush1.msra.mxu0 0.0
        %1403 = vmatprep.subr.mxu0 0.0
        %1404 = vmatpush1.msra.mxu0 0.0
        %1405 = vmatprep.subr.mxu0 0.0
        %1406 = vmatpush1.msra.mxu0 0.0
        %1407 = vmatprep.subr.mxu0 0.0
        %1408 = vmatpush1.msra.mxu0 0.0
        %1409 = vmatprep.subr.mxu0 0.0
        %1410 = vmatpush1.msra.mxu0 0.0
        %1411 = vmatprep.subr.mxu0 0.0
        %1412 = vmatpush1.msra.mxu0 0.0
        %1413 = vmatprep.subr.mxu0 0.0
        %1414 = vmatpush1.msra.mxu0 0.0
        %1415 = vmatprep.subr.mxu0 0.0
        %1416 = vmatpush1.msra.mxu0 0.0
        %1417 = vmatprep.subr.mxu0 0.0
        %1418 = vmatpush1.msra.mxu0 0.0
        %1419 = vmatprep.subr.mxu0 0.0
        %1420 = vmatpush1.msra.mxu0 0.0
        %1421 = vmatprep.subr.mxu0 0.0
        %1422 = vmatpush1.msra.mxu0 0.0
        %1423 = vmatprep.subr.mxu0 0.0
        %1424 = vmatpush1.msra.mxu0 0.0
        %1425 = vmatprep.subr.mxu0 0.0
        %1426 = vmatpush1.msra.mxu0 0.0
        %1427 = vmatprep.subr.mxu0 0.0
        %1428 = vmatpush1.msra.mxu0 0.0
        %1429 = vmatprep.subr.mxu0 0.0
        %1430 = vmatpush1.msra.mxu0 0.0
        %1431 = vmatprep.mubr.f32.mxu0 0.0
        %1432 = vmatmul.mubr.f32.gmra.mrb[0].mxu0 %v1362
        %v1433 = vpop.f32.mrb[0].mxu0
        %v1434 = vadd.f32 0.0, %v1433
        %v1435 = vpop.f32.mrb[0].mxu0
        %1436 = vmatprep.mubr.f32.mxu0 0.0
        %1437 = vmatmul.mubr.f32.gmra.mrb[0].mxu0 %v1365
        %v1438 = vpop.f32.mrb[0].mxu0
        %v1439 = vadd.f32 0.0, %v1438
        %v1440 = vpop.f32.mrb[0].mxu0
        %1441 = vdwg.mxu0
        %1442 = vmatprep.subr.mxu0 0.0
        %1443 = vmatpush1.msra.mxu0 %v594
        %1444 = vmatprep.subr.mxu0 0.0
        %1445 = vmatpush1.msra.mxu0 %v595
        %1446 = vmatprep.subr.mxu0 0.0
        %1447 = vmatpush1.msra.mxu0 %v596
        %1448 = vmatprep.subr.mxu0 0.0
        %1449 = vmatpush1.msra.mxu0 %v597
        %1450 = vmatprep.subr.mxu0 0.0
        %1451 = vmatpush1.msra.mxu0 %v598
        %1452 = vmatprep.subr.mxu0 0.0
        %1453 = vmatpush1.msra.mxu0 %v599
        %1454 = vmatprep.subr.mxu0 0.0
        %1455 = vmatpush1.msra.mxu0 0.0
        %1456 = vmatprep.subr.mxu0 0.0
        %1457 = vmatpush1.msra.mxu0 0.0
        %1458 = vmatprep.subr.mxu0 0.0
        %1459 = vmatpush1.msra.mxu0 0.0
        %1460 = vmatprep.subr.mxu0 0.0
        %1461 = vmatpush1.msra.mxu0 0.0
        %1462 = vmatprep.subr.mxu0 0.0
        %1463 = vmatpush1.msra.mxu0 0.0
        %1464 = vmatprep.subr.mxu0 0.0
        %1465 = vmatpush1.msra.mxu0 0.0
        %1466 = vmatprep.subr.mxu0 0.0
        %1467 = vmatpush1.msra.mxu0 0.0
        %1468 = vmatprep.subr.mxu0 0.0
        %1469 = vmatpush1.msra.mxu0 0.0
        %1470 = vmatprep.subr.mxu0 0.0
        %1471 = vmatpush1.msra.mxu0 0.0
        %1472 = vmatprep.subr.mxu0 0.0
        %1473 = vmatpush1.msra.mxu0 0.0
        %1474 = vmatprep.subr.mxu0 0.0
        %1475 = vmatpush1.msra.mxu0 0.0
        %1476 = vmatprep.subr.mxu0 0.0
        %1477 = vmatpush1.msra.mxu0 0.0
        %1478 = vmatprep.subr.mxu0 0.0
        %1479 = vmatpush1.msra.mxu0 0.0
        %1480 = vmatprep.subr.mxu0 0.0
        %1481 = vmatpush1.msra.mxu0 0.0
        %1482 = vmatprep.subr.mxu0 0.0
        %1483 = vmatpush1.msra.mxu0 0.0
        %1484 = vmatprep.subr.mxu0 0.0
        %1485 = vmatpush1.msra.mxu0 0.0
        %1486 = vmatprep.subr.mxu0 0.0
        %1487 = vmatpush1.msra.mxu0 0.0
        %1488 = vmatprep.subr.mxu0 0.0
        %1489 = vmatpush1.msra.mxu0 0.0
        %1490 = vmatprep.subr.mxu0 0.0
        %1491 = vmatpush1.msra.mxu0 0.0
        %1492 = vmatprep.subr.mxu0 0.0
        %1493 = vmatpush1.msra.mxu0 0.0
        %1494 = vmatprep.subr.mxu0 0.0
        %1495 = vmatpush1.msra.mxu0 0.0
        %1496 = vmatprep.subr.mxu0 0.0
        %1497 = vmatpush1.msra.mxu0 0.0
        %1498 = vmatprep.subr.mxu0 0.0
        %1499 = vmatpush1.msra.mxu0 0.0
        %1500 = vmatprep.subr.mxu0 0.0
        %1501 = vmatpush1.msra.mxu0 0.0
        %1502 = vmatprep.subr.mxu0 0.0
        %1503 = vmatpush1.msra.mxu0 0.0
        %1504 = vmatprep.subr.mxu0 0.0
        %1505 = vmatpush1.msra.mxu0 0.0
        %1506 = vmatprep.mubr.f32.mxu0 0.0
        %1507 = vmatmul.mubr.f32.gmra.mrb[0].mxu0 %v1122
        %v1508 = vpop.f32.mrb[0].mxu0
        %v1509 = vadd.f32 0.0, %v1508
        %v1510 = vpop.f32.mrb[0].mxu0
        %1511 = vmatprep.mubr.f32.mxu0 0.0
        %1512 = vmatmul.mubr.f32.gmra.mrb[0].mxu0 %v1125
        %v1513 = vpop.f32.mrb[0].mxu0
        %v1514 = vadd.f32 0.0, %v1513
        %v1515 = vpop.f32.mrb[0].mxu0
        %1516 = vdwg.mxu0
        %v1518 = vsel %vm356, %v1509, 0
        %v1521 = vsel %vm356, %v1514, 0
        %1523 = vmatprep.subr.mxu0 0.0
        %1524 = vmatpush1.msra.mxu0 %v1203
        %1525 = vmatprep.subr.mxu0 0.0
        %1526 = vmatpush1.msra.mxu0 %v1204
        %1527 = vmatprep.subr.mxu0 0.0
        %1528 = vmatpush1.msra.mxu0 0.0
        %1529 = vmatprep.subr.mxu0 0.0
        %1530 = vmatpush1.msra.mxu0 0.0
        %1531 = vmatprep.subr.mxu0 0.0
        %1532 = vmatpush1.msra.mxu0 0.0
        %1533 = vmatprep.subr.mxu0 0.0
        %1534 = vmatpush1.msra.mxu0 0.0
        %1535 = vmatprep.subr.mxu0 0.0
        %1536 = vmatpush1.msra.mxu0 0.0
        %1537 = vmatprep.subr.mxu0 0.0
        %1538 = vmatpush1.msra.mxu0 0.0
        %1539 = vmatprep.subr.mxu0 0.0
        %1540 = vmatpush1.msra.mxu0 0.0
        %1541 = vmatprep.subr.mxu0 0.0
        %1542 = vmatpush1.msra.mxu0 0.0
        %1543 = vmatprep.subr.mxu0 0.0
        %1544 = vmatpush1.msra.mxu0 0.0
        %1545 = vmatprep.subr.mxu0 0.0
        %1546 = vmatpush1.msra.mxu0 0.0
        %1547 = vmatprep.subr.mxu0 0.0
        %1548 = vmatpush1.msra.mxu0 0.0
        %1549 = vmatprep.subr.mxu0 0.0
        %1550 = vmatpush1.msra.mxu0 0.0
        %1551 = vmatprep.subr.mxu0 0.0
        %1552 = vmatpush1.msra.mxu0 0.0
        %1553 = vmatprep.subr.mxu0 0.0
        %1554 = vmatpush1.msra.mxu0 0.0
        %1555 = vmatprep.subr.mxu0 0.0
        %1556 = vmatpush1.msra.mxu0 0.0
        %1557 = vmatprep.subr.mxu0 0.0
        %1558 = vmatpush1.msra.mxu0 0.0
        %1559 = vmatprep.subr.mxu0 0.0
        %1560 = vmatpush1.msra.mxu0 0.0
        %1561 = vmatprep.subr.mxu0 0.0
        %1562 = vmatpush1.msra.mxu0 0.0
        %1563 = vmatprep.subr.mxu0 0.0
        %1564 = vmatpush1.msra.mxu0 0.0
        %1565 = vmatprep.subr.mxu0 0.0
        %1566 = vmatpush1.msra.mxu0 0.0
        %1567 = vmatprep.subr.mxu0 0.0
        %1568 = vmatpush1.msra.mxu0 0.0
        %1569 = vmatprep.subr.mxu0 0.0
        %1570 = vmatpush1.msra.mxu0 0.0
        %1571 = vmatprep.subr.mxu0 0.0
        %1572 = vmatpush1.msra.mxu0 0.0
        %1573 = vmatprep.subr.mxu0 0.0
        %1574 = vmatpush1.msra.mxu0 0.0
        %1575 = vmatprep.subr.mxu0 0.0
        %1576 = vmatpush1.msra.mxu0 0.0
        %1577 = vmatprep.subr.mxu0 0.0
        %1578 = vmatpush1.msra.mxu0 0.0
        %1579 = vmatprep.subr.mxu0 0.0
        %1580 = vmatpush1.msra.mxu0 0.0
        %1581 = vmatprep.subr.mxu0 0.0
        %1582 = vmatpush1.msra.mxu0 0.0
        %1583 = vmatprep.subr.mxu0 0.0
        %1584 = vmatpush1.msra.mxu0 0.0
        %1585 = vmatprep.subr.mxu0 0.0
        %1586 = vmatpush1.msra.mxu0 0.0
        %1587 = vmatprep.mubr.f32.mxu0 0.0
        %1588 = vmatmul.mubr.f32.gmra.mrb[0].mxu0 %v1518
        %v1589 = vpop.f32.mrb[0].mxu0
        %v1590 = vadd.f32 0.0, %v1589
        %v1591 = vpop.f32.mrb[0].mxu0
        %1592 = vmatprep.mubr.f32.mxu0 0.0
        %1593 = vmatmul.mubr.f32.gmra.mrb[0].mxu0 %v1521
        %v1594 = vpop.f32.mrb[0].mxu0
        %v1595 = vadd.f32 0.0, %v1594
        %v1596 = vpop.f32.mrb[0].mxu0
        %1597 = vdwg.mxu0
        %1598 = vmatprep.subr.mxu0 0.0
        %1599 = vmatpush1.msra.mxu0 %v756
        %1600 = vmatprep.subr.mxu0 0.0
        %1601 = vmatpush1.msra.mxu0 %v757
        %1602 = vmatprep.subr.mxu0 0.0
        %1603 = vmatpush1.msra.mxu0 %v758
        %1604 = vmatprep.subr.mxu0 0.0
        %1605 = vmatpush1.msra.mxu0 %v759
        %1606 = vmatprep.subr.mxu0 0.0
        %1607 = vmatpush1.msra.mxu0 %v760
        %1608 = vmatprep.subr.mxu0 0.0
        %1609 = vmatpush1.msra.mxu0 %v761
        %1610 = vmatprep.subr.mxu0 0.0
        %1611 = vmatpush1.msra.mxu0 0.0
        %1612 = vmatprep.subr.mxu0 0.0
        %1613 = vmatpush1.msra.mxu0 0.0
        %1614 = vmatprep.subr.mxu0 0.0
        %1615 = vmatpush1.msra.mxu0 0.0
        %1616 = vmatprep.subr.mxu0 0.0
        %1617 = vmatpush1.msra.mxu0 0.0
        %1618 = vmatprep.subr.mxu0 0.0
        %1619 = vmatpush1.msra.mxu0 0.0
        %1620 = vmatprep.subr.mxu0 0.0
        %1621 = vmatpush1.msra.mxu0 0.0
        %1622 = vmatprep.subr.mxu0 0.0
        %1623 = vmatpush1.msra.mxu0 0.0
        %1624 = vmatprep.subr.mxu0 0.0
        %1625 = vmatpush1.msra.mxu0 0.0
        %1626 = vmatprep.subr.mxu0 0.0
        %1627 = vmatpush1.msra.mxu0 0.0
        %1628 = vmatprep.subr.mxu0 0.0
        %1629 = vmatpush1.msra.mxu0 0.0
        %1630 = vmatprep.subr.mxu0 0.0
        %1631 = vmatpush1.msra.mxu0 0.0
        %1632 = vmatprep.subr.mxu0 0.0
        %1633 = vmatpush1.msra.mxu0 0.0
        %1634 = vmatprep.subr.mxu0 0.0
        %1635 = vmatpush1.msra.mxu0 0.0
        %1636 = vmatprep.subr.mxu0 0.0
        %1637 = vmatpush1.msra.mxu0 0.0
        %1638 = vmatprep.subr.mxu0 0.0
        %1639 = vmatpush1.msra.mxu0 0.0
        %1640 = vmatprep.subr.mxu0 0.0
        %1641 = vmatpush1.msra.mxu0 0.0
        %1642 = vmatprep.subr.mxu0 0.0
        %1643 = vmatpush1.msra.mxu0 0.0
        %1644 = vmatprep.subr.mxu0 0.0
        %1645 = vmatpush1.msra.mxu0 0.0
        %1646 = vmatprep.subr.mxu0 0.0
        %1647 = vmatpush1.msra.mxu0 0.0
        %1648 = vmatprep.subr.mxu0 0.0
        %1649 = vmatpush1.msra.mxu0 0.0
        %1650 = vmatprep.subr.mxu0 0.0
        %1651 = vmatpush1.msra.mxu0 0.0
        %1652 = vmatprep.subr.mxu0 0.0
        %1653 = vmatpush1.msra.mxu0 0.0
        %1654 = vmatprep.subr.mxu0 0.0
        %1655 = vmatpush1.msra.mxu0 0.0
        %1656 = vmatprep.subr.mxu0 0.0
        %1657 = vmatpush1.msra.mxu0 0.0
        %1658 = vmatprep.subr.mxu0 0.0
        %1659 = vmatpush1.msra.mxu0 0.0
        %1660 = vmatprep.subr.mxu0 0.0
        %1661 = vmatpush1.msra.mxu0 0.0
        %1662 = vmatprep.mubr.f32.mxu0 0.0
        %1663 = vmatmul.mubr.f32.gmra.mrb[0].mxu0 %v1122
        %v1664 = vpop.f32.mrb[0].mxu0
        %v1665 = vadd.f32 0.0, %v1664
        %v1666 = vpop.f32.mrb[0].mxu0
        %1667 = vmatprep.mubr.f32.mxu0 0.0
        %1668 = vmatmul.mubr.f32.gmra.mrb[0].mxu0 %v1125
        %v1669 = vpop.f32.mrb[0].mxu0
        %v1670 = vadd.f32 0.0, %v1669
        %v1671 = vpop.f32.mrb[0].mxu0
        %1672 = vdwg.mxu0
        %v1674 = vsel %vm356, %v1665, 0
        %v1677 = vsel %vm356, %v1670, 0
        %1679 = vmatprep.subr.mxu0 0.0
        %1680 = vmatpush1.msra.mxu0 %v1203
        %1681 = vmatprep.subr.mxu0 0.0
        %1682 = vmatpush1.msra.mxu0 %v1204
        %1683 = vmatprep.subr.mxu0 0.0
        %1684 = vmatpush1.msra.mxu0 0.0
        %1685 = vmatprep.subr.mxu0 0.0
        %1686 = vmatpush1.msra.mxu0 0.0
        %1687 = vmatprep.subr.mxu0 0.0
        %1688 = vmatpush1.msra.mxu0 0.0
        %1689 = vmatprep.subr.mxu0 0.0
        %1690 = vmatpush1.msra.mxu0 0.0
        %1691 = vmatprep.subr.mxu0 0.0
        %1692 = vmatpush1.msra.mxu0 0.0
        %1693 = vmatprep.subr.mxu0 0.0
        %1694 = vmatpush1.msra.mxu0 0.0
        %1695 = vmatprep.subr.mxu0 0.0
        %1696 = vmatpush1.msra.mxu0 0.0
        %1697 = vmatprep.subr.mxu0 0.0
        %1698 = vmatpush1.msra.mxu0 0.0
        %1699 = vmatprep.subr.mxu0 0.0
        %1700 = vmatpush1.msra.mxu0 0.0
        %1701 = vmatprep.subr.mxu0 0.0
        %1702 = vmatpush1.msra.mxu0 0.0
        %1703 = vmatprep.subr.mxu0 0.0
        %1704 = vmatpush1.msra.mxu0 0.0
        %1705 = vmatprep.subr.mxu0 0.0
        %1706 = vmatpush1.msra.mxu0 0.0
        %1707 = vmatprep.subr.mxu0 0.0
        %1708 = vmatpush1.msra.mxu0 0.0
        %1709 = vmatprep.subr.mxu0 0.0
        %1710 = vmatpush1.msra.mxu0 0.0
        %1711 = vmatprep.subr.mxu0 0.0
        %1712 = vmatpush1.msra.mxu0 0.0
        %1713 = vmatprep.subr.mxu0 0.0
        %1714 = vmatpush1.msra.mxu0 0.0
        %1715 = vmatprep.subr.mxu0 0.0
        %1716 = vmatpush1.msra.mxu0 0.0
        %1717 = vmatprep.subr.mxu0 0.0
        %1718 = vmatpush1.msra.mxu0 0.0
        %1719 = vmatprep.subr.mxu0 0.0
        %1720 = vmatpush1.msra.mxu0 0.0
        %1721 = vmatprep.subr.mxu0 0.0
        %1722 = vmatpush1.msra.mxu0 0.0
        %1723 = vmatprep.subr.mxu0 0.0
        %1724 = vmatpush1.msra.mxu0 0.0
        %1725 = vmatprep.subr.mxu0 0.0
        %1726 = vmatpush1.msra.mxu0 0.0
        %1727 = vmatprep.subr.mxu0 0.0
        %1728 = vmatpush1.msra.mxu0 0.0
        %1729 = vmatprep.subr.mxu0 0.0
        %1730 = vmatpush1.msra.mxu0 0.0
        %1731 = vmatprep.subr.mxu0 0.0
        %1732 = vmatpush1.msra.mxu0 0.0
        %1733 = vmatprep.subr.mxu0 0.0
        %1734 = vmatpush1.msra.mxu0 0.0
        %1735 = vmatprep.subr.mxu0 0.0
        %1736 = vmatpush1.msra.mxu0 0.0
        %1737 = vmatprep.subr.mxu0 0.0
        %1738 = vmatpush1.msra.mxu0 0.0
        %1739 = vmatprep.subr.mxu0 0.0
        %1740 = vmatpush1.msra.mxu0 0.0
        %1741 = vmatprep.subr.mxu0 0.0
        %1742 = vmatpush1.msra.mxu0 0.0
        %1743 = vmatprep.mubr.f32.mxu0 0.0
        %1744 = vmatmul.mubr.f32.gmra.mrb[0].mxu0 %v1674
        %v1745 = vpop.f32.mrb[0].mxu0
        %v1746 = vadd.f32 0.0, %v1745
        %v1747 = vpop.f32.mrb[0].mxu0
        %1748 = vmatprep.mubr.f32.mxu0 0.0
        %1749 = vmatmul.mubr.f32.gmra.mrb[0].mxu0 %v1677
        %v1750 = vpop.f32.mrb[0].mxu0
        %v1751 = vadd.f32 0.0, %v1750
        %v1752 = vpop.f32.mrb[0].mxu0
        %1753 = vdwg.mxu0
        %1754 = vmatprep.subr.mxu0 0.0
        %1755 = vmatpush1.msra.mxu0 %v918
        %1756 = vmatprep.subr.mxu0 0.0
        %1757 = vmatpush1.msra.mxu0 %v919
        %1758 = vmatprep.subr.mxu0 0.0
        %1759 = vmatpush1.msra.mxu0 %v920
        %1760 = vmatprep.subr.mxu0 0.0
        %1761 = vmatpush1.msra.mxu0 %v921
        %1762 = vmatprep.subr.mxu0 0.0
        %1763 = vmatpush1.msra.mxu0 %v922
        %1764 = vmatprep.subr.mxu0 0.0
        %1765 = vmatpush1.msra.mxu0 %v923
        %1766 = vmatprep.subr.mxu0 0.0
        %1767 = vmatpush1.msra.mxu0 0.0
        %1768 = vmatprep.subr.mxu0 0.0
        %1769 = vmatpush1.msra.mxu0 0.0
        %1770 = vmatprep.subr.mxu0 0.0
        %1771 = vmatpush1.msra.mxu0 0.0
        %1772 = vmatprep.subr.mxu0 0.0
        %1773 = vmatpush1.msra.mxu0 0.0
        %1774 = vmatprep.subr.mxu0 0.0
        %1775 = vmatpush1.msra.mxu0 0.0
        %1776 = vmatprep.subr.mxu0 0.0
        %1777 = vmatpush1.msra.mxu0 0.0
        %1778 = vmatprep.subr.mxu0 0.0
        %1779 = vmatpush1.msra.mxu0 0.0
        %1780 = vmatprep.subr.mxu0 0.0
        %1781 = vmatpush1.msra.mxu0 0.0
        %1782 = vmatprep.subr.mxu0 0.0
        %1783 = vmatpush1.msra.mxu0 0.0
        %1784 = vmatprep.subr.mxu0 0.0
        %1785 = vmatpush1.msra.mxu0 0.0
        %1786 = vmatprep.subr.mxu0 0.0
        %1787 = vmatpush1.msra.mxu0 0.0
        %1788 = vmatprep.subr.mxu0 0.0
        %1789 = vmatpush1.msra.mxu0 0.0
        %1790 = vmatprep.subr.mxu0 0.0
        %1791 = vmatpush1.msra.mxu0 0.0
        %1792 = vmatprep.subr.mxu0 0.0
        %1793 = vmatpush1.msra.mxu0 0.0
        %1794 = vmatprep.subr.mxu0 0.0
        %1795 = vmatpush1.msra.mxu0 0.0
        %1796 = vmatprep.subr.mxu0 0.0
        %1797 = vmatpush1.msra.mxu0 0.0
        %1798 = vmatprep.subr.mxu0 0.0
        %1799 = vmatpush1.msra.mxu0 0.0
        %1800 = vmatprep.subr.mxu0 0.0
        %1801 = vmatpush1.msra.mxu0 0.0
        %1802 = vmatprep.subr.mxu0 0.0
        %1803 = vmatpush1.msra.mxu0 0.0
        %1804 = vmatprep.subr.mxu0 0.0
        %1805 = vmatpush1.msra.mxu0 0.0
        %1806 = vmatprep.subr.mxu0 0.0
        %1807 = vmatpush1.msra.mxu0 0.0
        %1808 = vmatprep.subr.mxu0 0.0
        %1809 = vmatpush1.msra.mxu0 0.0
        %1810 = vmatprep.subr.mxu0 0.0
        %1811 = vmatpush1.msra.mxu0 0.0
        %1812 = vmatprep.subr.mxu0 0.0
        %1813 = vmatpush1.msra.mxu0 0.0
        %1814 = vmatprep.subr.mxu0 0.0
        %1815 = vmatpush1.msra.mxu0 0.0
        %1816 = vmatprep.subr.mxu0 0.0
        %1817 = vmatpush1.msra.mxu0 0.0
        %1818 = vmatprep.mubr.f32.mxu0 0.0
        %1819 = vmatmul.mubr.f32.gmra.mrb[0].mxu0 %v1122
        %v1820 = vpop.f32.mrb[0].mxu0
        %v1821 = vadd.f32 0.0, %v1820
        %v1822 = vpop.f32.mrb[0].mxu0
        %1823 = vmatprep.mubr.f32.mxu0 0.0
        %1824 = vmatmul.mubr.f32.gmra.mrb[0].mxu0 %v1125
        %v1825 = vpop.f32.mrb[0].mxu0
        %v1826 = vadd.f32 0.0, %v1825
        %v1827 = vpop.f32.mrb[0].mxu0
        %1828 = vdwg.mxu0
        %v1830 = vsel %vm356, %v1821, 0
        %v1833 = vsel %vm356, %v1826, 0
        %1835 = vmatprep.subr.mxu0 0.0
        %1836 = vmatpush1.msra.mxu0 %v1203
        %1837 = vmatprep.subr.mxu0 0.0
        %1838 = vmatpush1.msra.mxu0 %v1204
        %1839 = vmatprep.subr.mxu0 0.0
        %1840 = vmatpush1.msra.mxu0 0.0
        %1841 = vmatprep.subr.mxu0 0.0
        %1842 = vmatpush1.msra.mxu0 0.0
        %1843 = vmatprep.subr.mxu0 0.0
        %1844 = vmatpush1.msra.mxu0 0.0
        %1845 = vmatprep.subr.mxu0 0.0
        %1846 = vmatpush1.msra.mxu0 0.0
        %1847 = vmatprep.subr.mxu0 0.0
        %1848 = vmatpush1.msra.mxu0 0.0
        %1849 = vmatprep.subr.mxu0 0.0
        %1850 = vmatpush1.msra.mxu0 0.0
        %1851 = vmatprep.subr.mxu0 0.0
        %1852 = vmatpush1.msra.mxu0 0.0
        %1853 = vmatprep.subr.mxu0 0.0
        %1854 = vmatpush1.msra.mxu0 0.0
        %1855 = vmatprep.subr.mxu0 0.0
        %1856 = vmatpush1.msra.mxu0 0.0
        %1857 = vmatprep.subr.mxu0 0.0
        %1858 = vmatpush1.msra.mxu0 0.0
        %1859 = vmatprep.subr.mxu0 0.0
        %1860 = vmatpush1.msra.mxu0 0.0
        %1861 = vmatprep.subr.mxu0 0.0
        %1862 = vmatpush1.msra.mxu0 0.0
        %1863 = vmatprep.subr.mxu0 0.0
        %1864 = vmatpush1.msra.mxu0 0.0
        %1865 = vmatprep.subr.mxu0 0.0
        %1866 = vmatpush1.msra.mxu0 0.0
        %1867 = vmatprep.subr.mxu0 0.0
        %1868 = vmatpush1.msra.mxu0 0.0
        %1869 = vmatprep.subr.mxu0 0.0
        %1870 = vmatpush1.msra.mxu0 0.0
        %1871 = vmatprep.subr.mxu0 0.0
        %1872 = vmatpush1.msra.mxu0 0.0
        %1873 = vmatprep.subr.mxu0 0.0
        %1874 = vmatpush1.msra.mxu0 0.0
        %1875 = vmatprep.subr.mxu0 0.0
        %1876 = vmatpush1.msra.mxu0 0.0
        %1877 = vmatprep.subr.mxu0 0.0
        %1878 = vmatpush1.msra.mxu0 0.0
        %1879 = vmatprep.subr.mxu0 0.0
        %1880 = vmatpush1.msra.mxu0 0.0
        %1881 = vmatprep.subr.mxu0 0.0
        %1882 = vmatpush1.msra.mxu0 0.0
        %1883 = vmatprep.subr.mxu0 0.0
        %1884 = vmatpush1.msra.mxu0 0.0
        %1885 = vmatprep.subr.mxu0 0.0
        %1886 = vmatpush1.msra.mxu0 0.0
        %1887 = vmatprep.subr.mxu0 0.0
        %1888 = vmatpush1.msra.mxu0 0.0
        %1889 = vmatprep.subr.mxu0 0.0
        %1890 = vmatpush1.msra.mxu0 0.0
        %1891 = vmatprep.subr.mxu0 0.0
        %1892 = vmatpush1.msra.mxu0 0.0
        %1893 = vmatprep.subr.mxu0 0.0
        %1894 = vmatpush1.msra.mxu0 0.0
        %1895 = vmatprep.subr.mxu0 0.0
        %1896 = vmatpush1.msra.mxu0 0.0
        %1897 = vmatprep.subr.mxu0 0.0
        %1898 = vmatpush1.msra.mxu0 0.0
        %1899 = vmatprep.mubr.f32.mxu0 0.0
        %1900 = vmatmul.mubr.f32.gmra.mrb[0].mxu0 %v1830
        %v1901 = vpop.f32.mrb[0].mxu0
        %v1902 = vadd.f32 0.0, %v1901
        %v1903 = vpop.f32.mrb[0].mxu0
        %1904 = vmatprep.mubr.f32.mxu0 0.0
        %1905 = vmatmul.mubr.f32.gmra.mrb[0].mxu0 %v1833
        %v1906 = vpop.f32.mrb[0].mxu0
        %v1907 = vadd.f32 0.0, %v1906
        %v1908 = vpop.f32.mrb[0].mxu0
        %1909 = vdwg.mxu0
        %v1910 = vmul.f32 %v1278, %v1278
        %v1911 = vmul.f32 %v1283, %v1283
        %v1912 = vmul.f32 %v1434, %v1434
        %v1913 = vmul.f32 %v1439, %v1439
        %v1914 = vmul.f32 %v1278, %v1434
        %v1915 = vmul.f32 %v1283, %v1439
        %v1916 = vsub.f32 %v1902, %v1914
        %v1917 = vsub.f32 %v1907, %v1915
        %v1918 = vmul.f32 %v1916, 2.0
        %v1919 = vmul.f32 %v1917, 2.0
        %v1920 = vadd.f32 %v1918, 0.0009
        %v1921 = vadd.f32 %v1919, 0.0009
        %v1922 = vsub.f32 %v1590, %v1910
        %v1923 = vsub.f32 %v1595, %v1911
        %v1924 = vsub.f32 %v1746, %v1912
        %v1925 = vsub.f32 %v1751, %v1913
        %v1926 = vadd.f32 %v1922, %v1924
        %v1927 = vadd.f32 %v1923, %v1925
        %v1928 = vadd.f32 %v1926, 0.0009
        %v1929 = vadd.f32 %v1927, 0.0009
        %v1930 = vmul.f32 %v1920, %v1920
        %v1931 = vmul.f32 %v1921, %v1921
        %v1932 = vmul.f32 %v1928, %v1928
        %v1933 = vmul.f32 %v1929, %v1929
        %s1934 = scalar_lea.vmem %s248, 48
        %v1935 = vld [vmem:[%s1934] sm:$0xff]
        %v1936 = vld [vmem:[%s1934 + $0x8] sm:$0xff]
        %v1937 = vld [vmem:[%s1934 + $0x10] sm:$0xff]
        %v1938 = vld [vmem:[%s1934 + $0x18] sm:$0xff]
        %v1939 = vld [vmem:[%s1934 + $0x20] sm:$0xff]
        %v1940 = vld [vmem:[%s1934 + $0x28] sm:$0xff]
        %s1941 = scalar_lea.vmem %s257, 48
        %v1942 = vld [vmem:[%s1941] sm:$0xff]
        %v1943 = vld [vmem:[%s1941 + $0x8] sm:$0xff]
        %v1944 = vld [vmem:[%s1941 + $0x10] sm:$0xff]
        %v1945 = vld [vmem:[%s1941 + $0x18] sm:$0xff]
        %v1946 = vld [vmem:[%s1941 + $0x20] sm:$0xff]
        %v1947 = vld [vmem:[%s1941 + $0x28] sm:$0xff]
        %1948 = vmatprep.subr.mxu0 0.0
        %1949 = vmatpush1.msra.mxu0 %v1935
        %1950 = vmatprep.subr.mxu0 0.0
        %1951 = vmatpush1.msra.mxu0 %v1936
        %1952 = vmatprep.subr.mxu0 0.0
        %1953 = vmatpush1.msra.mxu0 %v1937
        %1954 = vmatprep.subr.mxu0 0.0
        %1955 = vmatpush1.msra.mxu0 %v1938
        %1956 = vmatprep.subr.mxu0 0.0
        %1957 = vmatpush1.msra.mxu0 %v1939
        %1958 = vmatprep.subr.mxu0 0.0
        %1959 = vmatpush1.msra.mxu0 %v1940
        %1960 = vmatprep.subr.mxu0 0.0
        %1961 = vmatpush1.msra.mxu0 0.0
        %1962 = vmatprep.subr.mxu0 0.0
        %1963 = vmatpush1.msra.mxu0 0.0
        %1964 = vmatprep.subr.mxu0 0.0
        %1965 = vmatpush1.msra.mxu0 0.0
        %1966 = vmatprep.subr.mxu0 0.0
        %1967 = vmatpush1.msra.mxu0 0.0
        %1968 = vmatprep.subr.mxu0 0.0
        %1969 = vmatpush1.msra.mxu0 0.0
        %1970 = vmatprep.subr.mxu0 0.0
        %1971 = vmatpush1.msra.mxu0 0.0
        %1972 = vmatprep.subr.mxu0 0.0
        %1973 = vmatpush1.msra.mxu0 0.0
        %1974 = vmatprep.subr.mxu0 0.0
        %1975 = vmatpush1.msra.mxu0 0.0
        %1976 = vmatprep.subr.mxu0 0.0
        %1977 = vmatpush1.msra.mxu0 0.0
        %1978 = vmatprep.subr.mxu0 0.0
        %1979 = vmatpush1.msra.mxu0 0.0
        %1980 = vmatprep.subr.mxu0 0.0
        %1981 = vmatpush1.msra.mxu0 0.0
        %1982 = vmatprep.subr.mxu0 0.0
        %1983 = vmatpush1.msra.mxu0 0.0
        %1984 = vmatprep.subr.mxu0 0.0
        %1985 = vmatpush1.msra.mxu0 0.0
        %1986 = vmatprep.subr.mxu0 0.0
        %1987 = vmatpush1.msra.mxu0 0.0
        %1988 = vmatprep.subr.mxu0 0.0
        %1989 = vmatpush1.msra.mxu0 0.0
        %1990 = vmatprep.subr.mxu0 0.0
        %1991 = vmatpush1.msra.mxu0 0.0
        %1992 = vmatprep.subr.mxu0 0.0
        %1993 = vmatpush1.msra.mxu0 0.0
        %1994 = vmatprep.subr.mxu0 0.0
        %1995 = vmatpush1.msra.mxu0 0.0
        %1996 = vmatprep.subr.mxu0 0.0
        %1997 = vmatpush1.msra.mxu0 0.0
        %1998 = vmatprep.subr.mxu0 0.0
        %1999 = vmatpush1.msra.mxu0 0.0
        %2000 = vmatprep.subr.mxu0 0.0
        %2001 = vmatpush1.msra.mxu0 0.0
        %2002 = vmatprep.subr.mxu0 0.0
        %2003 = vmatpush1.msra.mxu0 0.0
        %2004 = vmatprep.subr.mxu0 0.0
        %2005 = vmatpush1.msra.mxu0 0.0
        %2006 = vmatprep.subr.mxu0 0.0
        %2007 = vmatpush1.msra.mxu0 0.0
        %2008 = vmatprep.subr.mxu0 0.0
        %2009 = vmatpush1.msra.mxu0 0.0
        %2010 = vmatprep.subr.mxu0 0.0
        %2011 = vmatpush1.msra.mxu0 0.0
        %2012 = vmatprep.mubr.f32.mxu0 0.0
        %2013 = vmatmul.mubr.f32.gmra.mrb[0].mxu0 %v1122
        %v2014 = vpop.f32.mrb[0].mxu0
        %v2015 = vadd.f32 0.0, %v2014
        %v2016 = vpop.f32.mrb[0].mxu0
        %2017 = vmatprep.mubr.f32.mxu0 0.0
        %2018 = vmatmul.mubr.f32.gmra.mrb[0].mxu0 %v1125
        %v2019 = vpop.f32.mrb[0].mxu0
        %v2020 = vadd.f32 0.0, %v2019
        %v2021 = vpop.f32.mrb[0].mxu0
        %2022 = vdwg.mxu0
        %v2024 = vsel %vm356, %v2015, 0
        %v2027 = vsel %vm356, %v2020, 0
        %2029 = vmatprep.subr.mxu0 0.0
        %2030 = vmatpush1.msra.mxu0 %v1203
        %2031 = vmatprep.subr.mxu0 0.0
        %2032 = vmatpush1.msra.mxu0 %v1204
        %2033 = vmatprep.subr.mxu0 0.0
        %2034 = vmatpush1.msra.mxu0 0.0
        %2035 = vmatprep.subr.mxu0 0.0
        %2036 = vmatpush1.msra.mxu0 0.0
        %2037 = vmatprep.subr.mxu0 0.0
        %2038 = vmatpush1.msra.mxu0 0.0
        %2039 = vmatprep.subr.mxu0 0.0
        %2040 = vmatpush1.msra.mxu0 0.0
        %2041 = vmatprep.subr.mxu0 0.0
        %2042 = vmatpush1.msra.mxu0 0.0
        %2043 = vmatprep.subr.mxu0 0.0
        %2044 = vmatpush1.msra.mxu0 0.0
        %2045 = vmatprep.subr.mxu0 0.0
        %2046 = vmatpush1.msra.mxu0 0.0
        %2047 = vmatprep.subr.mxu0 0.0
        %2048 = vmatpush1.msra.mxu0 0.0
        %2049 = vmatprep.subr.mxu0 0.0
        %2050 = vmatpush1.msra.mxu0 0.0
        %2051 = vmatprep.subr.mxu0 0.0
        %2052 = vmatpush1.msra.mxu0 0.0
        %2053 = vmatprep.subr.mxu0 0.0
        %2054 = vmatpush1.msra.mxu0 0.0
        %2055 = vmatprep.subr.mxu0 0.0
        %2056 = vmatpush1.msra.mxu0 0.0
        %2057 = vmatprep.subr.mxu0 0.0
        %2058 = vmatpush1.msra.mxu0 0.0
        %2059 = vmatprep.subr.mxu0 0.0
        %2060 = vmatpush1.msra.mxu0 0.0
        %2061 = vmatprep.subr.mxu0 0.0
        %2062 = vmatpush1.msra.mxu0 0.0
        %2063 = vmatprep.subr.mxu0 0.0
        %2064 = vmatpush1.msra.mxu0 0.0
        %2065 = vmatprep.subr.mxu0 0.0
        %2066 = vmatpush1.msra.mxu0 0.0
        %2067 = vmatprep.subr.mxu0 0.0
        %2068 = vmatpush1.msra.mxu0 0.0
        %2069 = vmatprep.subr.mxu0 0.0
        %2070 = vmatpush1.msra.mxu0 0.0
        %2071 = vmatprep.subr.mxu0 0.0
        %2072 = vmatpush1.msra.mxu0 0.0
        %2073 = vmatprep.subr.mxu0 0.0
        %2074 = vmatpush1.msra.mxu0 0.0
        %2075 = vmatprep.subr.mxu0 0.0
        %2076 = vmatpush1.msra.mxu0 0.0
        %2077 = vmatprep.subr.mxu0 0.0
        %2078 = vmatpush1.msra.mxu0 0.0
        %2079 = vmatprep.subr.mxu0 0.0
        %2080 = vmatpush1.msra.mxu0 0.0
        %2081 = vmatprep.subr.mxu0 0.0
        %2082 = vmatpush1.msra.mxu0 0.0
        %2083 = vmatprep.subr.mxu0 0.0
        %2084 = vmatpush1.msra.mxu0 0.0
        %2085 = vmatprep.subr.mxu0 0.0
        %2086 = vmatpush1.msra.mxu0 0.0
        %2087 = vmatprep.subr.mxu0 0.0
        %2088 = vmatpush1.msra.mxu0 0.0
        %2089 = vmatprep.subr.mxu0 0.0
        %2090 = vmatpush1.msra.mxu0 0.0
        %2091 = vmatprep.subr.mxu0 0.0
        %2092 = vmatpush1.msra.mxu0 0.0
        %2093 = vmatprep.mubr.f32.mxu0 0.0
        %2094 = vmatmul.mubr.f32.gmra.mrb[0].mxu0 %v2024
        %v2095 = vpop.f32.mrb[0].mxu0
        %v2096 = vadd.f32 0.0, %v2095
        %v2097 = vpop.f32.mrb[0].mxu0
        %2098 = vmatprep.mubr.f32.mxu0 0.0
        %2099 = vmatmul.mubr.f32.gmra.mrb[0].mxu0 %v2027
        %v2100 = vpop.f32.mrb[0].mxu0
        %v2101 = vadd.f32 0.0, %v2100
        %v2102 = vpop.f32.mrb[0].mxu0
        %2103 = vdwg.mxu0
        %2104 = vmatprep.subr.mxu0 0.0
        %2105 = vmatpush1.msra.mxu0 %v1942
        %2106 = vmatprep.subr.mxu0 0.0
        %2107 = vmatpush1.msra.mxu0 %v1943
        %2108 = vmatprep.subr.mxu0 0.0
        %2109 = vmatpush1.msra.mxu0 %v1944
        %2110 = vmatprep.subr.mxu0 0.0
        %2111 = vmatpush1.msra.mxu0 %v1945
        %2112 = vmatprep.subr.mxu0 0.0
        %2113 = vmatpush1.msra.mxu0 %v1946
        %2114 = vmatprep.subr.mxu0 0.0
        %2115 = vmatpush1.msra.mxu0 %v1947
        %2116 = vmatprep.subr.mxu0 0.0
        %2117 = vmatpush1.msra.mxu0 0.0
        %2118 = vmatprep.subr.mxu0 0.0
        %2119 = vmatpush1.msra.mxu0 0.0
        %2120 = vmatprep.subr.mxu0 0.0
        %2121 = vmatpush1.msra.mxu0 0.0
        %2122 = vmatprep.subr.mxu0 0.0
        %2123 = vmatpush1.msra.mxu0 0.0
        %2124 = vmatprep.subr.mxu0 0.0
        %2125 = vmatpush1.msra.mxu0 0.0
        %2126 = vmatprep.subr.mxu0 0.0
        %2127 = vmatpush1.msra.mxu0 0.0
        %2128 = vmatprep.subr.mxu0 0.0
        %2129 = vmatpush1.msra.mxu0 0.0
        %2130 = vmatprep.subr.mxu0 0.0
        %2131 = vmatpush1.msra.mxu0 0.0
        %2132 = vmatprep.subr.mxu0 0.0
        %2133 = vmatpush1.msra.mxu0 0.0
        %2134 = vmatprep.subr.mxu0 0.0
        %2135 = vmatpush1.msra.mxu0 0.0
        %2136 = vmatprep.subr.mxu0 0.0
        %2137 = vmatpush1.msra.mxu0 0.0
        %2138 = vmatprep.subr.mxu0 0.0
        %2139 = vmatpush1.msra.mxu0 0.0
        %2140 = vmatprep.subr.mxu0 0.0
        %2141 = vmatpush1.msra.mxu0 0.0
        %2142 = vmatprep.subr.mxu0 0.0
        %2143 = vmatpush1.msra.mxu0 0.0
        %2144 = vmatprep.subr.mxu0 0.0
        %2145 = vmatpush1.msra.mxu0 0.0
        %2146 = vmatprep.subr.mxu0 0.0
        %2147 = vmatpush1.msra.mxu0 0.0
        %2148 = vmatprep.subr.mxu0 0.0
        %2149 = vmatpush1.msra.mxu0 0.0
        %2150 = vmatprep.subr.mxu0 0.0
        %2151 = vmatpush1.msra.mxu0 0.0
        %2152 = vmatprep.subr.mxu0 0.0
        %2153 = vmatpush1.msra.mxu0 0.0
        %2154 = vmatprep.subr.mxu0 0.0
        %2155 = vmatpush1.msra.mxu0 0.0
        %2156 = vmatprep.subr.mxu0 0.0
        %2157 = vmatpush1.msra.mxu0 0.0
        %2158 = vmatprep.subr.mxu0 0.0
        %2159 = vmatpush1.msra.mxu0 0.0
        %2160 = vmatprep.subr.mxu0 0.0
        %2161 = vmatpush1.msra.mxu0 0.0
        %2162 = vmatprep.subr.mxu0 0.0
        %2163 = vmatpush1.msra.mxu0 0.0
        %2164 = vmatprep.subr.mxu0 0.0
        %2165 = vmatpush1.msra.mxu0 0.0
        %2166 = vmatprep.subr.mxu0 0.0
        %2167 = vmatpush1.msra.mxu0 0.0
        %2168 = vmatprep.mubr.f32.mxu0 0.0
        %2169 = vmatmul.mubr.f32.gmra.mrb[0].mxu0 %v1122
        %v2170 = vpop.f32.mrb[0].mxu0
        %v2171 = vadd.f32 0.0, %v2170
        %v2172 = vpop.f32.mrb[0].mxu0
        %2173 = vmatprep.mubr.f32.mxu0 0.0
        %2174 = vmatmul.mubr.f32.gmra.mrb[0].mxu0 %v1125
        %v2175 = vpop.f32.mrb[0].mxu0
        %v2176 = vadd.f32 0.0, %v2175
        %v2177 = vpop.f32.mrb[0].mxu0
        %2178 = vdwg.mxu0
        %v2180 = vsel %vm356, %v2171, 0
        %v2183 = vsel %vm356, %v2176, 0
        %2185 = vmatprep.subr.mxu0 0.0
        %2186 = vmatpush1.msra.mxu0 %v1203
        %2187 = vmatprep.subr.mxu0 0.0
        %2188 = vmatpush1.msra.mxu0 %v1204
        %2189 = vmatprep.subr.mxu0 0.0
        %2190 = vmatpush1.msra.mxu0 0.0
        %2191 = vmatprep.subr.mxu0 0.0
        %2192 = vmatpush1.msra.mxu0 0.0
        %2193 = vmatprep.subr.mxu0 0.0
        %2194 = vmatpush1.msra.mxu0 0.0
        %2195 = vmatprep.subr.mxu0 0.0
        %2196 = vmatpush1.msra.mxu0 0.0
        %2197 = vmatprep.subr.mxu0 0.0
        %2198 = vmatpush1.msra.mxu0 0.0
        %2199 = vmatprep.subr.mxu0 0.0
        %2200 = vmatpush1.msra.mxu0 0.0
        %2201 = vmatprep.subr.mxu0 0.0
        %2202 = vmatpush1.msra.mxu0 0.0
        %2203 = vmatprep.subr.mxu0 0.0
        %2204 = vmatpush1.msra.mxu0 0.0
        %2205 = vmatprep.subr.mxu0 0.0
        %2206 = vmatpush1.msra.mxu0 0.0
        %2207 = vmatprep.subr.mxu0 0.0
        %2208 = vmatpush1.msra.mxu0 0.0
        %2209 = vmatprep.subr.mxu0 0.0
        %2210 = vmatpush1.msra.mxu0 0.0
        %2211 = vmatprep.subr.mxu0 0.0
        %2212 = vmatpush1.msra.mxu0 0.0
        %2213 = vmatprep.subr.mxu0 0.0
        %2214 = vmatpush1.msra.mxu0 0.0
        %2215 = vmatprep.subr.mxu0 0.0
        %2216 = vmatpush1.msra.mxu0 0.0
        %2217 = vmatprep.subr.mxu0 0.0
        %2218 = vmatpush1.msra.mxu0 0.0
        %2219 = vmatprep.subr.mxu0 0.0
        %2220 = vmatpush1.msra.mxu0 0.0
        %2221 = vmatprep.subr.mxu0 0.0
        %2222 = vmatpush1.msra.mxu0 0.0
        %2223 = vmatprep.subr.mxu0 0.0
        %2224 = vmatpush1.msra.mxu0 0.0
        %2225 = vmatprep.subr.mxu0 0.0
        %2226 = vmatpush1.msra.mxu0 0.0
        %2227 = vmatprep.subr.mxu0 0.0
        %2228 = vmatpush1.msra.mxu0 0.0
        %2229 = vmatprep.subr.mxu0 0.0
        %2230 = vmatpush1.msra.mxu0 0.0
        %2231 = vmatprep.subr.mxu0 0.0
        %2232 = vmatpush1.msra.mxu0 0.0
        %2233 = vmatprep.subr.mxu0 0.0
        %2234 = vmatpush1.msra.mxu0 0.0
        %2235 = vmatprep.subr.mxu0 0.0
        %2236 = vmatpush1.msra.mxu0 0.0
        %2237 = vmatprep.subr.mxu0 0.0
        %2238 = vmatpush1.msra.mxu0 0.0
        %2239 = vmatprep.subr.mxu0 0.0
        %2240 = vmatpush1.msra.mxu0 0.0
        %2241 = vmatprep.subr.mxu0 0.0
        %2242 = vmatpush1.msra.mxu0 0.0
        %2243 = vmatprep.subr.mxu0 0.0
        %2244 = vmatpush1.msra.mxu0 0.0
        %2245 = vmatprep.subr.mxu0 0.0
        %2246 = vmatpush1.msra.mxu0 0.0
        %2247 = vmatprep.subr.mxu0 0.0
        %2248 = vmatpush1.msra.mxu0 0.0
        %2249 = vmatprep.mubr.f32.mxu0 0.0
        %2250 = vmatmul.mubr.f32.gmra.mrb[0].mxu0 %v2180
        %v2251 = vpop.f32.mrb[0].mxu0
        %v2252 = vadd.f32 0.0, %v2251
        %v2253 = vpop.f32.mrb[0].mxu0
        %2254 = vmatprep.mubr.f32.mxu0 0.0
        %2255 = vmatmul.mubr.f32.gmra.mrb[0].mxu0 %v2183
        %v2256 = vpop.f32.mrb[0].mxu0
        %v2257 = vadd.f32 0.0, %v2256
        %v2258 = vpop.f32.mrb[0].mxu0
        %2259 = vdwg.mxu0
        %v2260 = vmul.f32 %v1935, %v1935
        %v2261 = vmul.f32 %v1936, %v1936
        %v2262 = vmul.f32 %v1937, %v1937
        %v2263 = vmul.f32 %v1938, %v1938
        %v2264 = vmul.f32 %v1939, %v1939
        %v2265 = vmul.f32 %v1940, %v1940
        %2266 = vmatprep.subr.mxu0 0.0
        %2267 = vmatpush1.msra.mxu0 %v2260
        %2268 = vmatprep.subr.mxu0 0.0
        %2269 = vmatpush1.msra.mxu0 %v2261
        %2270 = vmatprep.subr.mxu0 0.0
        %2271 = vmatpush1.msra.mxu0 %v2262
        %2272 = vmatprep.subr.mxu0 0.0
        %2273 = vmatpush1.msra.mxu0 %v2263
        %2274 = vmatprep.subr.mxu0 0.0
        %2275 = vmatpush1.msra.mxu0 %v2264
        %2276 = vmatprep.subr.mxu0 0.0
        %2277 = vmatpush1.msra.mxu0 %v2265
        %2278 = vmatprep.subr.mxu0 0.0
        %2279 = vmatpush1.msra.mxu0 0.0
        %2280 = vmatprep.subr.mxu0 0.0
        %2281 = vmatpush1.msra.mxu0 0.0
        %2282 = vmatprep.subr.mxu0 0.0
        %2283 = vmatpush1.msra.mxu0 0.0
        %2284 = vmatprep.subr.mxu0 0.0
        %2285 = vmatpush1.msra.mxu0 0.0
        %2286 = vmatprep.subr.mxu0 0.0
        %2287 = vmatpush1.msra.mxu0 0.0
        %2288 = vmatprep.subr.mxu0 0.0
        %2289 = vmatpush1.msra.mxu0 0.0
        %2290 = vmatprep.subr.mxu0 0.0
        %2291 = vmatpush1.msra.mxu0 0.0
        %2292 = vmatprep.subr.mxu0 0.0
        %2293 = vmatpush1.msra.mxu0 0.0
        %2294 = vmatprep.subr.mxu0 0.0
        %2295 = vmatpush1.msra.mxu0 0.0
        %2296 = vmatprep.subr.mxu0 0.0
        %2297 = vmatpush1.msra.mxu0 0.0
        %2298 = vmatprep.subr.mxu0 0.0
        %2299 = vmatpush1.msra.mxu0 0.0
        %2300 = vmatprep.subr.mxu0 0.0
        %2301 = vmatpush1.msra.mxu0 0.0
        %2302 = vmatprep.subr.mxu0 0.0
        %2303 = vmatpush1.msra.mxu0 0.0
        %2304 = vmatprep.subr.mxu0 0.0
        %2305 = vmatpush1.msra.mxu0 0.0
        %2306 = vmatprep.subr.mxu0 0.0
        %2307 = vmatpush1.msra.mxu0 0.0
        %2308 = vmatprep.subr.mxu0 0.0
        %2309 = vmatpush1.msra.mxu0 0.0
        %2310 = vmatprep.subr.mxu0 0.0
        %2311 = vmatpush1.msra.mxu0 0.0
        %2312 = vmatprep.subr.mxu0 0.0
        %2313 = vmatpush1.msra.mxu0 0.0
        %2314 = vmatprep.subr.mxu0 0.0
        %2315 = vmatpush1.msra.mxu0 0.0
        %2316 = vmatprep.subr.mxu0 0.0
        %2317 = vmatpush1.msra.mxu0 0.0
        %2318 = vmatprep.subr.mxu0 0.0
        %2319 = vmatpush1.msra.mxu0 0.0
        %2320 = vmatprep.subr.mxu0 0.0
        %2321 = vmatpush1.msra.mxu0 0.0
        %2322 = vmatprep.subr.mxu0 0.0
        %2323 = vmatpush1.msra.mxu0 0.0
        %2324 = vmatprep.subr.mxu0 0.0
        %2325 = vmatpush1.msra.mxu0 0.0
        %2326 = vmatprep.subr.mxu0 0.0
        %2327 = vmatpush1.msra.mxu0 0.0
        %2328 = vmatprep.subr.mxu0 0.0
        %2329 = vmatpush1.msra.mxu0 0.0
        %2330 = vmatprep.mubr.f32.mxu0 0.0
        %2331 = vmatmul.mubr.f32.gmra.mrb[0].mxu0 %v1122
        %v2332 = vpop.f32.mrb[0].mxu0
        %v2333 = vadd.f32 0.0, %v2332
        %v2334 = vpop.f32.mrb[0].mxu0
        %2335 = vmatprep.mubr.f32.mxu0 0.0
        %2336 = vmatmul.mubr.f32.gmra.mrb[0].mxu0 %v1125
        %v2337 = vpop.f32.mrb[0].mxu0
        %v2338 = vadd.f32 0.0, %v2337
        %v2339 = vpop.f32.mrb[0].mxu0
        %2340 = vdwg.mxu0
        %v2342 = vsel %vm356, %v2333, 0
        %v2345 = vsel %vm356, %v2338, 0
        %2347 = vmatprep.subr.mxu0 0.0
        %2348 = vmatpush1.msra.mxu0 %v1203
        %2349 = vmatprep.subr.mxu0 0.0
        %2350 = vmatpush1.msra.mxu0 %v1204
        %2351 = vmatprep.subr.mxu0 0.0
        %2352 = vmatpush1.msra.mxu0 0.0
        %2353 = vmatprep.subr.mxu0 0.0
        %2354 = vmatpush1.msra.mxu0 0.0
        %2355 = vmatprep.subr.mxu0 0.0
        %2356 = vmatpush1.msra.mxu0 0.0
        %2357 = vmatprep.subr.mxu0 0.0
        %2358 = vmatpush1.msra.mxu0 0.0
        %2359 = vmatprep.subr.mxu0 0.0
        %2360 = vmatpush1.msra.mxu0 0.0
        %2361 = vmatprep.subr.mxu0 0.0
        %2362 = vmatpush1.msra.mxu0 0.0
        %2363 = vmatprep.subr.mxu0 0.0
        %2364 = vmatpush1.msra.mxu0 0.0
        %2365 = vmatprep.subr.mxu0 0.0
        %2366 = vmatpush1.msra.mxu0 0.0
        %2367 = vmatprep.subr.mxu0 0.0
        %2368 = vmatpush1.msra.mxu0 0.0
        %2369 = vmatprep.subr.mxu0 0.0
        %2370 = vmatpush1.msra.mxu0 0.0
        %2371 = vmatprep.subr.mxu0 0.0
        %2372 = vmatpush1.msra.mxu0 0.0
        %2373 = vmatprep.subr.mxu0 0.0
        %2374 = vmatpush1.msra.mxu0 0.0
        %2375 = vmatprep.subr.mxu0 0.0
        %2376 = vmatpush1.msra.mxu0 0.0
        %2377 = vmatprep.subr.mxu0 0.0
        %2378 = vmatpush1.msra.mxu0 0.0
        %2379 = vmatprep.subr.mxu0 0.0
        %2380 = vmatpush1.msra.mxu0 0.0
        %2381 = vmatprep.subr.mxu0 0.0
        %2382 = vmatpush1.msra.mxu0 0.0
        %2383 = vmatprep.subr.mxu0 0.0
        %2384 = vmatpush1.msra.mxu0 0.0
        %2385 = vmatprep.subr.mxu0 0.0
        %2386 = vmatpush1.msra.mxu0 0.0
        %2387 = vmatprep.subr.mxu0 0.0
        %2388 = vmatpush1.msra.mxu0 0.0
        %2389 = vmatprep.subr.mxu0 0.0
        %2390 = vmatpush1.msra.mxu0 0.0
        %2391 = vmatprep.subr.mxu0 0.0
        %2392 = vmatpush1.msra.mxu0 0.0
        %2393 = vmatprep.subr.mxu0 0.0
        %2394 = vmatpush1.msra.mxu0 0.0
        %2395 = vmatprep.subr.mxu0 0.0
        %2396 = vmatpush1.msra.mxu0 0.0
        %2397 = vmatprep.subr.mxu0 0.0
        %2398 = vmatpush1.msra.mxu0 0.0
        %2399 = vmatprep.subr.mxu0 0.0
        %2400 = vmatpush1.msra.mxu0 0.0
        %2401 = vmatprep.subr.mxu0 0.0
        %2402 = vmatpush1.msra.mxu0 0.0
        %2403 = vmatprep.subr.mxu0 0.0
        %2404 = vmatpush1.msra.mxu0 0.0
        %2405 = vmatprep.subr.mxu0 0.0
        %2406 = vmatpush1.msra.mxu0 0.0
        %2407 = vmatprep.subr.mxu0 0.0
        %2408 = vmatpush1.msra.mxu0 0.0
        %2409 = vmatprep.subr.mxu0 0.0
        %2410 = vmatpush1.msra.mxu0 0.0
        %2411 = vmatprep.mubr.f32.mxu0 0.0
        %2412 = vmatmul.mubr.f32.gmra.mrb[0].mxu0 %v2342
        %v2413 = vpop.f32.mrb[0].mxu0
        %v2414 = vadd.f32 0.0, %v2413
        %v2415 = vpop.f32.mrb[0].mxu0
        %2416 = vmatprep.mubr.f32.mxu0 0.0
        %2417 = vmatmul.mubr.f32.gmra.mrb[0].mxu0 %v2345
        %v2418 = vpop.f32.mrb[0].mxu0
        %v2419 = vadd.f32 0.0, %v2418
        %v2420 = vpop.f32.mrb[0].mxu0
        %2421 = vdwg.mxu0
        %v2422 = vmul.f32 %v1942, %v1942
        %v2423 = vmul.f32 %v1943, %v1943
        %v2424 = vmul.f32 %v1944, %v1944
        %v2425 = vmul.f32 %v1945, %v1945
        %v2426 = vmul.f32 %v1946, %v1946
        %v2427 = vmul.f32 %v1947, %v1947
        %2428 = vmatprep.subr.mxu0 0.0
        %2429 = vmatpush1.msra.mxu0 %v2422
        %2430 = vmatprep.subr.mxu0 0.0
        %2431 = vmatpush1.msra.mxu0 %v2423
        %2432 = vmatprep.subr.mxu0 0.0
        %2433 = vmatpush1.msra.mxu0 %v2424
        %2434 = vmatprep.subr.mxu0 0.0
        %2435 = vmatpush1.msra.mxu0 %v2425
        %2436 = vmatprep.subr.mxu0 0.0
        %2437 = vmatpush1.msra.mxu0 %v2426
        %2438 = vmatprep.subr.mxu0 0.0
        %2439 = vmatpush1.msra.mxu0 %v2427
        %2440 = vmatprep.subr.mxu0 0.0
        %2441 = vmatpush1.msra.mxu0 0.0
        %2442 = vmatprep.subr.mxu0 0.0
        %2443 = vmatpush1.msra.mxu0 0.0
        %2444 = vmatprep.subr.mxu0 0.0
        %2445 = vmatpush1.msra.mxu0 0.0
        %2446 = vmatprep.subr.mxu0 0.0
        %2447 = vmatpush1.msra.mxu0 0.0
        %2448 = vmatprep.subr.mxu0 0.0
        %2449 = vmatpush1.msra.mxu0 0.0
        %2450 = vmatprep.subr.mxu0 0.0
        %2451 = vmatpush1.msra.mxu0 0.0
        %2452 = vmatprep.subr.mxu0 0.0
        %2453 = vmatpush1.msra.mxu0 0.0
        %2454 = vmatprep.subr.mxu0 0.0
        %2455 = vmatpush1.msra.mxu0 0.0
        %2456 = vmatprep.subr.mxu0 0.0
        %2457 = vmatpush1.msra.mxu0 0.0
        %2458 = vmatprep.subr.mxu0 0.0
        %2459 = vmatpush1.msra.mxu0 0.0
        %2460 = vmatprep.subr.mxu0 0.0
        %2461 = vmatpush1.msra.mxu0 0.0
        %2462 = vmatprep.subr.mxu0 0.0
        %2463 = vmatpush1.msra.mxu0 0.0
        %2464 = vmatprep.subr.mxu0 0.0
        %2465 = vmatpush1.msra.mxu0 0.0
        %2466 = vmatprep.subr.mxu0 0.0
        %2467 = vmatpush1.msra.mxu0 0.0
        %2468 = vmatprep.subr.mxu0 0.0
        %2469 = vmatpush1.msra.mxu0 0.0
        %2470 = vmatprep.subr.mxu0 0.0
        %2471 = vmatpush1.msra.mxu0 0.0
        %2472 = vmatprep.subr.mxu0 0.0
        %2473 = vmatpush1.msra.mxu0 0.0
        %2474 = vmatprep.subr.mxu0 0.0
        %2475 = vmatpush1.msra.mxu0 0.0
        %2476 = vmatprep.subr.mxu0 0.0
        %2477 = vmatpush1.msra.mxu0 0.0
        %2478 = vmatprep.subr.mxu0 0.0
        %2479 = vmatpush1.msra.mxu0 0.0
        %2480 = vmatprep.subr.mxu0 0.0
        %2481 = vmatpush1.msra.mxu0 0.0
        %2482 = vmatprep.subr.mxu0 0.0
        %2483 = vmatpush1.msra.mxu0 0.0
        %2484 = vmatprep.subr.mxu0 0.0
        %2485 = vmatpush1.msra.mxu0 0.0
        %2486 = vmatprep.subr.mxu0 0.0
        %2487 = vmatpush1.msra.mxu0 0.0
        %2488 = vmatprep.subr.mxu0 0.0
        %2489 = vmatpush1.msra.mxu0 0.0
        %2490 = vmatprep.subr.mxu0 0.0
        %2491 = vmatpush1.msra.mxu0 0.0
        %2492 = vmatprep.mubr.f32.mxu0 0.0
        %2493 = vmatmul.mubr.f32.gmra.mrb[0].mxu0 %v1122
        %v2494 = vpop.f32.mrb[0].mxu0
        %v2495 = vadd.f32 0.0, %v2494
        %v2496 = vpop.f32.mrb[0].mxu0
        %2497 = vmatprep.mubr.f32.mxu0 0.0
        %2498 = vmatmul.mubr.f32.gmra.mrb[0].mxu0 %v1125
        %v2499 = vpop.f32.mrb[0].mxu0
        %v2500 = vadd.f32 0.0, %v2499
        %v2501 = vpop.f32.mrb[0].mxu0
        %2502 = vdwg.mxu0
        %v2504 = vsel %vm356, %v2495, 0
        %v2507 = vsel %vm356, %v2500, 0
        %2509 = vmatprep.subr.mxu0 0.0
        %2510 = vmatpush1.msra.mxu0 %v1203
        %2511 = vmatprep.subr.mxu0 0.0
        %2512 = vmatpush1.msra.mxu0 %v1204
        %2513 = vmatprep.subr.mxu0 0.0
        %2514 = vmatpush1.msra.mxu0 0.0
        %2515 = vmatprep.subr.mxu0 0.0
        %2516 = vmatpush1.msra.mxu0 0.0
        %2517 = vmatprep.subr.mxu0 0.0
        %2518 = vmatpush1.msra.mxu0 0.0
        %2519 = vmatprep.subr.mxu0 0.0
        %2520 = vmatpush1.msra.mxu0 0.0
        %2521 = vmatprep.subr.mxu0 0.0
        %2522 = vmatpush1.msra.mxu0 0.0
        %2523 = vmatprep.subr.mxu0 0.0
        %2524 = vmatpush1.msra.mxu0 0.0
        %2525 = vmatprep.subr.mxu0 0.0
        %2526 = vmatpush1.msra.mxu0 0.0
        %2527 = vmatprep.subr.mxu0 0.0
        %2528 = vmatpush1.msra.mxu0 0.0
        %2529 = vmatprep.subr.mxu0 0.0
        %2530 = vmatpush1.msra.mxu0 0.0
        %2531 = vmatprep.subr.mxu0 0.0
        %2532 = vmatpush1.msra.mxu0 0.0
        %2533 = vmatprep.subr.mxu0 0.0
        %2534 = vmatpush1.msra.mxu0 0.0
        %2535 = vmatprep.subr.mxu0 0.0
        %2536 = vmatpush1.msra.mxu0 0.0
        %2537 = vmatprep.subr.mxu0 0.0
        %2538 = vmatpush1.msra.mxu0 0.0
        %2539 = vmatprep.subr.mxu0 0.0
        %2540 = vmatpush1.msra.mxu0 0.0
        %2541 = vmatprep.subr.mxu0 0.0
        %2542 = vmatpush1.msra.mxu0 0.0
        %2543 = vmatprep.subr.mxu0 0.0
        %2544 = vmatpush1.msra.mxu0 0.0
        %2545 = vmatprep.subr.mxu0 0.0
        %2546 = vmatpush1.msra.mxu0 0.0
        %2547 = vmatprep.subr.mxu0 0.0
        %2548 = vmatpush1.msra.mxu0 0.0
        %2549 = vmatprep.subr.mxu0 0.0
        %2550 = vmatpush1.msra.mxu0 0.0
        %2551 = vmatprep.subr.mxu0 0.0
        %2552 = vmatpush1.msra.mxu0 0.0
        %2553 = vmatprep.subr.mxu0 0.0
        %2554 = vmatpush1.msra.mxu0 0.0
        %2555 = vmatprep.subr.mxu0 0.0
        %2556 = vmatpush1.msra.mxu0 0.0
        %2557 = vmatprep.subr.mxu0 0.0
        %2558 = vmatpush1.msra.mxu0 0.0
        %2559 = vmatprep.subr.mxu0 0.0
        %2560 = vmatpush1.msra.mxu0 0.0
        %2561 = vmatprep.subr.mxu0 0.0
        %2562 = vmatpush1.msra.mxu0 0.0
        %2563 = vmatprep.subr.mxu0 0.0
        %2564 = vmatpush1.msra.mxu0 0.0
        %2565 = vmatprep.subr.mxu0 0.0
        %2566 = vmatpush1.msra.mxu0 0.0
        %2567 = vmatprep.subr.mxu0 0.0
        %2568 = vmatpush1.msra.mxu0 0.0
        %2569 = vmatprep.subr.mxu0 0.0
        %2570 = vmatpush1.msra.mxu0 0.0
        %2571 = vmatprep.subr.mxu0 0.0
        %2572 = vmatpush1.msra.mxu0 0.0
        %2573 = vmatprep.mubr.f32.mxu0 0.0
        %2574 = vmatmul.mubr.f32.gmra.mrb[0].mxu0 %v2504
        %v2575 = vpop.f32.mrb[0].mxu0
        %v2576 = vadd.f32 0.0, %v2575
        %v2577 = vpop.f32.mrb[0].mxu0
        %2578 = vmatprep.mubr.f32.mxu0 0.0
        %2579 = vmatmul.mubr.f32.gmra.mrb[0].mxu0 %v2507
        %v2580 = vpop.f32.mrb[0].mxu0
        %v2581 = vadd.f32 0.0, %v2580
        %v2582 = vpop.f32.mrb[0].mxu0
        %2583 = vdwg.mxu0
        %v2584 = vmul.f32 %v1935, %v1942
        %v2585 = vmul.f32 %v1936, %v1943
        %v2586 = vmul.f32 %v1937, %v1944
        %v2587 = vmul.f32 %v1938, %v1945
        %v2588 = vmul.f32 %v1939, %v1946
        %v2589 = vmul.f32 %v1940, %v1947
        %2590 = vmatprep.subr.mxu0 0.0
        %2591 = vmatpush1.msra.mxu0 %v2584
        %2592 = vmatprep.subr.mxu0 0.0
        %2593 = vmatpush1.msra.mxu0 %v2585
        %2594 = vmatprep.subr.mxu0 0.0
        %2595 = vmatpush1.msra.mxu0 %v2586
        %2596 = vmatprep.subr.mxu0 0.0
        %2597 = vmatpush1.msra.mxu0 %v2587
        %2598 = vmatprep.subr.mxu0 0.0
        %2599 = vmatpush1.msra.mxu0 %v2588
        %2600 = vmatprep.subr.mxu0 0.0
        %2601 = vmatpush1.msra.mxu0 %v2589
        %2602 = vmatprep.subr.mxu0 0.0
        %2603 = vmatpush1.msra.mxu0 0.0
        %2604 = vmatprep.subr.mxu0 0.0
        %2605 = vmatpush1.msra.mxu0 0.0
        %2606 = vmatprep.subr.mxu0 0.0
        %2607 = vmatpush1.msra.mxu0 0.0
        %2608 = vmatprep.subr.mxu0 0.0
        %2609 = vmatpush1.msra.mxu0 0.0
        %2610 = vmatprep.subr.mxu0 0.0
        %2611 = vmatpush1.msra.mxu0 0.0
        %2612 = vmatprep.subr.mxu0 0.0
        %2613 = vmatpush1.msra.mxu0 0.0
        %2614 = vmatprep.subr.mxu0 0.0
        %2615 = vmatpush1.msra.mxu0 0.0
        %2616 = vmatprep.subr.mxu0 0.0
        %2617 = vmatpush1.msra.mxu0 0.0
        %2618 = vmatprep.subr.mxu0 0.0
        %2619 = vmatpush1.msra.mxu0 0.0
        %2620 = vmatprep.subr.mxu0 0.0
        %2621 = vmatpush1.msra.mxu0 0.0
        %2622 = vmatprep.subr.mxu0 0.0
        %2623 = vmatpush1.msra.mxu0 0.0
        %2624 = vmatprep.subr.mxu0 0.0
        %2625 = vmatpush1.msra.mxu0 0.0
        %2626 = vmatprep.subr.mxu0 0.0
        %2627 = vmatpush1.msra.mxu0 0.0
        %2628 = vmatprep.subr.mxu0 0.0
        %2629 = vmatpush1.msra.mxu0 0.0
        %2630 = vmatprep.subr.mxu0 0.0
        %2631 = vmatpush1.msra.mxu0 0.0
        %2632 = vmatprep.subr.mxu0 0.0
        %2633 = vmatpush1.msra.mxu0 0.0
        %2634 = vmatprep.subr.mxu0 0.0
        %2635 = vmatpush1.msra.mxu0 0.0
        %2636 = vmatprep.subr.mxu0 0.0
        %2637 = vmatpush1.msra.mxu0 0.0
        %2638 = vmatprep.subr.mxu0 0.0
        %2639 = vmatpush1.msra.mxu0 0.0
        %2640 = vmatprep.subr.mxu0 0.0
        %2641 = vmatpush1.msra.mxu0 0.0
        %2642 = vmatprep.subr.mxu0 0.0
        %2643 = vmatpush1.msra.mxu0 0.0
        %2644 = vmatprep.subr.mxu0 0.0
        %2645 = vmatpush1.msra.mxu0 0.0
        %2646 = vmatprep.subr.mxu0 0.0
        %2647 = vmatpush1.msra.mxu0 0.0
        %2648 = vmatprep.subr.mxu0 0.0
        %2649 = vmatpush1.msra.mxu0 0.0
        %2650 = vmatprep.subr.mxu0 0.0
        %2651 = vmatpush1.msra.mxu0 0.0
        %2652 = vmatprep.subr.mxu0 0.0
        %2653 = vmatpush1.msra.mxu0 0.0
        %2654 = vmatprep.mubr.f32.mxu0 0.0
        %2655 = vmatmul.mubr.f32.gmra.mrb[0].mxu0 %v1122
        %v2656 = vpop.f32.mrb[0].mxu0
        %v2657 = vadd.f32 0.0, %v2656
        %v2658 = vpop.f32.mrb[0].mxu0
        %2659 = vmatprep.mubr.f32.mxu0 0.0
        %2660 = vmatmul.mubr.f32.gmra.mrb[0].mxu0 %v1125
        %v2661 = vpop.f32.mrb[0].mxu0
        %v2662 = vadd.f32 0.0, %v2661
        %v2663 = vpop.f32.mrb[0].mxu0
        %2664 = vdwg.mxu0
        %v2666 = vsel %vm356, %v2657, 0
        %v2669 = vsel %vm356, %v2662, 0
        %2671 = vmatprep.subr.mxu0 0.0
        %2672 = vmatpush1.msra.mxu0 %v1203
        %2673 = vmatprep.subr.mxu0 0.0
        %2674 = vmatpush1.msra.mxu0 %v1204
        %2675 = vmatprep.subr.mxu0 0.0
        %2676 = vmatpush1.msra.mxu0 0.0
        %2677 = vmatprep.subr.mxu0 0.0
        %2678 = vmatpush1.msra.mxu0 0.0
        %2679 = vmatprep.subr.mxu0 0.0
        %2680 = vmatpush1.msra.mxu0 0.0
        %2681 = vmatprep.subr.mxu0 0.0
        %2682 = vmatpush1.msra.mxu0 0.0
        %2683 = vmatprep.subr.mxu0 0.0
        %2684 = vmatpush1.msra.mxu0 0.0
        %2685 = vmatprep.subr.mxu0 0.0
        %2686 = vmatpush1.msra.mxu0 0.0
        %2687 = vmatprep.subr.mxu0 0.0
        %2688 = vmatpush1.msra.mxu0 0.0
        %2689 = vmatprep.subr.mxu0 0.0
        %2690 = vmatpush1.msra.mxu0 0.0
        %2691 = vmatprep.subr.mxu0 0.0
        %2692 = vmatpush1.msra.mxu0 0.0
        %2693 = vmatprep.subr.mxu0 0.0
        %2694 = vmatpush1.msra.mxu0 0.0
        %2695 = vmatprep.subr.mxu0 0.0
        %2696 = vmatpush1.msra.mxu0 0.0
        %2697 = vmatprep.subr.mxu0 0.0
        %2698 = vmatpush1.msra.mxu0 0.0
        %2699 = vmatprep.subr.mxu0 0.0
        %2700 = vmatpush1.msra.mxu0 0.0
        %2701 = vmatprep.subr.mxu0 0.0
        %2702 = vmatpush1.msra.mxu0 0.0
        %2703 = vmatprep.subr.mxu0 0.0
        %2704 = vmatpush1.msra.mxu0 0.0
        %2705 = vmatprep.subr.mxu0 0.0
        %2706 = vmatpush1.msra.mxu0 0.0
        %2707 = vmatprep.subr.mxu0 0.0
        %2708 = vmatpush1.msra.mxu0 0.0
        %2709 = vmatprep.subr.mxu0 0.0
        %2710 = vmatpush1.msra.mxu0 0.0
        %2711 = vmatprep.subr.mxu0 0.0
        %2712 = vmatpush1.msra.mxu0 0.0
        %2713 = vmatprep.subr.mxu0 0.0
        %2714 = vmatpush1.msra.mxu0 0.0
        %2715 = vmatprep.subr.mxu0 0.0
        %2716 = vmatpush1.msra.mxu0 0.0
        %2717 = vmatprep.subr.mxu0 0.0
        %2718 = vmatpush1.msra.mxu0 0.0
        %2719 = vmatprep.subr.mxu0 0.0
        %2720 = vmatpush1.msra.mxu0 0.0
        %2721 = vmatprep.subr.mxu0 0.0
        %2722 = vmatpush1.msra.mxu0 0.0
        %2723 = vmatprep.subr.mxu0 0.0
        %2724 = vmatpush1.msra.mxu0 0.0
        %2725 = vmatprep.subr.mxu0 0.0
        %2726 = vmatpush1.msra.mxu0 0.0
        %2727 = vmatprep.subr.mxu0 0.0
        %2728 = vmatpush1.msra.mxu0 0.0
        %2729 = vmatprep.subr.mxu0 0.0
        %2730 = vmatpush1.msra.mxu0 0.0
        %2731 = vmatprep.subr.mxu0 0.0
        %2732 = vmatpush1.msra.mxu0 0.0
        %2733 = vmatprep.subr.mxu0 0.0
        %2734 = vmatpush1.msra.mxu0 0.0
        %2735 = vmatprep.mubr.f32.mxu0 0.0
        %2736 = vmatmul.mubr.f32.gmra.mrb[0].mxu0 %v2666
        %v2737 = vpop.f32.mrb[0].mxu0
        %v2738 = vadd.f32 0.0, %v2737
        %v2739 = vpop.f32.mrb[0].mxu0
        %2740 = vmatprep.mubr.f32.mxu0 0.0
        %2741 = vmatmul.mubr.f32.gmra.mrb[0].mxu0 %v2669
        %v2742 = vpop.f32.mrb[0].mxu0
        %v2743 = vadd.f32 0.0, %v2742
        %v2744 = vpop.f32.mrb[0].mxu0
        %2745 = vdwg.mxu0
        %v2746 = vmul.f32 %v2096, %v2096
        %v2747 = vmul.f32 %v2101, %v2101
        %v2748 = vmul.f32 %v2252, %v2252
        %v2749 = vmul.f32 %v2257, %v2257
        %v2750 = vmul.f32 %v2096, %v2252
        %v2751 = vmul.f32 %v2101, %v2257
        %v2752 = vsub.f32 %v2738, %v2750
        %v2753 = vsub.f32 %v2743, %v2751
        %v2754 = vmul.f32 %v2752, 2.0
        %v2755 = vmul.f32 %v2753, 2.0
        %v2756 = vadd.f32 %v2754, 0.0009
        %v2757 = vadd.f32 %v2755, 0.0009
        %v2758 = vsub.f32 %v2414, %v2746
        %v2759 = vsub.f32 %v2419, %v2747
        %v2760 = vsub.f32 %v2576, %v2748
        %v2761 = vsub.f32 %v2581, %v2749
        %v2762 = vadd.f32 %v2758, %v2760
        %v2763 = vadd.f32 %v2759, %v2761
        %v2764 = vadd.f32 %v2762, 0.0009
        %v2765 = vadd.f32 %v2763, 0.0009
        %v2766 = vmul.f32 %v1930, %v2756
        %v2767 = vmul.f32 %v1931, %v2757
        %v2768 = vmul.f32 %v1932, %v2764
        %v2769 = vmul.f32 %v1933, %v2765
        %v2770 = vrcp.pop %v2768
        %v2771 = vrcp.pop %v2769
        %v2772 = vmul.f32 %v2768, %v2770
        %v2773 = vmul.f32 %v2769, %v2771
        %v2774 = vsub.f32 2.0, %v2772
        %v2775 = vsub.f32 2.0, %v2773
        %v2776 = vmul.f32 %v2770, %v2774
        %v2777 = vmul.f32 %v2771, %v2775
        %v2778 = vmul.f32 %v2766, %v2776
        %v2779 = vmul.f32 %v2767, %v2777
        %v2780 = vmul.f32 %v1116, %v2778
        %v2781 = vmul.f32 %v1117, %v2779
        %s2782 = scalar_lea.vmem %s2, 32
        %v2783 = vld [vmem:[%s2782] sm:$0xff]
        %v2784 = vld [vmem:[%s2782 + $0x8] sm:$0xff]
        %v2786 = vsel %vm272, %v2783, 0
        %v2789 = vsel %vm272, %v2784, 0
        %2791 = vmatprep.subr.mxu0 0.0
        %2792 = vmatpush1.msra.mxu0 %v1935
        %2793 = vmatprep.subr.mxu0 0.0
        %2794 = vmatpush1.msra.mxu0 %v1936
        %2795 = vmatprep.subr.mxu0 0.0
        %2796 = vmatpush1.msra.mxu0 %v1937
        %2797 = vmatprep.subr.mxu0 0.0
        %2798 = vmatpush1.msra.mxu0 %v1938
        %2799 = vmatprep.subr.mxu0 0.0
        %2800 = vmatpush1.msra.mxu0 %v1939
        %2801 = vmatprep.subr.mxu0 0.0
        %2802 = vmatpush1.msra.mxu0 %v1940
        %2803 = vmatprep.subr.mxu0 0.0
        %2804 = vmatpush1.msra.mxu0 0.0
        %2805 = vmatprep.subr.mxu0 0.0
        %2806 = vmatpush1.msra.mxu0 0.0
        %2807 = vmatprep.subr.mxu0 0.0
        %2808 = vmatpush1.msra.mxu0 0.0
        %2809 = vmatprep.subr.mxu0 0.0
        %2810 = vmatpush1.msra.mxu0 0.0
        %2811 = vmatprep.subr.mxu0 0.0
        %2812 = vmatpush1.msra.mxu0 0.0
        %2813 = vmatprep.subr.mxu0 0.0
        %2814 = vmatpush1.msra.mxu0 0.0
        %2815 = vmatprep.subr.mxu0 0.0
        %2816 = vmatpush1.msra.mxu0 0.0
        %2817 = vmatprep.subr.mxu0 0.0
        %2818 = vmatpush1.msra.mxu0 0.0
        %2819 = vmatprep.subr.mxu0 0.0
        %2820 = vmatpush1.msra.mxu0 0.0
        %2821 = vmatprep.subr.mxu0 0.0
        %2822 = vmatpush1.msra.mxu0 0.0
        %2823 = vmatprep.subr.mxu0 0.0
        %2824 = vmatpush1.msra.mxu0 0.0
        %2825 = vmatprep.subr.mxu0 0.0
        %2826 = vmatpush1.msra.mxu0 0.0
        %2827 = vmatprep.subr.mxu0 0.0
        %2828 = vmatpush1.msra.mxu0 0.0
        %2829 = vmatprep.subr.mxu0 0.0
        %2830 = vmatpush1.msra.mxu0 0.0
        %2831 = vmatprep.subr.mxu0 0.0
        %2832 = vmatpush1.msra.mxu0 0.0
        %2833 = vmatprep.subr.mxu0 0.0
        %2834 = vmatpush1.msra.mxu0 0.0
        %2835 = vmatprep.subr.mxu0 0.0
        %2836 = vmatpush1.msra.mxu0 0.0
        %2837 = vmatprep.subr.mxu0 0.0
        %2838 = vmatpush1.msra.mxu0 0.0
        %2839 = vmatprep.subr.mxu0 0.0
        %2840 = vmatpush1.msra.mxu0 0.0
        %2841 = vmatprep.subr.mxu0 0.0
        %2842 = vmatpush1.msra.mxu0 0.0
        %2843 = vmatprep.subr.mxu0 0.0
        %2844 = vmatpush1.msra.mxu0 0.0
        %2845 = vmatprep.subr.mxu0 0.0
        %2846 = vmatpush1.msra.mxu0 0.0
        %2847 = vmatprep.subr.mxu0 0.0
        %2848 = vmatpush1.msra.mxu0 0.0
        %2849 = vmatprep.subr.mxu0 0.0
        %2850 = vmatpush1.msra.mxu0 0.0
        %2851 = vmatprep.subr.mxu0 0.0
        %2852 = vmatpush1.msra.mxu0 0.0
        %2853 = vmatprep.subr.mxu0 0.0
        %2854 = vmatpush1.msra.mxu0 0.0
        %2855 = vmatprep.mubr.f32.mxu0 0.0
        %2856 = vmatmul.mubr.f32.gmra.mrb[0].mxu0 %v2786
        %v2857 = vpop.f32.mrb[0].mxu0
        %v2858 = vadd.f32 0.0, %v2857
        %v2859 = vpop.f32.mrb[0].mxu0
        %2860 = vmatprep.mubr.f32.mxu0 0.0
        %2861 = vmatmul.mubr.f32.gmra.mrb[0].mxu0 %v2789
        %v2862 = vpop.f32.mrb[0].mxu0
        %v2863 = vadd.f32 0.0, %v2862
        %v2864 = vpop.f32.mrb[0].mxu0
        %2865 = vdwg.mxu0
        %s2866 = scalar_lea.vmem %s3, 32
        %v2867 = vld [vmem:[%s2866] sm:$0xff]
        %v2868 = vld [vmem:[%s2866 + $0x8] sm:$0xff]
        %v2870 = vsel %vm356, %v2858, 0
        %v2873 = vsel %vm356, %v2863, 0
        %2875 = vmatprep.subr.mxu0 0.0
        %2876 = vmatpush1.msra.mxu0 %v2867
        %2877 = vmatprep.subr.mxu0 0.0
        %2878 = vmatpush1.msra.mxu0 %v2868
        %2879 = vmatprep.subr.mxu0 0.0
        %2880 = vmatpush1.msra.mxu0 0.0
        %2881 = vmatprep.subr.mxu0 0.0
        %2882 = vmatpush1.msra.mxu0 0.0
        %2883 = vmatprep.subr.mxu0 0.0
        %2884 = vmatpush1.msra.mxu0 0.0
        %2885 = vmatprep.subr.mxu0 0.0
        %2886 = vmatpush1.msra.mxu0 0.0
        %2887 = vmatprep.subr.mxu0 0.0
        %2888 = vmatpush1.msra.mxu0 0.0
        %2889 = vmatprep.subr.mxu0 0.0
        %2890 = vmatpush1.msra.mxu0 0.0
        %2891 = vmatprep.subr.mxu0 0.0
        %2892 = vmatpush1.msra.mxu0 0.0
        %2893 = vmatprep.subr.mxu0 0.0
        %2894 = vmatpush1.msra.mxu0 0.0
        %2895 = vmatprep.subr.mxu0 0.0
        %2896 = vmatpush1.msra.mxu0 0.0
        %2897 = vmatprep.subr.mxu0 0.0
        %2898 = vmatpush1.msra.mxu0 0.0
        %2899 = vmatprep.subr.mxu0 0.0
        %2900 = vmatpush1.msra.mxu0 0.0
        %2901 = vmatprep.subr.mxu0 0.0
        %2902 = vmatpush1.msra.mxu0 0.0
        %2903 = vmatprep.subr.mxu0 0.0
        %2904 = vmatpush1.msra.mxu0 0.0
        %2905 = vmatprep.subr.mxu0 0.0
        %2906 = vmatpush1.msra.mxu0 0.0
        %2907 = vmatprep.subr.mxu0 0.0
        %2908 = vmatpush1.msra.mxu0 0.0
        %2909 = vmatprep.subr.mxu0 0.0
        %2910 = vmatpush1.msra.mxu0 0.0
        %2911 = vmatprep.subr.mxu0 0.0
        %2912 = vmatpush1.msra.mxu0 0.0
        %2913 = vmatprep.subr.mxu0 0.0
        %2914 = vmatpush1.msra.mxu0 0.0
        %2915 = vmatprep.subr.mxu0 0.0
        %2916 = vmatpush1.msra.mxu0 0.0
        %2917 = vmatprep.subr.mxu0 0.0
        %2918 = vmatpush1.msra.mxu0 0.0
        %2919 = vmatprep.subr.mxu0 0.0
        %2920 = vmatpush1.msra.mxu0 0.0
        %2921 = vmatprep.subr.mxu0 0.0
        %2922 = vmatpush1.msra.mxu0 0.0
        %2923 = vmatprep.subr.mxu0 0.0
        %2924 = vmatpush1.msra.mxu0 0.0
        %2925 = vmatprep.subr.mxu0 0.0
        %2926 = vmatpush1.msra.mxu0 0.0
        %2927 = vmatprep.subr.mxu0 0.0
        %2928 = vmatpush1.msra.mxu0 0.0
        %2929 = vmatprep.subr.mxu0 0.0
        %2930 = vmatpush1.msra.mxu0 0.0
        %2931 = vmatprep.subr.mxu0 0.0
        %2932 = vmatpush1.msra.mxu0 0.0
        %2933 = vmatprep.subr.mxu0 0.0
        %2934 = vmatpush1.msra.mxu0 0.0
        %2935 = vmatprep.subr.mxu0 0.0
        %2936 = vmatpush1.msra.mxu0 0.0
        %2937 = vmatprep.subr.mxu0 0.0
        %2938 = vmatpush1.msra.mxu0 0.0
        %2939 = vmatprep.mubr.f32.mxu0 0.0
        %2940 = vmatmul.mubr.f32.gmra.mrb[0].mxu0 %v2870
        %v2941 = vpop.f32.mrb[0].mxu0
        %v2942 = vadd.f32 0.0, %v2941
        %v2943 = vpop.f32.mrb[0].mxu0
        %2944 = vmatprep.mubr.f32.mxu0 0.0
        %2945 = vmatmul.mubr.f32.gmra.mrb[0].mxu0 %v2873
        %v2946 = vpop.f32.mrb[0].mxu0
        %v2947 = vadd.f32 0.0, %v2946
        %v2948 = vpop.f32.mrb[0].mxu0
        %2949 = vdwg.mxu0
        %2950 = vmatprep.subr.mxu0 0.0
        %2951 = vmatpush1.msra.mxu0 %v1942
        %2952 = vmatprep.subr.mxu0 0.0
        %2953 = vmatpush1.msra.mxu0 %v1943
        %2954 = vmatprep.subr.mxu0 0.0
        %2955 = vmatpush1.msra.mxu0 %v1944
        %2956 = vmatprep.subr.mxu0 0.0
        %2957 = vmatpush1.msra.mxu0 %v1945
        %2958 = vmatprep.subr.mxu0 0.0
        %2959 = vmatpush1.msra.mxu0 %v1946
        %2960 = vmatprep.subr.mxu0 0.0
        %2961 = vmatpush1.msra.mxu0 %v1947
        %2962 = vmatprep.subr.mxu0 0.0
        %2963 = vmatpush1.msra.mxu0 0.0
        %2964 = vmatprep.subr.mxu0 0.0
        %2965 = vmatpush1.msra.mxu0 0.0
        %2966 = vmatprep.subr.mxu0 0.0
        %2967 = vmatpush1.msra.mxu0 0.0
        %2968 = vmatprep.subr.mxu0 0.0
        %2969 = vmatpush1.msra.mxu0 0.0
        %2970 = vmatprep.subr.mxu0 0.0
        %2971 = vmatpush1.msra.mxu0 0.0
        %2972 = vmatprep.subr.mxu0 0.0
        %2973 = vmatpush1.msra.mxu0 0.0
        %2974 = vmatprep.subr.mxu0 0.0
        %2975 = vmatpush1.msra.mxu0 0.0
        %2976 = vmatprep.subr.mxu0 0.0
        %2977 = vmatpush1.msra.mxu0 0.0
        %2978 = vmatprep.subr.mxu0 0.0
        %2979 = vmatpush1.msra.mxu0 0.0
        %2980 = vmatprep.subr.mxu0 0.0
        %2981 = vmatpush1.msra.mxu0 0.0
        %2982 = vmatprep.subr.mxu0 0.0
        %2983 = vmatpush1.msra.mxu0 0.0
        %2984 = vmatprep.subr.mxu0 0.0
        %2985 = vmatpush1.msra.mxu0 0.0
        %2986 = vmatprep.subr.mxu0 0.0
        %2987 = vmatpush1.msra.mxu0 0.0
        %2988 = vmatprep.subr.mxu0 0.0
        %2989 = vmatpush1.msra.mxu0 0.0
        %2990 = vmatprep.subr.mxu0 0.0
        %2991 = vmatpush1.msra.mxu0 0.0
        %2992 = vmatprep.subr.mxu0 0.0
        %2993 = vmatpush1.msra.mxu0 0.0
        %2994 = vmatprep.subr.mxu0 0.0
        %2995 = vmatpush1.msra.mxu0 0.0
        %2996 = vmatprep.subr.mxu0 0.0
        %2997 = vmatpush1.msra.mxu0 0.0
        %2998 = vmatprep.subr.mxu0 0.0
        %2999 = vmatpush1.msra.mxu0 0.0
        %3000 = vmatprep.subr.mxu0 0.0
        %3001 = vmatpush1.msra.mxu0 0.0
        %3002 = vmatprep.subr.mxu0 0.0
        %3003 = vmatpush1.msra.mxu0 0.0
        %3004 = vmatprep.subr.mxu0 0.0
        %3005 = vmatpush1.msra.mxu0 0.0
        %3006 = vmatprep.subr.mxu0 0.0
        %3007 = vmatpush1.msra.mxu0 0.0
        %3008 = vmatprep.subr.mxu0 0.0
        %3009 = vmatpush1.msra.mxu0 0.0
        %3010 = vmatprep.subr.mxu0 0.0
        %3011 = vmatpush1.msra.mxu0 0.0
        %3012 = vmatprep.subr.mxu0 0.0
        %3013 = vmatpush1.msra.mxu0 0.0
        %3014 = vmatprep.mubr.f32.mxu0 0.0
        %3015 = vmatmul.mubr.f32.gmra.mrb[0].mxu0 %v2786
        %v3016 = vpop.f32.mrb[0].mxu0
        %v3017 = vadd.f32 0.0, %v3016
        %v3018 = vpop.f32.mrb[0].mxu0
        %3019 = vmatprep.mubr.f32.mxu0 0.0
        %3020 = vmatmul.mubr.f32.gmra.mrb[0].mxu0 %v2789
        %v3021 = vpop.f32.mrb[0].mxu0
        %v3022 = vadd.f32 0.0, %v3021
        %v3023 = vpop.f32.mrb[0].mxu0
        %3024 = vdwg.mxu0
        %v3026 = vsel %vm356, %v3017, 0
        %v3029 = vsel %vm356, %v3022, 0
        %3031 = vmatprep.subr.mxu0 0.0
        %3032 = vmatpush1.msra.mxu0 %v2867
        %3033 = vmatprep.subr.mxu0 0.0
        %3034 = vmatpush1.msra.mxu0 %v2868
        %3035 = vmatprep.subr.mxu0 0.0
        %3036 = vmatpush1.msra.mxu0 0.0
        %3037 = vmatprep.subr.mxu0 0.0
        %3038 = vmatpush1.msra.mxu0 0.0
        %3039 = vmatprep.subr.mxu0 0.0
        %3040 = vmatpush1.msra.mxu0 0.0
        %3041 = vmatprep.subr.mxu0 0.0
        %3042 = vmatpush1.msra.mxu0 0.0
        %3043 = vmatprep.subr.mxu0 0.0
        %3044 = vmatpush1.msra.mxu0 0.0
        %3045 = vmatprep.subr.mxu0 0.0
        %3046 = vmatpush1.msra.mxu0 0.0
        %3047 = vmatprep.subr.mxu0 0.0
        %3048 = vmatpush1.msra.mxu0 0.0
        %3049 = vmatprep.subr.mxu0 0.0
        %3050 = vmatpush1.msra.mxu0 0.0
        %3051 = vmatprep.subr.mxu0 0.0
        %3052 = vmatpush1.msra.mxu0 0.0
        %3053 = vmatprep.subr.mxu0 0.0
        %3054 = vmatpush1.msra.mxu0 0.0
        %3055 = vmatprep.subr.mxu0 0.0
        %3056 = vmatpush1.msra.mxu0 0.0
        %3057 = vmatprep.subr.mxu0 0.0
        %3058 = vmatpush1.msra.mxu0 0.0
        %3059 = vmatprep.subr.mxu0 0.0
        %3060 = vmatpush1.msra.mxu0 0.0
        %3061 = vmatprep.subr.mxu0 0.0
        %3062 = vmatpush1.msra.mxu0 0.0
        %3063 = vmatprep.subr.mxu0 0.0
        %3064 = vmatpush1.msra.mxu0 0.0
        %3065 = vmatprep.subr.mxu0 0.0
        %3066 = vmatpush1.msra.mxu0 0.0
        %3067 = vmatprep.subr.mxu0 0.0
        %3068 = vmatpush1.msra.mxu0 0.0
        %3069 = vmatprep.subr.mxu0 0.0
        %3070 = vmatpush1.msra.mxu0 0.0
        %3071 = vmatprep.subr.mxu0 0.0
        %3072 = vmatpush1.msra.mxu0 0.0
        %3073 = vmatprep.subr.mxu0 0.0
        %3074 = vmatpush1.msra.mxu0 0.0
        %3075 = vmatprep.subr.mxu0 0.0
        %3076 = vmatpush1.msra.mxu0 0.0
        %3077 = vmatprep.subr.mxu0 0.0
        %3078 = vmatpush1.msra.mxu0 0.0
        %3079 = vmatprep.subr.mxu0 0.0
        %3080 = vmatpush1.msra.mxu0 0.0
        %3081 = vmatprep.subr.mxu0 0.0
        %3082 = vmatpush1.msra.mxu0 0.0
        %3083 = vmatprep.subr.mxu0 0.0
        %3084 = vmatpush1.msra.mxu0 0.0
        %3085 = vmatprep.subr.mxu0 0.0
        %3086 = vmatpush1.msra.mxu0 0.0
        %3087 = vmatprep.subr.mxu0 0.0
        %3088 = vmatpush1.msra.mxu0 0.0
        %3089 = vmatprep.subr.mxu0 0.0
        %3090 = vmatpush1.msra.mxu0 0.0
        %3091 = vmatprep.subr.mxu0 0.0
        %3092 = vmatpush1.msra.mxu0 0.0
        %3093 = vmatprep.subr.mxu0 0.0
        %3094 = vmatpush1.msra.mxu0 0.0
        %3095 = vmatprep.mubr.f32.mxu0 0.0
        %3096 = vmatmul.mubr.f32.gmra.mrb[0].mxu0 %v3026
        %v3097 = vpop.f32.mrb[0].mxu0
        %v3098 = vadd.f32 0.0, %v3097
        %v3099 = vpop.f32.mrb[0].mxu0
        %3100 = vmatprep.mubr.f32.mxu0 0.0
        %3101 = vmatmul.mubr.f32.gmra.mrb[0].mxu0 %v3029
        %v3102 = vpop.f32.mrb[0].mxu0
        %v3103 = vadd.f32 0.0, %v3102
        %v3104 = vpop.f32.mrb[0].mxu0
        %3105 = vdwg.mxu0
        %3106 = vmatprep.subr.mxu0 0.0
        %3107 = vmatpush1.msra.mxu0 %v2260
        %3108 = vmatprep.subr.mxu0 0.0
        %3109 = vmatpush1.msra.mxu0 %v2261
        %3110 = vmatprep.subr.mxu0 0.0
        %3111 = vmatpush1.msra.mxu0 %v2262
        %3112 = vmatprep.subr.mxu0 0.0
        %3113 = vmatpush1.msra.mxu0 %v2263
        %3114 = vmatprep.subr.mxu0 0.0
        %3115 = vmatpush1.msra.mxu0 %v2264
        %3116 = vmatprep.subr.mxu0 0.0
        %3117 = vmatpush1.msra.mxu0 %v2265
        %3118 = vmatprep.subr.mxu0 0.0
        %3119 = vmatpush1.msra.mxu0 0.0
        %3120 = vmatprep.subr.mxu0 0.0
        %3121 = vmatpush1.msra.mxu0 0.0
        %3122 = vmatprep.subr.mxu0 0.0
        %3123 = vmatpush1.msra.mxu0 0.0
        %3124 = vmatprep.subr.mxu0 0.0
        %3125 = vmatpush1.msra.mxu0 0.0
        %3126 = vmatprep.subr.mxu0 0.0
        %3127 = vmatpush1.msra.mxu0 0.0
        %3128 = vmatprep.subr.mxu0 0.0
        %3129 = vmatpush1.msra.mxu0 0.0
        %3130 = vmatprep.subr.mxu0 0.0
        %3131 = vmatpush1.msra.mxu0 0.0
        %3132 = vmatprep.subr.mxu0 0.0
        %3133 = vmatpush1.msra.mxu0 0.0
        %3134 = vmatprep.subr.mxu0 0.0
        %3135 = vmatpush1.msra.mxu0 0.0
        %3136 = vmatprep.subr.mxu0 0.0
        %3137 = vmatpush1.msra.mxu0 0.0
        %3138 = vmatprep.subr.mxu0 0.0
        %3139 = vmatpush1.msra.mxu0 0.0
        %3140 = vmatprep.subr.mxu0 0.0
        %3141 = vmatpush1.msra.mxu0 0.0
        %3142 = vmatprep.subr.mxu0 0.0
        %3143 = vmatpush1.msra.mxu0 0.0
        %3144 = vmatprep.subr.mxu0 0.0
        %3145 = vmatpush1.msra.mxu0 0.0
        %3146 = vmatprep.subr.mxu0 0.0
        %3147 = vmatpush1.msra.mxu0 0.0
        %3148 = vmatprep.subr.mxu0 0.0
        %3149 = vmatpush1.msra.mxu0 0.0
        %3150 = vmatprep.subr.mxu0 0.0
        %3151 = vmatpush1.msra.mxu0 0.0
        %3152 = vmatprep.subr.mxu0 0.0
        %3153 = vmatpush1.msra.mxu0 0.0
        %3154 = vmatprep.subr.mxu0 0.0
        %3155 = vmatpush1.msra.mxu0 0.0
        %3156 = vmatprep.subr.mxu0 0.0
        %3157 = vmatpush1.msra.mxu0 0.0
        %3158 = vmatprep.subr.mxu0 0.0
        %3159 = vmatpush1.msra.mxu0 0.0
        %3160 = vmatprep.subr.mxu0 0.0
        %3161 = vmatpush1.msra.mxu0 0.0
        %3162 = vmatprep.subr.mxu0 0.0
        %3163 = vmatpush1.msra.mxu0 0.0
        %3164 = vmatprep.subr.mxu0 0.0
        %3165 = vmatpush1.msra.mxu0 0.0
        %3166 = vmatprep.subr.mxu0 0.0
        %3167 = vmatpush1.msra.mxu0 0.0
        %3168 = vmatprep.subr.mxu0 0.0
        %3169 = vmatpush1.msra.mxu0 0.0
        %3170 = vmatprep.mubr.f32.mxu0 0.0
        %3171 = vmatmul.mubr.f32.gmra.mrb[0].mxu0 %v2786
        %v3172 = vpop.f32.mrb[0].mxu0
        %v3173 = vadd.f32 0.0, %v3172
        %v3174 = vpop.f32.mrb[0].mxu0
        %3175 = vmatprep.mubr.f32.mxu0 0.0
        %3176 = vmatmul.mubr.f32.gmra.mrb[0].mxu0 %v2789
        %v3177 = vpop.f32.mrb[0].mxu0
        %v3178 = vadd.f32 0.0, %v3177
        %v3179 = vpop.f32.mrb[0].mxu0
        %3180 = vdwg.mxu0
        %v3182 = vsel %vm356, %v3173, 0
        %v3185 = vsel %vm356, %v3178, 0
        %3187 = vmatprep.subr.mxu0 0.0
        %3188 = vmatpush1.msra.mxu0 %v2867
        %3189 = vmatprep.subr.mxu0 0.0
        %3190 = vmatpush1.msra.mxu0 %v2868
        %3191 = vmatprep.subr.mxu0 0.0
        %3192 = vmatpush1.msra.mxu0 0.0
        %3193 = vmatprep.subr.mxu0 0.0
        %3194 = vmatpush1.msra.mxu0 0.0
        %3195 = vmatprep.subr.mxu0 0.0
        %3196 = vmatpush1.msra.mxu0 0.0
        %3197 = vmatprep.subr.mxu0 0.0
        %3198 = vmatpush1.msra.mxu0 0.0
        %3199 = vmatprep.subr.mxu0 0.0
        %3200 = vmatpush1.msra.mxu0 0.0
        %3201 = vmatprep.subr.mxu0 0.0
        %3202 = vmatpush1.msra.mxu0 0.0
        %3203 = vmatprep.subr.mxu0 0.0
        %3204 = vmatpush1.msra.mxu0 0.0
        %3205 = vmatprep.subr.mxu0 0.0
        %3206 = vmatpush1.msra.mxu0 0.0
        %3207 = vmatprep.subr.mxu0 0.0
        %3208 = vmatpush1.msra.mxu0 0.0
        %3209 = vmatprep.subr.mxu0 0.0
        %3210 = vmatpush1.msra.mxu0 0.0
        %3211 = vmatprep.subr.mxu0 0.0
        %3212 = vmatpush1.msra.mxu0 0.0
        %3213 = vmatprep.subr.mxu0 0.0
        %3214 = vmatpush1.msra.mxu0 0.0
        %3215 = vmatprep.subr.mxu0 0.0
        %3216 = vmatpush1.msra.mxu0 0.0
        %3217 = vmatprep.subr.mxu0 0.0
        %3218 = vmatpush1.msra.mxu0 0.0
        %3219 = vmatprep.subr.mxu0 0.0
        %3220 = vmatpush1.msra.mxu0 0.0
        %3221 = vmatprep.subr.mxu0 0.0
        %3222 = vmatpush1.msra.mxu0 0.0
        %3223 = vmatprep.subr.mxu0 0.0
        %3224 = vmatpush1.msra.mxu0 0.0
        %3225 = vmatprep.subr.mxu0 0.0
        %3226 = vmatpush1.msra.mxu0 0.0
        %3227 = vmatprep.subr.mxu0 0.0
        %3228 = vmatpush1.msra.mxu0 0.0
        %3229 = vmatprep.subr.mxu0 0.0
        %3230 = vmatpush1.msra.mxu0 0.0
        %3231 = vmatprep.subr.mxu0 0.0
        %3232 = vmatpush1.msra.mxu0 0.0
        %3233 = vmatprep.subr.mxu0 0.0
        %3234 = vmatpush1.msra.mxu0 0.0
        %3235 = vmatprep.subr.mxu0 0.0
        %3236 = vmatpush1.msra.mxu0 0.0
        %3237 = vmatprep.subr.mxu0 0.0
        %3238 = vmatpush1.msra.mxu0 0.0
        %3239 = vmatprep.subr.mxu0 0.0
        %3240 = vmatpush1.msra.mxu0 0.0
        %3241 = vmatprep.subr.mxu0 0.0
        %3242 = vmatpush1.msra.mxu0 0.0
        %3243 = vmatprep.subr.mxu0 0.0
        %3244 = vmatpush1.msra.mxu0 0.0
        %3245 = vmatprep.subr.mxu0 0.0
        %3246 = vmatpush1.msra.mxu0 0.0
        %3247 = vmatprep.subr.mxu0 0.0
        %3248 = vmatpush1.msra.mxu0 0.0
        %3249 = vmatprep.subr.mxu0 0.0
        %3250 = vmatpush1.msra.mxu0 0.0
        %3251 = vmatprep.mubr.f32.mxu0 0.0
        %3252 = vmatmul.mubr.f32.gmra.mrb[0].mxu0 %v3182
        %v3253 = vpop.f32.mrb[0].mxu0
        %v3254 = vadd.f32 0.0, %v3253
        %v3255 = vpop.f32.mrb[0].mxu0
        %3256 = vmatprep.mubr.f32.mxu0 0.0
        %3257 = vmatmul.mubr.f32.gmra.mrb[0].mxu0 %v3185
        %v3258 = vpop.f32.mrb[0].mxu0
        %v3259 = vadd.f32 0.0, %v3258
        %v3260 = vpop.f32.mrb[0].mxu0
        %3261 = vdwg.mxu0
        %3262 = vmatprep.subr.mxu0 0.0
        %3263 = vmatpush1.msra.mxu0 %v2422
        %3264 = vmatprep.subr.mxu0 0.0
        %3265 = vmatpush1.msra.mxu0 %v2423
        %3266 = vmatprep.subr.mxu0 0.0
        %3267 = vmatpush1.msra.mxu0 %v2424
        %3268 = vmatprep.subr.mxu0 0.0
        %3269 = vmatpush1.msra.mxu0 %v2425
        %3270 = vmatprep.subr.mxu0 0.0
        %3271 = vmatpush1.msra.mxu0 %v2426
        %3272 = vmatprep.subr.mxu0 0.0
        %3273 = vmatpush1.msra.mxu0 %v2427
        %3274 = vmatprep.subr.mxu0 0.0
        %3275 = vmatpush1.msra.mxu0 0.0
        %3276 = vmatprep.subr.mxu0 0.0
        %3277 = vmatpush1.msra.mxu0 0.0
        %3278 = vmatprep.subr.mxu0 0.0
        %3279 = vmatpush1.msra.mxu0 0.0
        %3280 = vmatprep.subr.mxu0 0.0
        %3281 = vmatpush1.msra.mxu0 0.0
        %3282 = vmatprep.subr.mxu0 0.0
        %3283 = vmatpush1.msra.mxu0 0.0
        %3284 = vmatprep.subr.mxu0 0.0
        %3285 = vmatpush1.msra.mxu0 0.0
        %3286 = vmatprep.subr.mxu0 0.0
        %3287 = vmatpush1.msra.mxu0 0.0
        %3288 = vmatprep.subr.mxu0 0.0
        %3289 = vmatpush1.msra.mxu0 0.0
        %3290 = vmatprep.subr.mxu0 0.0
        %3291 = vmatpush1.msra.mxu0 0.0
        %3292 = vmatprep.subr.mxu0 0.0
        %3293 = vmatpush1.msra.mxu0 0.0
        %3294 = vmatprep.subr.mxu0 0.0
        %3295 = vmatpush1.msra.mxu0 0.0
        %3296 = vmatprep.subr.mxu0 0.0
        %3297 = vmatpush1.msra.mxu0 0.0
        %3298 = vmatprep.subr.mxu0 0.0
        %3299 = vmatpush1.msra.mxu0 0.0
        %3300 = vmatprep.subr.mxu0 0.0
        %3301 = vmatpush1.msra.mxu0 0.0
        %3302 = vmatprep.subr.mxu0 0.0
        %3303 = vmatpush1.msra.mxu0 0.0
        %3304 = vmatprep.subr.mxu0 0.0
        %3305 = vmatpush1.msra.mxu0 0.0
        %3306 = vmatprep.subr.mxu0 0.0
        %3307 = vmatpush1.msra.mxu0 0.0
        %3308 = vmatprep.subr.mxu0 0.0
        %3309 = vmatpush1.msra.mxu0 0.0
        %3310 = vmatprep.subr.mxu0 0.0
        %3311 = vmatpush1.msra.mxu0 0.0
        %3312 = vmatprep.subr.mxu0 0.0
        %3313 = vmatpush1.msra.mxu0 0.0
        %3314 = vmatprep.subr.mxu0 0.0
        %3315 = vmatpush1.msra.mxu0 0.0
        %3316 = vmatprep.subr.mxu0 0.0
        %3317 = vmatpush1.msra.mxu0 0.0
        %3318 = vmatprep.subr.mxu0 0.0
        %3319 = vmatpush1.msra.mxu0 0.0
        %3320 = vmatprep.subr.mxu0 0.0
        %3321 = vmatpush1.msra.mxu0 0.0
        %3322 = vmatprep.subr.mxu0 0.0
        %3323 = vmatpush1.msra.mxu0 0.0
        %3324 = vmatprep.subr.mxu0 0.0
        %3325 = vmatpush1.msra.mxu0 0.0
        %3326 = vmatprep.mubr.f32.mxu0 0.0
        %3327 = vmatmul.mubr.f32.gmra.mrb[0].mxu0 %v2786
        %v3328 = vpop.f32.mrb[0].mxu0
        %v3329 = vadd.f32 0.0, %v3328
        %v3330 = vpop.f32.mrb[0].mxu0
        %3331 = vmatprep.mubr.f32.mxu0 0.0
        %3332 = vmatmul.mubr.f32.gmra.mrb[0].mxu0 %v2789
        %v3333 = vpop.f32.mrb[0].mxu0
        %v3334 = vadd.f32 0.0, %v3333
        %v3335 = vpop.f32.mrb[0].mxu0
        %3336 = vdwg.mxu0
        %v3338 = vsel %vm356, %v3329, 0
        %v3341 = vsel %vm356, %v3334, 0
        %3343 = vmatprep.subr.mxu0 0.0
        %3344 = vmatpush1.msra.mxu0 %v2867
        %3345 = vmatprep.subr.mxu0 0.0
        %3346 = vmatpush1.msra.mxu0 %v2868
        %3347 = vmatprep.subr.mxu0 0.0
        %3348 = vmatpush1.msra.mxu0 0.0
        %3349 = vmatprep.subr.mxu0 0.0
        %3350 = vmatpush1.msra.mxu0 0.0
        %3351 = vmatprep.subr.mxu0 0.0
        %3352 = vmatpush1.msra.mxu0 0.0
        %3353 = vmatprep.subr.mxu0 0.0
        %3354 = vmatpush1.msra.mxu0 0.0
        %3355 = vmatprep.subr.mxu0 0.0
        %3356 = vmatpush1.msra.mxu0 0.0
        %3357 = vmatprep.subr.mxu0 0.0
        %3358 = vmatpush1.msra.mxu0 0.0
        %3359 = vmatprep.subr.mxu0 0.0
        %3360 = vmatpush1.msra.mxu0 0.0
        %3361 = vmatprep.subr.mxu0 0.0
        %3362 = vmatpush1.msra.mxu0 0.0
        %3363 = vmatprep.subr.mxu0 0.0
        %3364 = vmatpush1.msra.mxu0 0.0
        %3365 = vmatprep.subr.mxu0 0.0
        %3366 = vmatpush1.msra.mxu0 0.0
        %3367 = vmatprep.subr.mxu0 0.0
        %3368 = vmatpush1.msra.mxu0 0.0
        %3369 = vmatprep.subr.mxu0 0.0
        %3370 = vmatpush1.msra.mxu0 0.0
        %3371 = vmatprep.subr.mxu0 0.0
        %3372 = vmatpush1.msra.mxu0 0.0
        %3373 = vmatprep.subr.mxu0 0.0
        %3374 = vmatpush1.msra.mxu0 0.0
        %3375 = vmatprep.subr.mxu0 0.0
        %3376 = vmatpush1.msra.mxu0 0.0
        %3377 = vmatprep.subr.mxu0 0.0
        %3378 = vmatpush1.msra.mxu0 0.0
        %3379 = vmatprep.subr.mxu0 0.0
        %3380 = vmatpush1.msra.mxu0 0.0
        %3381 = vmatprep.subr.mxu0 0.0
        %3382 = vmatpush1.msra.mxu0 0.0
        %3383 = vmatprep.subr.mxu0 0.0
        %3384 = vmatpush1.msra.mxu0 0.0
        %3385 = vmatprep.subr.mxu0 0.0
        %3386 = vmatpush1.msra.mxu0 0.0
        %3387 = vmatprep.subr.mxu0 0.0
        %3388 = vmatpush1.msra.mxu0 0.0
        %3389 = vmatprep.subr.mxu0 0.0
        %3390 = vmatpush1.msra.mxu0 0.0
        %3391 = vmatprep.subr.mxu0 0.0
        %3392 = vmatpush1.msra.mxu0 0.0
        %3393 = vmatprep.subr.mxu0 0.0
        %3394 = vmatpush1.msra.mxu0 0.0
        %3395 = vmatprep.subr.mxu0 0.0
        %3396 = vmatpush1.msra.mxu0 0.0
        %3397 = vmatprep.subr.mxu0 0.0
        %3398 = vmatpush1.msra.mxu0 0.0
        %3399 = vmatprep.subr.mxu0 0.0
        %3400 = vmatpush1.msra.mxu0 0.0
        %3401 = vmatprep.subr.mxu0 0.0
        %3402 = vmatpush1.msra.mxu0 0.0
        %3403 = vmatprep.subr.mxu0 0.0
        %3404 = vmatpush1.msra.mxu0 0.0
        %3405 = vmatprep.subr.mxu0 0.0
        %3406 = vmatpush1.msra.mxu0 0.0
        %3407 = vmatprep.mubr.f32.mxu0 0.0
        %3408 = vmatmul.mubr.f32.gmra.mrb[0].mxu0 %v3338
        %v3409 = vpop.f32.mrb[0].mxu0
        %v3410 = vadd.f32 0.0, %v3409
        %v3411 = vpop.f32.mrb[0].mxu0
        %3412 = vmatprep.mubr.f32.mxu0 0.0
        %3413 = vmatmul.mubr.f32.gmra.mrb[0].mxu0 %v3341
        %v3414 = vpop.f32.mrb[0].mxu0
        %v3415 = vadd.f32 0.0, %v3414
        %v3416 = vpop.f32.mrb[0].mxu0
        %3417 = vdwg.mxu0
        %3418 = vmatprep.subr.mxu0 0.0
        %3419 = vmatpush1.msra.mxu0 %v2584
        %3420 = vmatprep.subr.mxu0 0.0
        %3421 = vmatpush1.msra.mxu0 %v2585
        %3422 = vmatprep.subr.mxu0 0.0
        %3423 = vmatpush1.msra.mxu0 %v2586
        %3424 = vmatprep.subr.mxu0 0.0
        %3425 = vmatpush1.msra.mxu0 %v2587
        %3426 = vmatprep.subr.mxu0 0.0
        %3427 = vmatpush1.msra.mxu0 %v2588
        %3428 = vmatprep.subr.mxu0 0.0
        %3429 = vmatpush1.msra.mxu0 %v2589
        %3430 = vmatprep.subr.mxu0 0.0
        %3431 = vmatpush1.msra.mxu0 0.0
        %3432 = vmatprep.subr.mxu0 0.0
        %3433 = vmatpush1.msra.mxu0 0.0
        %3434 = vmatprep.subr.mxu0 0.0
        %3435 = vmatpush1.msra.mxu0 0.0
        %3436 = vmatprep.subr.mxu0 0.0
        %3437 = vmatpush1.msra.mxu0 0.0
        %3438 = vmatprep.subr.mxu0 0.0
        %3439 = vmatpush1.msra.mxu0 0.0
        %3440 = vmatprep.subr.mxu0 0.0
        %3441 = vmatpush1.msra.mxu0 0.0
        %3442 = vmatprep.subr.mxu0 0.0
        %3443 = vmatpush1.msra.mxu0 0.0
        %3444 = vmatprep.subr.mxu0 0.0
        %3445 = vmatpush1.msra.mxu0 0.0
        %3446 = vmatprep.subr.mxu0 0.0
        %3447 = vmatpush1.msra.mxu0 0.0
        %3448 = vmatprep.subr.mxu0 0.0
        %3449 = vmatpush1.msra.mxu0 0.0
        %3450 = vmatprep.subr.mxu0 0.0
        %3451 = vmatpush1.msra.mxu0 0.0
        %3452 = vmatprep.subr.mxu0 0.0
        %3453 = vmatpush1.msra.mxu0 0.0
        %3454 = vmatprep.subr.mxu0 0.0
        %3455 = vmatpush1.msra.mxu0 0.0
        %3456 = vmatprep.subr.mxu0 0.0
        %3457 = vmatpush1.msra.mxu0 0.0
        %3458 = vmatprep.subr.mxu0 0.0
        %3459 = vmatpush1.msra.mxu0 0.0
        %3460 = vmatprep.subr.mxu0 0.0
        %3461 = vmatpush1.msra.mxu0 0.0
        %3462 = vmatprep.subr.mxu0 0.0
        %3463 = vmatpush1.msra.mxu0 0.0
        %3464 = vmatprep.subr.mxu0 0.0
        %3465 = vmatpush1.msra.mxu0 0.0
        %3466 = vmatprep.subr.mxu0 0.0
        %3467 = vmatpush1.msra.mxu0 0.0
        %3468 = vmatprep.subr.mxu0 0.0
        %3469 = vmatpush1.msra.mxu0 0.0
        %3470 = vmatprep.subr.mxu0 0.0
        %3471 = vmatpush1.msra.mxu0 0.0
        %3472 = vmatprep.subr.mxu0 0.0
        %3473 = vmatpush1.msra.mxu0 0.0
        %3474 = vmatprep.subr.mxu0 0.0
        %3475 = vmatpush1.msra.mxu0 0.0
        %3476 = vmatprep.subr.mxu0 0.0
        %3477 = vmatpush1.msra.mxu0 0.0
        %3478 = vmatprep.subr.mxu0 0.0
        %3479 = vmatpush1.msra.mxu0 0.0
        %3480 = vmatprep.subr.mxu0 0.0
        %3481 = vmatpush1.msra.mxu0 0.0
        %3482 = vmatprep.mubr.f32.mxu0 0.0
        %3483 = vmatmul.mubr.f32.gmra.mrb[0].mxu0 %v2786
        %v3484 = vpop.f32.mrb[0].mxu0
        %v3485 = vadd.f32 0.0, %v3484
        %v3486 = vpop.f32.mrb[0].mxu0
        %3487 = vmatprep.mubr.f32.mxu0 0.0
        %3488 = vmatmul.mubr.f32.gmra.mrb[0].mxu0 %v2789
        %v3489 = vpop.f32.mrb[0].mxu0
        %v3490 = vadd.f32 0.0, %v3489
        %v3491 = vpop.f32.mrb[0].mxu0
        %3492 = vdwg.mxu0
        %v3494 = vsel %vm356, %v3485, 0
        %v3497 = vsel %vm356, %v3490, 0
        %3499 = vmatprep.subr.mxu0 0.0
        %3500 = vmatpush1.msra.mxu0 %v2867
        %3501 = vmatprep.subr.mxu0 0.0
        %3502 = vmatpush1.msra.mxu0 %v2868
        %3503 = vmatprep.subr.mxu0 0.0
        %3504 = vmatpush1.msra.mxu0 0.0
        %3505 = vmatprep.subr.mxu0 0.0
        %3506 = vmatpush1.msra.mxu0 0.0
        %3507 = vmatprep.subr.mxu0 0.0
        %3508 = vmatpush1.msra.mxu0 0.0
        %3509 = vmatprep.subr.mxu0 0.0
        %3510 = vmatpush1.msra.mxu0 0.0
        %3511 = vmatprep.subr.mxu0 0.0
        %3512 = vmatpush1.msra.mxu0 0.0
        %3513 = vmatprep.subr.mxu0 0.0
        %3514 = vmatpush1.msra.mxu0 0.0
        %3515 = vmatprep.subr.mxu0 0.0
        %3516 = vmatpush1.msra.mxu0 0.0
        %3517 = vmatprep.subr.mxu0 0.0
        %3518 = vmatpush1.msra.mxu0 0.0
        %3519 = vmatprep.subr.mxu0 0.0
        %3520 = vmatpush1.msra.mxu0 0.0
        %3521 = vmatprep.subr.mxu0 0.0
        %3522 = vmatpush1.msra.mxu0 0.0
        %3523 = vmatprep.subr.mxu0 0.0
        %3524 = vmatpush1.msra.mxu0 0.0
        %3525 = vmatprep.subr.mxu0 0.0
        %3526 = vmatpush1.msra.mxu0 0.0
        %3527 = vmatprep.subr.mxu0 0.0
        %3528 = vmatpush1.msra.mxu0 0.0
        %3529 = vmatprep.subr.mxu0 0.0
        %3530 = vmatpush1.msra.mxu0 0.0
        %3531 = vmatprep.subr.mxu0 0.0
        %3532 = vmatpush1.msra.mxu0 0.0
        %3533 = vmatprep.subr.mxu0 0.0
        %3534 = vmatpush1.msra.mxu0 0.0
        %3535 = vmatprep.subr.mxu0 0.0
        %3536 = vmatpush1.msra.mxu0 0.0
        %3537 = vmatprep.subr.mxu0 0.0
        %3538 = vmatpush1.msra.mxu0 0.0
        %3539 = vmatprep.subr.mxu0 0.0
        %3540 = vmatpush1.msra.mxu0 0.0
        %3541 = vmatprep.subr.mxu0 0.0
        %3542 = vmatpush1.msra.mxu0 0.0
        %3543 = vmatprep.subr.mxu0 0.0
        %3544 = vmatpush1.msra.mxu0 0.0
        %3545 = vmatprep.subr.mxu0 0.0
        %3546 = vmatpush1.msra.mxu0 0.0
        %3547 = vmatprep.subr.mxu0 0.0
        %3548 = vmatpush1.msra.mxu0 0.0
        %3549 = vmatprep.subr.mxu0 0.0
        %3550 = vmatpush1.msra.mxu0 0.0
        %3551 = vmatprep.subr.mxu0 0.0
        %3552 = vmatpush1.msra.mxu0 0.0
        %3553 = vmatprep.subr.mxu0 0.0
        %3554 = vmatpush1.msra.mxu0 0.0
        %3555 = vmatprep.subr.mxu0 0.0
        %3556 = vmatpush1.msra.mxu0 0.0
        %3557 = vmatprep.subr.mxu0 0.0
        %3558 = vmatpush1.msra.mxu0 0.0
        %3559 = vmatprep.subr.mxu0 0.0
        %3560 = vmatpush1.msra.mxu0 0.0
        %3561 = vmatprep.subr.mxu0 0.0
        %3562 = vmatpush1.msra.mxu0 0.0
        %3563 = vmatprep.mubr.f32.mxu0 0.0
        %3564 = vmatmul.mubr.f32.gmra.mrb[0].mxu0 %v3494
        %v3565 = vpop.f32.mrb[0].mxu0
        %v3566 = vadd.f32 0.0, %v3565
        %v3567 = vpop.f32.mrb[0].mxu0
        %3568 = vmatprep.mubr.f32.mxu0 0.0
        %3569 = vmatmul.mubr.f32.gmra.mrb[0].mxu0 %v3497
        %v3570 = vpop.f32.mrb[0].mxu0
        %v3571 = vadd.f32 0.0, %v3570
        %v3572 = vpop.f32.mrb[0].mxu0
        %3573 = vdwg.mxu0
        %v3574 = vmul.f32 %v2942, %v2942
        %v3575 = vmul.f32 %v2947, %v2947
        %v3576 = vmul.f32 %v3098, %v3098
        %v3577 = vmul.f32 %v3103, %v3103
        %v3578 = vmul.f32 %v2942, %v3098
        %v3579 = vmul.f32 %v2947, %v3103
        %v3580 = vsub.f32 %v3566, %v3578
        %v3581 = vsub.f32 %v3571, %v3579
        %v3582 = vmul.f32 %v3580, 2.0
        %v3583 = vmul.f32 %v3581, 2.0
        %v3584 = vadd.f32 %v3582, 0.0009
        %v3585 = vadd.f32 %v3583, 0.0009
        %v3586 = vsub.f32 %v3254, %v3574
        %v3587 = vsub.f32 %v3259, %v3575
        %v3588 = vsub.f32 %v3410, %v3576
        %v3589 = vsub.f32 %v3415, %v3577
        %v3590 = vadd.f32 %v3586, %v3588
        %v3591 = vadd.f32 %v3587, %v3589
        %v3592 = vadd.f32 %v3590, 0.0009
        %v3593 = vadd.f32 %v3591, 0.0009
        %v3594 = vmul.f32 %v3584, %v3584
        %v3595 = vmul.f32 %v3585, %v3585
        %v3596 = vmul.f32 %v3592, %v3592
        %v3597 = vmul.f32 %v3593, %v3593
        %v3598 = vmul.f32 %v3594, %v3584
        %v3599 = vmul.f32 %v3595, %v3585
        %v3600 = vmul.f32 %v3596, %v3592
        %v3601 = vmul.f32 %v3597, %v3593
        %v3602 = vrcp.pop %v3600
        %v3603 = vrcp.pop %v3601
        %v3604 = vmul.f32 %v3600, %v3602
        %v3605 = vmul.f32 %v3601, %v3603
        %v3606 = vsub.f32 2.0, %v3604
        %v3607 = vsub.f32 2.0, %v3605
        %v3608 = vmul.f32 %v3602, %v3606
        %v3609 = vmul.f32 %v3603, %v3607
        %v3610 = vmul.f32 %v3598, %v3608
        %v3611 = vmul.f32 %v3599, %v3609
        %v3612 = vmul.f32 %v2780, %v3610
        %v3613 = vmul.f32 %v2781, %v3611
        %s3614 = scalar_lea.vmem %s2, 48
        %v3615 = vld [vmem:[%s3614] sm:$0xff]
        %v3616 = vld [vmem:[%s3614 + $0x8] sm:$0xff]
        %v3618 = vsel %vm272, %v3615, 0
        %v3621 = vsel %vm272, %v3616, 0
        %3623 = vmatprep.subr.mxu0 0.0
        %3624 = vmatpush1.msra.mxu0 %v1935
        %3625 = vmatprep.subr.mxu0 0.0
        %3626 = vmatpush1.msra.mxu0 %v1936
        %3627 = vmatprep.subr.mxu0 0.0
        %3628 = vmatpush1.msra.mxu0 %v1937
        %3629 = vmatprep.subr.mxu0 0.0
        %3630 = vmatpush1.msra.mxu0 %v1938
        %3631 = vmatprep.subr.mxu0 0.0
        %3632 = vmatpush1.msra.mxu0 %v1939
        %3633 = vmatprep.subr.mxu0 0.0
        %3634 = vmatpush1.msra.mxu0 %v1940
        %3635 = vmatprep.subr.mxu0 0.0
        %3636 = vmatpush1.msra.mxu0 0.0
        %3637 = vmatprep.subr.mxu0 0.0
        %3638 = vmatpush1.msra.mxu0 0.0
        %3639 = vmatprep.subr.mxu0 0.0
        %3640 = vmatpush1.msra.mxu0 0.0
        %3641 = vmatprep.subr.mxu0 0.0
        %3642 = vmatpush1.msra.mxu0 0.0
        %3643 = vmatprep.subr.mxu0 0.0
        %3644 = vmatpush1.msra.mxu0 0.0
        %3645 = vmatprep.subr.mxu0 0.0
        %3646 = vmatpush1.msra.mxu0 0.0
        %3647 = vmatprep.subr.mxu0 0.0
        %3648 = vmatpush1.msra.mxu0 0.0
        %3649 = vmatprep.subr.mxu0 0.0
        %3650 = vmatpush1.msra.mxu0 0.0
        %3651 = vmatprep.subr.mxu0 0.0
        %3652 = vmatpush1.msra.mxu0 0.0
        %3653 = vmatprep.subr.mxu0 0.0
        %3654 = vmatpush1.msra.mxu0 0.0
        %3655 = vmatprep.subr.mxu0 0.0
        %3656 = vmatpush1.msra.mxu0 0.0
        %3657 = vmatprep.subr.mxu0 0.0
        %3658 = vmatpush1.msra.mxu0 0.0
        %3659 = vmatprep.subr.mxu0 0.0
        %3660 = vmatpush1.msra.mxu0 0.0
        %3661 = vmatprep.subr.mxu0 0.0
        %3662 = vmatpush1.msra.mxu0 0.0
        %3663 = vmatprep.subr.mxu0 0.0
        %3664 = vmatpush1.msra.mxu0 0.0
        %3665 = vmatprep.subr.mxu0 0.0
        %3666 = vmatpush1.msra.mxu0 0.0
        %3667 = vmatprep.subr.mxu0 0.0
        %3668 = vmatpush1.msra.mxu0 0.0
        %3669 = vmatprep.subr.mxu0 0.0
        %3670 = vmatpush1.msra.mxu0 0.0
        %3671 = vmatprep.subr.mxu0 0.0
        %3672 = vmatpush1.msra.mxu0 0.0
        %3673 = vmatprep.subr.mxu0 0.0
        %3674 = vmatpush1.msra.mxu0 0.0
        %3675 = vmatprep.subr.mxu0 0.0
        %3676 = vmatpush1.msra.mxu0 0.0
        %3677 = vmatprep.subr.mxu0 0.0
        %3678 = vmatpush1.msra.mxu0 0.0
        %3679 = vmatprep.subr.mxu0 0.0
        %3680 = vmatpush1.msra.mxu0 0.0
        %3681 = vmatprep.subr.mxu0 0.0
        %3682 = vmatpush1.msra.mxu0 0.0
        %3683 = vmatprep.subr.mxu0 0.0
        %3684 = vmatpush1.msra.mxu0 0.0
        %3685 = vmatprep.subr.mxu0 0.0
        %3686 = vmatpush1.msra.mxu0 0.0
        %3687 = vmatprep.mubr.f32.mxu0 0.0
        %3688 = vmatmul.mubr.f32.gmra.mrb[0].mxu0 %v3618
        %v3689 = vpop.f32.mrb[0].mxu0
        %v3690 = vadd.f32 0.0, %v3689
        %v3691 = vpop.f32.mrb[0].mxu0
        %3692 = vmatprep.mubr.f32.mxu0 0.0
        %3693 = vmatmul.mubr.f32.gmra.mrb[0].mxu0 %v3621
        %v3694 = vpop.f32.mrb[0].mxu0
        %v3695 = vadd.f32 0.0, %v3694
        %v3696 = vpop.f32.mrb[0].mxu0
        %3697 = vdwg.mxu0
        %s3698 = scalar_lea.vmem %s3, 48
        %v3699 = vld [vmem:[%s3698] sm:$0xff]
        %v3700 = vld [vmem:[%s3698 + $0x8] sm:$0xff]
        %v3702 = vsel %vm356, %v3690, 0
        %v3705 = vsel %vm356, %v3695, 0
        %3707 = vmatprep.subr.mxu0 0.0
        %3708 = vmatpush1.msra.mxu0 %v3699
        %3709 = vmatprep.subr.mxu0 0.0
        %3710 = vmatpush1.msra.mxu0 %v3700
        %3711 = vmatprep.subr.mxu0 0.0
        %3712 = vmatpush1.msra.mxu0 0.0
        %3713 = vmatprep.subr.mxu0 0.0
        %3714 = vmatpush1.msra.mxu0 0.0
        %3715 = vmatprep.subr.mxu0 0.0
        %3716 = vmatpush1.msra.mxu0 0.0
        %3717 = vmatprep.subr.mxu0 0.0
        %3718 = vmatpush1.msra.mxu0 0.0
        %3719 = vmatprep.subr.mxu0 0.0
        %3720 = vmatpush1.msra.mxu0 0.0
        %3721 = vmatprep.subr.mxu0 0.0
        %3722 = vmatpush1.msra.mxu0 0.0
        %3723 = vmatprep.subr.mxu0 0.0
        %3724 = vmatpush1.msra.mxu0 0.0
        %3725 = vmatprep.subr.mxu0 0.0
        %3726 = vmatpush1.msra.mxu0 0.0
        %3727 = vmatprep.subr.mxu0 0.0
        %3728 = vmatpush1.msra.mxu0 0.0
        %3729 = vmatprep.subr.mxu0 0.0
        %3730 = vmatpush1.msra.mxu0 0.0
        %3731 = vmatprep.subr.mxu0 0.0
        %3732 = vmatpush1.msra.mxu0 0.0
        %3733 = vmatprep.subr.mxu0 0.0
        %3734 = vmatpush1.msra.mxu0 0.0
        %3735 = vmatprep.subr.mxu0 0.0
        %3736 = vmatpush1.msra.mxu0 0.0
        %3737 = vmatprep.subr.mxu0 0.0
        %3738 = vmatpush1.msra.mxu0 0.0
        %3739 = vmatprep.subr.mxu0 0.0
        %3740 = vmatpush1.msra.mxu0 0.0
        %3741 = vmatprep.subr.mxu0 0.0
        %3742 = vmatpush1.msra.mxu0 0.0
        %3743 = vmatprep.subr.mxu0 0.0
        %3744 = vmatpush1.msra.mxu0 0.0
        %3745 = vmatprep.subr.mxu0 0.0
        %3746 = vmatpush1.msra.mxu0 0.0
        %3747 = vmatprep.subr.mxu0 0.0
        %3748 = vmatpush1.msra.mxu0 0.0
        %3749 = vmatprep.subr.mxu0 0.0
        %3750 = vmatpush1.msra.mxu0 0.0
        %3751 = vmatprep.subr.mxu0 0.0
        %3752 = vmatpush1.msra.mxu0 0.0
        %3753 = vmatprep.subr.mxu0 0.0
        %3754 = vmatpush1.msra.mxu0 0.0
        %3755 = vmatprep.subr.mxu0 0.0
        %3756 = vmatpush1.msra.mxu0 0.0
        %3757 = vmatprep.subr.mxu0 0.0
        %3758 = vmatpush1.msra.mxu0 0.0
        %3759 = vmatprep.subr.mxu0 0.0
        %3760 = vmatpush1.msra.mxu0 0.0
        %3761 = vmatprep.subr.mxu0 0.0
        %3762 = vmatpush1.msra.mxu0 0.0
        %3763 = vmatprep.subr.mxu0 0.0
        %3764 = vmatpush1.msra.mxu0 0.0
        %3765 = vmatprep.subr.mxu0 0.0
        %3766 = vmatpush1.msra.mxu0 0.0
        %3767 = vmatprep.subr.mxu0 0.0
        %3768 = vmatpush1.msra.mxu0 0.0
        %3769 = vmatprep.subr.mxu0 0.0
        %3770 = vmatpush1.msra.mxu0 0.0
        %3771 = vmatprep.mubr.f32.mxu0 0.0
        %3772 = vmatmul.mubr.f32.gmra.mrb[0].mxu0 %v3702
        %v3773 = vpop.f32.mrb[0].mxu0
        %v3774 = vadd.f32 0.0, %v3773
        %v3775 = vpop.f32.mrb[0].mxu0
        %3776 = vmatprep.mubr.f32.mxu0 0.0
        %3777 = vmatmul.mubr.f32.gmra.mrb[0].mxu0 %v3705
        %v3778 = vpop.f32.mrb[0].mxu0
        %v3779 = vadd.f32 0.0, %v3778
        %v3780 = vpop.f32.mrb[0].mxu0
        %3781 = vdwg.mxu0
        %3782 = vmatprep.subr.mxu0 0.0
        %3783 = vmatpush1.msra.mxu0 %v1942
        %3784 = vmatprep.subr.mxu0 0.0
        %3785 = vmatpush1.msra.mxu0 %v1943
        %3786 = vmatprep.subr.mxu0 0.0
        %3787 = vmatpush1.msra.mxu0 %v1944
        %3788 = vmatprep.subr.mxu0 0.0
        %3789 = vmatpush1.msra.mxu0 %v1945
        %3790 = vmatprep.subr.mxu0 0.0
        %3791 = vmatpush1.msra.mxu0 %v1946
        %3792 = vmatprep.subr.mxu0 0.0
        %3793 = vmatpush1.msra.mxu0 %v1947
        %3794 = vmatprep.subr.mxu0 0.0
        %3795 = vmatpush1.msra.mxu0 0.0
        %3796 = vmatprep.subr.mxu0 0.0
        %3797 = vmatpush1.msra.mxu0 0.0
        %3798 = vmatprep.subr.mxu0 0.0
        %3799 = vmatpush1.msra.mxu0 0.0
        %3800 = vmatprep.subr.mxu0 0.0
        %3801 = vmatpush1.msra.mxu0 0.0
        %3802 = vmatprep.subr.mxu0 0.0
        %3803 = vmatpush1.msra.mxu0 0.0
        %3804 = vmatprep.subr.mxu0 0.0
        %3805 = vmatpush1.msra.mxu0 0.0
        %3806 = vmatprep.subr.mxu0 0.0
        %3807 = vmatpush1.msra.mxu0 0.0
        %3808 = vmatprep.subr.mxu0 0.0
        %3809 = vmatpush1.msra.mxu0 0.0
        %3810 = vmatprep.subr.mxu0 0.0
        %3811 = vmatpush1.msra.mxu0 0.0
        %3812 = vmatprep.subr.mxu0 0.0
        %3813 = vmatpush1.msra.mxu0 0.0
        %3814 = vmatprep.subr.mxu0 0.0
        %3815 = vmatpush1.msra.mxu0 0.0
        %3816 = vmatprep.subr.mxu0 0.0
        %3817 = vmatpush1.msra.mxu0 0.0
        %3818 = vmatprep.subr.mxu0 0.0
        %3819 = vmatpush1.msra.mxu0 0.0
        %3820 = vmatprep.subr.mxu0 0.0
        %3821 = vmatpush1.msra.mxu0 0.0
        %3822 = vmatprep.subr.mxu0 0.0
        %3823 = vmatpush1.msra.mxu0 0.0
        %3824 = vmatprep.subr.mxu0 0.0
        %3825 = vmatpush1.msra.mxu0 0.0
        %3826 = vmatprep.subr.mxu0 0.0
        %3827 = vmatpush1.msra.mxu0 0.0
        %3828 = vmatprep.subr.mxu0 0.0
        %3829 = vmatpush1.msra.mxu0 0.0
        %3830 = vmatprep.subr.mxu0 0.0
        %3831 = vmatpush1.msra.mxu0 0.0
        %3832 = vmatprep.subr.mxu0 0.0
        %3833 = vmatpush1.msra.mxu0 0.0
        %3834 = vmatprep.subr.mxu0 0.0
        %3835 = vmatpush1.msra.mxu0 0.0
        %3836 = vmatprep.subr.mxu0 0.0
        %3837 = vmatpush1.msra.mxu0 0.0
        %3838 = vmatprep.subr.mxu0 0.0
        %3839 = vmatpush1.msra.mxu0 0.0
        %3840 = vmatprep.subr.mxu0 0.0
        %3841 = vmatpush1.msra.mxu0 0.0
        %3842 = vmatprep.subr.mxu0 0.0
        %3843 = vmatpush1.msra.mxu0 0.0
        %3844 = vmatprep.subr.mxu0 0.0
        %3845 = vmatpush1.msra.mxu0 0.0
        %3846 = vmatprep.mubr.f32.mxu0 0.0
        %3847 = vmatmul.mubr.f32.gmra.mrb[0].mxu0 %v3618
        %v3848 = vpop.f32.mrb[0].mxu0
        %v3849 = vadd.f32 0.0, %v3848
        %v3850 = vpop.f32.mrb[0].mxu0
        %3851 = vmatprep.mubr.f32.mxu0 0.0
        %3852 = vmatmul.mubr.f32.gmra.mrb[0].mxu0 %v3621
        %v3853 = vpop.f32.mrb[0].mxu0
        %v3854 = vadd.f32 0.0, %v3853
        %v3855 = vpop.f32.mrb[0].mxu0
        %3856 = vdwg.mxu0
        %v3858 = vsel %vm356, %v3849, 0
        %v3861 = vsel %vm356, %v3854, 0
        %3863 = vmatprep.subr.mxu0 0.0
        %3864 = vmatpush1.msra.mxu0 %v3699
        %3865 = vmatprep.subr.mxu0 0.0
        %3866 = vmatpush1.msra.mxu0 %v3700
        %3867 = vmatprep.subr.mxu0 0.0
        %3868 = vmatpush1.msra.mxu0 0.0
        %3869 = vmatprep.subr.mxu0 0.0
        %3870 = vmatpush1.msra.mxu0 0.0
        %3871 = vmatprep.subr.mxu0 0.0
        %3872 = vmatpush1.msra.mxu0 0.0
        %3873 = vmatprep.subr.mxu0 0.0
        %3874 = vmatpush1.msra.mxu0 0.0
        %3875 = vmatprep.subr.mxu0 0.0
        %3876 = vmatpush1.msra.mxu0 0.0
        %3877 = vmatprep.subr.mxu0 0.0
        %3878 = vmatpush1.msra.mxu0 0.0
        %3879 = vmatprep.subr.mxu0 0.0
        %3880 = vmatpush1.msra.mxu0 0.0
        %3881 = vmatprep.subr.mxu0 0.0
        %3882 = vmatpush1.msra.mxu0 0.0
        %3883 = vmatprep.subr.mxu0 0.0
        %3884 = vmatpush1.msra.mxu0 0.0
        %3885 = vmatprep.subr.mxu0 0.0
        %3886 = vmatpush1.msra.mxu0 0.0
        %3887 = vmatprep.subr.mxu0 0.0
        %3888 = vmatpush1.msra.mxu0 0.0
        %3889 = vmatprep.subr.mxu0 0.0
        %3890 = vmatpush1.msra.mxu0 0.0
        %3891 = vmatprep.subr.mxu0 0.0
        %3892 = vmatpush1.msra.mxu0 0.0
        %3893 = vmatprep.subr.mxu0 0.0
        %3894 = vmatpush1.msra.mxu0 0.0
        %3895 = vmatprep.subr.mxu0 0.0
        %3896 = vmatpush1.msra.mxu0 0.0
        %3897 = vmatprep.subr.mxu0 0.0
        %3898 = vmatpush1.msra.mxu0 0.0
        %3899 = vmatprep.subr.mxu0 0.0
        %3900 = vmatpush1.msra.mxu0 0.0
        %3901 = vmatprep.subr.mxu0 0.0
        %3902 = vmatpush1.msra.mxu0 0.0
        %3903 = vmatprep.subr.mxu0 0.0
        %3904 = vmatpush1.msra.mxu0 0.0
        %3905 = vmatprep.subr.mxu0 0.0
        %3906 = vmatpush1.msra.mxu0 0.0
        %3907 = vmatprep.subr.mxu0 0.0
        %3908 = vmatpush1.msra.mxu0 0.0
        %3909 = vmatprep.subr.mxu0 0.0
        %3910 = vmatpush1.msra.mxu0 0.0
        %3911 = vmatprep.subr.mxu0 0.0
        %3912 = vmatpush1.msra.mxu0 0.0
        %3913 = vmatprep.subr.mxu0 0.0
        %3914 = vmatpush1.msra.mxu0 0.0
        %3915 = vmatprep.subr.mxu0 0.0
        %3916 = vmatpush1.msra.mxu0 0.0
        %3917 = vmatprep.subr.mxu0 0.0
        %3918 = vmatpush1.msra.mxu0 0.0
        %3919 = vmatprep.subr.mxu0 0.0
        %3920 = vmatpush1.msra.mxu0 0.0
        %3921 = vmatprep.subr.mxu0 0.0
        %3922 = vmatpush1.msra.mxu0 0.0
        %3923 = vmatprep.subr.mxu0 0.0
        %3924 = vmatpush1.msra.mxu0 0.0
        %3925 = vmatprep.subr.mxu0 0.0
        %3926 = vmatpush1.msra.mxu0 0.0
        %3927 = vmatprep.mubr.f32.mxu0 0.0
        %3928 = vmatmul.mubr.f32.gmra.mrb[0].mxu0 %v3858
        %v3929 = vpop.f32.mrb[0].mxu0
        %v3930 = vadd.f32 0.0, %v3929
        %v3931 = vpop.f32.mrb[0].mxu0
        %3932 = vmatprep.mubr.f32.mxu0 0.0
        %3933 = vmatmul.mubr.f32.gmra.mrb[0].mxu0 %v3861
        %v3934 = vpop.f32.mrb[0].mxu0
        %v3935 = vadd.f32 0.0, %v3934
        %v3936 = vpop.f32.mrb[0].mxu0
        %3937 = vdwg.mxu0
        %3938 = vmatprep.subr.mxu0 0.0
        %3939 = vmatpush1.msra.mxu0 %v2260
        %3940 = vmatprep.subr.mxu0 0.0
        %3941 = vmatpush1.msra.mxu0 %v2261
        %3942 = vmatprep.subr.mxu0 0.0
        %3943 = vmatpush1.msra.mxu0 %v2262
        %3944 = vmatprep.subr.mxu0 0.0
        %3945 = vmatpush1.msra.mxu0 %v2263
        %3946 = vmatprep.subr.mxu0 0.0
        %3947 = vmatpush1.msra.mxu0 %v2264
        %3948 = vmatprep.subr.mxu0 0.0
        %3949 = vmatpush1.msra.mxu0 %v2265
        %3950 = vmatprep.subr.mxu0 0.0
        %3951 = vmatpush1.msra.mxu0 0.0
        %3952 = vmatprep.subr.mxu0 0.0
        %3953 = vmatpush1.msra.mxu0 0.0
        %3954 = vmatprep.subr.mxu0 0.0
        %3955 = vmatpush1.msra.mxu0 0.0
        %3956 = vmatprep.subr.mxu0 0.0
        %3957 = vmatpush1.msra.mxu0 0.0
        %3958 = vmatprep.subr.mxu0 0.0
        %3959 = vmatpush1.msra.mxu0 0.0
        %3960 = vmatprep.subr.mxu0 0.0
        %3961 = vmatpush1.msra.mxu0 0.0
        %3962 = vmatprep.subr.mxu0 0.0
        %3963 = vmatpush1.msra.mxu0 0.0
        %3964 = vmatprep.subr.mxu0 0.0
        %3965 = vmatpush1.msra.mxu0 0.0
        %3966 = vmatprep.subr.mxu0 0.0
        %3967 = vmatpush1.msra.mxu0 0.0
        %3968 = vmatprep.subr.mxu0 0.0
        %3969 = vmatpush1.msra.mxu0 0.0
        %3970 = vmatprep.subr.mxu0 0.0
        %3971 = vmatpush1.msra.mxu0 0.0
        %3972 = vmatprep.subr.mxu0 0.0
        %3973 = vmatpush1.msra.mxu0 0.0
        %3974 = vmatprep.subr.mxu0 0.0
        %3975 = vmatpush1.msra.mxu0 0.0
        %3976 = vmatprep.subr.mxu0 0.0
        %3977 = vmatpush1.msra.mxu0 0.0
        %3978 = vmatprep.subr.mxu0 0.0
        %3979 = vmatpush1.msra.mxu0 0.0
        %3980 = vmatprep.subr.mxu0 0.0
        %3981 = vmatpush1.msra.mxu0 0.0
        %3982 = vmatprep.subr.mxu0 0.0
        %3983 = vmatpush1.msra.mxu0 0.0
        %3984 = vmatprep.subr.mxu0 0.0
        %3985 = vmatpush1.msra.mxu0 0.0
        %3986 = vmatprep.subr.mxu0 0.0
        %3987 = vmatpush1.msra.mxu0 0.0
        %3988 = vmatprep.subr.mxu0 0.0
        %3989 = vmatpush1.msra.mxu0 0.0
        %3990 = vmatprep.subr.mxu0 0.0
        %3991 = vmatpush1.msra.mxu0 0.0
        %3992 = vmatprep.subr.mxu0 0.0
        %3993 = vmatpush1.msra.mxu0 0.0
        %3994 = vmatprep.subr.mxu0 0.0
        %3995 = vmatpush1.msra.mxu0 0.0
        %3996 = vmatprep.subr.mxu0 0.0
        %3997 = vmatpush1.msra.mxu0 0.0
        %3998 = vmatprep.subr.mxu0 0.0
        %3999 = vmatpush1.msra.mxu0 0.0
        %4000 = vmatprep.subr.mxu0 0.0
        %4001 = vmatpush1.msra.mxu0 0.0
        %4002 = vmatprep.mubr.f32.mxu0 0.0
        %4003 = vmatmul.mubr.f32.gmra.mrb[0].mxu0 %v3618
        %v4004 = vpop.f32.mrb[0].mxu0
        %v4005 = vadd.f32 0.0, %v4004
        %v4006 = vpop.f32.mrb[0].mxu0
        %4007 = vmatprep.mubr.f32.mxu0 0.0
        %4008 = vmatmul.mubr.f32.gmra.mrb[0].mxu0 %v3621
        %v4009 = vpop.f32.mrb[0].mxu0
        %v4010 = vadd.f32 0.0, %v4009
        %v4011 = vpop.f32.mrb[0].mxu0
        %4012 = vdwg.mxu0
        %v4014 = vsel %vm356, %v4005, 0
        %v4017 = vsel %vm356, %v4010, 0
        %4019 = vmatprep.subr.mxu0 0.0
        %4020 = vmatpush1.msra.mxu0 %v3699
        %4021 = vmatprep.subr.mxu0 0.0
        %4022 = vmatpush1.msra.mxu0 %v3700
        %4023 = vmatprep.subr.mxu0 0.0
        %4024 = vmatpush1.msra.mxu0 0.0
        %4025 = vmatprep.subr.mxu0 0.0
        %4026 = vmatpush1.msra.mxu0 0.0
        %4027 = vmatprep.subr.mxu0 0.0
        %4028 = vmatpush1.msra.mxu0 0.0
        %4029 = vmatprep.subr.mxu0 0.0
        %4030 = vmatpush1.msra.mxu0 0.0
        %4031 = vmatprep.subr.mxu0 0.0
        %4032 = vmatpush1.msra.mxu0 0.0
        %4033 = vmatprep.subr.mxu0 0.0
        %4034 = vmatpush1.msra.mxu0 0.0
        %4035 = vmatprep.subr.mxu0 0.0
        %4036 = vmatpush1.msra.mxu0 0.0
        %4037 = vmatprep.subr.mxu0 0.0
        %4038 = vmatpush1.msra.mxu0 0.0
        %4039 = vmatprep.subr.mxu0 0.0
        %4040 = vmatpush1.msra.mxu0 0.0
        %4041 = vmatprep.subr.mxu0 0.0
        %4042 = vmatpush1.msra.mxu0 0.0
        %4043 = vmatprep.subr.mxu0 0.0
        %4044 = vmatpush1.msra.mxu0 0.0
        %4045 = vmatprep.subr.mxu0 0.0
        %4046 = vmatpush1.msra.mxu0 0.0
        %4047 = vmatprep.subr.mxu0 0.0
        %4048 = vmatpush1.msra.mxu0 0.0
        %4049 = vmatprep.subr.mxu0 0.0
        %4050 = vmatpush1.msra.mxu0 0.0
        %4051 = vmatprep.subr.mxu0 0.0
        %4052 = vmatpush1.msra.mxu0 0.0
        %4053 = vmatprep.subr.mxu0 0.0
        %4054 = vmatpush1.msra.mxu0 0.0
        %4055 = vmatprep.subr.mxu0 0.0
        %4056 = vmatpush1.msra.mxu0 0.0
        %4057 = vmatprep.subr.mxu0 0.0
        %4058 = vmatpush1.msra.mxu0 0.0
        %4059 = vmatprep.subr.mxu0 0.0
        %4060 = vmatpush1.msra.mxu0 0.0
        %4061 = vmatprep.subr.mxu0 0.0
        %4062 = vmatpush1.msra.mxu0 0.0
        %4063 = vmatprep.subr.mxu0 0.0
        %4064 = vmatpush1.msra.mxu0 0.0
        %4065 = vmatprep.subr.mxu0 0.0
        %4066 = vmatpush1.msra.mxu0 0.0
        %4067 = vmatprep.subr.mxu0 0.0
        %4068 = vmatpush1.msra.mxu0 0.0
        %4069 = vmatprep.subr.mxu0 0.0
        %4070 = vmatpush1.msra.mxu0 0.0
        %4071 = vmatprep.subr.mxu0 0.0
        %4072 = vmatpush1.msra.mxu0 0.0
        %4073 = vmatprep.subr.mxu0 0.0
        %4074 = vmatpush1.msra.mxu0 0.0
        %4075 = vmatprep.subr.mxu0 0.0
        %4076 = vmatpush1.msra.mxu0 0.0
        %4077 = vmatprep.subr.mxu0 0.0
        %4078 = vmatpush1.msra.mxu0 0.0
        %4079 = vmatprep.subr.mxu0 0.0
        %4080 = vmatpush1.msra.mxu0 0.0
        %4081 = vmatprep.subr.mxu0 0.0
        %4082 = vmatpush1.msra.mxu0 0.0
        %4083 = vmatprep.mubr.f32.mxu0 0.0
        %4084 = vmatmul.mubr.f32.gmra.mrb[0].mxu0 %v4014
        %v4085 = vpop.f32.mrb[0].mxu0
        %v4086 = vadd.f32 0.0, %v4085
        %v4087 = vpop.f32.mrb[0].mxu0
        %4088 = vmatprep.mubr.f32.mxu0 0.0
        %4089 = vmatmul.mubr.f32.gmra.mrb[0].mxu0 %v4017
        %v4090 = vpop.f32.mrb[0].mxu0
        %v4091 = vadd.f32 0.0, %v4090
        %v4092 = vpop.f32.mrb[0].mxu0
        %4093 = vdwg.mxu0
        %4094 = vmatprep.subr.mxu0 0.0
        %4095 = vmatpush1.msra.mxu0 %v2422
        %4096 = vmatprep.subr.mxu0 0.0
        %4097 = vmatpush1.msra.mxu0 %v2423
        %4098 = vmatprep.subr.mxu0 0.0
        %4099 = vmatpush1.msra.mxu0 %v2424
        %4100 = vmatprep.subr.mxu0 0.0
        %4101 = vmatpush1.msra.mxu0 %v2425
        %4102 = vmatprep.subr.mxu0 0.0
        %4103 = vmatpush1.msra.mxu0 %v2426
        %4104 = vmatprep.subr.mxu0 0.0
        %4105 = vmatpush1.msra.mxu0 %v2427
        %4106 = vmatprep.subr.mxu0 0.0
        %4107 = vmatpush1.msra.mxu0 0.0
        %4108 = vmatprep.subr.mxu0 0.0
        %4109 = vmatpush1.msra.mxu0 0.0
        %4110 = vmatprep.subr.mxu0 0.0
        %4111 = vmatpush1.msra.mxu0 0.0
        %4112 = vmatprep.subr.mxu0 0.0
        %4113 = vmatpush1.msra.mxu0 0.0
        %4114 = vmatprep.subr.mxu0 0.0
        %4115 = vmatpush1.msra.mxu0 0.0
        %4116 = vmatprep.subr.mxu0 0.0
        %4117 = vmatpush1.msra.mxu0 0.0
        %4118 = vmatprep.subr.mxu0 0.0
        %4119 = vmatpush1.msra.mxu0 0.0
        %4120 = vmatprep.subr.mxu0 0.0
        %4121 = vmatpush1.msra.mxu0 0.0
        %4122 = vmatprep.subr.mxu0 0.0
        %4123 = vmatpush1.msra.mxu0 0.0
        %4124 = vmatprep.subr.mxu0 0.0
        %4125 = vmatpush1.msra.mxu0 0.0
        %4126 = vmatprep.subr.mxu0 0.0
        %4127 = vmatpush1.msra.mxu0 0.0
        %4128 = vmatprep.subr.mxu0 0.0
        %4129 = vmatpush1.msra.mxu0 0.0
        %4130 = vmatprep.subr.mxu0 0.0
        %4131 = vmatpush1.msra.mxu0 0.0
        %4132 = vmatprep.subr.mxu0 0.0
        %4133 = vmatpush1.msra.mxu0 0.0
        %4134 = vmatprep.subr.mxu0 0.0
        %4135 = vmatpush1.msra.mxu0 0.0
        %4136 = vmatprep.subr.mxu0 0.0
        %4137 = vmatpush1.msra.mxu0 0.0
        %4138 = vmatprep.subr.mxu0 0.0
        %4139 = vmatpush1.msra.mxu0 0.0
        %4140 = vmatprep.subr.mxu0 0.0
        %4141 = vmatpush1.msra.mxu0 0.0
        %4142 = vmatprep.subr.mxu0 0.0
        %4143 = vmatpush1.msra.mxu0 0.0
        %4144 = vmatprep.subr.mxu0 0.0
        %4145 = vmatpush1.msra.mxu0 0.0
        %4146 = vmatprep.subr.mxu0 0.0
        %4147 = vmatpush1.msra.mxu0 0.0
        %4148 = vmatprep.subr.mxu0 0.0
        %4149 = vmatpush1.msra.mxu0 0.0
        %4150 = vmatprep.subr.mxu0 0.0
        %4151 = vmatpush1.msra.mxu0 0.0
        %4152 = vmatprep.subr.mxu0 0.0
        %4153 = vmatpush1.msra.mxu0 0.0
        %4154 = vmatprep.subr.mxu0 0.0
        %4155 = vmatpush1.msra.mxu0 0.0
        %4156 = vmatprep.subr.mxu0 0.0
        %4157 = vmatpush1.msra.mxu0 0.0
        %4158 = vmatprep.mubr.f32.mxu0 0.0
        %4159 = vmatmul.mubr.f32.gmra.mrb[0].mxu0 %v3618
        %v4160 = vpop.f32.mrb[0].mxu0
        %v4161 = vadd.f32 0.0, %v4160
        %v4162 = vpop.f32.mrb[0].mxu0
        %4163 = vmatprep.mubr.f32.mxu0 0.0
        %4164 = vmatmul.mubr.f32.gmra.mrb[0].mxu0 %v3621
        %v4165 = vpop.f32.mrb[0].mxu0
        %v4166 = vadd.f32 0.0, %v4165
        %v4167 = vpop.f32.mrb[0].mxu0
        %4168 = vdwg.mxu0
        %v4170 = vsel %vm356, %v4161, 0
        %v4173 = vsel %vm356, %v4166, 0
        %4175 = vmatprep.subr.mxu0 0.0
        %4176 = vmatpush1.msra.mxu0 %v3699
        %4177 = vmatprep.subr.mxu0 0.0
        %4178 = vmatpush1.msra.mxu0 %v3700
        %4179 = vmatprep.subr.mxu0 0.0
        %4180 = vmatpush1.msra.mxu0 0.0
        %4181 = vmatprep.subr.mxu0 0.0
        %4182 = vmatpush1.msra.mxu0 0.0
        %4183 = vmatprep.subr.mxu0 0.0
        %4184 = vmatpush1.msra.mxu0 0.0
        %4185 = vmatprep.subr.mxu0 0.0
        %4186 = vmatpush1.msra.mxu0 0.0
        %4187 = vmatprep.subr.mxu0 0.0
        %4188 = vmatpush1.msra.mxu0 0.0
        %4189 = vmatprep.subr.mxu0 0.0
        %4190 = vmatpush1.msra.mxu0 0.0
        %4191 = vmatprep.subr.mxu0 0.0
        %4192 = vmatpush1.msra.mxu0 0.0
        %4193 = vmatprep.subr.mxu0 0.0
        %4194 = vmatpush1.msra.mxu0 0.0
        %4195 = vmatprep.subr.mxu0 0.0
        %4196 = vmatpush1.msra.mxu0 0.0
        %4197 = vmatprep.subr.mxu0 0.0
        %4198 = vmatpush1.msra.mxu0 0.0
        %4199 = vmatprep.subr.mxu0 0.0
        %4200 = vmatpush1.msra.mxu0 0.0
        %4201 = vmatprep.subr.mxu0 0.0
        %4202 = vmatpush1.msra.mxu0 0.0
        %4203 = vmatprep.subr.mxu0 0.0
        %4204 = vmatpush1.msra.mxu0 0.0
        %4205 = vmatprep.subr.mxu0 0.0
        %4206 = vmatpush1.msra.mxu0 0.0
        %4207 = vmatprep.subr.mxu0 0.0
        %4208 = vmatpush1.msra.mxu0 0.0
        %4209 = vmatprep.subr.mxu0 0.0
        %4210 = vmatpush1.msra.mxu0 0.0
        %4211 = vmatprep.subr.mxu0 0.0
        %4212 = vmatpush1.msra.mxu0 0.0
        %4213 = vmatprep.subr.mxu0 0.0
        %4214 = vmatpush1.msra.mxu0 0.0
        %4215 = vmatprep.subr.mxu0 0.0
        %4216 = vmatpush1.msra.mxu0 0.0
        %4217 = vmatprep.subr.mxu0 0.0
        %4218 = vmatpush1.msra.mxu0 0.0
        %4219 = vmatprep.subr.mxu0 0.0
        %4220 = vmatpush1.msra.mxu0 0.0
        %4221 = vmatprep.subr.mxu0 0.0
        %4222 = vmatpush1.msra.mxu0 0.0
        %4223 = vmatprep.subr.mxu0 0.0
        %4224 = vmatpush1.msra.mxu0 0.0
        %4225 = vmatprep.subr.mxu0 0.0
        %4226 = vmatpush1.msra.mxu0 0.0
        %4227 = vmatprep.subr.mxu0 0.0
        %4228 = vmatpush1.msra.mxu0 0.0
        %4229 = vmatprep.subr.mxu0 0.0
        %4230 = vmatpush1.msra.mxu0 0.0
        %4231 = vmatprep.subr.mxu0 0.0
        %4232 = vmatpush1.msra.mxu0 0.0
        %4233 = vmatprep.subr.mxu0 0.0
        %4234 = vmatpush1.msra.mxu0 0.0
        %4235 = vmatprep.subr.mxu0 0.0
        %4236 = vmatpush1.msra.mxu0 0.0
        %4237 = vmatprep.subr.mxu0 0.0
        %4238 = vmatpush1.msra.mxu0 0.0
        %4239 = vmatprep.mubr.f32.mxu0 0.0
        %4240 = vmatmul.mubr.f32.gmra.mrb[0].mxu0 %v4170
        %v4241 = vpop.f32.mrb[0].mxu0
        %v4242 = vadd.f32 0.0, %v4241
        %v4243 = vpop.f32.mrb[0].mxu0
        %4244 = vmatprep.mubr.f32.mxu0 0.0
        %4245 = vmatmul.mubr.f32.gmra.mrb[0].mxu0 %v4173
        %v4246 = vpop.f32.mrb[0].mxu0
        %v4247 = vadd.f32 0.0, %v4246
        %v4248 = vpop.f32.mrb[0].mxu0
        %4249 = vdwg.mxu0
        %4250 = vmatprep.subr.mxu0 0.0
        %4251 = vmatpush1.msra.mxu0 %v2584
        %4252 = vmatprep.subr.mxu0 0.0
        %4253 = vmatpush1.msra.mxu0 %v2585
        %4254 = vmatprep.subr.mxu0 0.0
        %4255 = vmatpush1.msra.mxu0 %v2586
        %4256 = vmatprep.subr.mxu0 0.0
        %4257 = vmatpush1.msra.mxu0 %v2587
        %4258 = vmatprep.subr.mxu0 0.0
        %4259 = vmatpush1.msra.mxu0 %v2588
        %4260 = vmatprep.subr.mxu0 0.0
        %4261 = vmatpush1.msra.mxu0 %v2589
        %4262 = vmatprep.subr.mxu0 0.0
        %4263 = vmatpush1.msra.mxu0 0.0
        %4264 = vmatprep.subr.mxu0 0.0
        %4265 = vmatpush1.msra.mxu0 0.0
        %4266 = vmatprep.subr.mxu0 0.0
        %4267 = vmatpush1.msra.mxu0 0.0
        %4268 = vmatprep.subr.mxu0 0.0
        %4269 = vmatpush1.msra.mxu0 0.0
        %4270 = vmatprep.subr.mxu0 0.0
        %4271 = vmatpush1.msra.mxu0 0.0
        %4272 = vmatprep.subr.mxu0 0.0
        %4273 = vmatpush1.msra.mxu0 0.0
        %4274 = vmatprep.subr.mxu0 0.0
        %4275 = vmatpush1.msra.mxu0 0.0
        %4276 = vmatprep.subr.mxu0 0.0
        %4277 = vmatpush1.msra.mxu0 0.0
        %4278 = vmatprep.subr.mxu0 0.0
        %4279 = vmatpush1.msra.mxu0 0.0
        %4280 = vmatprep.subr.mxu0 0.0
        %4281 = vmatpush1.msra.mxu0 0.0
        %4282 = vmatprep.subr.mxu0 0.0
        %4283 = vmatpush1.msra.mxu0 0.0
        %4284 = vmatprep.subr.mxu0 0.0
        %4285 = vmatpush1.msra.mxu0 0.0
        %4286 = vmatprep.subr.mxu0 0.0
        %4287 = vmatpush1.msra.mxu0 0.0
        %4288 = vmatprep.subr.mxu0 0.0
        %4289 = vmatpush1.msra.mxu0 0.0
        %4290 = vmatprep.subr.mxu0 0.0
        %4291 = vmatpush1.msra.mxu0 0.0
        %4292 = vmatprep.subr.mxu0 0.0
        %4293 = vmatpush1.msra.mxu0 0.0
        %4294 = vmatprep.subr.mxu0 0.0
        %4295 = vmatpush1.msra.mxu0 0.0
        %4296 = vmatprep.subr.mxu0 0.0
        %4297 = vmatpush1.msra.mxu0 0.0
        %4298 = vmatprep.subr.mxu0 0.0
        %4299 = vmatpush1.msra.mxu0 0.0
        %4300 = vmatprep.subr.mxu0 0.0
        %4301 = vmatpush1.msra.mxu0 0.0
        %4302 = vmatprep.subr.mxu0 0.0
        %4303 = vmatpush1.msra.mxu0 0.0
        %4304 = vmatprep.subr.mxu0 0.0
        %4305 = vmatpush1.msra.mxu0 0.0
        %4306 = vmatprep.subr.mxu0 0.0
        %4307 = vmatpush1.msra.mxu0 0.0
        %4308 = vmatprep.subr.mxu0 0.0
        %4309 = vmatpush1.msra.mxu0 0.0
        %4310 = vmatprep.subr.mxu0 0.0
        %4311 = vmatpush1.msra.mxu0 0.0
        %4312 = vmatprep.subr.mxu0 0.0
        %4313 = vmatpush1.msra.mxu0 0.0
        %4314 = vmatprep.mubr.f32.mxu0 0.0
        %4315 = vmatmul.mubr.f32.gmra.mrb[0].mxu0 %v3618
        %v4316 = vpop.f32.mrb[0].mxu0
        %v4317 = vadd.f32 0.0, %v4316
        %v4318 = vpop.f32.mrb[0].mxu0
        %4319 = vmatprep.mubr.f32.mxu0 0.0
        %4320 = vmatmul.mubr.f32.gmra.mrb[0].mxu0 %v3621
        %v4321 = vpop.f32.mrb[0].mxu0
        %v4322 = vadd.f32 0.0, %v4321
        %v4323 = vpop.f32.mrb[0].mxu0
        %4324 = vdwg.mxu0
        %v4326 = vsel %vm356, %v4317, 0
        %v4329 = vsel %vm356, %v4322, 0
        %4331 = vmatprep.subr.mxu0 0.0
        %4332 = vmatpush1.msra.mxu0 %v3699
        %4333 = vmatprep.subr.mxu0 0.0
        %4334 = vmatpush1.msra.mxu0 %v3700
        %4335 = vmatprep.subr.mxu0 0.0
        %4336 = vmatpush1.msra.mxu0 0.0
        %4337 = vmatprep.subr.mxu0 0.0
        %4338 = vmatpush1.msra.mxu0 0.0
        %4339 = vmatprep.subr.mxu0 0.0
        %4340 = vmatpush1.msra.mxu0 0.0
        %4341 = vmatprep.subr.mxu0 0.0
        %4342 = vmatpush1.msra.mxu0 0.0
        %4343 = vmatprep.subr.mxu0 0.0
        %4344 = vmatpush1.msra.mxu0 0.0
        %4345 = vmatprep.subr.mxu0 0.0
        %4346 = vmatpush1.msra.mxu0 0.0
        %4347 = vmatprep.subr.mxu0 0.0
        %4348 = vmatpush1.msra.mxu0 0.0
        %4349 = vmatprep.subr.mxu0 0.0
        %4350 = vmatpush1.msra.mxu0 0.0
        %4351 = vmatprep.subr.mxu0 0.0
        %4352 = vmatpush1.msra.mxu0 0.0
        %4353 = vmatprep.subr.mxu0 0.0
        %4354 = vmatpush1.msra.mxu0 0.0
        %4355 = vmatprep.subr.mxu0 0.0
        %4356 = vmatpush1.msra.mxu0 0.0
        %4357 = vmatprep.subr.mxu0 0.0
        %4358 = vmatpush1.msra.mxu0 0.0
        %4359 = vmatprep.subr.mxu0 0.0
        %4360 = vmatpush1.msra.mxu0 0.0
        %4361 = vmatprep.subr.mxu0 0.0
        %4362 = vmatpush1.msra.mxu0 0.0
        %4363 = vmatprep.subr.mxu0 0.0
        %4364 = vmatpush1.msra.mxu0 0.0
        %4365 = vmatprep.subr.mxu0 0.0
        %4366 = vmatpush1.msra.mxu0 0.0
        %4367 = vmatprep.subr.mxu0 0.0
        %4368 = vmatpush1.msra.mxu0 0.0
        %4369 = vmatprep.subr.mxu0 0.0
        %4370 = vmatpush1.msra.mxu0 0.0
        %4371 = vmatprep.subr.mxu0 0.0
        %4372 = vmatpush1.msra.mxu0 0.0
        %4373 = vmatprep.subr.mxu0 0.0
        %4374 = vmatpush1.msra.mxu0 0.0
        %4375 = vmatprep.subr.mxu0 0.0
        %4376 = vmatpush1.msra.mxu0 0.0
        %4377 = vmatprep.subr.mxu0 0.0
        %4378 = vmatpush1.msra.mxu0 0.0
        %4379 = vmatprep.subr.mxu0 0.0
        %4380 = vmatpush1.msra.mxu0 0.0
        %4381 = vmatprep.subr.mxu0 0.0
        %4382 = vmatpush1.msra.mxu0 0.0
        %4383 = vmatprep.subr.mxu0 0.0
        %4384 = vmatpush1.msra.mxu0 0.0
        %4385 = vmatprep.subr.mxu0 0.0
        %4386 = vmatpush1.msra.mxu0 0.0
        %4387 = vmatprep.subr.mxu0 0.0
        %4388 = vmatpush1.msra.mxu0 0.0
        %4389 = vmatprep.subr.mxu0 0.0
        %4390 = vmatpush1.msra.mxu0 0.0
        %4391 = vmatprep.subr.mxu0 0.0
        %4392 = vmatpush1.msra.mxu0 0.0
        %4393 = vmatprep.subr.mxu0 0.0
        %4394 = vmatpush1.msra.mxu0 0.0
        %4395 = vmatprep.mubr.f32.mxu0 0.0
        %4396 = vmatmul.mubr.f32.gmra.mrb[0].mxu0 %v4326
        %v4397 = vpop.f32.mrb[0].mxu0
        %v4398 = vadd.f32 0.0, %v4397
        %v4399 = vpop.f32.mrb[0].mxu0
        %4400 = vmatprep.mubr.f32.mxu0 0.0
        %4401 = vmatmul.mubr.f32.gmra.mrb[0].mxu0 %v4329
        %v4402 = vpop.f32.mrb[0].mxu0
        %v4403 = vadd.f32 0.0, %v4402
        %v4404 = vpop.f32.mrb[0].mxu0
        %4405 = vdwg.mxu0
        %v4406 = vmul.f32 %v3774, %v3774
        %v4407 = vmul.f32 %v3779, %v3779
        %v4408 = vmul.f32 %v3930, %v3930
        %v4409 = vmul.f32 %v3935, %v3935
        %v4410 = vmul.f32 %v3774, %v3930
        %v4411 = vmul.f32 %v3779, %v3935
        %v4412 = vsub.f32 %v4398, %v4410
        %v4413 = vsub.f32 %v4403, %v4411
        %v4414 = vmul.f32 %v4412, 2.0
        %v4415 = vmul.f32 %v4413, 2.0
        %v4416 = vadd.f32 %v4414, 0.0009
        %v4417 = vadd.f32 %v4415, 0.0009
        %v4418 = vsub.f32 %v4086, %v4406
        %v4419 = vsub.f32 %v4091, %v4407
        %v4420 = vsub.f32 %v4242, %v4408
        %v4421 = vsub.f32 %v4247, %v4409
        %v4422 = vadd.f32 %v4418, %v4420
        %v4423 = vadd.f32 %v4419, %v4421
        %v4424 = vadd.f32 %v4422, 0.0009
        %v4425 = vadd.f32 %v4423, 0.0009
        %s4426 = scalar_lea.vmem %s248, 96
        %v4427 = vld [vmem:[%s4426] sm:$0xff]
        %v4428 = vld [vmem:[%s4426 + $0x8] sm:$0xff]
        %v4429 = vld [vmem:[%s4426 + $0x10] sm:$0xff]
        %v4430 = vld [vmem:[%s4426 + $0x18] sm:$0xff]
        %v4431 = vld [vmem:[%s4426 + $0x20] sm:$0xff]
        %v4432 = vld [vmem:[%s4426 + $0x28] sm:$0xff]
        %s4433 = scalar_lea.vmem %s257, 96
        %v4434 = vld [vmem:[%s4433] sm:$0xff]
        %v4435 = vld [vmem:[%s4433 + $0x8] sm:$0xff]
        %v4436 = vld [vmem:[%s4433 + $0x10] sm:$0xff]
        %v4437 = vld [vmem:[%s4433 + $0x18] sm:$0xff]
        %v4438 = vld [vmem:[%s4433 + $0x20] sm:$0xff]
        %v4439 = vld [vmem:[%s4433 + $0x28] sm:$0xff]
        %4440 = vmatprep.subr.mxu0 0.0
        %4441 = vmatpush1.msra.mxu0 %v4427
        %4442 = vmatprep.subr.mxu0 0.0
        %4443 = vmatpush1.msra.mxu0 %v4428
        %4444 = vmatprep.subr.mxu0 0.0
        %4445 = vmatpush1.msra.mxu0 %v4429
        %4446 = vmatprep.subr.mxu0 0.0
        %4447 = vmatpush1.msra.mxu0 %v4430
        %4448 = vmatprep.subr.mxu0 0.0
        %4449 = vmatpush1.msra.mxu0 %v4431
        %4450 = vmatprep.subr.mxu0 0.0
        %4451 = vmatpush1.msra.mxu0 %v4432
        %4452 = vmatprep.subr.mxu0 0.0
        %4453 = vmatpush1.msra.mxu0 0.0
        %4454 = vmatprep.subr.mxu0 0.0
        %4455 = vmatpush1.msra.mxu0 0.0
        %4456 = vmatprep.subr.mxu0 0.0
        %4457 = vmatpush1.msra.mxu0 0.0
        %4458 = vmatprep.subr.mxu0 0.0
        %4459 = vmatpush1.msra.mxu0 0.0
        %4460 = vmatprep.subr.mxu0 0.0
        %4461 = vmatpush1.msra.mxu0 0.0
        %4462 = vmatprep.subr.mxu0 0.0
        %4463 = vmatpush1.msra.mxu0 0.0
        %4464 = vmatprep.subr.mxu0 0.0
        %4465 = vmatpush1.msra.mxu0 0.0
        %4466 = vmatprep.subr.mxu0 0.0
        %4467 = vmatpush1.msra.mxu0 0.0
        %4468 = vmatprep.subr.mxu0 0.0
        %4469 = vmatpush1.msra.mxu0 0.0
        %4470 = vmatprep.subr.mxu0 0.0
        %4471 = vmatpush1.msra.mxu0 0.0
        %4472 = vmatprep.subr.mxu0 0.0
        %4473 = vmatpush1.msra.mxu0 0.0
        %4474 = vmatprep.subr.mxu0 0.0
        %4475 = vmatpush1.msra.mxu0 0.0
        %4476 = vmatprep.subr.mxu0 0.0
        %4477 = vmatpush1.msra.mxu0 0.0
        %4478 = vmatprep.subr.mxu0 0.0
        %4479 = vmatpush1.msra.mxu0 0.0
        %4480 = vmatprep.subr.mxu0 0.0
        %4481 = vmatpush1.msra.mxu0 0.0
        %4482 = vmatprep.subr.mxu0 0.0
        %4483 = vmatpush1.msra.mxu0 0.0
        %4484 = vmatprep.subr.mxu0 0.0
        %4485 = vmatpush1.msra.mxu0 0.0
        %4486 = vmatprep.subr.mxu0 0.0
        %4487 = vmatpush1.msra.mxu0 0.0
        %4488 = vmatprep.subr.mxu0 0.0
        %4489 = vmatpush1.msra.mxu0 0.0
        %4490 = vmatprep.subr.mxu0 0.0
        %4491 = vmatpush1.msra.mxu0 0.0
        %4492 = vmatprep.subr.mxu0 0.0
        %4493 = vmatpush1.msra.mxu0 0.0
        %4494 = vmatprep.subr.mxu0 0.0
        %4495 = vmatpush1.msra.mxu0 0.0
        %4496 = vmatprep.subr.mxu0 0.0
        %4497 = vmatpush1.msra.mxu0 0.0
        %4498 = vmatprep.subr.mxu0 0.0
        %4499 = vmatpush1.msra.mxu0 0.0
        %4500 = vmatprep.subr.mxu0 0.0
        %4501 = vmatpush1.msra.mxu0 0.0
        %4502 = vmatprep.subr.mxu0 0.0
        %4503 = vmatpush1.msra.mxu0 0.0
        %4504 = vmatprep.mubr.f32.mxu0 0.0
        %4505 = vmatmul.mubr.f32.gmra.mrb[0].mxu0 %v3618
        %v4506 = vpop.f32.mrb[0].mxu0
        %v4507 = vadd.f32 0.0, %v4506
        %v4508 = vpop.f32.mrb[0].mxu0
        %4509 = vmatprep.mubr.f32.mxu0 0.0
        %4510 = vmatmul.mubr.f32.gmra.mrb[0].mxu0 %v3621
        %v4511 = vpop.f32.mrb[0].mxu0
        %v4512 = vadd.f32 0.0, %v4511
        %v4513 = vpop.f32.mrb[0].mxu0
        %4514 = vdwg.mxu0
        %v4516 = vsel %vm356, %v4507, 0
        %v4519 = vsel %vm356, %v4512, 0
        %4521 = vmatprep.subr.mxu0 0.0
        %4522 = vmatpush1.msra.mxu0 %v3699
        %4523 = vmatprep.subr.mxu0 0.0
        %4524 = vmatpush1.msra.mxu0 %v3700
        %4525 = vmatprep.subr.mxu0 0.0
        %4526 = vmatpush1.msra.mxu0 0.0
        %4527 = vmatprep.subr.mxu0 0.0
        %4528 = vmatpush1.msra.mxu0 0.0
        %4529 = vmatprep.subr.mxu0 0.0
        %4530 = vmatpush1.msra.mxu0 0.0
        %4531 = vmatprep.subr.mxu0 0.0
        %4532 = vmatpush1.msra.mxu0 0.0
        %4533 = vmatprep.subr.mxu0 0.0
        %4534 = vmatpush1.msra.mxu0 0.0
        %4535 = vmatprep.subr.mxu0 0.0
        %4536 = vmatpush1.msra.mxu0 0.0
        %4537 = vmatprep.subr.mxu0 0.0
        %4538 = vmatpush1.msra.mxu0 0.0
        %4539 = vmatprep.subr.mxu0 0.0
        %4540 = vmatpush1.msra.mxu0 0.0
        %4541 = vmatprep.subr.mxu0 0.0
        %4542 = vmatpush1.msra.mxu0 0.0
        %4543 = vmatprep.subr.mxu0 0.0
        %4544 = vmatpush1.msra.mxu0 0.0
        %4545 = vmatprep.subr.mxu0 0.0
        %4546 = vmatpush1.msra.mxu0 0.0
        %4547 = vmatprep.subr.mxu0 0.0
        %4548 = vmatpush1.msra.mxu0 0.0
        %4549 = vmatprep.subr.mxu0 0.0
        %4550 = vmatpush1.msra.mxu0 0.0
        %4551 = vmatprep.subr.mxu0 0.0
        %4552 = vmatpush1.msra.mxu0 0.0
        %4553 = vmatprep.subr.mxu0 0.0
        %4554 = vmatpush1.msra.mxu0 0.0
        %4555 = vmatprep.subr.mxu0 0.0
        %4556 = vmatpush1.msra.mxu0 0.0
        %4557 = vmatprep.subr.mxu0 0.0
        %4558 = vmatpush1.msra.mxu0 0.0
        %4559 = vmatprep.subr.mxu0 0.0
        %4560 = vmatpush1.msra.mxu0 0.0
        %4561 = vmatprep.subr.mxu0 0.0
        %4562 = vmatpush1.msra.mxu0 0.0
        %4563 = vmatprep.subr.mxu0 0.0
        %4564 = vmatpush1.msra.mxu0 0.0
        %4565 = vmatprep.subr.mxu0 0.0
        %4566 = vmatpush1.msra.mxu0 0.0
        %4567 = vmatprep.subr.mxu0 0.0
        %4568 = vmatpush1.msra.mxu0 0.0
        %4569 = vmatprep.subr.mxu0 0.0
        %4570 = vmatpush1.msra.mxu0 0.0
        %4571 = vmatprep.subr.mxu0 0.0
        %4572 = vmatpush1.msra.mxu0 0.0
        %4573 = vmatprep.subr.mxu0 0.0
        %4574 = vmatpush1.msra.mxu0 0.0
        %4575 = vmatprep.subr.mxu0 0.0
        %4576 = vmatpush1.msra.mxu0 0.0
        %4577 = vmatprep.subr.mxu0 0.0
        %4578 = vmatpush1.msra.mxu0 0.0
        %4579 = vmatprep.subr.mxu0 0.0
        %4580 = vmatpush1.msra.mxu0 0.0
        %4581 = vmatprep.subr.mxu0 0.0
        %4582 = vmatpush1.msra.mxu0 0.0
        %4583 = vmatprep.subr.mxu0 0.0
        %4584 = vmatpush1.msra.mxu0 0.0
        %4585 = vmatprep.mubr.f32.mxu0 0.0
        %4586 = vmatmul.mubr.f32.gmra.mrb[0].mxu0 %v4516
        %v4587 = vpop.f32.mrb[0].mxu0
        %v4588 = vadd.f32 0.0, %v4587
        %v4589 = vpop.f32.mrb[0].mxu0
        %4590 = vmatprep.mubr.f32.mxu0 0.0
        %4591 = vmatmul.mubr.f32.gmra.mrb[0].mxu0 %v4519
        %v4592 = vpop.f32.mrb[0].mxu0
        %v4593 = vadd.f32 0.0, %v4592
        %v4594 = vpop.f32.mrb[0].mxu0
        %4595 = vdwg.mxu0
        %4596 = vmatprep.subr.mxu0 0.0
        %4597 = vmatpush1.msra.mxu0 %v4434
        %4598 = vmatprep.subr.mxu0 0.0
        %4599 = vmatpush1.msra.mxu0 %v4435
        %4600 = vmatprep.subr.mxu0 0.0
        %4601 = vmatpush1.msra.mxu0 %v4436
        %4602 = vmatprep.subr.mxu0 0.0
        %4603 = vmatpush1.msra.mxu0 %v4437
        %4604 = vmatprep.subr.mxu0 0.0
        %4605 = vmatpush1.msra.mxu0 %v4438
        %4606 = vmatprep.subr.mxu0 0.0
        %4607 = vmatpush1.msra.mxu0 %v4439
        %4608 = vmatprep.subr.mxu0 0.0
        %4609 = vmatpush1.msra.mxu0 0.0
        %4610 = vmatprep.subr.mxu0 0.0
        %4611 = vmatpush1.msra.mxu0 0.0
        %4612 = vmatprep.subr.mxu0 0.0
        %4613 = vmatpush1.msra.mxu0 0.0
        %4614 = vmatprep.subr.mxu0 0.0
        %4615 = vmatpush1.msra.mxu0 0.0
        %4616 = vmatprep.subr.mxu0 0.0
        %4617 = vmatpush1.msra.mxu0 0.0
        %4618 = vmatprep.subr.mxu0 0.0
        %4619 = vmatpush1.msra.mxu0 0.0
        %4620 = vmatprep.subr.mxu0 0.0
        %4621 = vmatpush1.msra.mxu0 0.0
        %4622 = vmatprep.subr.mxu0 0.0
        %4623 = vmatpush1.msra.mxu0 0.0
        %4624 = vmatprep.subr.mxu0 0.0
        %4625 = vmatpush1.msra.mxu0 0.0
        %4626 = vmatprep.subr.mxu0 0.0
        %4627 = vmatpush1.msra.mxu0 0.0
        %4628 = vmatprep.subr.mxu0 0.0
        %4629 = vmatpush1.msra.mxu0 0.0
        %4630 = vmatprep.subr.mxu0 0.0
        %4631 = vmatpush1.msra.mxu0 0.0
        %4632 = vmatprep.subr.mxu0 0.0
        %4633 = vmatpush1.msra.mxu0 0.0
        %4634 = vmatprep.subr.mxu0 0.0
        %4635 = vmatpush1.msra.mxu0 0.0
        %4636 = vmatprep.subr.mxu0 0.0
        %4637 = vmatpush1.msra.mxu0 0.0
        %4638 = vmatprep.subr.mxu0 0.0
        %4639 = vmatpush1.msra.mxu0 0.0
        %4640 = vmatprep.subr.mxu0 0.0
        %4641 = vmatpush1.msra.mxu0 0.0
        %4642 = vmatprep.subr.mxu0 0.0
        %4643 = vmatpush1.msra.mxu0 0.0
        %4644 = vmatprep.subr.mxu0 0.0
        %4645 = vmatpush1.msra.mxu0 0.0
        %4646 = vmatprep.subr.mxu0 0.0
        %4647 = vmatpush1.msra.mxu0 0.0
        %4648 = vmatprep.subr.mxu0 0.0
        %4649 = vmatpush1.msra.mxu0 0.0
        %4650 = vmatprep.subr.mxu0 0.0
        %4651 = vmatpush1.msra.mxu0 0.0
        %4652 = vmatprep.subr.mxu0 0.0
        %4653 = vmatpush1.msra.mxu0 0.0
        %4654 = vmatprep.subr.mxu0 0.0
        %4655 = vmatpush1.msra.mxu0 0.0
        %4656 = vmatprep.subr.mxu0 0.0
        %4657 = vmatpush1.msra.mxu0 0.0
        %4658 = vmatprep.subr.mxu0 0.0
        %4659 = vmatpush1.msra.mxu0 0.0
        %4660 = vmatprep.mubr.f32.mxu0 0.0
        %4661 = vmatmul.mubr.f32.gmra.mrb[0].mxu0 %v3618
        %v4662 = vpop.f32.mrb[0].mxu0
        %v4663 = vadd.f32 0.0, %v4662
        %v4664 = vpop.f32.mrb[0].mxu0
        %4665 = vmatprep.mubr.f32.mxu0 0.0
        %4666 = vmatmul.mubr.f32.gmra.mrb[0].mxu0 %v3621
        %v4667 = vpop.f32.mrb[0].mxu0
        %v4668 = vadd.f32 0.0, %v4667
        %v4669 = vpop.f32.mrb[0].mxu0
        %4670 = vdwg.mxu0
        %v4672 = vsel %vm356, %v4663, 0
        %v4675 = vsel %vm356, %v4668, 0
        %4677 = vmatprep.subr.mxu0 0.0
        %4678 = vmatpush1.msra.mxu0 %v3699
        %4679 = vmatprep.subr.mxu0 0.0
        %4680 = vmatpush1.msra.mxu0 %v3700
        %4681 = vmatprep.subr.mxu0 0.0
        %4682 = vmatpush1.msra.mxu0 0.0
        %4683 = vmatprep.subr.mxu0 0.0
        %4684 = vmatpush1.msra.mxu0 0.0
        %4685 = vmatprep.subr.mxu0 0.0
        %4686 = vmatpush1.msra.mxu0 0.0
        %4687 = vmatprep.subr.mxu0 0.0
        %4688 = vmatpush1.msra.mxu0 0.0
        %4689 = vmatprep.subr.mxu0 0.0
        %4690 = vmatpush1.msra.mxu0 0.0
        %4691 = vmatprep.subr.mxu0 0.0
        %4692 = vmatpush1.msra.mxu0 0.0
        %4693 = vmatprep.subr.mxu0 0.0
        %4694 = vmatpush1.msra.mxu0 0.0
        %4695 = vmatprep.subr.mxu0 0.0
        %4696 = vmatpush1.msra.mxu0 0.0
        %4697 = vmatprep.subr.mxu0 0.0
        %4698 = vmatpush1.msra.mxu0 0.0
        %4699 = vmatprep.subr.mxu0 0.0
        %4700 = vmatpush1.msra.mxu0 0.0
        %4701 = vmatprep.subr.mxu0 0.0
        %4702 = vmatpush1.msra.mxu0 0.0
        %4703 = vmatprep.subr.mxu0 0.0
        %4704 = vmatpush1.msra.mxu0 0.0
        %4705 = vmatprep.subr.mxu0 0.0
        %4706 = vmatpush1.msra.mxu0 0.0
        %4707 = vmatprep.subr.mxu0 0.0
        %4708 = vmatpush1.msra.mxu0 0.0
        %4709 = vmatprep.subr.mxu0 0.0
        %4710 = vmatpush1.msra.mxu0 0.0
        %4711 = vmatprep.subr.mxu0 0.0
        %4712 = vmatpush1.msra.mxu0 0.0
        %4713 = vmatprep.subr.mxu0 0.0
        %4714 = vmatpush1.msra.mxu0 0.0
        %4715 = vmatprep.subr.mxu0 0.0
        %4716 = vmatpush1.msra.mxu0 0.0
        %4717 = vmatprep.subr.mxu0 0.0
        %4718 = vmatpush1.msra.mxu0 0.0
        %4719 = vmatprep.subr.mxu0 0.0
        %4720 = vmatpush1.msra.mxu0 0.0
        %4721 = vmatprep.subr.mxu0 0.0
        %4722 = vmatpush1.msra.mxu0 0.0
        %4723 = vmatprep.subr.mxu0 0.0
        %4724 = vmatpush1.msra.mxu0 0.0
        %4725 = vmatprep.subr.mxu0 0.0
        %4726 = vmatpush1.msra.mxu0 0.0
        %4727 = vmatprep.subr.mxu0 0.0
        %4728 = vmatpush1.msra.mxu0 0.0
        %4729 = vmatprep.subr.mxu0 0.0
        %4730 = vmatpush1.msra.mxu0 0.0
        %4731 = vmatprep.subr.mxu0 0.0
        %4732 = vmatpush1.msra.mxu0 0.0
        %4733 = vmatprep.subr.mxu0 0.0
        %4734 = vmatpush1.msra.mxu0 0.0
        %4735 = vmatprep.subr.mxu0 0.0
        %4736 = vmatpush1.msra.mxu0 0.0
        %4737 = vmatprep.subr.mxu0 0.0
        %4738 = vmatpush1.msra.mxu0 0.0
        %4739 = vmatprep.subr.mxu0 0.0
        %4740 = vmatpush1.msra.mxu0 0.0
        %4741 = vmatprep.mubr.f32.mxu0 0.0
        %4742 = vmatmul.mubr.f32.gmra.mrb[0].mxu0 %v4672
        %v4743 = vpop.f32.mrb[0].mxu0
        %v4744 = vadd.f32 0.0, %v4743
        %v4745 = vpop.f32.mrb[0].mxu0
        %4746 = vmatprep.mubr.f32.mxu0 0.0
        %4747 = vmatmul.mubr.f32.gmra.mrb[0].mxu0 %v4675
        %v4748 = vpop.f32.mrb[0].mxu0
        %v4749 = vadd.f32 0.0, %v4748
        %v4750 = vpop.f32.mrb[0].mxu0
        %4751 = vdwg.mxu0
        %v4752 = vmul.f32 %v4427, %v4427
        %v4753 = vmul.f32 %v4428, %v4428
        %v4754 = vmul.f32 %v4429, %v4429
        %v4755 = vmul.f32 %v4430, %v4430
        %v4756 = vmul.f32 %v4431, %v4431
        %v4757 = vmul.f32 %v4432, %v4432
        %4758 = vmatprep.subr.mxu0 0.0
        %4759 = vmatpush1.msra.mxu0 %v4752
        %4760 = vmatprep.subr.mxu0 0.0
        %4761 = vmatpush1.msra.mxu0 %v4753
        %4762 = vmatprep.subr.mxu0 0.0
        %4763 = vmatpush1.msra.mxu0 %v4754
        %4764 = vmatprep.subr.mxu0 0.0
        %4765 = vmatpush1.msra.mxu0 %v4755
        %4766 = vmatprep.subr.mxu0 0.0
        %4767 = vmatpush1.msra.mxu0 %v4756
        %4768 = vmatprep.subr.mxu0 0.0
        %4769 = vmatpush1.msra.mxu0 %v4757
        %4770 = vmatprep.subr.mxu0 0.0
        %4771 = vmatpush1.msra.mxu0 0.0
        %4772 = vmatprep.subr.mxu0 0.0
        %4773 = vmatpush1.msra.mxu0 0.0
        %4774 = vmatprep.subr.mxu0 0.0
        %4775 = vmatpush1.msra.mxu0 0.0
        %4776 = vmatprep.subr.mxu0 0.0
        %4777 = vmatpush1.msra.mxu0 0.0
        %4778 = vmatprep.subr.mxu0 0.0
        %4779 = vmatpush1.msra.mxu0 0.0
        %4780 = vmatprep.subr.mxu0 0.0
        %4781 = vmatpush1.msra.mxu0 0.0
        %4782 = vmatprep.subr.mxu0 0.0
        %4783 = vmatpush1.msra.mxu0 0.0
        %4784 = vmatprep.subr.mxu0 0.0
        %4785 = vmatpush1.msra.mxu0 0.0
        %4786 = vmatprep.subr.mxu0 0.0
        %4787 = vmatpush1.msra.mxu0 0.0
        %4788 = vmatprep.subr.mxu0 0.0
        %4789 = vmatpush1.msra.mxu0 0.0
        %4790 = vmatprep.subr.mxu0 0.0
        %4791 = vmatpush1.msra.mxu0 0.0
        %4792 = vmatprep.subr.mxu0 0.0
        %4793 = vmatpush1.msra.mxu0 0.0
        %4794 = vmatprep.subr.mxu0 0.0
        %4795 = vmatpush1.msra.mxu0 0.0
        %4796 = vmatprep.subr.mxu0 0.0
        %4797 = vmatpush1.msra.mxu0 0.0
        %4798 = vmatprep.subr.mxu0 0.0
        %4799 = vmatpush1.msra.mxu0 0.0
        %4800 = vmatprep.subr.mxu0 0.0
        %4801 = vmatpush1.msra.mxu0 0.0
        %4802 = vmatprep.subr.mxu0 0.0
        %4803 = vmatpush1.msra.mxu0 0.0
        %4804 = vmatprep.subr.mxu0 0.0
        %4805 = vmatpush1.msra.mxu0 0.0
        %4806 = vmatprep.subr.mxu0 0.0
        %4807 = vmatpush1.msra.mxu0 0.0
        %4808 = vmatprep.subr.mxu0 0.0
        %4809 = vmatpush1.msra.mxu0 0.0
        %4810 = vmatprep.subr.mxu0 0.0
        %4811 = vmatpush1.msra.mxu0 0.0
        %4812 = vmatprep.subr.mxu0 0.0
        %4813 = vmatpush1.msra.mxu0 0.0
        %4814 = vmatprep.subr.mxu0 0.0
        %4815 = vmatpush1.msra.mxu0 0.0
        %4816 = vmatprep.subr.mxu0 0.0
        %4817 = vmatpush1.msra.mxu0 0.0
        %4818 = vmatprep.subr.mxu0 0.0
        %4819 = vmatpush1.msra.mxu0 0.0
        %4820 = vmatprep.subr.mxu0 0.0
        %4821 = vmatpush1.msra.mxu0 0.0
        %4822 = vmatprep.mubr.f32.mxu0 0.0
        %4823 = vmatmul.mubr.f32.gmra.mrb[0].mxu0 %v3618
        %v4824 = vpop.f32.mrb[0].mxu0
        %v4825 = vadd.f32 0.0, %v4824
        %v4826 = vpop.f32.mrb[0].mxu0
        %4827 = vmatprep.mubr.f32.mxu0 0.0
        %4828 = vmatmul.mubr.f32.gmra.mrb[0].mxu0 %v3621
        %v4829 = vpop.f32.mrb[0].mxu0
        %v4830 = vadd.f32 0.0, %v4829
        %v4831 = vpop.f32.mrb[0].mxu0
        %4832 = vdwg.mxu0
        %v4834 = vsel %vm356, %v4825, 0
        %v4837 = vsel %vm356, %v4830, 0
        %4839 = vmatprep.subr.mxu0 0.0
        %4840 = vmatpush1.msra.mxu0 %v3699
        %4841 = vmatprep.subr.mxu0 0.0
        %4842 = vmatpush1.msra.mxu0 %v3700
        %4843 = vmatprep.subr.mxu0 0.0
        %4844 = vmatpush1.msra.mxu0 0.0
        %4845 = vmatprep.subr.mxu0 0.0
        %4846 = vmatpush1.msra.mxu0 0.0
        %4847 = vmatprep.subr.mxu0 0.0
        %4848 = vmatpush1.msra.mxu0 0.0
        %4849 = vmatprep.subr.mxu0 0.0
        %4850 = vmatpush1.msra.mxu0 0.0
        %4851 = vmatprep.subr.mxu0 0.0
        %4852 = vmatpush1.msra.mxu0 0.0
        %4853 = vmatprep.subr.mxu0 0.0
        %4854 = vmatpush1.msra.mxu0 0.0
        %4855 = vmatprep.subr.mxu0 0.0
        %4856 = vmatpush1.msra.mxu0 0.0
        %4857 = vmatprep.subr.mxu0 0.0
        %4858 = vmatpush1.msra.mxu0 0.0
        %4859 = vmatprep.subr.mxu0 0.0
        %4860 = vmatpush1.msra.mxu0 0.0
        %4861 = vmatprep.subr.mxu0 0.0
        %4862 = vmatpush1.msra.mxu0 0.0
        %4863 = vmatprep.subr.mxu0 0.0
        %4864 = vmatpush1.msra.mxu0 0.0
        %4865 = vmatprep.subr.mxu0 0.0
        %4866 = vmatpush1.msra.mxu0 0.0
        %4867 = vmatprep.subr.mxu0 0.0
        %4868 = vmatpush1.msra.mxu0 0.0
        %4869 = vmatprep.subr.mxu0 0.0
        %4870 = vmatpush1.msra.mxu0 0.0
        %4871 = vmatprep.subr.mxu0 0.0
        %4872 = vmatpush1.msra.mxu0 0.0
        %4873 = vmatprep.subr.mxu0 0.0
        %4874 = vmatpush1.msra.mxu0 0.0
        %4875 = vmatprep.subr.mxu0 0.0
        %4876 = vmatpush1.msra.mxu0 0.0
        %4877 = vmatprep.subr.mxu0 0.0
        %4878 = vmatpush1.msra.mxu0 0.0
        %4879 = vmatprep.subr.mxu0 0.0
        %4880 = vmatpush1.msra.mxu0 0.0
        %4881 = vmatprep.subr.mxu0 0.0
        %4882 = vmatpush1.msra.mxu0 0.0
        %4883 = vmatprep.subr.mxu0 0.0
        %4884 = vmatpush1.msra.mxu0 0.0
        %4885 = vmatprep.subr.mxu0 0.0
        %4886 = vmatpush1.msra.mxu0 0.0
        %4887 = vmatprep.subr.mxu0 0.0
        %4888 = vmatpush1.msra.mxu0 0.0
        %4889 = vmatprep.subr.mxu0 0.0
        %4890 = vmatpush1.msra.mxu0 0.0
        %4891 = vmatprep.subr.mxu0 0.0
        %4892 = vmatpush1.msra.mxu0 0.0
        %4893 = vmatprep.subr.mxu0 0.0
        %4894 = vmatpush1.msra.mxu0 0.0
        %4895 = vmatprep.subr.mxu0 0.0
        %4896 = vmatpush1.msra.mxu0 0.0
        %4897 = vmatprep.subr.mxu0 0.0
        %4898 = vmatpush1.msra.mxu0 0.0
        %4899 = vmatprep.subr.mxu0 0.0
        %4900 = vmatpush1.msra.mxu0 0.0
        %4901 = vmatprep.subr.mxu0 0.0
        %4902 = vmatpush1.msra.mxu0 0.0
        %4903 = vmatprep.mubr.f32.mxu0 0.0
        %4904 = vmatmul.mubr.f32.gmra.mrb[0].mxu0 %v4834
        %v4905 = vpop.f32.mrb[0].mxu0
        %v4906 = vadd.f32 0.0, %v4905
        %v4907 = vpop.f32.mrb[0].mxu0
        %4908 = vmatprep.mubr.f32.mxu0 0.0
        %4909 = vmatmul.mubr.f32.gmra.mrb[0].mxu0 %v4837
        %v4910 = vpop.f32.mrb[0].mxu0
        %v4911 = vadd.f32 0.0, %v4910
        %v4912 = vpop.f32.mrb[0].mxu0
        %4913 = vdwg.mxu0
        %v4914 = vmul.f32 %v4434, %v4434
        %v4915 = vmul.f32 %v4435, %v4435
        %v4916 = vmul.f32 %v4436, %v4436
        %v4917 = vmul.f32 %v4437, %v4437
        %v4918 = vmul.f32 %v4438, %v4438
        %v4919 = vmul.f32 %v4439, %v4439
        %4920 = vmatprep.subr.mxu0 0.0
        %4921 = vmatpush1.msra.mxu0 %v4914
        %4922 = vmatprep.subr.mxu0 0.0
        %4923 = vmatpush1.msra.mxu0 %v4915
        %4924 = vmatprep.subr.mxu0 0.0
        %4925 = vmatpush1.msra.mxu0 %v4916
        %4926 = vmatprep.subr.mxu0 0.0
        %4927 = vmatpush1.msra.mxu0 %v4917
        %4928 = vmatprep.subr.mxu0 0.0
        %4929 = vmatpush1.msra.mxu0 %v4918
        %4930 = vmatprep.subr.mxu0 0.0
        %4931 = vmatpush1.msra.mxu0 %v4919
        %4932 = vmatprep.subr.mxu0 0.0
        %4933 = vmatpush1.msra.mxu0 0.0
        %4934 = vmatprep.subr.mxu0 0.0
        %4935 = vmatpush1.msra.mxu0 0.0
        %4936 = vmatprep.subr.mxu0 0.0
        %4937 = vmatpush1.msra.mxu0 0.0
        %4938 = vmatprep.subr.mxu0 0.0
        %4939 = vmatpush1.msra.mxu0 0.0
        %4940 = vmatprep.subr.mxu0 0.0
        %4941 = vmatpush1.msra.mxu0 0.0
        %4942 = vmatprep.subr.mxu0 0.0
        %4943 = vmatpush1.msra.mxu0 0.0
        %4944 = vmatprep.subr.mxu0 0.0
        %4945 = vmatpush1.msra.mxu0 0.0
        %4946 = vmatprep.subr.mxu0 0.0
        %4947 = vmatpush1.msra.mxu0 0.0
        %4948 = vmatprep.subr.mxu0 0.0
        %4949 = vmatpush1.msra.mxu0 0.0
        %4950 = vmatprep.subr.mxu0 0.0
        %4951 = vmatpush1.msra.mxu0 0.0
        %4952 = vmatprep.subr.mxu0 0.0
        %4953 = vmatpush1.msra.mxu0 0.0
        %4954 = vmatprep.subr.mxu0 0.0
        %4955 = vmatpush1.msra.mxu0 0.0
        %4956 = vmatprep.subr.mxu0 0.0
        %4957 = vmatpush1.msra.mxu0 0.0
        %4958 = vmatprep.subr.mxu0 0.0
        %4959 = vmatpush1.msra.mxu0 0.0
        %4960 = vmatprep.subr.mxu0 0.0
        %4961 = vmatpush1.msra.mxu0 0.0
        %4962 = vmatprep.subr.mxu0 0.0
        %4963 = vmatpush1.msra.mxu0 0.0
        %4964 = vmatprep.subr.mxu0 0.0
        %4965 = vmatpush1.msra.mxu0 0.0
        %4966 = vmatprep.subr.mxu0 0.0
        %4967 = vmatpush1.msra.mxu0 0.0
        %4968 = vmatprep.subr.mxu0 0.0
        %4969 = vmatpush1.msra.mxu0 0.0
        %4970 = vmatprep.subr.mxu0 0.0
        %4971 = vmatpush1.msra.mxu0 0.0
        %4972 = vmatprep.subr.mxu0 0.0
        %4973 = vmatpush1.msra.mxu0 0.0
        %4974 = vmatprep.subr.mxu0 0.0
        %4975 = vmatpush1.msra.mxu0 0.0
        %4976 = vmatprep.subr.mxu0 0.0
        %4977 = vmatpush1.msra.mxu0 0.0
        %4978 = vmatprep.subr.mxu0 0.0
        %4979 = vmatpush1.msra.mxu0 0.0
        %4980 = vmatprep.subr.mxu0 0.0
        %4981 = vmatpush1.msra.mxu0 0.0
        %4982 = vmatprep.subr.mxu0 0.0
        %4983 = vmatpush1.msra.mxu0 0.0
        %4984 = vmatprep.mubr.f32.mxu0 0.0
        %4985 = vmatmul.mubr.f32.gmra.mrb[0].mxu0 %v3618
        %v4986 = vpop.f32.mrb[0].mxu0
        %v4987 = vadd.f32 0.0, %v4986
        %v4988 = vpop.f32.mrb[0].mxu0
        %4989 = vmatprep.mubr.f32.mxu0 0.0
        %4990 = vmatmul.mubr.f32.gmra.mrb[0].mxu0 %v3621
        %v4991 = vpop.f32.mrb[0].mxu0
        %v4992 = vadd.f32 0.0, %v4991
        %v4993 = vpop.f32.mrb[0].mxu0
        %4994 = vdwg.mxu0
        %v4996 = vsel %vm356, %v4987, 0
        %v4999 = vsel %vm356, %v4992, 0
        %5001 = vmatprep.subr.mxu0 0.0
        %5002 = vmatpush1.msra.mxu0 %v3699
        %5003 = vmatprep.subr.mxu0 0.0
        %5004 = vmatpush1.msra.mxu0 %v3700
        %5005 = vmatprep.subr.mxu0 0.0
        %5006 = vmatpush1.msra.mxu0 0.0
        %5007 = vmatprep.subr.mxu0 0.0
        %5008 = vmatpush1.msra.mxu0 0.0
        %5009 = vmatprep.subr.mxu0 0.0
        %5010 = vmatpush1.msra.mxu0 0.0
        %5011 = vmatprep.subr.mxu0 0.0
        %5012 = vmatpush1.msra.mxu0 0.0
        %5013 = vmatprep.subr.mxu0 0.0
        %5014 = vmatpush1.msra.mxu0 0.0
        %5015 = vmatprep.subr.mxu0 0.0
        %5016 = vmatpush1.msra.mxu0 0.0
        %5017 = vmatprep.subr.mxu0 0.0
        %5018 = vmatpush1.msra.mxu0 0.0
        %5019 = vmatprep.subr.mxu0 0.0
        %5020 = vmatpush1.msra.mxu0 0.0
        %5021 = vmatprep.subr.mxu0 0.0
        %5022 = vmatpush1.msra.mxu0 0.0
        %5023 = vmatprep.subr.mxu0 0.0
        %5024 = vmatpush1.msra.mxu0 0.0
        %5025 = vmatprep.subr.mxu0 0.0
        %5026 = vmatpush1.msra.mxu0 0.0
        %5027 = vmatprep.subr.mxu0 0.0
        %5028 = vmatpush1.msra.mxu0 0.0
        %5029 = vmatprep.subr.mxu0 0.0
        %5030 = vmatpush1.msra.mxu0 0.0
        %5031 = vmatprep.subr.mxu0 0.0
        %5032 = vmatpush1.msra.mxu0 0.0
        %5033 = vmatprep.subr.mxu0 0.0
        %5034 = vmatpush1.msra.mxu0 0.0
        %5035 = vmatprep.subr.mxu0 0.0
        %5036 = vmatpush1.msra.mxu0 0.0
        %5037 = vmatprep.subr.mxu0 0.0
        %5038 = vmatpush1.msra.mxu0 0.0
        %5039 = vmatprep.subr.mxu0 0.0
        %5040 = vmatpush1.msra.mxu0 0.0
        %5041 = vmatprep.subr.mxu0 0.0
        %5042 = vmatpush1.msra.mxu0 0.0
        %5043 = vmatprep.subr.mxu0 0.0
        %5044 = vmatpush1.msra.mxu0 0.0
        %5045 = vmatprep.subr.mxu0 0.0
        %5046 = vmatpush1.msra.mxu0 0.0
        %5047 = vmatprep.subr.mxu0 0.0
        %5048 = vmatpush1.msra.mxu0 0.0
        %5049 = vmatprep.subr.mxu0 0.0
        %5050 = vmatpush1.msra.mxu0 0.0
        %5051 = vmatprep.subr.mxu0 0.0
        %5052 = vmatpush1.msra.mxu0 0.0
        %5053 = vmatprep.subr.mxu0 0.0
        %5054 = vmatpush1.msra.mxu0 0.0
        %5055 = vmatprep.subr.mxu0 0.0
        %5056 = vmatpush1.msra.mxu0 0.0
        %5057 = vmatprep.subr.mxu0 0.0
        %5058 = vmatpush1.msra.mxu0 0.0
        %5059 = vmatprep.subr.mxu0 0.0
        %5060 = vmatpush1.msra.mxu0 0.0
        %5061 = vmatprep.subr.mxu0 0.0
        %5062 = vmatpush1.msra.mxu0 0.0
        %5063 = vmatprep.subr.mxu0 0.0
        %5064 = vmatpush1.msra.mxu0 0.0
        %5065 = vmatprep.mubr.f32.mxu0 0.0
        %5066 = vmatmul.mubr.f32.gmra.mrb[0].mxu0 %v4996
        %v5067 = vpop.f32.mrb[0].mxu0
        %v5068 = vadd.f32 0.0, %v5067
        %v5069 = vpop.f32.mrb[0].mxu0
        %5070 = vmatprep.mubr.f32.mxu0 0.0
        %5071 = vmatmul.mubr.f32.gmra.mrb[0].mxu0 %v4999
        %v5072 = vpop.f32.mrb[0].mxu0
        %v5073 = vadd.f32 0.0, %v5072
        %v5074 = vpop.f32.mrb[0].mxu0
        %5075 = vdwg.mxu0
        %v5076 = vmul.f32 %v4427, %v4434
        %v5077 = vmul.f32 %v4428, %v4435
        %v5078 = vmul.f32 %v4429, %v4436
        %v5079 = vmul.f32 %v4430, %v4437
        %v5080 = vmul.f32 %v4431, %v4438
        %v5081 = vmul.f32 %v4432, %v4439
        %5082 = vmatprep.subr.mxu0 0.0
        %5083 = vmatpush1.msra.mxu0 %v5076
        %5084 = vmatprep.subr.mxu0 0.0
        %5085 = vmatpush1.msra.mxu0 %v5077
        %5086 = vmatprep.subr.mxu0 0.0
        %5087 = vmatpush1.msra.mxu0 %v5078
        %5088 = vmatprep.subr.mxu0 0.0
        %5089 = vmatpush1.msra.mxu0 %v5079
        %5090 = vmatprep.subr.mxu0 0.0
        %5091 = vmatpush1.msra.mxu0 %v5080
        %5092 = vmatprep.subr.mxu0 0.0
        %5093 = vmatpush1.msra.mxu0 %v5081
        %5094 = vmatprep.subr.mxu0 0.0
        %5095 = vmatpush1.msra.mxu0 0.0
        %5096 = vmatprep.subr.mxu0 0.0
        %5097 = vmatpush1.msra.mxu0 0.0
        %5098 = vmatprep.subr.mxu0 0.0
        %5099 = vmatpush1.msra.mxu0 0.0
        %5100 = vmatprep.subr.mxu0 0.0
        %5101 = vmatpush1.msra.mxu0 0.0
        %5102 = vmatprep.subr.mxu0 0.0
        %5103 = vmatpush1.msra.mxu0 0.0
        %5104 = vmatprep.subr.mxu0 0.0
        %5105 = vmatpush1.msra.mxu0 0.0
        %5106 = vmatprep.subr.mxu0 0.0
        %5107 = vmatpush1.msra.mxu0 0.0
        %5108 = vmatprep.subr.mxu0 0.0
        %5109 = vmatpush1.msra.mxu0 0.0
        %5110 = vmatprep.subr.mxu0 0.0
        %5111 = vmatpush1.msra.mxu0 0.0
        %5112 = vmatprep.subr.mxu0 0.0
        %5113 = vmatpush1.msra.mxu0 0.0
        %5114 = vmatprep.subr.mxu0 0.0
        %5115 = vmatpush1.msra.mxu0 0.0
        %5116 = vmatprep.subr.mxu0 0.0
        %5117 = vmatpush1.msra.mxu0 0.0
        %5118 = vmatprep.subr.mxu0 0.0
        %5119 = vmatpush1.msra.mxu0 0.0
        %5120 = vmatprep.subr.mxu0 0.0
        %5121 = vmatpush1.msra.mxu0 0.0
        %5122 = vmatprep.subr.mxu0 0.0
        %5123 = vmatpush1.msra.mxu0 0.0
        %5124 = vmatprep.subr.mxu0 0.0
        %5125 = vmatpush1.msra.mxu0 0.0
        %5126 = vmatprep.subr.mxu0 0.0
        %5127 = vmatpush1.msra.mxu0 0.0
        %5128 = vmatprep.subr.mxu0 0.0
        %5129 = vmatpush1.msra.mxu0 0.0
        %5130 = vmatprep.subr.mxu0 0.0
        %5131 = vmatpush1.msra.mxu0 0.0
        %5132 = vmatprep.subr.mxu0 0.0
        %5133 = vmatpush1.msra.mxu0 0.0
        %5134 = vmatprep.subr.mxu0 0.0
        %5135 = vmatpush1.msra.mxu0 0.0
        %5136 = vmatprep.subr.mxu0 0.0
        %5137 = vmatpush1.msra.mxu0 0.0
        %5138 = vmatprep.subr.mxu0 0.0
        %5139 = vmatpush1.msra.mxu0 0.0
        %5140 = vmatprep.subr.mxu0 0.0
        %5141 = vmatpush1.msra.mxu0 0.0
        %5142 = vmatprep.subr.mxu0 0.0
        %5143 = vmatpush1.msra.mxu0 0.0
        %5144 = vmatprep.subr.mxu0 0.0
        %5145 = vmatpush1.msra.mxu0 0.0
        %5146 = vmatprep.mubr.f32.mxu0 0.0
        %5147 = vmatmul.mubr.f32.gmra.mrb[0].mxu0 %v3618
        %v5148 = vpop.f32.mrb[0].mxu0
        %v5149 = vadd.f32 0.0, %v5148
        %v5150 = vpop.f32.mrb[0].mxu0
        %5151 = vmatprep.mubr.f32.mxu0 0.0
        %5152 = vmatmul.mubr.f32.gmra.mrb[0].mxu0 %v3621
        %v5153 = vpop.f32.mrb[0].mxu0
        %v5154 = vadd.f32 0.0, %v5153
        %v5155 = vpop.f32.mrb[0].mxu0
        %5156 = vdwg.mxu0
        %v5158 = vsel %vm356, %v5149, 0
        %v5161 = vsel %vm356, %v5154, 0
        %5163 = vmatprep.subr.mxu0 0.0
        %5164 = vmatpush1.msra.mxu0 %v3699
        %5165 = vmatprep.subr.mxu0 0.0
        %5166 = vmatpush1.msra.mxu0 %v3700
        %5167 = vmatprep.subr.mxu0 0.0
        %5168 = vmatpush1.msra.mxu0 0.0
        %5169 = vmatprep.subr.mxu0 0.0
        %5170 = vmatpush1.msra.mxu0 0.0
        %5171 = vmatprep.subr.mxu0 0.0
        %5172 = vmatpush1.msra.mxu0 0.0
        %5173 = vmatprep.subr.mxu0 0.0
        %5174 = vmatpush1.msra.mxu0 0.0
        %5175 = vmatprep.subr.mxu0 0.0
        %5176 = vmatpush1.msra.mxu0 0.0
        %5177 = vmatprep.subr.mxu0 0.0
        %5178 = vmatpush1.msra.mxu0 0.0
        %5179 = vmatprep.subr.mxu0 0.0
        %5180 = vmatpush1.msra.mxu0 0.0
        %5181 = vmatprep.subr.mxu0 0.0
        %5182 = vmatpush1.msra.mxu0 0.0
        %5183 = vmatprep.subr.mxu0 0.0
        %5184 = vmatpush1.msra.mxu0 0.0
        %5185 = vmatprep.subr.mxu0 0.0
        %5186 = vmatpush1.msra.mxu0 0.0
        %5187 = vmatprep.subr.mxu0 0.0
        %5188 = vmatpush1.msra.mxu0 0.0
        %5189 = vmatprep.subr.mxu0 0.0
        %5190 = vmatpush1.msra.mxu0 0.0
        %5191 = vmatprep.subr.mxu0 0.0
        %5192 = vmatpush1.msra.mxu0 0.0
        %5193 = vmatprep.subr.mxu0 0.0
        %5194 = vmatpush1.msra.mxu0 0.0
        %5195 = vmatprep.subr.mxu0 0.0
        %5196 = vmatpush1.msra.mxu0 0.0
        %5197 = vmatprep.subr.mxu0 0.0
        %5198 = vmatpush1.msra.mxu0 0.0
        %5199 = vmatprep.subr.mxu0 0.0
        %5200 = vmatpush1.msra.mxu0 0.0
        %5201 = vmatprep.subr.mxu0 0.0
        %5202 = vmatpush1.msra.mxu0 0.0
        %5203 = vmatprep.subr.mxu0 0.0
        %5204 = vmatpush1.msra.mxu0 0.0
        %5205 = vmatprep.subr.mxu0 0.0
        %5206 = vmatpush1.msra.mxu0 0.0
        %5207 = vmatprep.subr.mxu0 0.0
        %5208 = vmatpush1.msra.mxu0 0.0
        %5209 = vmatprep.subr.mxu0 0.0
        %5210 = vmatpush1.msra.mxu0 0.0
        %5211 = vmatprep.subr.mxu0 0.0
        %5212 = vmatpush1.msra.mxu0 0.0
        %5213 = vmatprep.subr.mxu0 0.0
        %5214 = vmatpush1.msra.mxu0 0.0
        %5215 = vmatprep.subr.mxu0 0.0
        %5216 = vmatpush1.msra.mxu0 0.0
        %5217 = vmatprep.subr.mxu0 0.0
        %5218 = vmatpush1.msra.mxu0 0.0
        %5219 = vmatprep.subr.mxu0 0.0
        %5220 = vmatpush1.msra.mxu0 0.0
        %5221 = vmatprep.subr.mxu0 0.0
        %5222 = vmatpush1.msra.mxu0 0.0
        %5223 = vmatprep.subr.mxu0 0.0
        %5224 = vmatpush1.msra.mxu0 0.0
        %5225 = vmatprep.subr.mxu0 0.0
        %5226 = vmatpush1.msra.mxu0 0.0
        %5227 = vmatprep.mubr.f32.mxu0 0.0
        %5228 = vmatmul.mubr.f32.gmra.mrb[0].mxu0 %v5158
        %v5229 = vpop.f32.mrb[0].mxu0
        %v5230 = vadd.f32 0.0, %v5229
        %v5231 = vpop.f32.mrb[0].mxu0
        %5232 = vmatprep.mubr.f32.mxu0 0.0
        %5233 = vmatmul.mubr.f32.gmra.mrb[0].mxu0 %v5161
        %v5234 = vpop.f32.mrb[0].mxu0
        %v5235 = vadd.f32 0.0, %v5234
        %v5236 = vpop.f32.mrb[0].mxu0
        %5237 = vdwg.mxu0
        %v5238 = vmul.f32 %v4588, %v4588
        %v5239 = vmul.f32 %v4593, %v4593
        %v5240 = vmul.f32 %v4744, %v4744
        %v5241 = vmul.f32 %v4749, %v4749
        %v5242 = vmul.f32 %v4588, %v4744
        %v5243 = vmul.f32 %v4593, %v4749
        %v5244 = vsub.f32 %v5230, %v5242
        %v5245 = vsub.f32 %v5235, %v5243
        %v5246 = vmul.f32 %v5244, 2.0
        %v5247 = vmul.f32 %v5245, 2.0
        %v5248 = vadd.f32 %v5246, 0.0009
        %v5249 = vadd.f32 %v5247, 0.0009
        %v5250 = vsub.f32 %v4906, %v5238
        %v5251 = vsub.f32 %v4911, %v5239
        %v5252 = vsub.f32 %v5068, %v5240
        %v5253 = vsub.f32 %v5073, %v5241
        %v5254 = vadd.f32 %v5250, %v5252
        %v5255 = vadd.f32 %v5251, %v5253
        %v5256 = vadd.f32 %v5254, 0.0009
        %v5257 = vadd.f32 %v5255, 0.0009
        %v5258 = vmul.f32 %v5248, %v5248
        %v5259 = vmul.f32 %v5249, %v5249
        %v5260 = vmul.f32 %v5256, %v5256
        %v5261 = vmul.f32 %v5257, %v5257
        %v5262 = vmul.f32 %v4416, %v5258
        %v5263 = vmul.f32 %v4417, %v5259
        %v5264 = vmul.f32 %v4424, %v5260
        %v5265 = vmul.f32 %v4425, %v5261
        %v5266 = vrcp.pop %v5264
        %v5267 = vrcp.pop %v5265
        %v5268 = vmul.f32 %v5264, %v5266
        %v5269 = vmul.f32 %v5265, %v5267
        %v5270 = vsub.f32 2.0, %v5268
        %v5271 = vsub.f32 2.0, %v5269
        %v5272 = vmul.f32 %v5266, %v5270
        %v5273 = vmul.f32 %v5267, %v5271
        %v5274 = vmul.f32 %v5262, %v5272
        %v5275 = vmul.f32 %v5263, %v5273
        %v5276 = vmul.f32 %v3612, %v5274
        %v5277 = vmul.f32 %v3613, %v5275
        %s5278 = scalar_lea.vmem %s2, 64
        %v5279 = vld [vmem:[%s5278] sm:$0xff]
        %v5280 = vld [vmem:[%s5278 + $0x8] sm:$0xff]
        %v5282 = vsel %vm272, %v5279, 0
        %v5285 = vsel %vm272, %v5280, 0
        %5287 = vmatprep.subr.mxu0 0.0
        %5288 = vmatpush1.msra.mxu0 %v4427
        %5289 = vmatprep.subr.mxu0 0.0
        %5290 = vmatpush1.msra.mxu0 %v4428
        %5291 = vmatprep.subr.mxu0 0.0
        %5292 = vmatpush1.msra.mxu0 %v4429
        %5293 = vmatprep.subr.mxu0 0.0
        %5294 = vmatpush1.msra.mxu0 %v4430
        %5295 = vmatprep.subr.mxu0 0.0
        %5296 = vmatpush1.msra.mxu0 %v4431
        %5297 = vmatprep.subr.mxu0 0.0
        %5298 = vmatpush1.msra.mxu0 %v4432
        %5299 = vmatprep.subr.mxu0 0.0
        %5300 = vmatpush1.msra.mxu0 0.0
        %5301 = vmatprep.subr.mxu0 0.0
        %5302 = vmatpush1.msra.mxu0 0.0
        %5303 = vmatprep.subr.mxu0 0.0
        %5304 = vmatpush1.msra.mxu0 0.0
        %5305 = vmatprep.subr.mxu0 0.0
        %5306 = vmatpush1.msra.mxu0 0.0
        %5307 = vmatprep.subr.mxu0 0.0
        %5308 = vmatpush1.msra.mxu0 0.0
        %5309 = vmatprep.subr.mxu0 0.0
        %5310 = vmatpush1.msra.mxu0 0.0
        %5311 = vmatprep.subr.mxu0 0.0
        %5312 = vmatpush1.msra.mxu0 0.0
        %5313 = vmatprep.subr.mxu0 0.0
        %5314 = vmatpush1.msra.mxu0 0.0
        %5315 = vmatprep.subr.mxu0 0.0
        %5316 = vmatpush1.msra.mxu0 0.0
        %5317 = vmatprep.subr.mxu0 0.0
        %5318 = vmatpush1.msra.mxu0 0.0
        %5319 = vmatprep.subr.mxu0 0.0
        %5320 = vmatpush1.msra.mxu0 0.0
        %5321 = vmatprep.subr.mxu0 0.0
        %5322 = vmatpush1.msra.mxu0 0.0
        %5323 = vmatprep.subr.mxu0 0.0
        %5324 = vmatpush1.msra.mxu0 0.0
        %5325 = vmatprep.subr.mxu0 0.0
        %5326 = vmatpush1.msra.mxu0 0.0
        %5327 = vmatprep.subr.mxu0 0.0
        %5328 = vmatpush1.msra.mxu0 0.0
        %5329 = vmatprep.subr.mxu0 0.0
        %5330 = vmatpush1.msra.mxu0 0.0
        %5331 = vmatprep.subr.mxu0 0.0
        %5332 = vmatpush1.msra.mxu0 0.0
        %5333 = vmatprep.subr.mxu0 0.0
        %5334 = vmatpush1.msra.mxu0 0.0
        %5335 = vmatprep.subr.mxu0 0.0
        %5336 = vmatpush1.msra.mxu0 0.0
        %5337 = vmatprep.subr.mxu0 0.0
        %5338 = vmatpush1.msra.mxu0 0.0
        %5339 = vmatprep.subr.mxu0 0.0
        %5340 = vmatpush1.msra.mxu0 0.0
        %5341 = vmatprep.subr.mxu0 0.0
        %5342 = vmatpush1.msra.mxu0 0.0
        %5343 = vmatprep.subr.mxu0 0.0
        %5344 = vmatpush1.msra.mxu0 0.0
        %5345 = vmatprep.subr.mxu0 0.0
        %5346 = vmatpush1.msra.mxu0 0.0
        %5347 = vmatprep.subr.mxu0 0.0
        %5348 = vmatpush1.msra.mxu0 0.0
        %5349 = vmatprep.subr.mxu0 0.0
        %5350 = vmatpush1.msra.mxu0 0.0
        %5351 = vmatprep.mubr.f32.mxu0 0.0
        %5352 = vmatmul.mubr.f32.gmra.mrb[0].mxu0 %v5282
        %v5353 = vpop.f32.mrb[0].mxu0
        %v5354 = vadd.f32 0.0, %v5353
        %v5355 = vpop.f32.mrb[0].mxu0
        %5356 = vmatprep.mubr.f32.mxu0 0.0
        %5357 = vmatmul.mubr.f32.gmra.mrb[0].mxu0 %v5285
        %v5358 = vpop.f32.mrb[0].mxu0
        %v5359 = vadd.f32 0.0, %v5358
        %v5360 = vpop.f32.mrb[0].mxu0
        %5361 = vdwg.mxu0
        %s5362 = scalar_lea.vmem %s3, 64
        %v5363 = vld [vmem:[%s5362] sm:$0xff]
        %v5364 = vld [vmem:[%s5362 + $0x8] sm:$0xff]
        %v5366 = vsel %vm356, %v5354, 0
        %v5369 = vsel %vm356, %v5359, 0
        %5371 = vmatprep.subr.mxu0 0.0
        %5372 = vmatpush1.msra.mxu0 %v5363
        %5373 = vmatprep.subr.mxu0 0.0
        %5374 = vmatpush1.msra.mxu0 %v5364
        %5375 = vmatprep.subr.mxu0 0.0
        %5376 = vmatpush1.msra.mxu0 0.0
        %5377 = vmatprep.subr.mxu0 0.0
        %5378 = vmatpush1.msra.mxu0 0.0
        %5379 = vmatprep.subr.mxu0 0.0
        %5380 = vmatpush1.msra.mxu0 0.0
        %5381 = vmatprep.subr.mxu0 0.0
        %5382 = vmatpush1.msra.mxu0 0.0
        %5383 = vmatprep.subr.mxu0 0.0
        %5384 = vmatpush1.msra.mxu0 0.0
        %5385 = vmatprep.subr.mxu0 0.0
        %5386 = vmatpush1.msra.mxu0 0.0
        %5387 = vmatprep.subr.mxu0 0.0
        %5388 = vmatpush1.msra.mxu0 0.0
        %5389 = vmatprep.subr.mxu0 0.0
        %5390 = vmatpush1.msra.mxu0 0.0
        %5391 = vmatprep.subr.mxu0 0.0
        %5392 = vmatpush1.msra.mxu0 0.0
        %5393 = vmatprep.subr.mxu0 0.0
        %5394 = vmatpush1.msra.mxu0 0.0
        %5395 = vmatprep.subr.mxu0 0.0
        %5396 = vmatpush1.msra.mxu0 0.0
        %5397 = vmatprep.subr.mxu0 0.0
        %5398 = vmatpush1.msra.mxu0 0.0
        %5399 = vmatprep.subr.mxu0 0.0
        %5400 = vmatpush1.msra.mxu0 0.0
        %5401 = vmatprep.subr.mxu0 0.0
        %5402 = vmatpush1.msra.mxu0 0.0
        %5403 = vmatprep.subr.mxu0 0.0
        %5404 = vmatpush1.msra.mxu0 0.0
        %5405 = vmatprep.subr.mxu0 0.0
        %5406 = vmatpush1.msra.mxu0 0.0
        %5407 = vmatprep.subr.mxu0 0.0
        %5408 = vmatpush1.msra.mxu0 0.0
        %5409 = vmatprep.subr.mxu0 0.0
        %5410 = vmatpush1.msra.mxu0 0.0
        %5411 = vmatprep.subr.mxu0 0.0
        %5412 = vmatpush1.msra.mxu0 0.0
        %5413 = vmatprep.subr.mxu0 0.0
        %5414 = vmatpush1.msra.mxu0 0.0
        %5415 = vmatprep.subr.mxu0 0.0
        %5416 = vmatpush1.msra.mxu0 0.0
        %5417 = vmatprep.subr.mxu0 0.0
        %5418 = vmatpush1.msra.mxu0 0.0
        %5419 = vmatprep.subr.mxu0 0.0
        %5420 = vmatpush1.msra.mxu0 0.0
        %5421 = vmatprep.subr.mxu0 0.0
        %5422 = vmatpush1.msra.mxu0 0.0
        %5423 = vmatprep.subr.mxu0 0.0
        %5424 = vmatpush1.msra.mxu0 0.0
        %5425 = vmatprep.subr.mxu0 0.0
        %5426 = vmatpush1.msra.mxu0 0.0
        %5427 = vmatprep.subr.mxu0 0.0
        %5428 = vmatpush1.msra.mxu0 0.0
        %5429 = vmatprep.subr.mxu0 0.0
        %5430 = vmatpush1.msra.mxu0 0.0
        %5431 = vmatprep.subr.mxu0 0.0
        %5432 = vmatpush1.msra.mxu0 0.0
        %5433 = vmatprep.subr.mxu0 0.0
        %5434 = vmatpush1.msra.mxu0 0.0
        %5435 = vmatprep.mubr.f32.mxu0 0.0
        %5436 = vmatmul.mubr.f32.gmra.mrb[0].mxu0 %v5366
        %v5437 = vpop.f32.mrb[0].mxu0
        %v5438 = vadd.f32 0.0, %v5437
        %v5439 = vpop.f32.mrb[0].mxu0
        %5440 = vmatprep.mubr.f32.mxu0 0.0
        %5441 = vmatmul.mubr.f32.gmra.mrb[0].mxu0 %v5369
        %v5442 = vpop.f32.mrb[0].mxu0
        %v5443 = vadd.f32 0.0, %v5442
        %v5444 = vpop.f32.mrb[0].mxu0
        %5445 = vdwg.mxu0
        %5446 = vmatprep.subr.mxu0 0.0
        %5447 = vmatpush1.msra.mxu0 %v4434
        %5448 = vmatprep.subr.mxu0 0.0
        %5449 = vmatpush1.msra.mxu0 %v4435
        %5450 = vmatprep.subr.mxu0 0.0
        %5451 = vmatpush1.msra.mxu0 %v4436
        %5452 = vmatprep.subr.mxu0 0.0
        %5453 = vmatpush1.msra.mxu0 %v4437
        %5454 = vmatprep.subr.mxu0 0.0
        %5455 = vmatpush1.msra.mxu0 %v4438
        %5456 = vmatprep.subr.mxu0 0.0
        %5457 = vmatpush1.msra.mxu0 %v4439
        %5458 = vmatprep.subr.mxu0 0.0
        %5459 = vmatpush1.msra.mxu0 0.0
        %5460 = vmatprep.subr.mxu0 0.0
        %5461 = vmatpush1.msra.mxu0 0.0
        %5462 = vmatprep.subr.mxu0 0.0
        %5463 = vmatpush1.msra.mxu0 0.0
        %5464 = vmatprep.subr.mxu0 0.0
        %5465 = vmatpush1.msra.mxu0 0.0
        %5466 = vmatprep.subr.mxu0 0.0
        %5467 = vmatpush1.msra.mxu0 0.0
        %5468 = vmatprep.subr.mxu0 0.0
        %5469 = vmatpush1.msra.mxu0 0.0
        %5470 = vmatprep.subr.mxu0 0.0
        %5471 = vmatpush1.msra.mxu0 0.0
        %5472 = vmatprep.subr.mxu0 0.0
        %5473 = vmatpush1.msra.mxu0 0.0
        %5474 = vmatprep.subr.mxu0 0.0
        %5475 = vmatpush1.msra.mxu0 0.0
        %5476 = vmatprep.subr.mxu0 0.0
        %5477 = vmatpush1.msra.mxu0 0.0
        %5478 = vmatprep.subr.mxu0 0.0
        %5479 = vmatpush1.msra.mxu0 0.0
        %5480 = vmatprep.subr.mxu0 0.0
        %5481 = vmatpush1.msra.mxu0 0.0
        %5482 = vmatprep.subr.mxu0 0.0
        %5483 = vmatpush1.msra.mxu0 0.0
        %5484 = vmatprep.subr.mxu0 0.0
        %5485 = vmatpush1.msra.mxu0 0.0
        %5486 = vmatprep.subr.mxu0 0.0
        %5487 = vmatpush1.msra.mxu0 0.0
        %5488 = vmatprep.subr.mxu0 0.0
        %5489 = vmatpush1.msra.mxu0 0.0
        %5490 = vmatprep.subr.mxu0 0.0
        %5491 = vmatpush1.msra.mxu0 0.0
        %5492 = vmatprep.subr.mxu0 0.0
        %5493 = vmatpush1.msra.mxu0 0.0
        %5494 = vmatprep.subr.mxu0 0.0
        %5495 = vmatpush1.msra.mxu0 0.0
        %5496 = vmatprep.subr.mxu0 0.0
        %5497 = vmatpush1.msra.mxu0 0.0
        %5498 = vmatprep.subr.mxu0 0.0
        %5499 = vmatpush1.msra.mxu0 0.0
        %5500 = vmatprep.subr.mxu0 0.0
        %5501 = vmatpush1.msra.mxu0 0.0
        %5502 = vmatprep.subr.mxu0 0.0
        %5503 = vmatpush1.msra.mxu0 0.0
        %5504 = vmatprep.subr.mxu0 0.0
        %5505 = vmatpush1.msra.mxu0 0.0
        %5506 = vmatprep.subr.mxu0 0.0
        %5507 = vmatpush1.msra.mxu0 0.0
        %5508 = vmatprep.subr.mxu0 0.0
        %5509 = vmatpush1.msra.mxu0 0.0
        %5510 = vmatprep.mubr.f32.mxu0 0.0
        %5511 = vmatmul.mubr.f32.gmra.mrb[0].mxu0 %v5282
        %v5512 = vpop.f32.mrb[0].mxu0
        %v5513 = vadd.f32 0.0, %v5512
        %v5514 = vpop.f32.mrb[0].mxu0
        %5515 = vmatprep.mubr.f32.mxu0 0.0
        %5516 = vmatmul.mubr.f32.gmra.mrb[0].mxu0 %v5285
        %v5517 = vpop.f32.mrb[0].mxu0
        %v5518 = vadd.f32 0.0, %v5517
        %v5519 = vpop.f32.mrb[0].mxu0
        %5520 = vdwg.mxu0
        %v5522 = vsel %vm356, %v5513, 0
        %v5525 = vsel %vm356, %v5518, 0
        %5527 = vmatprep.subr.mxu0 0.0
        %5528 = vmatpush1.msra.mxu0 %v5363
        %5529 = vmatprep.subr.mxu0 0.0
        %5530 = vmatpush1.msra.mxu0 %v5364
        %5531 = vmatprep.subr.mxu0 0.0
        %5532 = vmatpush1.msra.mxu0 0.0
        %5533 = vmatprep.subr.mxu0 0.0
        %5534 = vmatpush1.msra.mxu0 0.0
        %5535 = vmatprep.subr.mxu0 0.0
        %5536 = vmatpush1.msra.mxu0 0.0
        %5537 = vmatprep.subr.mxu0 0.0
        %5538 = vmatpush1.msra.mxu0 0.0
        %5539 = vmatprep.subr.mxu0 0.0
        %5540 = vmatpush1.msra.mxu0 0.0
        %5541 = vmatprep.subr.mxu0 0.0
        %5542 = vmatpush1.msra.mxu0 0.0
        %5543 = vmatprep.subr.mxu0 0.0
        %5544 = vmatpush1.msra.mxu0 0.0
        %5545 = vmatprep.subr.mxu0 0.0
        %5546 = vmatpush1.msra.mxu0 0.0
        %5547 = vmatprep.subr.mxu0 0.0
        %5548 = vmatpush1.msra.mxu0 0.0
        %5549 = vmatprep.subr.mxu0 0.0
        %5550 = vmatpush1.msra.mxu0 0.0
        %5551 = vmatprep.subr.mxu0 0.0
        %5552 = vmatpush1.msra.mxu0 0.0
        %5553 = vmatprep.subr.mxu0 0.0
        %5554 = vmatpush1.msra.mxu0 0.0
        %5555 = vmatprep.subr.mxu0 0.0
        %5556 = vmatpush1.msra.mxu0 0.0
        %5557 = vmatprep.subr.mxu0 0.0
        %5558 = vmatpush1.msra.mxu0 0.0
        %5559 = vmatprep.subr.mxu0 0.0
        %5560 = vmatpush1.msra.mxu0 0.0
        %5561 = vmatprep.subr.mxu0 0.0
        %5562 = vmatpush1.msra.mxu0 0.0
        %5563 = vmatprep.subr.mxu0 0.0
        %5564 = vmatpush1.msra.mxu0 0.0
        %5565 = vmatprep.subr.mxu0 0.0
        %5566 = vmatpush1.msra.mxu0 0.0
        %5567 = vmatprep.subr.mxu0 0.0
        %5568 = vmatpush1.msra.mxu0 0.0
        %5569 = vmatprep.subr.mxu0 0.0
        %5570 = vmatpush1.msra.mxu0 0.0
        %5571 = vmatprep.subr.mxu0 0.0
        %5572 = vmatpush1.msra.mxu0 0.0
        %5573 = vmatprep.subr.mxu0 0.0
        %5574 = vmatpush1.msra.mxu0 0.0
        %5575 = vmatprep.subr.mxu0 0.0
        %5576 = vmatpush1.msra.mxu0 0.0
        %5577 = vmatprep.subr.mxu0 0.0
        %5578 = vmatpush1.msra.mxu0 0.0
        %5579 = vmatprep.subr.mxu0 0.0
        %5580 = vmatpush1.msra.mxu0 0.0
        %5581 = vmatprep.subr.mxu0 0.0
        %5582 = vmatpush1.msra.mxu0 0.0
        %5583 = vmatprep.subr.mxu0 0.0
        %5584 = vmatpush1.msra.mxu0 0.0
        %5585 = vmatprep.subr.mxu0 0.0
        %5586 = vmatpush1.msra.mxu0 0.0
        %5587 = vmatprep.subr.mxu0 0.0
        %5588 = vmatpush1.msra.mxu0 0.0
        %5589 = vmatprep.subr.mxu0 0.0
        %5590 = vmatpush1.msra.mxu0 0.0
        %5591 = vmatprep.mubr.f32.mxu0 0.0
        %5592 = vmatmul.mubr.f32.gmra.mrb[0].mxu0 %v5522
        %v5593 = vpop.f32.mrb[0].mxu0
        %v5594 = vadd.f32 0.0, %v5593
        %v5595 = vpop.f32.mrb[0].mxu0
        %5596 = vmatprep.mubr.f32.mxu0 0.0
        %5597 = vmatmul.mubr.f32.gmra.mrb[0].mxu0 %v5525
        %v5598 = vpop.f32.mrb[0].mxu0
        %v5599 = vadd.f32 0.0, %v5598
        %v5600 = vpop.f32.mrb[0].mxu0
        %5601 = vdwg.mxu0
        %5602 = vmatprep.subr.mxu0 0.0
        %5603 = vmatpush1.msra.mxu0 %v4752
        %5604 = vmatprep.subr.mxu0 0.0
        %5605 = vmatpush1.msra.mxu0 %v4753
        %5606 = vmatprep.subr.mxu0 0.0
        %5607 = vmatpush1.msra.mxu0 %v4754
        %5608 = vmatprep.subr.mxu0 0.0
        %5609 = vmatpush1.msra.mxu0 %v4755
        %5610 = vmatprep.subr.mxu0 0.0
        %5611 = vmatpush1.msra.mxu0 %v4756
        %5612 = vmatprep.subr.mxu0 0.0
        %5613 = vmatpush1.msra.mxu0 %v4757
        %5614 = vmatprep.subr.mxu0 0.0
        %5615 = vmatpush1.msra.mxu0 0.0
        %5616 = vmatprep.subr.mxu0 0.0
        %5617 = vmatpush1.msra.mxu0 0.0
        %5618 = vmatprep.subr.mxu0 0.0
        %5619 = vmatpush1.msra.mxu0 0.0
        %5620 = vmatprep.subr.mxu0 0.0
        %5621 = vmatpush1.msra.mxu0 0.0
        %5622 = vmatprep.subr.mxu0 0.0
        %5623 = vmatpush1.msra.mxu0 0.0
        %5624 = vmatprep.subr.mxu0 0.0
        %5625 = vmatpush1.msra.mxu0 0.0
        %5626 = vmatprep.subr.mxu0 0.0
        %5627 = vmatpush1.msra.mxu0 0.0
        %5628 = vmatprep.subr.mxu0 0.0
        %5629 = vmatpush1.msra.mxu0 0.0
        %5630 = vmatprep.subr.mxu0 0.0
        %5631 = vmatpush1.msra.mxu0 0.0
        %5632 = vmatprep.subr.mxu0 0.0
        %5633 = vmatpush1.msra.mxu0 0.0
        %5634 = vmatprep.subr.mxu0 0.0
        %5635 = vmatpush1.msra.mxu0 0.0
        %5636 = vmatprep.subr.mxu0 0.0
        %5637 = vmatpush1.msra.mxu0 0.0
        %5638 = vmatprep.subr.mxu0 0.0
        %5639 = vmatpush1.msra.mxu0 0.0
        %5640 = vmatprep.subr.mxu0 0.0
        %5641 = vmatpush1.msra.mxu0 0.0
        %5642 = vmatprep.subr.mxu0 0.0
        %5643 = vmatpush1.msra.mxu0 0.0
        %5644 = vmatprep.subr.mxu0 0.0
        %5645 = vmatpush1.msra.mxu0 0.0
        %5646 = vmatprep.subr.mxu0 0.0
        %5647 = vmatpush1.msra.mxu0 0.0
        %5648 = vmatprep.subr.mxu0 0.0
        %5649 = vmatpush1.msra.mxu0 0.0
        %5650 = vmatprep.subr.mxu0 0.0
        %5651 = vmatpush1.msra.mxu0 0.0
        %5652 = vmatprep.subr.mxu0 0.0
        %5653 = vmatpush1.msra.mxu0 0.0
        %5654 = vmatprep.subr.mxu0 0.0
        %5655 = vmatpush1.msra.mxu0 0.0
        %5656 = vmatprep.subr.mxu0 0.0
        %5657 = vmatpush1.msra.mxu0 0.0
        %5658 = vmatprep.subr.mxu0 0.0
        %5659 = vmatpush1.msra.mxu0 0.0
        %5660 = vmatprep.subr.mxu0 0.0
        %5661 = vmatpush1.msra.mxu0 0.0
        %5662 = vmatprep.subr.mxu0 0.0
        %5663 = vmatpush1.msra.mxu0 0.0
        %5664 = vmatprep.subr.mxu0 0.0
        %5665 = vmatpush1.msra.mxu0 0.0
        %5666 = vmatprep.mubr.f32.mxu0 0.0
        %5667 = vmatmul.mubr.f32.gmra.mrb[0].mxu0 %v5282
        %v5668 = vpop.f32.mrb[0].mxu0
        %v5669 = vadd.f32 0.0, %v5668
        %v5670 = vpop.f32.mrb[0].mxu0
        %5671 = vmatprep.mubr.f32.mxu0 0.0
        %5672 = vmatmul.mubr.f32.gmra.mrb[0].mxu0 %v5285
        %v5673 = vpop.f32.mrb[0].mxu0
        %v5674 = vadd.f32 0.0, %v5673
        %v5675 = vpop.f32.mrb[0].mxu0
        %5676 = vdwg.mxu0
        %v5678 = vsel %vm356, %v5669, 0
        %v5681 = vsel %vm356, %v5674, 0
        %5683 = vmatprep.subr.mxu0 0.0
        %5684 = vmatpush1.msra.mxu0 %v5363
        %5685 = vmatprep.subr.mxu0 0.0
        %5686 = vmatpush1.msra.mxu0 %v5364
        %5687 = vmatprep.subr.mxu0 0.0
        %5688 = vmatpush1.msra.mxu0 0.0
        %5689 = vmatprep.subr.mxu0 0.0
        %5690 = vmatpush1.msra.mxu0 0.0
        %5691 = vmatprep.subr.mxu0 0.0
        %5692 = vmatpush1.msra.mxu0 0.0
        %5693 = vmatprep.subr.mxu0 0.0
        %5694 = vmatpush1.msra.mxu0 0.0
        %5695 = vmatprep.subr.mxu0 0.0
        %5696 = vmatpush1.msra.mxu0 0.0
        %5697 = vmatprep.subr.mxu0 0.0
        %5698 = vmatpush1.msra.mxu0 0.0
        %5699 = vmatprep.subr.mxu0 0.0
        %5700 = vmatpush1.msra.mxu0 0.0
        %5701 = vmatprep.subr.mxu0 0.0
        %5702 = vmatpush1.msra.mxu0 0.0
        %5703 = vmatprep.subr.mxu0 0.0
        %5704 = vmatpush1.msra.mxu0 0.0
        %5705 = vmatprep.subr.mxu0 0.0
        %5706 = vmatpush1.msra.mxu0 0.0
        %5707 = vmatprep.subr.mxu0 0.0
        %5708 = vmatpush1.msra.mxu0 0.0
        %5709 = vmatprep.subr.mxu0 0.0
        %5710 = vmatpush1.msra.mxu0 0.0
        %5711 = vmatprep.subr.mxu0 0.0
        %5712 = vmatpush1.msra.mxu0 0.0
        %5713 = vmatprep.subr.mxu0 0.0
        %5714 = vmatpush1.msra.mxu0 0.0
        %5715 = vmatprep.subr.mxu0 0.0
        %5716 = vmatpush1.msra.mxu0 0.0
        %5717 = vmatprep.subr.mxu0 0.0
        %5718 = vmatpush1.msra.mxu0 0.0
        %5719 = vmatprep.subr.mxu0 0.0
        %5720 = vmatpush1.msra.mxu0 0.0
        %5721 = vmatprep.subr.mxu0 0.0
        %5722 = vmatpush1.msra.mxu0 0.0
        %5723 = vmatprep.subr.mxu0 0.0
        %5724 = vmatpush1.msra.mxu0 0.0
        %5725 = vmatprep.subr.mxu0 0.0
        %5726 = vmatpush1.msra.mxu0 0.0
        %5727 = vmatprep.subr.mxu0 0.0
        %5728 = vmatpush1.msra.mxu0 0.0
        %5729 = vmatprep.subr.mxu0 0.0
        %5730 = vmatpush1.msra.mxu0 0.0
        %5731 = vmatprep.subr.mxu0 0.0
        %5732 = vmatpush1.msra.mxu0 0.0
        %5733 = vmatprep.subr.mxu0 0.0
        %5734 = vmatpush1.msra.mxu0 0.0
        %5735 = vmatprep.subr.mxu0 0.0
        %5736 = vmatpush1.msra.mxu0 0.0
        %5737 = vmatprep.subr.mxu0 0.0
        %5738 = vmatpush1.msra.mxu0 0.0
        %5739 = vmatprep.subr.mxu0 0.0
        %5740 = vmatpush1.msra.mxu0 0.0
        %5741 = vmatprep.subr.mxu0 0.0
        %5742 = vmatpush1.msra.mxu0 0.0
        %5743 = vmatprep.subr.mxu0 0.0
        %5744 = vmatpush1.msra.mxu0 0.0
        %5745 = vmatprep.subr.mxu0 0.0
        %5746 = vmatpush1.msra.mxu0 0.0
        %5747 = vmatprep.mubr.f32.mxu0 0.0
        %5748 = vmatmul.mubr.f32.gmra.mrb[0].mxu0 %v5678
        %v5749 = vpop.f32.mrb[0].mxu0
        %v5750 = vadd.f32 0.0, %v5749
        %v5751 = vpop.f32.mrb[0].mxu0
        %5752 = vmatprep.mubr.f32.mxu0 0.0
        %5753 = vmatmul.mubr.f32.gmra.mrb[0].mxu0 %v5681
        %v5754 = vpop.f32.mrb[0].mxu0
        %v5755 = vadd.f32 0.0, %v5754
        %v5756 = vpop.f32.mrb[0].mxu0
        %5757 = vdwg.mxu0
        %5758 = vmatprep.subr.mxu0 0.0
        %5759 = vmatpush1.msra.mxu0 %v4914
        %5760 = vmatprep.subr.mxu0 0.0
        %5761 = vmatpush1.msra.mxu0 %v4915
        %5762 = vmatprep.subr.mxu0 0.0
        %5763 = vmatpush1.msra.mxu0 %v4916
        %5764 = vmatprep.subr.mxu0 0.0
        %5765 = vmatpush1.msra.mxu0 %v4917
        %5766 = vmatprep.subr.mxu0 0.0
        %5767 = vmatpush1.msra.mxu0 %v4918
        %5768 = vmatprep.subr.mxu0 0.0
        %5769 = vmatpush1.msra.mxu0 %v4919
        %5770 = vmatprep.subr.mxu0 0.0
        %5771 = vmatpush1.msra.mxu0 0.0
        %5772 = vmatprep.subr.mxu0 0.0
        %5773 = vmatpush1.msra.mxu0 0.0
        %5774 = vmatprep.subr.mxu0 0.0
        %5775 = vmatpush1.msra.mxu0 0.0
        %5776 = vmatprep.subr.mxu0 0.0
        %5777 = vmatpush1.msra.mxu0 0.0
        %5778 = vmatprep.subr.mxu0 0.0
        %5779 = vmatpush1.msra.mxu0 0.0
        %5780 = vmatprep.subr.mxu0 0.0
        %5781 = vmatpush1.msra.mxu0 0.0
        %5782 = vmatprep.subr.mxu0 0.0
        %5783 = vmatpush1.msra.mxu0 0.0
        %5784 = vmatprep.subr.mxu0 0.0
        %5785 = vmatpush1.msra.mxu0 0.0
        %5786 = vmatprep.subr.mxu0 0.0
        %5787 = vmatpush1.msra.mxu0 0.0
        %5788 = vmatprep.subr.mxu0 0.0
        %5789 = vmatpush1.msra.mxu0 0.0
        %5790 = vmatprep.subr.mxu0 0.0
        %5791 = vmatpush1.msra.mxu0 0.0
        %5792 = vmatprep.subr.mxu0 0.0
        %5793 = vmatpush1.msra.mxu0 0.0
        %5794 = vmatprep.subr.mxu0 0.0
        %5795 = vmatpush1.msra.mxu0 0.0
        %5796 = vmatprep.subr.mxu0 0.0
        %5797 = vmatpush1.msra.mxu0 0.0
        %5798 = vmatprep.subr.mxu0 0.0
        %5799 = vmatpush1.msra.mxu0 0.0
        %5800 = vmatprep.subr.mxu0 0.0
        %5801 = vmatpush1.msra.mxu0 0.0
        %5802 = vmatprep.subr.mxu0 0.0
        %5803 = vmatpush1.msra.mxu0 0.0
        %5804 = vmatprep.subr.mxu0 0.0
        %5805 = vmatpush1.msra.mxu0 0.0
        %5806 = vmatprep.subr.mxu0 0.0
        %5807 = vmatpush1.msra.mxu0 0.0
        %5808 = vmatprep.subr.mxu0 0.0
        %5809 = vmatpush1.msra.mxu0 0.0
        %5810 = vmatprep.subr.mxu0 0.0
        %5811 = vmatpush1.msra.mxu0 0.0
        %5812 = vmatprep.subr.mxu0 0.0
        %5813 = vmatpush1.msra.mxu0 0.0
        %5814 = vmatprep.subr.mxu0 0.0
        %5815 = vmatpush1.msra.mxu0 0.0
        %5816 = vmatprep.subr.mxu0 0.0
        %5817 = vmatpush1.msra.mxu0 0.0
        %5818 = vmatprep.subr.mxu0 0.0
        %5819 = vmatpush1.msra.mxu0 0.0
        %5820 = vmatprep.subr.mxu0 0.0
        %5821 = vmatpush1.msra.mxu0 0.0
        %5822 = vmatprep.mubr.f32.mxu0 0.0
        %5823 = vmatmul.mubr.f32.gmra.mrb[0].mxu0 %v5282
        %v5824 = vpop.f32.mrb[0].mxu0
        %v5825 = vadd.f32 0.0, %v5824
        %v5826 = vpop.f32.mrb[0].mxu0
        %5827 = vmatprep.mubr.f32.mxu0 0.0
        %5828 = vmatmul.mubr.f32.gmra.mrb[0].mxu0 %v5285
        %v5829 = vpop.f32.mrb[0].mxu0
        %v5830 = vadd.f32 0.0, %v5829
        %v5831 = vpop.f32.mrb[0].mxu0
        %5832 = vdwg.mxu0
        %v5834 = vsel %vm356, %v5825, 0
        %v5837 = vsel %vm356, %v5830, 0
        %5839 = vmatprep.subr.mxu0 0.0
        %5840 = vmatpush1.msra.mxu0 %v5363
        %5841 = vmatprep.subr.mxu0 0.0
        %5842 = vmatpush1.msra.mxu0 %v5364
        %5843 = vmatprep.subr.mxu0 0.0
        %5844 = vmatpush1.msra.mxu0 0.0
        %5845 = vmatprep.subr.mxu0 0.0
        %5846 = vmatpush1.msra.mxu0 0.0
        %5847 = vmatprep.subr.mxu0 0.0
        %5848 = vmatpush1.msra.mxu0 0.0
        %5849 = vmatprep.subr.mxu0 0.0
        %5850 = vmatpush1.msra.mxu0 0.0
        %5851 = vmatprep.subr.mxu0 0.0
        %5852 = vmatpush1.msra.mxu0 0.0
        %5853 = vmatprep.subr.mxu0 0.0
        %5854 = vmatpush1.msra.mxu0 0.0
        %5855 = vmatprep.subr.mxu0 0.0
        %5856 = vmatpush1.msra.mxu0 0.0
        %5857 = vmatprep.subr.mxu0 0.0
        %5858 = vmatpush1.msra.mxu0 0.0
        %5859 = vmatprep.subr.mxu0 0.0
        %5860 = vmatpush1.msra.mxu0 0.0
        %5861 = vmatprep.subr.mxu0 0.0
        %5862 = vmatpush1.msra.mxu0 0.0
        %5863 = vmatprep.subr.mxu0 0.0
        %5864 = vmatpush1.msra.mxu0 0.0
        %5865 = vmatprep.subr.mxu0 0.0
        %5866 = vmatpush1.msra.mxu0 0.0
        %5867 = vmatprep.subr.mxu0 0.0
        %5868 = vmatpush1.msra.mxu0 0.0
        %5869 = vmatprep.subr.mxu0 0.0
        %5870 = vmatpush1.msra.mxu0 0.0
        %5871 = vmatprep.subr.mxu0 0.0
        %5872 = vmatpush1.msra.mxu0 0.0
        %5873 = vmatprep.subr.mxu0 0.0
        %5874 = vmatpush1.msra.mxu0 0.0
        %5875 = vmatprep.subr.mxu0 0.0
        %5876 = vmatpush1.msra.mxu0 0.0
        %5877 = vmatprep.subr.mxu0 0.0
        %5878 = vmatpush1.msra.mxu0 0.0
        %5879 = vmatprep.subr.mxu0 0.0
        %5880 = vmatpush1.msra.mxu0 0.0
        %5881 = vmatprep.subr.mxu0 0.0
        %5882 = vmatpush1.msra.mxu0 0.0
        %5883 = vmatprep.subr.mxu0 0.0
        %5884 = vmatpush1.msra.mxu0 0.0
        %5885 = vmatprep.subr.mxu0 0.0
        %5886 = vmatpush1.msra.mxu0 0.0
        %5887 = vmatprep.subr.mxu0 0.0
        %5888 = vmatpush1.msra.mxu0 0.0
        %5889 = vmatprep.subr.mxu0 0.0
        %5890 = vmatpush1.msra.mxu0 0.0
        %5891 = vmatprep.subr.mxu0 0.0
        %5892 = vmatpush1.msra.mxu0 0.0
        %5893 = vmatprep.subr.mxu0 0.0
        %5894 = vmatpush1.msra.mxu0 0.0
        %5895 = vmatprep.subr.mxu0 0.0
        %5896 = vmatpush1.msra.mxu0 0.0
        %5897 = vmatprep.subr.mxu0 0.0
        %5898 = vmatpush1.msra.mxu0 0.0
        %5899 = vmatprep.subr.mxu0 0.0
        %5900 = vmatpush1.msra.mxu0 0.0
        %5901 = vmatprep.subr.mxu0 0.0
        %5902 = vmatpush1.msra.mxu0 0.0
        %5903 = vmatprep.mubr.f32.mxu0 0.0
        %5904 = vmatmul.mubr.f32.gmra.mrb[0].mxu0 %v5834
        %v5905 = vpop.f32.mrb[0].mxu0
        %v5906 = vadd.f32 0.0, %v5905
        %v5907 = vpop.f32.mrb[0].mxu0
        %5908 = vmatprep.mubr.f32.mxu0 0.0
        %5909 = vmatmul.mubr.f32.gmra.mrb[0].mxu0 %v5837
        %v5910 = vpop.f32.mrb[0].mxu0
        %v5911 = vadd.f32 0.0, %v5910
        %v5912 = vpop.f32.mrb[0].mxu0
        %5913 = vdwg.mxu0
        %5914 = vmatprep.subr.mxu0 0.0
        %5915 = vmatpush1.msra.mxu0 %v5076
        %5916 = vmatprep.subr.mxu0 0.0
        %5917 = vmatpush1.msra.mxu0 %v5077
        %5918 = vmatprep.subr.mxu0 0.0
        %5919 = vmatpush1.msra.mxu0 %v5078
        %5920 = vmatprep.subr.mxu0 0.0
        %5921 = vmatpush1.msra.mxu0 %v5079
        %5922 = vmatprep.subr.mxu0 0.0
        %5923 = vmatpush1.msra.mxu0 %v5080
        %5924 = vmatprep.subr.mxu0 0.0
        %5925 = vmatpush1.msra.mxu0 %v5081
        %5926 = vmatprep.subr.mxu0 0.0
        %5927 = vmatpush1.msra.mxu0 0.0
        %5928 = vmatprep.subr.mxu0 0.0
        %5929 = vmatpush1.msra.mxu0 0.0
        %5930 = vmatprep.subr.mxu0 0.0
        %5931 = vmatpush1.msra.mxu0 0.0
        %5932 = vmatprep.subr.mxu0 0.0
        %5933 = vmatpush1.msra.mxu0 0.0
        %5934 = vmatprep.subr.mxu0 0.0
        %5935 = vmatpush1.msra.mxu0 0.0
        %5936 = vmatprep.subr.mxu0 0.0
        %5937 = vmatpush1.msra.mxu0 0.0
        %5938 = vmatprep.subr.mxu0 0.0
        %5939 = vmatpush1.msra.mxu0 0.0
        %5940 = vmatprep.subr.mxu0 0.0
        %5941 = vmatpush1.msra.mxu0 0.0
        %5942 = vmatprep.subr.mxu0 0.0
        %5943 = vmatpush1.msra.mxu0 0.0
        %5944 = vmatprep.subr.mxu0 0.0
        %5945 = vmatpush1.msra.mxu0 0.0
        %5946 = vmatprep.subr.mxu0 0.0
        %5947 = vmatpush1.msra.mxu0 0.0
        %5948 = vmatprep.subr.mxu0 0.0
        %5949 = vmatpush1.msra.mxu0 0.0
        %5950 = vmatprep.subr.mxu0 0.0
        %5951 = vmatpush1.msra.mxu0 0.0
        %5952 = vmatprep.subr.mxu0 0.0
        %5953 = vmatpush1.msra.mxu0 0.0
        %5954 = vmatprep.subr.mxu0 0.0
        %5955 = vmatpush1.msra.mxu0 0.0
        %5956 = vmatprep.subr.mxu0 0.0
        %5957 = vmatpush1.msra.mxu0 0.0
        %5958 = vmatprep.subr.mxu0 0.0
        %5959 = vmatpush1.msra.mxu0 0.0
        %5960 = vmatprep.subr.mxu0 0.0
        %5961 = vmatpush1.msra.mxu0 0.0
        %5962 = vmatprep.subr.mxu0 0.0
        %5963 = vmatpush1.msra.mxu0 0.0
        %5964 = vmatprep.subr.mxu0 0.0
        %5965 = vmatpush1.msra.mxu0 0.0
        %5966 = vmatprep.subr.mxu0 0.0
        %5967 = vmatpush1.msra.mxu0 0.0
        %5968 = vmatprep.subr.mxu0 0.0
        %5969 = vmatpush1.msra.mxu0 0.0
        %5970 = vmatprep.subr.mxu0 0.0
        %5971 = vmatpush1.msra.mxu0 0.0
        %5972 = vmatprep.subr.mxu0 0.0
        %5973 = vmatpush1.msra.mxu0 0.0
        %5974 = vmatprep.subr.mxu0 0.0
        %5975 = vmatpush1.msra.mxu0 0.0
        %5976 = vmatprep.subr.mxu0 0.0
        %5977 = vmatpush1.msra.mxu0 0.0
        %5978 = vmatprep.mubr.f32.mxu0 0.0
        %5979 = vmatmul.mubr.f32.gmra.mrb[0].mxu0 %v5282
        %v5980 = vpop.f32.mrb[0].mxu0
        %v5981 = vadd.f32 0.0, %v5980
        %v5982 = vpop.f32.mrb[0].mxu0
        %5983 = vmatprep.mubr.f32.mxu0 0.0
        %5984 = vmatmul.mubr.f32.gmra.mrb[0].mxu0 %v5285
        %v5985 = vpop.f32.mrb[0].mxu0
        %v5986 = vadd.f32 0.0, %v5985
        %v5987 = vpop.f32.mrb[0].mxu0
        %5988 = vdwg.mxu0
        %v5990 = vsel %vm356, %v5981, 0
        %v5993 = vsel %vm356, %v5986, 0
        %5995 = vmatprep.subr.mxu0 0.0
        %5996 = vmatpush1.msra.mxu0 %v5363
        %5997 = vmatprep.subr.mxu0 0.0
        %5998 = vmatpush1.msra.mxu0 %v5364
        %5999 = vmatprep.subr.mxu0 0.0
        %6000 = vmatpush1.msra.mxu0 0.0
        %6001 = vmatprep.subr.mxu0 0.0
        %6002 = vmatpush1.msra.mxu0 0.0
        %6003 = vmatprep.subr.mxu0 0.0
        %6004 = vmatpush1.msra.mxu0 0.0
        %6005 = vmatprep.subr.mxu0 0.0
        %6006 = vmatpush1.msra.mxu0 0.0
        %6007 = vmatprep.subr.mxu0 0.0
        %6008 = vmatpush1.msra.mxu0 0.0
        %6009 = vmatprep.subr.mxu0 0.0
        %6010 = vmatpush1.msra.mxu0 0.0
        %6011 = vmatprep.subr.mxu0 0.0
        %6012 = vmatpush1.msra.mxu0 0.0
        %6013 = vmatprep.subr.mxu0 0.0
        %6014 = vmatpush1.msra.mxu0 0.0
        %6015 = vmatprep.subr.mxu0 0.0
        %6016 = vmatpush1.msra.mxu0 0.0
        %6017 = vmatprep.subr.mxu0 0.0
        %6018 = vmatpush1.msra.mxu0 0.0
        %6019 = vmatprep.subr.mxu0 0.0
        %6020 = vmatpush1.msra.mxu0 0.0
        %6021 = vmatprep.subr.mxu0 0.0
        %6022 = vmatpush1.msra.mxu0 0.0
        %6023 = vmatprep.subr.mxu0 0.0
        %6024 = vmatpush1.msra.mxu0 0.0
        %6025 = vmatprep.subr.mxu0 0.0
        %6026 = vmatpush1.msra.mxu0 0.0
        %6027 = vmatprep.subr.mxu0 0.0
        %6028 = vmatpush1.msra.mxu0 0.0
        %6029 = vmatprep.subr.mxu0 0.0
        %6030 = vmatpush1.msra.mxu0 0.0
        %6031 = vmatprep.subr.mxu0 0.0
        %6032 = vmatpush1.msra.mxu0 0.0
        %6033 = vmatprep.subr.mxu0 0.0
        %6034 = vmatpush1.msra.mxu0 0.0
        %6035 = vmatprep.subr.mxu0 0.0
        %6036 = vmatpush1.msra.mxu0 0.0
        %6037 = vmatprep.subr.mxu0 0.0
        %6038 = vmatpush1.msra.mxu0 0.0
        %6039 = vmatprep.subr.mxu0 0.0
        %6040 = vmatpush1.msra.mxu0 0.0
        %6041 = vmatprep.subr.mxu0 0.0
        %6042 = vmatpush1.msra.mxu0 0.0
        %6043 = vmatprep.subr.mxu0 0.0
        %6044 = vmatpush1.msra.mxu0 0.0
        %6045 = vmatprep.subr.mxu0 0.0
        %6046 = vmatpush1.msra.mxu0 0.0
        %6047 = vmatprep.subr.mxu0 0.0
        %6048 = vmatpush1.msra.mxu0 0.0
        %6049 = vmatprep.subr.mxu0 0.0
        %6050 = vmatpush1.msra.mxu0 0.0
        %6051 = vmatprep.subr.mxu0 0.0
        %6052 = vmatpush1.msra.mxu0 0.0
        %6053 = vmatprep.subr.mxu0 0.0
        %6054 = vmatpush1.msra.mxu0 0.0
        %6055 = vmatprep.subr.mxu0 0.0
        %6056 = vmatpush1.msra.mxu0 0.0
        %6057 = vmatprep.subr.mxu0 0.0
        %6058 = vmatpush1.msra.mxu0 0.0
        %6059 = vmatprep.mubr.f32.mxu0 0.0
        %6060 = vmatmul.mubr.f32.gmra.mrb[0].mxu0 %v5990
        %v6061 = vpop.f32.mrb[0].mxu0
        %v6062 = vadd.f32 0.0, %v6061
        %v6063 = vpop.f32.mrb[0].mxu0
        %6064 = vmatprep.mubr.f32.mxu0 0.0
        %6065 = vmatmul.mubr.f32.gmra.mrb[0].mxu0 %v5993
        %v6066 = vpop.f32.mrb[0].mxu0
        %v6067 = vadd.f32 0.0, %v6066
        %v6068 = vpop.f32.mrb[0].mxu0
        %6069 = vdwg.mxu0
        %v6070 = vmul.f32 %v5438, %v5438
        %v6071 = vmul.f32 %v5443, %v5443
        %v6072 = vmul.f32 %v5594, %v5594
        %v6073 = vmul.f32 %v5599, %v5599
        %v6074 = vmul.f32 %v5438, %v5594
        %v6075 = vmul.f32 %v5443, %v5599
        %v6076 = vsub.f32 %v6062, %v6074
        %v6077 = vsub.f32 %v6067, %v6075
        %v6078 = vmul.f32 %v6076, 2.0
        %v6079 = vmul.f32 %v6077, 2.0
        %v6080 = vadd.f32 %v6078, 0.0009
        %v6081 = vadd.f32 %v6079, 0.0009
        %v6082 = vsub.f32 %v5750, %v6070
        %v6083 = vsub.f32 %v5755, %v6071
        %v6084 = vsub.f32 %v5906, %v6072
        %v6085 = vsub.f32 %v5911, %v6073
        %v6086 = vadd.f32 %v6082, %v6084
        %v6087 = vadd.f32 %v6083, %v6085
        %v6088 = vadd.f32 %v6086, 0.0009
        %v6089 = vadd.f32 %v6087, 0.0009
        %v6090 = vmul.f32 %v6080, %v6080
        %v6091 = vmul.f32 %v6081, %v6081
        %v6092 = vmul.f32 %v6088, %v6088
        %v6093 = vmul.f32 %v6089, %v6089
        %v6094 = vmul.f32 %v6090, %v6080
        %v6095 = vmul.f32 %v6091, %v6081
        %v6096 = vmul.f32 %v6092, %v6088
        %v6097 = vmul.f32 %v6093, %v6089
        %v6098 = vmul.f32 %v6074, 2.0
        %v6099 = vmul.f32 %v6075, 2.0
        %v6100 = vadd.f32 %v6098, 0.0001
        %v6101 = vadd.f32 %v6099, 0.0001
        %v6102 = vadd.f32 %v6070, %v6072
        %v6103 = vadd.f32 %v6071, %v6073
        %v6104 = vadd.f32 %v6102, 0.0001
        %v6105 = vadd.f32 %v6103, 0.0001
        %v6106 = vrcp.pop %v6104
        %v6107 = vrcp.pop %v6105
        %v6108 = vmul.f32 %v6104, %v6106
        %v6109 = vmul.f32 %v6105, %v6107
        %v6110 = vsub.f32 2.0, %v6108
        %v6111 = vsub.f32 2.0, %v6109
        %v6112 = vmul.f32 %v6106, %v6110
        %v6113 = vmul.f32 %v6107, %v6111
        %v6114 = vmul.f32 %v6100, %v6112
        %v6115 = vmul.f32 %v6101, %v6113
        %v6116 = vmul.f32 %v6114, %v6114
        %v6117 = vmul.f32 %v6115, %v6115
        %v6118 = vmul.f32 %v6116, %v6114
        %v6119 = vmul.f32 %v6117, %v6115
        %v6120 = vrcp.pop %v6096
        %v6121 = vrcp.pop %v6097
        %v6122 = vmul.f32 %v6096, %v6120
        %v6123 = vmul.f32 %v6097, %v6121
        %v6124 = vsub.f32 2.0, %v6122
        %v6125 = vsub.f32 2.0, %v6123
        %v6126 = vmul.f32 %v6120, %v6124
        %v6127 = vmul.f32 %v6121, %v6125
        %v6128 = vmul.f32 %v6094, %v6126
        %v6129 = vmul.f32 %v6095, %v6127
        %v6130 = vmul.f32 %v5276, %v6128
        %v6131 = vmul.f32 %v5277, %v6129
        %v6132 = vsub.f32 %v258, %v264
        %v6133 = vsub.f32 %v259, %v265
        %v6134 = vsub.f32 %v260, %v266
        %v6135 = vsub.f32 %v261, %v267
        %v6136 = vsub.f32 %v262, %v268
        %v6137 = vsub.f32 %v263, %v269
        %v6138 = vand.u32 2147483647, %v6132
        %v6139 = vand.u32 2147483647, %v6133
        %v6140 = vand.u32 2147483647, %v6134
        %v6141 = vand.u32 2147483647, %v6135
        %v6142 = vand.u32 2147483647, %v6136
        %v6143 = vand.u32 2147483647, %v6137
        %6144 = vmatprep.subr.mxu0 0.0
        %6145 = vmatpush1.msra.mxu0 %v6138
        %6146 = vmatprep.subr.mxu0 0.0
        %6147 = vmatpush1.msra.mxu0 %v6139
        %6148 = vmatprep.subr.mxu0 0.0
        %6149 = vmatpush1.msra.mxu0 %v6140
        %6150 = vmatprep.subr.mxu0 0.0
        %6151 = vmatpush1.msra.mxu0 %v6141
        %6152 = vmatprep.subr.mxu0 0.0
        %6153 = vmatpush1.msra.mxu0 %v6142
        %6154 = vmatprep.subr.mxu0 0.0
        %6155 = vmatpush1.msra.mxu0 %v6143
        %6156 = vmatprep.subr.mxu0 0.0
        %6157 = vmatpush1.msra.mxu0 0.0
        %6158 = vmatprep.subr.mxu0 0.0
        %6159 = vmatpush1.msra.mxu0 0.0
        %6160 = vmatprep.subr.mxu0 0.0
        %6161 = vmatpush1.msra.mxu0 0.0
        %6162 = vmatprep.subr.mxu0 0.0
        %6163 = vmatpush1.msra.mxu0 0.0
        %6164 = vmatprep.subr.mxu0 0.0
        %6165 = vmatpush1.msra.mxu0 0.0
        %6166 = vmatprep.subr.mxu0 0.0
        %6167 = vmatpush1.msra.mxu0 0.0
        %6168 = vmatprep.subr.mxu0 0.0
        %6169 = vmatpush1.msra.mxu0 0.0
        %6170 = vmatprep.subr.mxu0 0.0
        %6171 = vmatpush1.msra.mxu0 0.0
        %6172 = vmatprep.subr.mxu0 0.0
        %6173 = vmatpush1.msra.mxu0 0.0
        %6174 = vmatprep.subr.mxu0 0.0
        %6175 = vmatpush1.msra.mxu0 0.0
        %6176 = vmatprep.subr.mxu0 0.0
        %6177 = vmatpush1.msra.mxu0 0.0
        %6178 = vmatprep.subr.mxu0 0.0
        %6179 = vmatpush1.msra.mxu0 0.0
        %6180 = vmatprep.subr.mxu0 0.0
        %6181 = vmatpush1.msra.mxu0 0.0
        %6182 = vmatprep.subr.mxu0 0.0
        %6183 = vmatpush1.msra.mxu0 0.0
        %6184 = vmatprep.subr.mxu0 0.0
        %6185 = vmatpush1.msra.mxu0 0.0
        %6186 = vmatprep.subr.mxu0 0.0
        %6187 = vmatpush1.msra.mxu0 0.0
        %6188 = vmatprep.subr.mxu0 0.0
        %6189 = vmatpush1.msra.mxu0 0.0
        %6190 = vmatprep.subr.mxu0 0.0
        %6191 = vmatpush1.msra.mxu0 0.0
        %6192 = vmatprep.subr.mxu0 0.0
        %6193 = vmatpush1.msra.mxu0 0.0
        %6194 = vmatprep.subr.mxu0 0.0
        %6195 = vmatpush1.msra.mxu0 0.0
        %6196 = vmatprep.subr.mxu0 0.0
        %6197 = vmatpush1.msra.mxu0 0.0
        %6198 = vmatprep.subr.mxu0 0.0
        %6199 = vmatpush1.msra.mxu0 0.0
        %6200 = vmatprep.subr.mxu0 0.0
        %6201 = vmatpush1.msra.mxu0 0.0
        %6202 = vmatprep.subr.mxu0 0.0
        %6203 = vmatpush1.msra.mxu0 0.0
        %6204 = vmatprep.subr.mxu0 0.0
        %6205 = vmatpush1.msra.mxu0 0.0
        %6206 = vmatprep.subr.mxu0 0.0
        %6207 = vmatpush1.msra.mxu0 0.0
        %6208 = vmatprep.mubr.f32.mxu0 0.0
        %6209 = vmatmul.mubr.f32.gmra.mrb[0].mxu0 %v5282
        %v6210 = vpop.f32.mrb[0].mxu0
        %v6211 = vadd.f32 0.0, %v6210
        %v6212 = vpop.f32.mrb[0].mxu0
        %6213 = vmatprep.mubr.f32.mxu0 0.0
        %6214 = vmatmul.mubr.f32.gmra.mrb[0].mxu0 %v5285
        %v6215 = vpop.f32.mrb[0].mxu0
        %v6216 = vadd.f32 0.0, %v6215
        %v6217 = vpop.f32.mrb[0].mxu0
        %6218 = vdwg.mxu0
        %v6219 = vsub.f32 %v1935, %v1942
        %v6220 = vsub.f32 %v1936, %v1943
        %v6221 = vsub.f32 %v1937, %v1944
        %v6222 = vsub.f32 %v1938, %v1945
        %v6223 = vsub.f32 %v1939, %v1946
        %v6224 = vsub.f32 %v1940, %v1947
        %v6225 = vand.u32 2147483647, %v6219
        %v6226 = vand.u32 2147483647, %v6220
        %v6227 = vand.u32 2147483647, %v6221
        %v6228 = vand.u32 2147483647, %v6222
        %v6229 = vand.u32 2147483647, %v6223
        %v6230 = vand.u32 2147483647, %v6224
        %6231 = vmatprep.subr.mxu0 0.0
        %6232 = vmatpush1.msra.mxu0 %v6225
        %6233 = vmatprep.subr.mxu0 0.0
        %6234 = vmatpush1.msra.mxu0 %v6226
        %6235 = vmatprep.subr.mxu0 0.0
        %6236 = vmatpush1.msra.mxu0 %v6227
        %6237 = vmatprep.subr.mxu0 0.0
        %6238 = vmatpush1.msra.mxu0 %v6228
        %6239 = vmatprep.subr.mxu0 0.0
        %6240 = vmatpush1.msra.mxu0 %v6229
        %6241 = vmatprep.subr.mxu0 0.0
        %6242 = vmatpush1.msra.mxu0 %v6230
        %6243 = vmatprep.subr.mxu0 0.0
        %6244 = vmatpush1.msra.mxu0 0.0
        %6245 = vmatprep.subr.mxu0 0.0
        %6246 = vmatpush1.msra.mxu0 0.0
        %6247 = vmatprep.subr.mxu0 0.0
        %6248 = vmatpush1.msra.mxu0 0.0
        %6249 = vmatprep.subr.mxu0 0.0
        %6250 = vmatpush1.msra.mxu0 0.0
        %6251 = vmatprep.subr.mxu0 0.0
        %6252 = vmatpush1.msra.mxu0 0.0
        %6253 = vmatprep.subr.mxu0 0.0
        %6254 = vmatpush1.msra.mxu0 0.0
        %6255 = vmatprep.subr.mxu0 0.0
        %6256 = vmatpush1.msra.mxu0 0.0
        %6257 = vmatprep.subr.mxu0 0.0
        %6258 = vmatpush1.msra.mxu0 0.0
        %6259 = vmatprep.subr.mxu0 0.0
        %6260 = vmatpush1.msra.mxu0 0.0
        %6261 = vmatprep.subr.mxu0 0.0
        %6262 = vmatpush1.msra.mxu0 0.0
        %6263 = vmatprep.subr.mxu0 0.0
        %6264 = vmatpush1.msra.mxu0 0.0
        %6265 = vmatprep.subr.mxu0 0.0
        %6266 = vmatpush1.msra.mxu0 0.0
        %6267 = vmatprep.subr.mxu0 0.0
        %6268 = vmatpush1.msra.mxu0 0.0
        %6269 = vmatprep.subr.mxu0 0.0
        %6270 = vmatpush1.msra.mxu0 0.0
        %6271 = vmatprep.subr.mxu0 0.0
        %6272 = vmatpush1.msra.mxu0 0.0
        %6273 = vmatprep.subr.mxu0 0.0
        %6274 = vmatpush1.msra.mxu0 0.0
        %6275 = vmatprep.subr.mxu0 0.0
        %6276 = vmatpush1.msra.mxu0 0.0
        %6277 = vmatprep.subr.mxu0 0.0
        %6278 = vmatpush1.msra.mxu0 0.0
        %6279 = vmatprep.subr.mxu0 0.0
        %6280 = vmatpush1.msra.mxu0 0.0
        %6281 = vmatprep.subr.mxu0 0.0
        %6282 = vmatpush1.msra.mxu0 0.0
        %6283 = vmatprep.subr.mxu0 0.0
        %6284 = vmatpush1.msra.mxu0 0.0
        %6285 = vmatprep.subr.mxu0 0.0
        %6286 = vmatpush1.msra.mxu0 0.0
        %6287 = vmatprep.subr.mxu0 0.0
        %6288 = vmatpush1.msra.mxu0 0.0
        %6289 = vmatprep.subr.mxu0 0.0
        %6290 = vmatpush1.msra.mxu0 0.0
        %6291 = vmatprep.subr.mxu0 0.0
        %6292 = vmatpush1.msra.mxu0 0.0
        %6293 = vmatprep.subr.mxu0 0.0
        %6294 = vmatpush1.msra.mxu0 0.0
        %6295 = vmatprep.mubr.f32.mxu0 0.0
        %6296 = vmatmul.mubr.f32.gmra.mrb[0].mxu0 %v5282
        %v6297 = vpop.f32.mrb[0].mxu0
        %v6298 = vadd.f32 0.0, %v6297
        %v6299 = vpop.f32.mrb[0].mxu0
        %6300 = vmatprep.mubr.f32.mxu0 0.0
        %6301 = vmatmul.mubr.f32.gmra.mrb[0].mxu0 %v5285
        %v6302 = vpop.f32.mrb[0].mxu0
        %v6303 = vadd.f32 0.0, %v6302
        %v6304 = vpop.f32.mrb[0].mxu0
        %6305 = vdwg.mxu0
        %v6307 = vsel %vm356, %v6298, 0
        %v6310 = vsel %vm356, %v6303, 0
        %6312 = vmatprep.subr.mxu0 0.0
        %6313 = vmatpush1.msra.mxu0 %v5363
        %6314 = vmatprep.subr.mxu0 0.0
        %6315 = vmatpush1.msra.mxu0 %v5364
        %6316 = vmatprep.subr.mxu0 0.0
        %6317 = vmatpush1.msra.mxu0 0.0
        %6318 = vmatprep.subr.mxu0 0.0
        %6319 = vmatpush1.msra.mxu0 0.0
        %6320 = vmatprep.subr.mxu0 0.0
        %6321 = vmatpush1.msra.mxu0 0.0
        %6322 = vmatprep.subr.mxu0 0.0
        %6323 = vmatpush1.msra.mxu0 0.0
        %6324 = vmatprep.subr.mxu0 0.0
        %6325 = vmatpush1.msra.mxu0 0.0
        %6326 = vmatprep.subr.mxu0 0.0
        %6327 = vmatpush1.msra.mxu0 0.0
        %6328 = vmatprep.subr.mxu0 0.0
        %6329 = vmatpush1.msra.mxu0 0.0
        %6330 = vmatprep.subr.mxu0 0.0
        %6331 = vmatpush1.msra.mxu0 0.0
        %6332 = vmatprep.subr.mxu0 0.0
        %6333 = vmatpush1.msra.mxu0 0.0
        %6334 = vmatprep.subr.mxu0 0.0
        %6335 = vmatpush1.msra.mxu0 0.0
        %6336 = vmatprep.subr.mxu0 0.0
        %6337 = vmatpush1.msra.mxu0 0.0
        %6338 = vmatprep.subr.mxu0 0.0
        %6339 = vmatpush1.msra.mxu0 0.0
        %6340 = vmatprep.subr.mxu0 0.0
        %6341 = vmatpush1.msra.mxu0 0.0
        %6342 = vmatprep.subr.mxu0 0.0
        %6343 = vmatpush1.msra.mxu0 0.0
        %6344 = vmatprep.subr.mxu0 0.0
        %6345 = vmatpush1.msra.mxu0 0.0
        %6346 = vmatprep.subr.mxu0 0.0
        %6347 = vmatpush1.msra.mxu0 0.0
        %6348 = vmatprep.subr.mxu0 0.0
        %6349 = vmatpush1.msra.mxu0 0.0
        %6350 = vmatprep.subr.mxu0 0.0
        %6351 = vmatpush1.msra.mxu0 0.0
        %6352 = vmatprep.subr.mxu0 0.0
        %6353 = vmatpush1.msra.mxu0 0.0
        %6354 = vmatprep.subr.mxu0 0.0
        %6355 = vmatpush1.msra.mxu0 0.0
        %6356 = vmatprep.subr.mxu0 0.0
        %6357 = vmatpush1.msra.mxu0 0.0
        %6358 = vmatprep.subr.mxu0 0.0
        %6359 = vmatpush1.msra.mxu0 0.0
        %6360 = vmatprep.subr.mxu0 0.0
        %6361 = vmatpush1.msra.mxu0 0.0
        %6362 = vmatprep.subr.mxu0 0.0
        %6363 = vmatpush1.msra.mxu0 0.0
        %6364 = vmatprep.subr.mxu0 0.0
        %6365 = vmatpush1.msra.mxu0 0.0
        %6366 = vmatprep.subr.mxu0 0.0
        %6367 = vmatpush1.msra.mxu0 0.0
        %6368 = vmatprep.subr.mxu0 0.0
        %6369 = vmatpush1.msra.mxu0 0.0
        %6370 = vmatprep.subr.mxu0 0.0
        %6371 = vmatpush1.msra.mxu0 0.0
        %6372 = vmatprep.subr.mxu0 0.0
        %6373 = vmatpush1.msra.mxu0 0.0
        %6374 = vmatprep.subr.mxu0 0.0
        %6375 = vmatpush1.msra.mxu0 0.0
        %6376 = vmatprep.mubr.f32.mxu0 0.0
        %6377 = vmatmul.mubr.f32.gmra.mrb[0].mxu0 %v6307
        %v6378 = vpop.f32.mrb[0].mxu0
        %v6379 = vadd.f32 0.0, %v6378
        %v6380 = vpop.f32.mrb[0].mxu0
        %6381 = vmatprep.mubr.f32.mxu0 0.0
        %6382 = vmatmul.mubr.f32.gmra.mrb[0].mxu0 %v6310
        %v6383 = vpop.f32.mrb[0].mxu0
        %v6384 = vadd.f32 0.0, %v6383
        %v6385 = vpop.f32.mrb[0].mxu0
        %6386 = vdwg.mxu0
        %v6388 = vsel %vm356, %v6211, 0
        %v6391 = vsel %vm356, %v6216, 0
        %6393 = vmatprep.subr.mxu0 0.0
        %6394 = vmatpush1.msra.mxu0 %v5363
        %6395 = vmatprep.subr.mxu0 0.0
        %6396 = vmatpush1.msra.mxu0 %v5364
        %6397 = vmatprep.subr.mxu0 0.0
        %6398 = vmatpush1.msra.mxu0 0.0
        %6399 = vmatprep.subr.mxu0 0.0
        %6400 = vmatpush1.msra.mxu0 0.0
        %6401 = vmatprep.subr.mxu0 0.0
        %6402 = vmatpush1.msra.mxu0 0.0
        %6403 = vmatprep.subr.mxu0 0.0
        %6404 = vmatpush1.msra.mxu0 0.0
        %6405 = vmatprep.subr.mxu0 0.0
        %6406 = vmatpush1.msra.mxu0 0.0
        %6407 = vmatprep.subr.mxu0 0.0
        %6408 = vmatpush1.msra.mxu0 0.0
        %6409 = vmatprep.subr.mxu0 0.0
        %6410 = vmatpush1.msra.mxu0 0.0
        %6411 = vmatprep.subr.mxu0 0.0
        %6412 = vmatpush1.msra.mxu0 0.0
        %6413 = vmatprep.subr.mxu0 0.0
        %6414 = vmatpush1.msra.mxu0 0.0
        %6415 = vmatprep.subr.mxu0 0.0
        %6416 = vmatpush1.msra.mxu0 0.0
        %6417 = vmatprep.subr.mxu0 0.0
        %6418 = vmatpush1.msra.mxu0 0.0
        %6419 = vmatprep.subr.mxu0 0.0
        %6420 = vmatpush1.msra.mxu0 0.0
        %6421 = vmatprep.subr.mxu0 0.0
        %6422 = vmatpush1.msra.mxu0 0.0
        %6423 = vmatprep.subr.mxu0 0.0
        %6424 = vmatpush1.msra.mxu0 0.0
        %6425 = vmatprep.subr.mxu0 0.0
        %6426 = vmatpush1.msra.mxu0 0.0
        %6427 = vmatprep.subr.mxu0 0.0
        %6428 = vmatpush1.msra.mxu0 0.0
        %6429 = vmatprep.subr.mxu0 0.0
        %6430 = vmatpush1.msra.mxu0 0.0
        %6431 = vmatprep.subr.mxu0 0.0
        %6432 = vmatpush1.msra.mxu0 0.0
        %6433 = vmatprep.subr.mxu0 0.0
        %6434 = vmatpush1.msra.mxu0 0.0
        %6435 = vmatprep.subr.mxu0 0.0
        %6436 = vmatpush1.msra.mxu0 0.0
        %6437 = vmatprep.subr.mxu0 0.0
        %6438 = vmatpush1.msra.mxu0 0.0
        %6439 = vmatprep.subr.mxu0 0.0
        %6440 = vmatpush1.msra.mxu0 0.0
        %6441 = vmatprep.subr.mxu0 0.0
        %6442 = vmatpush1.msra.mxu0 0.0
        %6443 = vmatprep.subr.mxu0 0.0
        %6444 = vmatpush1.msra.mxu0 0.0
        %6445 = vmatprep.subr.mxu0 0.0
        %6446 = vmatpush1.msra.mxu0 0.0
        %6447 = vmatprep.subr.mxu0 0.0
        %6448 = vmatpush1.msra.mxu0 0.0
        %6449 = vmatprep.subr.mxu0 0.0
        %6450 = vmatpush1.msra.mxu0 0.0
        %6451 = vmatprep.subr.mxu0 0.0
        %6452 = vmatpush1.msra.mxu0 0.0
        %6453 = vmatprep.subr.mxu0 0.0
        %6454 = vmatpush1.msra.mxu0 0.0
        %6455 = vmatprep.subr.mxu0 0.0
        %6456 = vmatpush1.msra.mxu0 0.0
        %6457 = vmatprep.mubr.f32.mxu0 0.0
        %6458 = vmatmul.mubr.f32.gmra.mrb[0].mxu0 %v6388
        %v6459 = vpop.f32.mrb[0].mxu0
        %v6460 = vadd.f32 %v6379, %v6459
        %v6461 = vpop.f32.mrb[0].mxu0
        %6462 = vmatprep.mubr.f32.mxu0 0.0
        %6463 = vmatmul.mubr.f32.gmra.mrb[0].mxu0 %v6391
        %v6464 = vpop.f32.mrb[0].mxu0
        %v6465 = vadd.f32 %v6384, %v6464
        %v6466 = vpop.f32.mrb[0].mxu0
        %6467 = vdwg.mxu0
        %v6468 = vsub.f32 %v4427, %v4434
        %v6469 = vsub.f32 %v4428, %v4435
        %v6470 = vsub.f32 %v4429, %v4436
        %v6471 = vsub.f32 %v4430, %v4437
        %v6472 = vsub.f32 %v4431, %v4438
        %v6473 = vsub.f32 %v4432, %v4439
        %v6474 = vand.u32 2147483647, %v6468
        %v6475 = vand.u32 2147483647, %v6469
        %v6476 = vand.u32 2147483647, %v6470
        %v6477 = vand.u32 2147483647, %v6471
        %v6478 = vand.u32 2147483647, %v6472
        %v6479 = vand.u32 2147483647, %v6473
        %6480 = vmatprep.subr.mxu0 0.0
        %6481 = vmatpush1.msra.mxu0 %v6474
        %6482 = vmatprep.subr.mxu0 0.0
        %6483 = vmatpush1.msra.mxu0 %v6475
        %6484 = vmatprep.subr.mxu0 0.0
        %6485 = vmatpush1.msra.mxu0 %v6476
        %6486 = vmatprep.subr.mxu0 0.0
        %6487 = vmatpush1.msra.mxu0 %v6477
        %6488 = vmatprep.subr.mxu0 0.0
        %6489 = vmatpush1.msra.mxu0 %v6478
        %6490 = vmatprep.subr.mxu0 0.0
        %6491 = vmatpush1.msra.mxu0 %v6479
        %6492 = vmatprep.subr.mxu0 0.0
        %6493 = vmatpush1.msra.mxu0 0.0
        %6494 = vmatprep.subr.mxu0 0.0
        %6495 = vmatpush1.msra.mxu0 0.0
        %6496 = vmatprep.subr.mxu0 0.0
        %6497 = vmatpush1.msra.mxu0 0.0
        %6498 = vmatprep.subr.mxu0 0.0
        %6499 = vmatpush1.msra.mxu0 0.0
        %6500 = vmatprep.subr.mxu0 0.0
        %6501 = vmatpush1.msra.mxu0 0.0
        %6502 = vmatprep.subr.mxu0 0.0
        %6503 = vmatpush1.msra.mxu0 0.0
        %6504 = vmatprep.subr.mxu0 0.0
        %6505 = vmatpush1.msra.mxu0 0.0
        %6506 = vmatprep.subr.mxu0 0.0
        %6507 = vmatpush1.msra.mxu0 0.0
        %6508 = vmatprep.subr.mxu0 0.0
        %6509 = vmatpush1.msra.mxu0 0.0
        %6510 = vmatprep.subr.mxu0 0.0
        %6511 = vmatpush1.msra.mxu0 0.0
        %6512 = vmatprep.subr.mxu0 0.0
        %6513 = vmatpush1.msra.mxu0 0.0
        %6514 = vmatprep.subr.mxu0 0.0
        %6515 = vmatpush1.msra.mxu0 0.0
        %6516 = vmatprep.subr.mxu0 0.0
        %6517 = vmatpush1.msra.mxu0 0.0
        %6518 = vmatprep.subr.mxu0 0.0
        %6519 = vmatpush1.msra.mxu0 0.0
        %6520 = vmatprep.subr.mxu0 0.0
        %6521 = vmatpush1.msra.mxu0 0.0
        %6522 = vmatprep.subr.mxu0 0.0
        %6523 = vmatpush1.msra.mxu0 0.0
        %6524 = vmatprep.subr.mxu0 0.0
        %6525 = vmatpush1.msra.mxu0 0.0
        %6526 = vmatprep.subr.mxu0 0.0
        %6527 = vmatpush1.msra.mxu0 0.0
        %6528 = vmatprep.subr.mxu0 0.0
        %6529 = vmatpush1.msra.mxu0 0.0
        %6530 = vmatprep.subr.mxu0 0.0
        %6531 = vmatpush1.msra.mxu0 0.0
        %6532 = vmatprep.subr.mxu0 0.0
        %6533 = vmatpush1.msra.mxu0 0.0
        %6534 = vmatprep.subr.mxu0 0.0
        %6535 = vmatpush1.msra.mxu0 0.0
        %6536 = vmatprep.subr.mxu0 0.0
        %6537 = vmatpush1.msra.mxu0 0.0
        %6538 = vmatprep.subr.mxu0 0.0
        %6539 = vmatpush1.msra.mxu0 0.0
        %6540 = vmatprep.subr.mxu0 0.0
        %6541 = vmatpush1.msra.mxu0 0.0
        %6542 = vmatprep.subr.mxu0 0.0
        %6543 = vmatpush1.msra.mxu0 0.0
        %6544 = vmatprep.mubr.f32.mxu0 0.0
        %6545 = vmatmul.mubr.f32.gmra.mrb[0].mxu0 %v5282
        %v6546 = vpop.f32.mrb[0].mxu0
        %v6547 = vadd.f32 0.0, %v6546
        %v6548 = vpop.f32.mrb[0].mxu0
        %6549 = vmatprep.mubr.f32.mxu0 0.0
        %6550 = vmatmul.mubr.f32.gmra.mrb[0].mxu0 %v5285
        %v6551 = vpop.f32.mrb[0].mxu0
        %v6552 = vadd.f32 0.0, %v6551
        %v6553 = vpop.f32.mrb[0].mxu0
        %6554 = vdwg.mxu0
        %v6556 = vsel %vm356, %v6547, 0
        %v6559 = vsel %vm356, %v6552, 0
        %6561 = vmatprep.subr.mxu0 0.0
        %6562 = vmatpush1.msra.mxu0 %v5363
        %6563 = vmatprep.subr.mxu0 0.0
        %6564 = vmatpush1.msra.mxu0 %v5364
        %6565 = vmatprep.subr.mxu0 0.0
        %6566 = vmatpush1.msra.mxu0 0.0
        %6567 = vmatprep.subr.mxu0 0.0
        %6568 = vmatpush1.msra.mxu0 0.0
        %6569 = vmatprep.subr.mxu0 0.0
        %6570 = vmatpush1.msra.mxu0 0.0
        %6571 = vmatprep.subr.mxu0 0.0
        %6572 = vmatpush1.msra.mxu0 0.0
        %6573 = vmatprep.subr.mxu0 0.0
        %6574 = vmatpush1.msra.mxu0 0.0
        %6575 = vmatprep.subr.mxu0 0.0
        %6576 = vmatpush1.msra.mxu0 0.0
        %6577 = vmatprep.subr.mxu0 0.0
        %6578 = vmatpush1.msra.mxu0 0.0
        %6579 = vmatprep.subr.mxu0 0.0
        %6580 = vmatpush1.msra.mxu0 0.0
        %6581 = vmatprep.subr.mxu0 0.0
        %6582 = vmatpush1.msra.mxu0 0.0
        %6583 = vmatprep.subr.mxu0 0.0
        %6584 = vmatpush1.msra.mxu0 0.0
        %6585 = vmatprep.subr.mxu0 0.0
        %6586 = vmatpush1.msra.mxu0 0.0
        %6587 = vmatprep.subr.mxu0 0.0
        %6588 = vmatpush1.msra.mxu0 0.0
        %6589 = vmatprep.subr.mxu0 0.0
        %6590 = vmatpush1.msra.mxu0 0.0
        %6591 = vmatprep.subr.mxu0 0.0
        %6592 = vmatpush1.msra.mxu0 0.0
        %6593 = vmatprep.subr.mxu0 0.0
        %6594 = vmatpush1.msra.mxu0 0.0
        %6595 = vmatprep.subr.mxu0 0.0
        %6596 = vmatpush1.msra.mxu0 0.0
        %6597 = vmatprep.subr.mxu0 0.0
        %6598 = vmatpush1.msra.mxu0 0.0
        %6599 = vmatprep.subr.mxu0 0.0
        %6600 = vmatpush1.msra.mxu0 0.0
        %6601 = vmatprep.subr.mxu0 0.0
        %6602 = vmatpush1.msra.mxu0 0.0
        %6603 = vmatprep.subr.mxu0 0.0
        %6604 = vmatpush1.msra.mxu0 0.0
        %6605 = vmatprep.subr.mxu0 0.0
        %6606 = vmatpush1.msra.mxu0 0.0
        %6607 = vmatprep.subr.mxu0 0.0
        %6608 = vmatpush1.msra.mxu0 0.0
        %6609 = vmatprep.subr.mxu0 0.0
        %6610 = vmatpush1.msra.mxu0 0.0
        %6611 = vmatprep.subr.mxu0 0.0
        %6612 = vmatpush1.msra.mxu0 0.0
        %6613 = vmatprep.subr.mxu0 0.0
        %6614 = vmatpush1.msra.mxu0 0.0
        %6615 = vmatprep.subr.mxu0 0.0
        %6616 = vmatpush1.msra.mxu0 0.0
        %6617 = vmatprep.subr.mxu0 0.0
        %6618 = vmatpush1.msra.mxu0 0.0
        %6619 = vmatprep.subr.mxu0 0.0
        %6620 = vmatpush1.msra.mxu0 0.0
        %6621 = vmatprep.subr.mxu0 0.0
        %6622 = vmatpush1.msra.mxu0 0.0
        %6623 = vmatprep.subr.mxu0 0.0
        %6624 = vmatpush1.msra.mxu0 0.0
        %6625 = vmatprep.mubr.f32.mxu0 0.0
        %6626 = vmatmul.mubr.f32.gmra.mrb[0].mxu0 %v6556
        %v6627 = vpop.f32.mrb[0].mxu0
        %v6628 = vadd.f32 0.0, %v6627
        %v6629 = vpop.f32.mrb[0].mxu0
        %6630 = vmatprep.mubr.f32.mxu0 0.0
        %6631 = vmatmul.mubr.f32.gmra.mrb[0].mxu0 %v6559
        %v6632 = vpop.f32.mrb[0].mxu0
        %v6633 = vadd.f32 0.0, %v6632
        %v6634 = vpop.f32.mrb[0].mxu0
        %6635 = vdwg.mxu0
        %v6636 = vadd.f32 %v6460, %v6628
        %v6637 = vadd.f32 %v6465, %v6633
        %v6638 = vmul.f32 %v6636, 0.33333334
        %v6639 = vmul.f32 %v6637, 0.33333334
        %v6640 = vmul.f32 %v6118, %v6130
        %v6641 = vmul.f32 %v6119, %v6131
        %v6642 = vsub.f32 1.0, %v6640
        %v6643 = vsub.f32 1.0, %v6641
        %v6644 = vmul.f32 %v6642, 0.025
        %v6645 = vmul.f32 %v6643, 0.025
        %v6646 = vmul.f32 %v6638, 0.975
        %v6647 = vmul.f32 %v6639, 0.975
        %v6648 = vadd.f32 %v6644, %v6646
        %v6649 = vadd.f32 %v6645, %v6647
        %s6650 = smul.u32 %s23, 16
        %s6651 = ssub.s32 16, %s6650
        %v6652 = vlaneseq
        %v6653 = vshrl.u32 %v6652, 7
        %v6654 = vadd.s32 %v6653, 8
        %v6655 = vstv %s6651
        %vm6656 = vcmp.lt.s32.totalorder %v6653, %v6655
        %vm6657 = vcmp.lt.s32.totalorder %v6654, %v6655
        %v6658 = vsel %vm6656, %v6648, 0.0
        %v6659 = vsel %vm6657, %v6649, 0.0
        %v6660 = vsel %vm356, %v6658, 0.0
        %v6661 = vsel %vm356, %v6659, 0.0
        %v6662 = vadd.f32 %v6660, %v6661
        %6663 = vadd.xlane.f32.xlu0 %v6662
        %v6664 = vpop.xlane.xlu0 %6663
        %v6665 = vrot.slane %v6664, 4
        %v6666 = vadd.f32 %v6664, %v6665
        %v6667 = vrot.slane %v6666, 2
        %v6668 = vadd.f32 %v6666, %v6667
        %v6669 = vrot.slane %v6668, 1
        %v6670 = vadd.f32 %v6668, %v6669
        %s6671 = vtos %v6670
        %s6672 = smul.f32 %s6671, 200.0
        %v6673 = vstv %s6672
        %v6674 = vadd.f32 %v6673, 0.0
        %6675 = vst [vmem:[%s239] sm:$0xff] %v6674
        %s6676 = sand.u32 %s138, 1
        %s6677 = scalar_lea.sflag [#allocation3], %s6676
        %s6678 = sand.u32 %s138, 1
        %s6679 = smul.addr %s6678, 8
        %s6680 = scalar_lea.vmem [#allocation2], %s6679
        // Predicated region
        $region37: #{tpu_custom_call.1} parent=35 // pred_check
          %p6681 = pneg %p148
        $region38: #{tpu_custom_call.1} parent=35 // pred_check_branch
          %6683 = sbr.rel (%p6681) target = $region40
        $region39: #{tpu_custom_call.1} parent=35 // pred_region
          %s6685 = ssub.s32 128, 128
          %6686 = vsyncadd %s6677, %s6685
          %s6687 = sadd.s32 %s23, %s22
          %s6688 = smul.addr %s6687, 128
          %s6689 = scalar_lea.hbm %s4, %s6688
          %s6691 = sshll.u32 %s6680, 4
          %s6692 = int_to_ptr.vmem [resolvable:$true] %s6691
          %6694 = dma.vmem_to_hbm [thread:$0]  %s6692, 128, %s6689, %s6677
        $region40: #{tpu_custom_call.1} parent=35 // pred_fallthru
          _
      $region36: #{tpu_custom_call.1} parent=5 // pred_fallthru
        _
      %p6695 = scmp.le.s32.totalorder 2, %s13
      // Predicated region
      $region41: #{tpu_custom_call.1} parent=5 // pred_check
        %p6696 = pneg %p6695
      $region42: #{tpu_custom_call.1} parent=5 // pred_check_branch
        %6698 = sbr.rel (%p6696) target = $region44
      $region43: #{tpu_custom_call.1} parent=5 // pred_region
        %s6699 = ssub.s32 %s13, 2
        // Predicated region
        $region45: #{tpu_custom_call.1} parent=43 // pred_check
          %p6700 = pneg %p154
        $region46: #{tpu_custom_call.1} parent=43 // pred_check_branch
          %6702 = sbr.rel (%p6700) target = $region48
        $region47: #{tpu_custom_call.1} parent=43 // pred_region
          %s6703 = sand.u32 %s139, 1
          %s6704 = scalar_lea.sflag [#allocation3], %s6703
          %s6705 = sand.u32 %s139, 1
          %s6706 = smul.addr %s6705, 8
          %s6707 = scalar_lea.vmem [#allocation2], %s6706
          %6708 = dma.done %s6704, 128
        $region48: #{tpu_custom_call.1} parent=43 // pred_fallthru
          _
      $region44: #{tpu_custom_call.1} parent=5 // pred_fallthru
        _
    $region6: #{tpu_custom_call.1} parent=1 // loop_footer
      %s17 = sadd.s32 1, %s13
    $region7: #{tpu_custom_call.1} parent=1 // loop_footer_branch
      %12 = sbr.rel target = $region3
    $region8: #{tpu_custom_call.1} parent=1 // loop_exit
      _
    %6709 = vsyncpa [#allocation3], 1
    %s6710 = scalar_lea.sflag [#allocation3], 1
    %6711 = vsyncpa %s6710, 1

</llo_original>
